<compile_context>
chip_gen: v7x
topology: tpu7x:2x2x1
jax: 0.10.0
libtpu: 0.0.40
codegen_flags: <defaults>
</compile_context>

<pallas_src>
import functools

import jax
import jax.numpy as jnp
from jax.experimental import pallas as pl
from jax.experimental.pallas import tpu as pltpu


def _round_up(x, m):
    return (x + m - 1) // m * m


# ----------------------------------------------------------------------------
# Pallas kernel: direct conv (+bias) for one batch element, no im2col in HBM.
# ----------------------------------------------------------------------------
def _upsample_conv_kernel(xp_ref, w_ref, b_ref, o_ref, *, K, stride, Ho, Wo):
    """xp_ref: (1, Hp, Wp, Cin)   reflection-padded (and upsampled) input block
       w_ref : (K*K, Cin, Cout_p) weights, Cout zero-padded to a multiple of 128
       b_ref : (1, Cout_p)        bias (zero in padded channels)
       o_ref : (1, Ho*Wo, Cout_p) lane-dense output block
    """
    xp = xp_ref[0]                                     # (Hp, Wp, Cin)
    cout_p = o_ref.shape[-1]
    rows = Ho * Wo
    acc = jnp.zeros((rows, cout_p), jnp.float32)
    # K is a small static int -> fully unrolled tap loop (K*K MXU dots).
    for kh in range(K):
        for kw in range(K):
            tap = xp[kh:kh + (Ho - 1) * stride + 1:stride,
                     kw:kw + (Wo - 1) * stride + 1:stride, :]      # (Ho, Wo, Cin)
            tap = tap.reshape(rows, -1)                            # (rows, Cin)
            acc = acc + jnp.dot(tap, w_ref[kh * K + kw],
                                preferred_element_type=jnp.float32)
    o_ref[0] = acc + b_ref[...]


# ----------------------------------------------------------------------------
# Wrapper (matches torch.nn layout: weight (Cout, Cin, K, K), bias (Cout,))
# ----------------------------------------------------------------------------
def upsample_conv_layer(x_nchw, weight, bias, *, kernel_size, stride,
                        upsample=None):
    K = kernel_size
    x = jnp.transpose(x_nchw, (0, 2, 3, 1)).astype(jnp.float32)    # NHWC
    if upsample:
        # F.interpolate(mode='nearest', scale_factor=upsample)
        x = jnp.repeat(jnp.repeat(x, upsample, axis=1), upsample, axis=2)
    p = K // 2
    if p > 0:
        # ReflectionPad2d(K//2)
        x = jnp.pad(x, ((0, 0), (p, p), (p, p), (0, 0)), mode="reflect")

    B, Hp, Wp, Cin = x.shape
    Ho = (Hp - K) // stride + 1
    Wo = (Wp - K) // stride + 1
    rows = Ho * Wo

    Cout = weight.shape[0]
    Cout_p = _round_up(Cout, 128)
    # (Cout, Cin, K, K) -> (K*K, Cin, Cout), zero-pad Cout to full lane width.
    w_t = jnp.transpose(weight, (2, 3, 1, 0)).reshape(K * K, Cin, Cout)
    w_t = jnp.pad(w_t, ((0, 0), (0, 0), (0, Cout_p - Cout))).astype(jnp.float32)
    b_p = jnp.pad(bias.astype(jnp.float32), (0, Cout_p - Cout)).reshape(1, Cout_p)

    kernel = functools.partial(_upsample_conv_kernel, K=K, stride=stride,
                               Ho=Ho, Wo=Wo)

    # TODO(synk): for large images add a spatial grid axis with overlapping halo
    # blocks (pl.Element index map) + vmem_limit_bytes so the padded per-batch
    # block need not fit VMEM; at these shapes the whole block is a few hundred KB.
    out = pl.pallas_call(
        kernel,
        out_shape=jax.ShapeDtypeStruct((B, rows, Cout_p), jnp.float32),
        grid=(B,),
        in_specs=[
            pl.BlockSpec((1, Hp, Wp, Cin), lambda b: (b, 0, 0, 0)),
            pl.BlockSpec((K * K, Cin, Cout_p), lambda b: (0, 0, 0)),
            pl.BlockSpec((1, Cout_p), lambda b: (0, 0)),
        ],
        out_specs=pl.BlockSpec((1, rows, Cout_p), lambda b: (b, 0, 0)),
        compiler_params=pltpu.CompilerParams(
            dimension_semantics=("parallel",)),
    )(x, w_t, b_p)

    out = out[:, :, :Cout].reshape(B, Ho, Wo, Cout)
    return jnp.transpose(out, (0, 3, 1, 2))                        # back to NCHW


# ----------------------------------------------------------------------------
# Pure-JAX reference (for correctness check only)
# ----------------------------------------------------------------------------
def _reference(x_nchw, weight, bias, *, kernel_size, stride, upsample=None):
    x = x_nchw.astype(jnp.float32)
    if upsample:
        x = jnp.repeat(jnp.repeat(x, upsample, axis=2), upsample, axis=3)
    p = kernel_size // 2
    if p > 0:
        x = jnp.pad(x, ((0, 0), (0, 0), (p, p), (p, p)), mode="reflect")
    out = jax.lax.conv_general_dilated(
        x, weight.astype(jnp.float32), window_strides=(stride, stride),
        padding="VALID", dimension_numbers=("NCHW", "OIHW", "NCHW"),
        precision=jax.lax.Precision.HIGHEST)
    return out + bias[None, :, None, None]


# ----------------------------------------------------------------------------
# Main
# ----------------------------------------------------------------------------
if __name__ == "__main__":
    key = jax.random.PRNGKey(0)
    k_w1, k_b1, k_w2, k_b2, k_x = jax.random.split(key, 5)

    B, Cin, H, W = 2, 4, 16, 16
    x = jax.random.uniform(k_x, (B, Cin, H, W), dtype=jnp.float32)

    # Config 1: UpsampleConvLayer(4, 32, kernel_size=3, stride=1, upsample=2)
    C1 = 32
    w1 = jax.random.normal(k_w1, (C1, Cin, 3, 3), jnp.float32) * 0.1
    b1 = jax.random.normal(k_b1, (C1,), jnp.float32) * 0.05
    f1 = jax.jit(functools.partial(upsample_conv_layer, kernel_size=3,
                                   stride=1, upsample=2))
    y1 = f1(x, w1, b1)
    jax.block_until_ready(y1)
    assert y1.shape == (B, C1, 2 * H, 2 * W), y1.shape
    r1 = _reference(x, w1, b1, kernel_size=3, stride=1, upsample=2)
    assert bool(jnp.allclose(y1, r1, atol=5e-2, rtol=5e-2)), \
        float(jnp.max(jnp.abs(y1 - r1)))

    # Config 2: UpsampleConvLayer(4, 8, kernel_size=3, stride=1, upsample=None)
    C2 = 8
    w2 = jax.random.normal(k_w2, (C2, Cin, 3, 3), jnp.float32) * 0.1
    b2 = jax.random.normal(k_b2, (C2,), jnp.float32) * 0.05
    f2 = jax.jit(functools.partial(upsample_conv_layer, kernel_size=3,
                                   stride=1, upsample=None))
    y2 = f2(x, w2, b2)
    jax.block_until_ready(y2)
    assert y2.shape == (B, C2, H, W), y2.shape
    r2 = _reference(x, w2, b2, kernel_size=3, stride=1, upsample=None)
    assert bool(jnp.allclose(y2, r2, atol=5e-2, rtol=5e-2)), \
        float(jnp.max(jnp.abs(y2 - r2)))

    print("KERNEL_OK")
</pallas_src>

<mosaic_0001>
module attributes {stable_mosaic.version = 11 : i64} {
  func.func @_upsample_conv_kernel(%arg0: i32, %arg1: memref<1x34x34x4xf32, #tpu.memory_space<vmem>>, %arg2: memref<9x4x128xf32, #tpu.memory_space<vmem>>, %arg3: memref<1x128xf32, #tpu.memory_space<vmem>>, %arg4: memref<1x1024x128xf32, #tpu.memory_space<vmem>>) attributes {dimension_semantics = [#tpu.dimension_semantics<parallel>], iteration_bounds = array<i64: 2>, scalar_prefetch = 0 : i64, scratch_operands = 0 : i64, tpu.core_type = #tpu.core_type<tc>, window_params = [{transform_indices = @transform_0, window_bounds = array<i64: 1, 34, 34, 4>}, {pipeline_mode = #tpu.pipeline_mode<synchronous>, transform_indices = @transform_1, window_bounds = array<i64: 9, 4, 128>}, {pipeline_mode = #tpu.pipeline_mode<synchronous>, transform_indices = @transform_2, window_bounds = array<i64: 1, 128>}, {transform_indices = @transform_3, window_bounds = array<i64: 1, 1024, 128>}]} {
    %c0 = arith.constant 0 : index
    %c0_0 = arith.constant 0 : index
    %c0_1 = arith.constant 0 : index
    %c0_2 = arith.constant 0 : index
    %0 = vector.load %arg1[%c0, %c0_0, %c0_1, %c0_2] : memref<1x34x34x4xf32, #tpu.memory_space<vmem>>, vector<1x34x34x4xf32>
    %1 = vector.shape_cast %0 : vector<1x34x34x4xf32> to vector<34x34x4xf32>
    %cst = arith.constant 0.000000e+00 : f32
    %2 = vector.broadcast %cst : f32 to vector<1024x128xf32>
    %3 = vector.extract_strided_slice %1 {offsets = [0, 0, 0], sizes = [32, 32, 4], strides = [1, 1, 1]} : vector<34x34x4xf32> to vector<32x32x4xf32>
    %4 = vector.shape_cast %3 : vector<32x32x4xf32> to vector<1024x4xf32>
    %c0_3 = arith.constant 0 : index
    %c0_4 = arith.constant 0 : index
    %c0_5 = arith.constant 0 : index
    %5 = vector.load %arg2[%c0_3, %c0_4, %c0_5] : memref<9x4x128xf32, #tpu.memory_space<vmem>>, vector<1x4x128xf32>
    %6 = vector.shape_cast %5 : vector<1x4x128xf32> to vector<4x128xf32>
    %cst_6 = arith.constant dense<0.000000e+00> : vector<1024x128xf32>
    %7 = tpu.matmul %4, %6, %cst_6 {dimension_numbers = #tpu.dot_dimension_numbers<[1], [0], [0], [1], [0, 0, 1, 1], [], []>} : vector<1024x4xf32>, vector<4x128xf32>, vector<1024x128xf32> -> vector<1024x128xf32>
    %8 = arith.addf %2, %7 : vector<1024x128xf32>
    %9 = vector.extract_strided_slice %1 {offsets = [0, 1, 0], sizes = [32, 32, 4], strides = [1, 1, 1]} : vector<34x34x4xf32> to vector<32x32x4xf32>
    %10 = vector.shape_cast %9 : vector<32x32x4xf32> to vector<1024x4xf32>
    %c1 = arith.constant 1 : index
    %c0_7 = arith.constant 0 : index
    %c0_8 = arith.constant 0 : index
    %11 = vector.load %arg2[%c1, %c0_7, %c0_8] : memref<9x4x128xf32, #tpu.memory_space<vmem>>, vector<1x4x128xf32>
    %12 = vector.shape_cast %11 : vector<1x4x128xf32> to vector<4x128xf32>
    %cst_9 = arith.constant dense<0.000000e+00> : vector<1024x128xf32>
    %13 = tpu.matmul %10, %12, %cst_9 {dimension_numbers = #tpu.dot_dimension_numbers<[1], [0], [0], [1], [0, 0, 1, 1], [], []>} : vector<1024x4xf32>, vector<4x128xf32>, vector<1024x128xf32> -> vector<1024x128xf32>
    %14 = arith.addf %8, %13 : vector<1024x128xf32>
    %15 = vector.extract_strided_slice %1 {offsets = [0, 2, 0], sizes = [32, 32, 4], strides = [1, 1, 1]} : vector<34x34x4xf32> to vector<32x32x4xf32>
    %16 = vector.shape_cast %15 : vector<32x32x4xf32> to vector<1024x4xf32>
    %c2 = arith.constant 2 : index
    %c0_10 = arith.constant 0 : index
    %c0_11 = arith.constant 0 : index
    %17 = vector.load %arg2[%c2, %c0_10, %c0_11] : memref<9x4x128xf32, #tpu.memory_space<vmem>>, vector<1x4x128xf32>
    %18 = vector.shape_cast %17 : vector<1x4x128xf32> to vector<4x128xf32>
    %cst_12 = arith.constant dense<0.000000e+00> : vector<1024x128xf32>
    %19 = tpu.matmul %16, %18, %cst_12 {dimension_numbers = #tpu.dot_dimension_numbers<[1], [0], [0], [1], [0, 0, 1, 1], [], []>} : vector<1024x4xf32>, vector<4x128xf32>, vector<1024x128xf32> -> vector<1024x128xf32>
    %20 = arith.addf %14, %19 : vector<1024x128xf32>
    %21 = vector.extract_strided_slice %1 {offsets = [1, 0, 0], sizes = [32, 32, 4], strides = [1, 1, 1]} : vector<34x34x4xf32> to vector<32x32x4xf32>
    %22 = vector.shape_cast %21 : vector<32x32x4xf32> to vector<1024x4xf32>
    %c3 = arith.constant 3 : index
    %c0_13 = arith.constant 0 : index
    %c0_14 = arith.constant 0 : index
    %23 = vector.load %arg2[%c3, %c0_13, %c0_14] : memref<9x4x128xf32, #tpu.memory_space<vmem>>, vector<1x4x128xf32>
    %24 = vector.shape_cast %23 : vector<1x4x128xf32> to vector<4x128xf32>
    %cst_15 = arith.constant dense<0.000000e+00> : vector<1024x128xf32>
    %25 = tpu.matmul %22, %24, %cst_15 {dimension_numbers = #tpu.dot_dimension_numbers<[1], [0], [0], [1], [0, 0, 1, 1], [], []>} : vector<1024x4xf32>, vector<4x128xf32>, vector<1024x128xf32> -> vector<1024x128xf32>
    %26 = arith.addf %20, %25 : vector<1024x128xf32>
    %27 = vector.extract_strided_slice %1 {offsets = [1, 1, 0], sizes = [32, 32, 4], strides = [1, 1, 1]} : vector<34x34x4xf32> to vector<32x32x4xf32>
    %28 = vector.shape_cast %27 : vector<32x32x4xf32> to vector<1024x4xf32>
    %c4 = arith.constant 4 : index
    %c0_16 = arith.constant 0 : index
    %c0_17 = arith.constant 0 : index
    %29 = vector.load %arg2[%c4, %c0_16, %c0_17] : memref<9x4x128xf32, #tpu.memory_space<vmem>>, vector<1x4x128xf32>
    %30 = vector.shape_cast %29 : vector<1x4x128xf32> to vector<4x128xf32>
    %cst_18 = arith.constant dense<0.000000e+00> : vector<1024x128xf32>
    %31 = tpu.matmul %28, %30, %cst_18 {dimension_numbers = #tpu.dot_dimension_numbers<[1], [0], [0], [1], [0, 0, 1, 1], [], []>} : vector<1024x4xf32>, vector<4x128xf32>, vector<1024x128xf32> -> vector<1024x128xf32>
    %32 = arith.addf %26, %31 : vector<1024x128xf32>
    %33 = vector.extract_strided_slice %1 {offsets = [1, 2, 0], sizes = [32, 32, 4], strides = [1, 1, 1]} : vector<34x34x4xf32> to vector<32x32x4xf32>
    %34 = vector.shape_cast %33 : vector<32x32x4xf32> to vector<1024x4xf32>
    %c5 = arith.constant 5 : index
    %c0_19 = arith.constant 0 : index
    %c0_20 = arith.constant 0 : index
    %35 = vector.load %arg2[%c5, %c0_19, %c0_20] : memref<9x4x128xf32, #tpu.memory_space<vmem>>, vector<1x4x128xf32>
    %36 = vector.shape_cast %35 : vector<1x4x128xf32> to vector<4x128xf32>
    %cst_21 = arith.constant dense<0.000000e+00> : vector<1024x128xf32>
    %37 = tpu.matmul %34, %36, %cst_21 {dimension_numbers = #tpu.dot_dimension_numbers<[1], [0], [0], [1], [0, 0, 1, 1], [], []>} : vector<1024x4xf32>, vector<4x128xf32>, vector<1024x128xf32> -> vector<1024x128xf32>
    %38 = arith.addf %32, %37 : vector<1024x128xf32>
    %39 = vector.extract_strided_slice %1 {offsets = [2, 0, 0], sizes = [32, 32, 4], strides = [1, 1, 1]} : vector<34x34x4xf32> to vector<32x32x4xf32>
    %40 = vector.shape_cast %39 : vector<32x32x4xf32> to vector<1024x4xf32>
    %c6 = arith.constant 6 : index
    %c0_22 = arith.constant 0 : index
    %c0_23 = arith.constant 0 : index
    %41 = vector.load %arg2[%c6, %c0_22, %c0_23] : memref<9x4x128xf32, #tpu.memory_space<vmem>>, vector<1x4x128xf32>
    %42 = vector.shape_cast %41 : vector<1x4x128xf32> to vector<4x128xf32>
    %cst_24 = arith.constant dense<0.000000e+00> : vector<1024x128xf32>
    %43 = tpu.matmul %40, %42, %cst_24 {dimension_numbers = #tpu.dot_dimension_numbers<[1], [0], [0], [1], [0, 0, 1, 1], [], []>} : vector<1024x4xf32>, vector<4x128xf32>, vector<1024x128xf32> -> vector<1024x128xf32>
    %44 = arith.addf %38, %43 : vector<1024x128xf32>
    %45 = vector.extract_strided_slice %1 {offsets = [2, 1, 0], sizes = [32, 32, 4], strides = [1, 1, 1]} : vector<34x34x4xf32> to vector<32x32x4xf32>
    %46 = vector.shape_cast %45 : vector<32x32x4xf32> to vector<1024x4xf32>
    %c7 = arith.constant 7 : index
    %c0_25 = arith.constant 0 : index
    %c0_26 = arith.constant 0 : index
    %47 = vector.load %arg2[%c7, %c0_25, %c0_26] : memref<9x4x128xf32, #tpu.memory_space<vmem>>, vector<1x4x128xf32>
    %48 = vector.shape_cast %47 : vector<1x4x128xf32> to vector<4x128xf32>
    %cst_27 = arith.constant dense<0.000000e+00> : vector<1024x128xf32>
    %49 = tpu.matmul %46, %48, %cst_27 {dimension_numbers = #tpu.dot_dimension_numbers<[1], [0], [0], [1], [0, 0, 1, 1], [], []>} : vector<1024x4xf32>, vector<4x128xf32>, vector<1024x128xf32> -> vector<1024x128xf32>
    %50 = arith.addf %44, %49 : vector<1024x128xf32>
    %51 = vector.extract_strided_slice %1 {offsets = [2, 2, 0], sizes = [32, 32, 4], strides = [1, 1, 1]} : vector<34x34x4xf32> to vector<32x32x4xf32>
    %52 = vector.shape_cast %51 : vector<32x32x4xf32> to vector<1024x4xf32>
    %c8 = arith.constant 8 : index
    %c0_28 = arith.constant 0 : index
    %c0_29 = arith.constant 0 : index
    %53 = vector.load %arg2[%c8, %c0_28, %c0_29] : memref<9x4x128xf32, #tpu.memory_space<vmem>>, vector<1x4x128xf32>
    %54 = vector.shape_cast %53 : vector<1x4x128xf32> to vector<4x128xf32>
    %cst_30 = arith.constant dense<0.000000e+00> : vector<1024x128xf32>
    %55 = tpu.matmul %52, %54, %cst_30 {dimension_numbers = #tpu.dot_dimension_numbers<[1], [0], [0], [1], [0, 0, 1, 1], [], []>} : vector<1024x4xf32>, vector<4x128xf32>, vector<1024x128xf32> -> vector<1024x128xf32>
    %56 = arith.addf %50, %55 : vector<1024x128xf32>
    %c0_31 = arith.constant 0 : index
    %c0_32 = arith.constant 0 : index
    %57 = vector.load %arg3[%c0_31, %c0_32] : memref<1x128xf32, #tpu.memory_space<vmem>>, vector<1x128xf32>
    %58 = vector.broadcast %57 : vector<1x128xf32> to vector<1024x128xf32>
    %59 = arith.addf %56, %58 : vector<1024x128xf32>
    %c0_33 = arith.constant 0 : index
    %c0_34 = arith.constant 0 : index
    %c0_35 = arith.constant 0 : index
    %60 = vector.load %arg4[%c0_33, %c0_34, %c0_35] : memref<1x1024x128xf32, #tpu.memory_space<vmem>>, vector<1x1024x128xf32>
    %61 = vector.shape_cast %60 : vector<1x1024x128xf32> to vector<1024x128xf32>
    %62 = vector.shape_cast %59 : vector<1024x128xf32> to vector<1x1024x128xf32>
    tpu.vector_store %arg4[%c0_33, %c0_34, %c0_35], %62 {strides = array<i32>} : memref<1x1024x128xf32, #tpu.memory_space<vmem>>, vector<1x1024x128xf32>,
    return
  }
  func.func @transform_0(%arg0: i32) -> (i32, i32, i32, i32) {
    %c0_i32 = arith.constant 0 : i32
    %c0_i32_0 = arith.constant 0 : i32
    %c0_i32_1 = arith.constant 0 : i32
    %c0_i32_2 = arith.constant 0 : i32
    return %arg0, %c0_i32, %c0_i32_0, %c0_i32_1 : i32, i32, i32, i32
  }
  func.func @transform_1(%arg0: i32) -> (i32, i32, i32) {
    %c0_i32 = arith.constant 0 : i32
    %c0_i32_0 = arith.constant 0 : i32
    %c0_i32_1 = arith.constant 0 : i32
    %c0_i32_2 = arith.constant 0 : i32
    return %c0_i32, %c0_i32_0, %c0_i32_1 : i32, i32, i32
  }
  func.func @transform_2(%arg0: i32) -> (i32, i32) {
    %c0_i32 = arith.constant 0 : i32
    %c0_i32_0 = arith.constant 0 : i32
    %c0_i32_1 = arith.constant 0 : i32
    return %c0_i32, %c0_i32_0 : i32, i32
  }
  func.func @transform_3(%arg0: i32) -> (i32, i32, i32) {
    %c0_i32 = arith.constant 0 : i32
    %c0_i32_0 = arith.constant 0 : i32
    %c0_i32_1 = arith.constant 0 : i32
    return %arg0, %c0_i32, %c0_i32_0 : i32, i32, i32
  }
}

</mosaic_0001>

<llo_original>
// kernel: upsample_conv_layer.1
$region0: #{upsample_conv_layer.1}
  #allocation0 [shape = 'u32[]', space=smem, size = 0x4, offset = 0x4, fixed_abs, tag = 'smem constant byte address 0x4 - core index']
  #allocation1 [shape = 'u32[144,128]{1,0:T(1,128)}', space=vmem, size = 0x12000, scoped, tag = 'internal scratch']
  %s0 = inlined_call_operand.vmem [shape: f32[2,34,34,4], index: 0, kind: input, shape index: {}]
  %s1 = inlined_call_operand.vmem [shape: f32[9,4,128], index: 1, kind: input, shape index: {}]
  %s2 = inlined_call_operand.vmem [shape: f32[1,128], index: 2, kind: input, shape index: {}]
  %s3 = inlined_call_operand.vmem [shape: f32[2,1024,128], index: 3, kind: output, shape index: {}]
  %s4 = sld [smem:[#allocation0]]
  $region45: #{upsample_conv_layer.1} parent=0
    _
  %s6 = ssub.s32 1, %s4
  %s7 = scalar_select 0, %s6, %s4
  loop: start=0, step=1, limit=4
  $region2: #{upsample_conv_layer.1} parent=0 // loop_pre_header
    _
  $region3: #{upsample_conv_layer.1} parent=0 // loop_header
    %s9 = sphi 0, %s13
    %p10 = scmp.ge.s32.totalorder %s9, 4
    %s19 = sphi 0, %s21
    %s22 = sphi 0, %s19
    %s23 = sphi 0, %s22
    %s39 = sphi 0, %s23
    %s43 = sphi 0, %s43
    %s45 = sphi 0, %s43
    %s46 = sphi 0, %s45
    %s60 = sphi 0, %s46
    %s64 = sphi 0, %s64
    %s66 = sphi 0, %s64
    %s67 = sphi 0, %s66
    %s81 = sphi 0, %s67
    %s87 = sphi 0, %s89
    %s90 = sphi 0, %s87
    %s91 = sphi 0, %s90
    %s107 = sphi 0, %s91
  $region4: #{upsample_conv_layer.1} parent=0 // loop_header_branch
    %12 = sbr.rel (%p10) target = $region8
  $region5: #{upsample_conv_layer.1} parent=0 // loop_body
    %s14 = ssub.s32 %s9, 1
    %s15 = ssub.s32 %s9, 2
    %s16 = sadd.s32 %s9, 1
    %s17 = ssub.s32 %s9, %s16
    %p18 = scmp.eq.s32.totalorder %s17, 0
    %s20 = sadd.s32 %s19, 1
    %s21 = scalar_select %p18, %s19, %s20
    %p24 = pneg %p18
    %p25 = scmp.eq.s32.totalorder %s9, 1
    %p26 = por %p24, %p25
    %p27 = scmp.ne.s32.totalorder %s19, %s22
    %p28 = scmp.eq.s32.totalorder %s9, 0
    %p29 = por %p27, %p28
    %p30 = scmp.ne.s32.totalorder %s19, %s22
    %p31 = scmp.eq.s32.totalorder %s14, 1
    %p32 = por %p30, %p31
    %p33 = scmp.ne.s32.totalorder %s22, %s23
    %p34 = scmp.eq.s32.totalorder %s14, 0
    %p35 = por %p33, %p34
    %p36 = scmp.ne.s32.totalorder %s22, %s23
    %p37 = scmp.eq.s32.totalorder %s15, 1
    %p38 = por %p36, %p37
    %p40 = scmp.ne.s32.totalorder %s23, %s39
    %p41 = scmp.eq.s32.totalorder %s15, 0
    %p42 = por %p40, %p41
    %s44 = sadd.s32 %s43, 1
    %p47 = scmp.eq.s32.totalorder %s9, 1
    %p48 = scmp.ne.s32.totalorder %s43, %s45
    %p49 = scmp.eq.s32.totalorder %s9, 0
    %p50 = por %p48, %p49
    %p51 = scmp.ne.s32.totalorder %s43, %s45
    %p52 = scmp.eq.s32.totalorder %s14, 1
    %p53 = por %p51, %p52
    %p54 = scmp.ne.s32.totalorder %s45, %s46
    %p55 = scmp.eq.s32.totalorder %s14, 0
    %p56 = por %p54, %p55
    %p57 = scmp.ne.s32.totalorder %s45, %s46
    %p58 = scmp.eq.s32.totalorder %s15, 1
    %p59 = por %p57, %p58
    %p61 = scmp.ne.s32.totalorder %s46, %s60
    %p62 = scmp.eq.s32.totalorder %s15, 0
    %p63 = por %p61, %p62
    %s65 = sadd.s32 %s64, 1
    %p68 = scmp.eq.s32.totalorder %s9, 1
    %p69 = scmp.ne.s32.totalorder %s64, %s66
    %p70 = scmp.eq.s32.totalorder %s9, 0
    %p71 = por %p69, %p70
    %p72 = scmp.ne.s32.totalorder %s64, %s66
    %p73 = scmp.eq.s32.totalorder %s14, 1
    %p74 = por %p72, %p73
    %p75 = scmp.ne.s32.totalorder %s66, %s67
    %p76 = scmp.eq.s32.totalorder %s14, 0
    %p77 = por %p75, %p76
    %p78 = scmp.ne.s32.totalorder %s66, %s67
    %p79 = scmp.eq.s32.totalorder %s15, 1
    %p80 = por %p78, %p79
    %p82 = scmp.ne.s32.totalorder %s67, %s81
    %p83 = scmp.eq.s32.totalorder %s15, 0
    %p84 = por %p82, %p83
    %s85 = ssub.s32 %s9, %s16
    %p86 = scmp.eq.s32.totalorder %s85, 0
    %s88 = sadd.s32 %s87, 1
    %s89 = scalar_select %p86, %s87, %s88
    %p92 = pneg %p86
    %p93 = scmp.eq.s32.totalorder %s9, 1
    %p94 = por %p92, %p93
    %p95 = scmp.ne.s32.totalorder %s87, %s90
    %p96 = scmp.eq.s32.totalorder %s9, 0
    %p97 = por %p95, %p96
    %p98 = scmp.ne.s32.totalorder %s87, %s90
    %p99 = scmp.eq.s32.totalorder %s14, 1
    %p100 = por %p98, %p99
    %p101 = scmp.ne.s32.totalorder %s90, %s91
    %p102 = scmp.eq.s32.totalorder %s14, 0
    %p103 = por %p101, %p102
    %p104 = scmp.ne.s32.totalorder %s90, %s91
    %p105 = scmp.eq.s32.totalorder %s15, 1
    %p106 = por %p104, %p105
    %p108 = scmp.ne.s32.totalorder %s91, %s107
    %p109 = scmp.eq.s32.totalorder %s15, 0
    %p110 = por %p108, %p109
    %p111 = scmp.le.s32.totalorder 1, %s9
    %p112 = scmp.lt.s32.totalorder %s9, 3
    %p113 = pnand %p111, %p112
    %p114 = pneg %p113
    // Predicated region
    $region9: #{upsample_conv_layer.1} parent=5 // pred_check
      _
    $region10: #{upsample_conv_layer.1} parent=5 // pred_check_branch
      %116 = sbr.rel (%p113) target = $region12
    $region11: #{upsample_conv_layer.1} parent=5 // pred_region
      %s117 = ssub.s32 %s9, 1
      // Predicated region
      $region13: #{upsample_conv_layer.1} parent=11 // pred_check
        %p118 = pneg %p56
      $region14: #{upsample_conv_layer.1} parent=11 // pred_check_branch
        %120 = sbr.rel (%p118) target = $region16
      $region15: #{upsample_conv_layer.1} parent=11 // pred_region
        _
      $region16: #{upsample_conv_layer.1} parent=11 // pred_fallthru
        _
      // Predicated region
      $region17: #{upsample_conv_layer.1} parent=11 // pred_check
        %p121 = pneg %p77
      $region18: #{upsample_conv_layer.1} parent=11 // pred_check_branch
        %123 = sbr.rel (%p121) target = $region20
      $region19: #{upsample_conv_layer.1} parent=11 // pred_region
        _
      $region20: #{upsample_conv_layer.1} parent=11 // pred_fallthru
        _
    $region12: #{upsample_conv_layer.1} parent=5 // pred_fallthru
      _
    %p124 = scmp.lt.s32.totalorder %s9, 2
    // Predicated region
    $region21: #{upsample_conv_layer.1} parent=5 // pred_check
      %p125 = pneg %p124
    $region22: #{upsample_conv_layer.1} parent=5 // pred_check_branch
      %127 = sbr.rel (%p125) target = $region24
    $region23: #{upsample_conv_layer.1} parent=5 // pred_region
      // Predicated region
      $region25: #{upsample_conv_layer.1} parent=23 // pred_check
        %p128 = pneg %p29
      $region26: #{upsample_conv_layer.1} parent=23 // pred_check_branch
        %130 = sbr.rel (%p128) target = $region28
      $region27: #{upsample_conv_layer.1} parent=23 // pred_region
        %p131 = scmp.lt.s32.totalorder %s9, 1
        %s132 = scalar_select %p131, %s9, 1
        %s133 = smul.addr %s132, 170
        %s134 = smul.addr %s133, 8
        %s135 = scalar_lea.vmem %s0, %s134
      $region28: #{upsample_conv_layer.1} parent=23 // pred_fallthru
        _
    $region24: #{upsample_conv_layer.1} parent=5 // pred_fallthru
      _
    %p136 = scmp.le.s32.totalorder 1, %s9
    %p137 = scmp.lt.s32.totalorder %s9, 3
    %p138 = pnand %p136, %p137
    %p139 = pneg %p138
    // Predicated region
    $region29: #{upsample_conv_layer.1} parent=5 // pred_check
      _
    $region30: #{upsample_conv_layer.1} parent=5 // pred_check_branch
      %141 = sbr.rel (%p138) target = $region32
    $region31: #{upsample_conv_layer.1} parent=5 // pred_region
      %s142 = ssub.s32 %s9, 1
      %p143 = scmp.lt.s32.totalorder %s14, 1
      %s144 = scalar_select %p143, %s14, 1
      %s145 = smul.addr %s144, 170
      %s146 = smul.addr %s145, 8
      %s147 = scalar_lea.vmem %s0, %s146
      %p148 = pneg %p35
      %p149 = pneg %p32
      %p150 = pneg %p56
      %p151 = pneg %p53
      %p152 = pneg %p77
      %p153 = pneg %p74
      %p154 = pneg %p103
      %p155 = pneg %p100
      %p156 = scmp.lt.s32.totalorder %s14, 1
      %s157 = scalar_select %p156, %s14, 1
      %s158 = smul.addr %s157, 128
      %s159 = smul.addr %s158, 8
      %s160 = scalar_lea.vmem %s3, %s159
      %p161 = scmp.lt.s32.totalorder %s14, 1
      %s162 = scalar_select %p161, %s14, 1
      %s163 = smul.addr %s162, 170
      %s164 = smul.addr %s163, 8
      %s165 = scalar_lea.vmem %s0, %s164
      %p166 = scmp.lt.s32.totalorder %s14, 1
      %s167 = scalar_select %p166, %s14, 1
      %s168 = smul.addr %s167, 128
      %s169 = smul.addr %s168, 8
      %s170 = scalar_lea.vmem %s3, %s169
      %v171 = vld [vmem:[%s165] sm:$0xff]
      %v172 = vld [vmem:[%s165 + $0x8] sm:$0xff]
      %v173 = vld [vmem:[%s165 + $0x10] sm:$0xff]
      %v174 = vld [vmem:[%s165 + $0x18] sm:$0xff]
      %v175 = vld [vmem:[%s165 + $0x20] sm:$0x3]
      %v176 = vld [vmem:[%s165 + $0x28] sm:$0xff]
      %v177 = vld [vmem:[%s165 + $0x30] sm:$0xff]
      %v178 = vld [vmem:[%s165 + $0x38] sm:$0xff]
      %v179 = vld [vmem:[%s165 + $0x40] sm:$0xff]
      %v180 = vld [vmem:[%s165 + $0x48] sm:$0x3]
      %v181 = vld [vmem:[%s165 + $0x50] sm:$0xff]
      %v182 = vld [vmem:[%s165 + $0x58] sm:$0xff]
      %v183 = vld [vmem:[%s165 + $0x60] sm:$0xff]
      %v184 = vld [vmem:[%s165 + $0x68] sm:$0xff]
      %v185 = vld [vmem:[%s165 + $0x70] sm:$0x3]
      %v186 = vld [vmem:[%s165 + $0x78] sm:$0xff]
      %v187 = vld [vmem:[%s165 + $0x80] sm:$0xff]
      %v188 = vld [vmem:[%s165 + $0x88] sm:$0xff]
      %v189 = vld [vmem:[%s165 + $0x90] sm:$0xff]
      %v190 = vld [vmem:[%s165 + $0x98] sm:$0x3]
      %v191 = vld [vmem:[%s165 + $0xa0] sm:$0xff]
      %v192 = vld [vmem:[%s165 + $0xa8] sm:$0xff]
      %v193 = vld [vmem:[%s165 + $0xb0] sm:$0xff]
      %v194 = vld [vmem:[%s165 + $0xb8] sm:$0xff]
      %v195 = vld [vmem:[%s165 + $0xc0] sm:$0x3]
      %v196 = vld [vmem:[%s165 + $0xc8] sm:$0xff]
      %v197 = vld [vmem:[%s165 + $0xd0] sm:$0xff]
      %v198 = vld [vmem:[%s165 + $0xd8] sm:$0xff]
      %v199 = vld [vmem:[%s165 + $0xe0] sm:$0xff]
      %v200 = vld [vmem:[%s165 + $0xe8] sm:$0x3]
      %v201 = vld [vmem:[%s165 + $0xf0] sm:$0xff]
      %v202 = vld [vmem:[%s165 + $0xf8] sm:$0xff]
      %v203 = vld [vmem:[%s165 + $0x100] sm:$0xff]
      %v204 = vld [vmem:[%s165 + $0x108] sm:$0xff]
      %v205 = vld [vmem:[%s165 + $0x110] sm:$0x3]
      %v206 = vld [vmem:[%s165 + $0x118] sm:$0xff]
      %v207 = vld [vmem:[%s165 + $0x120] sm:$0xff]
      %v208 = vld [vmem:[%s165 + $0x128] sm:$0xff]
      %v209 = vld [vmem:[%s165 + $0x130] sm:$0xff]
      %v210 = vld [vmem:[%s165 + $0x138] sm:$0x3]
      %v211 = vld [vmem:[%s165 + $0x140] sm:$0xff]
      %v212 = vld [vmem:[%s165 + $0x148] sm:$0xff]
      %v213 = vld [vmem:[%s165 + $0x150] sm:$0xff]
      %v214 = vld [vmem:[%s165 + $0x158] sm:$0xff]
      %v215 = vld [vmem:[%s165 + $0x160] sm:$0x3]
      %v216 = vld [vmem:[%s165 + $0x168] sm:$0xff]
      %v217 = vld [vmem:[%s165 + $0x170] sm:$0xff]
      %v218 = vld [vmem:[%s165 + $0x178] sm:$0xff]
      %v219 = vld [vmem:[%s165 + $0x180] sm:$0xff]
      %v220 = vld [vmem:[%s165 + $0x188] sm:$0x3]
      %v221 = vld [vmem:[%s165 + $0x190] sm:$0xff]
      %v222 = vld [vmem:[%s165 + $0x198] sm:$0xff]
      %v223 = vld [vmem:[%s165 + $0x1a0] sm:$0xff]
      %v224 = vld [vmem:[%s165 + $0x1a8] sm:$0xff]
      %v225 = vld [vmem:[%s165 + $0x1b0] sm:$0x3]
      %v226 = vld [vmem:[%s165 + $0x1b8] sm:$0xff]
      %v227 = vld [vmem:[%s165 + $0x1c0] sm:$0xff]
      %v228 = vld [vmem:[%s165 + $0x1c8] sm:$0xff]
      %v229 = vld [vmem:[%s165 + $0x1d0] sm:$0xff]
      %v230 = vld [vmem:[%s165 + $0x1d8] sm:$0x3]
      %v231 = vld [vmem:[%s165 + $0x1e0] sm:$0xff]
      %v232 = vld [vmem:[%s165 + $0x1e8] sm:$0xff]
      %v233 = vld [vmem:[%s165 + $0x1f0] sm:$0xff]
      %v234 = vld [vmem:[%s165 + $0x1f8] sm:$0xff]
      %v235 = vld [vmem:[%s165 + $0x200] sm:$0x3]
      %v236 = vld [vmem:[%s165 + $0x208] sm:$0xff]
      %v237 = vld [vmem:[%s165 + $0x210] sm:$0xff]
      %v238 = vld [vmem:[%s165 + $0x218] sm:$0xff]
      %v239 = vld [vmem:[%s165 + $0x220] sm:$0xff]
      %v240 = vld [vmem:[%s165 + $0x228] sm:$0x3]
      %v241 = vld [vmem:[%s165 + $0x230] sm:$0xff]
      %v242 = vld [vmem:[%s165 + $0x238] sm:$0xff]
      %v243 = vld [vmem:[%s165 + $0x240] sm:$0xff]
      %v244 = vld [vmem:[%s165 + $0x248] sm:$0xff]
      %v245 = vld [vmem:[%s165 + $0x250] sm:$0x3]
      %v246 = vld [vmem:[%s165 + $0x258] sm:$0xff]
      %v247 = vld [vmem:[%s165 + $0x260] sm:$0xff]
      %v248 = vld [vmem:[%s165 + $0x268] sm:$0xff]
      %v249 = vld [vmem:[%s165 + $0x270] sm:$0xff]
      %v250 = vld [vmem:[%s165 + $0x278] sm:$0x3]
      %v251 = vld [vmem:[%s165 + $0x280] sm:$0xff]
      %v252 = vld [vmem:[%s165 + $0x288] sm:$0xff]
      %v253 = vld [vmem:[%s165 + $0x290] sm:$0xff]
      %v254 = vld [vmem:[%s165 + $0x298] sm:$0xff]
      %v255 = vld [vmem:[%s165 + $0x2a0] sm:$0x3]
      %v256 = vld [vmem:[%s165 + $0x2a8] sm:$0xff]
      %v257 = vld [vmem:[%s165 + $0x2b0] sm:$0xff]
      %v258 = vld [vmem:[%s165 + $0x2b8] sm:$0xff]
      %v259 = vld [vmem:[%s165 + $0x2c0] sm:$0xff]
      %v260 = vld [vmem:[%s165 + $0x2c8] sm:$0x3]
      %v261 = vld [vmem:[%s165 + $0x2d0] sm:$0xff]
      %v262 = vld [vmem:[%s165 + $0x2d8] sm:$0xff]
      %v263 = vld [vmem:[%s165 + $0x2e0] sm:$0xff]
      %v264 = vld [vmem:[%s165 + $0x2e8] sm:$0xff]
      %v265 = vld [vmem:[%s165 + $0x2f0] sm:$0x3]
      %v266 = vld [vmem:[%s165 + $0x2f8] sm:$0xff]
      %v267 = vld [vmem:[%s165 + $0x300] sm:$0xff]
      %v268 = vld [vmem:[%s165 + $0x308] sm:$0xff]
      %v269 = vld [vmem:[%s165 + $0x310] sm:$0xff]
      %v270 = vld [vmem:[%s165 + $0x318] sm:$0x3]
      %v271 = vld [vmem:[%s165 + $0x320] sm:$0xff]
      %v272 = vld [vmem:[%s165 + $0x328] sm:$0xff]
      %v273 = vld [vmem:[%s165 + $0x330] sm:$0xff]
      %v274 = vld [vmem:[%s165 + $0x338] sm:$0xff]
      %v275 = vld [vmem:[%s165 + $0x340] sm:$0x3]
      %v276 = vld [vmem:[%s165 + $0x348] sm:$0xff]
      %v277 = vld [vmem:[%s165 + $0x350] sm:$0xff]
      %v278 = vld [vmem:[%s165 + $0x358] sm:$0xff]
      %v279 = vld [vmem:[%s165 + $0x360] sm:$0xff]
      %v280 = vld [vmem:[%s165 + $0x368] sm:$0x3]
      %v281 = vld [vmem:[%s165 + $0x370] sm:$0xff]
      %v282 = vld [vmem:[%s165 + $0x378] sm:$0xff]
      %v283 = vld [vmem:[%s165 + $0x380] sm:$0xff]
      %v284 = vld [vmem:[%s165 + $0x388] sm:$0xff]
      %v285 = vld [vmem:[%s165 + $0x390] sm:$0x3]
      %v286 = vld [vmem:[%s165 + $0x398] sm:$0xff]
      %v287 = vld [vmem:[%s165 + $0x3a0] sm:$0xff]
      %v288 = vld [vmem:[%s165 + $0x3a8] sm:$0xff]
      %v289 = vld [vmem:[%s165 + $0x3b0] sm:$0xff]
      %v290 = vld [vmem:[%s165 + $0x3b8] sm:$0x3]
      %v291 = vld [vmem:[%s165 + $0x3c0] sm:$0xff]
      %v292 = vld [vmem:[%s165 + $0x3c8] sm:$0xff]
      %v293 = vld [vmem:[%s165 + $0x3d0] sm:$0xff]
      %v294 = vld [vmem:[%s165 + $0x3d8] sm:$0xff]
      %v295 = vld [vmem:[%s165 + $0x3e0] sm:$0x3]
      %v296 = vld [vmem:[%s165 + $0x3e8] sm:$0xff]
      %v297 = vld [vmem:[%s165 + $0x3f0] sm:$0xff]
      %v298 = vld [vmem:[%s165 + $0x3f8] sm:$0xff]
      %v299 = vld [vmem:[%s165 + $0x400] sm:$0xff]
      %v300 = vld [vmem:[%s165 + $0x408] sm:$0x3]
      %v301 = vld [vmem:[%s165 + $0x410] sm:$0xff]
      %v302 = vld [vmem:[%s165 + $0x418] sm:$0xff]
      %v303 = vld [vmem:[%s165 + $0x420] sm:$0xff]
      %v304 = vld [vmem:[%s165 + $0x428] sm:$0xff]
      %v305 = vld [vmem:[%s165 + $0x430] sm:$0x3]
      %v306 = vld [vmem:[%s165 + $0x438] sm:$0xff]
      %v307 = vld [vmem:[%s165 + $0x440] sm:$0xff]
      %v308 = vld [vmem:[%s165 + $0x448] sm:$0xff]
      %v309 = vld [vmem:[%s165 + $0x450] sm:$0xff]
      %v310 = vld [vmem:[%s165 + $0x458] sm:$0x3]
      %v311 = vld [vmem:[%s165 + $0x460] sm:$0xff]
      %v312 = vld [vmem:[%s165 + $0x468] sm:$0xff]
      %v313 = vld [vmem:[%s165 + $0x470] sm:$0xff]
      %v314 = vld [vmem:[%s165 + $0x478] sm:$0xff]
      %v315 = vld [vmem:[%s165 + $0x480] sm:$0x3]
      %v316 = vld [vmem:[%s165 + $0x488] sm:$0xff]
      %v317 = vld [vmem:[%s165 + $0x490] sm:$0xff]
      %v318 = vld [vmem:[%s165 + $0x498] sm:$0xff]
      %v319 = vld [vmem:[%s165 + $0x4a0] sm:$0xff]
      %v320 = vld [vmem:[%s165 + $0x4a8] sm:$0x3]
      %v321 = vld [vmem:[%s165 + $0x4b0] sm:$0xff]
      %v322 = vld [vmem:[%s165 + $0x4b8] sm:$0xff]
      %v323 = vld [vmem:[%s165 + $0x4c0] sm:$0xff]
      %v324 = vld [vmem:[%s165 + $0x4c8] sm:$0xff]
      %v325 = vld [vmem:[%s165 + $0x4d0] sm:$0x3]
      %v326 = vld [vmem:[%s165 + $0x4d8] sm:$0xff]
      %v327 = vld [vmem:[%s165 + $0x4e0] sm:$0xff]
      %v328 = vld [vmem:[%s165 + $0x4e8] sm:$0xff]
      %v329 = vld [vmem:[%s165 + $0x4f0] sm:$0xff]
      %v330 = vld [vmem:[%s165 + $0x4f8] sm:$0x3]
      %v331 = vld [vmem:[%s165 + $0x500] sm:$0xff]
      %v332 = vld [vmem:[%s165 + $0x508] sm:$0xff]
      %v333 = vld [vmem:[%s165 + $0x510] sm:$0xff]
      %v334 = vld [vmem:[%s165 + $0x518] sm:$0xff]
      %v335 = vld [vmem:[%s165 + $0x520] sm:$0x3]
      %v336 = vld [vmem:[%s165 + $0x528] sm:$0xff]
      %v337 = vld [vmem:[%s165 + $0x530] sm:$0xff]
      %v338 = vld [vmem:[%s165 + $0x538] sm:$0xff]
      %v339 = vld [vmem:[%s165 + $0x540] sm:$0xff]
      %v340 = vld [vmem:[%s165 + $0x548] sm:$0x3]
      %v341 = vld [vmem:[%s1] sm:$0xf]
      %vm502 = vcmask 1046528
      %v503 = vrot.slane %v171, 1
      %v504 = vrot.slane %v172, 1
      %v505 = vsel %vm502, %v503, %v504
      %v506 = vrot.slane %v173, 1
      %v507 = vsel %vm502, %v504, %v506
      %v508 = vrot.slane %v174, 1
      %v509 = vsel %vm502, %v506, %v508
      %v510 = vrot.slane %v175, 1
      %v511 = vsel %vm502, %v508, %v510
      %v512 = vrot.slane %v176, 1
      %v513 = vrot.slane %v177, 1
      %v514 = vsel %vm502, %v512, %v513
      %v515 = vrot.slane %v178, 1
      %v516 = vsel %vm502, %v513, %v515
      %v517 = vrot.slane %v179, 1
      %v518 = vsel %vm502, %v515, %v517
      %v519 = vrot.slane %v180, 1
      %v520 = vsel %vm502, %v517, %v519
      %v521 = vrot.slane %v181, 1
      %v522 = vrot.slane %v182, 1
      %v523 = vsel %vm502, %v521, %v522
      %v524 = vrot.slane %v183, 1
      %v525 = vsel %vm502, %v522, %v524
      %v526 = vrot.slane %v184, 1
      %v527 = vsel %vm502, %v524, %v526
      %v528 = vrot.slane %v185, 1
      %v529 = vsel %vm502, %v526, %v528
      %v530 = vrot.slane %v186, 1
      %v531 = vrot.slane %v187, 1
      %v532 = vsel %vm502, %v530, %v531
      %v533 = vrot.slane %v188, 1
      %v534 = vsel %vm502, %v531, %v533
      %v535 = vrot.slane %v189, 1
      %v536 = vsel %vm502, %v533, %v535
      %v537 = vrot.slane %v190, 1
      %v538 = vsel %vm502, %v535, %v537
      %v539 = vrot.slane %v191, 1
      %v540 = vrot.slane %v192, 1
      %v541 = vsel %vm502, %v539, %v540
      %v542 = vrot.slane %v193, 1
      %v543 = vsel %vm502, %v540, %v542
      %v544 = vrot.slane %v194, 1
      %v545 = vsel %vm502, %v542, %v544
      %v546 = vrot.slane %v195, 1
      %v547 = vsel %vm502, %v544, %v546
      %v548 = vrot.slane %v196, 1
      %v549 = vrot.slane %v197, 1
      %v550 = vsel %vm502, %v548, %v549
      %v551 = vrot.slane %v198, 1
      %v552 = vsel %vm502, %v549, %v551
      %v553 = vrot.slane %v199, 1
      %v554 = vsel %vm502, %v551, %v553
      %v555 = vrot.slane %v200, 1
      %v556 = vsel %vm502, %v553, %v555
      %v557 = vrot.slane %v201, 1
      %v558 = vrot.slane %v202, 1
      %v559 = vsel %vm502, %v557, %v558
      %v560 = vrot.slane %v203, 1
      %v561 = vsel %vm502, %v558, %v560
      %v562 = vrot.slane %v204, 1
      %v563 = vsel %vm502, %v560, %v562
      %v564 = vrot.slane %v205, 1
      %v565 = vsel %vm502, %v562, %v564
      %v566 = vrot.slane %v206, 1
      %v567 = vrot.slane %v207, 1
      %v568 = vsel %vm502, %v566, %v567
      %v569 = vrot.slane %v208, 1
      %v570 = vsel %vm502, %v567, %v569
      %v571 = vrot.slane %v209, 1
      %v572 = vsel %vm502, %v569, %v571
      %v573 = vrot.slane %v210, 1
      %v574 = vsel %vm502, %v571, %v573
      %v575 = vrot.slane %v211, 1
      %v576 = vrot.slane %v212, 1
      %v577 = vsel %vm502, %v575, %v576
      %v578 = vrot.slane %v213, 1
      %v579 = vsel %vm502, %v576, %v578
      %v580 = vrot.slane %v214, 1
      %v581 = vsel %vm502, %v578, %v580
      %v582 = vrot.slane %v215, 1
      %v583 = vsel %vm502, %v580, %v582
      %v584 = vrot.slane %v216, 1
      %v585 = vrot.slane %v217, 1
      %v586 = vsel %vm502, %v584, %v585
      %v587 = vrot.slane %v218, 1
      %v588 = vsel %vm502, %v585, %v587
      %v589 = vrot.slane %v219, 1
      %v590 = vsel %vm502, %v587, %v589
      %v591 = vrot.slane %v220, 1
      %v592 = vsel %vm502, %v589, %v591
      %v593 = vrot.slane %v221, 1
      %v594 = vrot.slane %v222, 1
      %v595 = vsel %vm502, %v593, %v594
      %v596 = vrot.slane %v223, 1
      %v597 = vsel %vm502, %v594, %v596
      %v598 = vrot.slane %v224, 1
      %v599 = vsel %vm502, %v596, %v598
      %v600 = vrot.slane %v225, 1
      %v601 = vsel %vm502, %v598, %v600
      %v602 = vrot.slane %v226, 1
      %v603 = vrot.slane %v227, 1
      %v604 = vsel %vm502, %v602, %v603
      %v605 = vrot.slane %v228, 1
      %v606 = vsel %vm502, %v603, %v605
      %v607 = vrot.slane %v229, 1
      %v608 = vsel %vm502, %v605, %v607
      %v609 = vrot.slane %v230, 1
      %v610 = vsel %vm502, %v607, %v609
      %v611 = vrot.slane %v231, 1
      %v612 = vrot.slane %v232, 1
      %v613 = vsel %vm502, %v611, %v612
      %v614 = vrot.slane %v233, 1
      %v615 = vsel %vm502, %v612, %v614
      %v616 = vrot.slane %v234, 1
      %v617 = vsel %vm502, %v614, %v616
      %v618 = vrot.slane %v235, 1
      %v619 = vsel %vm502, %v616, %v618
      %v620 = vrot.slane %v236, 1
      %v621 = vrot.slane %v237, 1
      %v622 = vsel %vm502, %v620, %v621
      %v623 = vrot.slane %v238, 1
      %v624 = vsel %vm502, %v621, %v623
      %v625 = vrot.slane %v239, 1
      %v626 = vsel %vm502, %v623, %v625
      %v627 = vrot.slane %v240, 1
      %v628 = vsel %vm502, %v625, %v627
      %v629 = vrot.slane %v241, 1
      %v630 = vrot.slane %v242, 1
      %v631 = vsel %vm502, %v629, %v630
      %v632 = vrot.slane %v243, 1
      %v633 = vsel %vm502, %v630, %v632
      %v634 = vrot.slane %v244, 1
      %v635 = vsel %vm502, %v632, %v634
      %v636 = vrot.slane %v245, 1
      %v637 = vsel %vm502, %v634, %v636
      %v638 = vrot.slane %v246, 1
      %v639 = vrot.slane %v247, 1
      %v640 = vsel %vm502, %v638, %v639
      %v641 = vrot.slane %v248, 1
      %v642 = vsel %vm502, %v639, %v641
      %v643 = vrot.slane %v249, 1
      %v644 = vsel %vm502, %v641, %v643
      %v645 = vrot.slane %v250, 1
      %v646 = vsel %vm502, %v643, %v645
      %v647 = vrot.slane %v251, 1
      %v648 = vrot.slane %v252, 1
      %v649 = vsel %vm502, %v647, %v648
      %v650 = vrot.slane %v253, 1
      %v651 = vsel %vm502, %v648, %v650
      %v652 = vrot.slane %v254, 1
      %v653 = vsel %vm502, %v650, %v652
      %v654 = vrot.slane %v255, 1
      %v655 = vsel %vm502, %v652, %v654
      %v656 = vrot.slane %v256, 1
      %v657 = vrot.slane %v257, 1
      %v658 = vsel %vm502, %v656, %v657
      %v659 = vrot.slane %v258, 1
      %v660 = vsel %vm502, %v657, %v659
      %v661 = vrot.slane %v259, 1
      %v662 = vsel %vm502, %v659, %v661
      %v663 = vrot.slane %v260, 1
      %v664 = vsel %vm502, %v661, %v663
      %v665 = vrot.slane %v261, 1
      %v666 = vrot.slane %v262, 1
      %v667 = vsel %vm502, %v665, %v666
      %v668 = vrot.slane %v263, 1
      %v669 = vsel %vm502, %v666, %v668
      %v670 = vrot.slane %v264, 1
      %v671 = vsel %vm502, %v668, %v670
      %v672 = vrot.slane %v265, 1
      %v673 = vsel %vm502, %v670, %v672
      %v674 = vrot.slane %v266, 1
      %v675 = vrot.slane %v267, 1
      %v676 = vsel %vm502, %v674, %v675
      %v677 = vrot.slane %v268, 1
      %v678 = vsel %vm502, %v675, %v677
      %v679 = vrot.slane %v269, 1
      %v680 = vsel %vm502, %v677, %v679
      %v681 = vrot.slane %v270, 1
      %v682 = vsel %vm502, %v679, %v681
      %v683 = vrot.slane %v271, 1
      %v684 = vrot.slane %v272, 1
      %v685 = vsel %vm502, %v683, %v684
      %v686 = vrot.slane %v273, 1
      %v687 = vsel %vm502, %v684, %v686
      %v688 = vrot.slane %v274, 1
      %v689 = vsel %vm502, %v686, %v688
      %v690 = vrot.slane %v275, 1
      %v691 = vsel %vm502, %v688, %v690
      %v692 = vrot.slane %v276, 1
      %v693 = vrot.slane %v277, 1
      %v694 = vsel %vm502, %v692, %v693
      %v695 = vrot.slane %v278, 1
      %v696 = vsel %vm502, %v693, %v695
      %v697 = vrot.slane %v279, 1
      %v698 = vsel %vm502, %v695, %v697
      %v699 = vrot.slane %v280, 1
      %v700 = vsel %vm502, %v697, %v699
      %v701 = vrot.slane %v281, 1
      %v702 = vrot.slane %v282, 1
      %v703 = vsel %vm502, %v701, %v702
      %v704 = vrot.slane %v283, 1
      %v705 = vsel %vm502, %v702, %v704
      %v706 = vrot.slane %v284, 1
      %v707 = vsel %vm502, %v704, %v706
      %v708 = vrot.slane %v285, 1
      %v709 = vsel %vm502, %v706, %v708
      %v710 = vrot.slane %v286, 1
      %v711 = vrot.slane %v287, 1
      %v712 = vsel %vm502, %v710, %v711
      %v713 = vrot.slane %v288, 1
      %v714 = vsel %vm502, %v711, %v713
      %v715 = vrot.slane %v289, 1
      %v716 = vsel %vm502, %v713, %v715
      %v717 = vrot.slane %v290, 1
      %v718 = vsel %vm502, %v715, %v717
      %v719 = vrot.slane %v291, 1
      %v720 = vrot.slane %v292, 1
      %v721 = vsel %vm502, %v719, %v720
      %v722 = vrot.slane %v293, 1
      %v723 = vsel %vm502, %v720, %v722
      %v724 = vrot.slane %v294, 1
      %v725 = vsel %vm502, %v722, %v724
      %v726 = vrot.slane %v295, 1
      %v727 = vsel %vm502, %v724, %v726
      %v728 = vrot.slane %v296, 1
      %v729 = vrot.slane %v297, 1
      %v730 = vsel %vm502, %v728, %v729
      %v731 = vrot.slane %v298, 1
      %v732 = vsel %vm502, %v729, %v731
      %v733 = vrot.slane %v299, 1
      %v734 = vsel %vm502, %v731, %v733
      %v735 = vrot.slane %v300, 1
      %v736 = vsel %vm502, %v733, %v735
      %v737 = vrot.slane %v301, 1
      %v738 = vrot.slane %v302, 1
      %v739 = vsel %vm502, %v737, %v738
      %v740 = vrot.slane %v303, 1
      %v741 = vsel %vm502, %v738, %v740
      %v742 = vrot.slane %v304, 1
      %v743 = vsel %vm502, %v740, %v742
      %v744 = vrot.slane %v305, 1
      %v745 = vsel %vm502, %v742, %v744
      %v746 = vrot.slane %v306, 1
      %v747 = vrot.slane %v307, 1
      %v748 = vsel %vm502, %v746, %v747
      %v749 = vrot.slane %v308, 1
      %v750 = vsel %vm502, %v747, %v749
      %v751 = vrot.slane %v309, 1
      %v752 = vsel %vm502, %v749, %v751
      %v753 = vrot.slane %v310, 1
      %v754 = vsel %vm502, %v751, %v753
      %v755 = vrot.slane %v311, 1
      %v756 = vrot.slane %v312, 1
      %v757 = vsel %vm502, %v755, %v756
      %v758 = vrot.slane %v313, 1
      %v759 = vsel %vm502, %v756, %v758
      %v760 = vrot.slane %v314, 1
      %v761 = vsel %vm502, %v758, %v760
      %v762 = vrot.slane %v315, 1
      %v763 = vsel %vm502, %v760, %v762
      %v764 = vrot.slane %v316, 1
      %v765 = vrot.slane %v317, 1
      %v766 = vsel %vm502, %v764, %v765
      %v767 = vrot.slane %v318, 1
      %v768 = vsel %vm502, %v765, %v767
      %v769 = vrot.slane %v319, 1
      %v770 = vsel %vm502, %v767, %v769
      %v771 = vrot.slane %v320, 1
      %v772 = vsel %vm502, %v769, %v771
      %v773 = vrot.slane %v321, 1
      %v774 = vrot.slane %v322, 1
      %v775 = vsel %vm502, %v773, %v774
      %v776 = vrot.slane %v323, 1
      %v777 = vsel %vm502, %v774, %v776
      %v778 = vrot.slane %v324, 1
      %v779 = vsel %vm502, %v776, %v778
      %v780 = vrot.slane %v325, 1
      %v781 = vsel %vm502, %v778, %v780
      %v782 = vrot.slane %v326, 1
      %v783 = vrot.slane %v327, 1
      %v784 = vsel %vm502, %v782, %v783
      %v785 = vrot.slane %v328, 1
      %v786 = vsel %vm502, %v783, %v785
      %v787 = vrot.slane %v329, 1
      %v788 = vsel %vm502, %v785, %v787
      %v789 = vrot.slane %v330, 1
      %v790 = vsel %vm502, %v787, %v789
      %s791 = scalar_lea.vmem %s1, 4
      %v792 = vld [vmem:[%s791] sm:$0xf]
      %vm793 = vcmask 31744
      %v794 = vsel %vm793, %v505, 0
      %v796 = vsel %vm793, %v507, 0
      %v798 = vsel %vm793, %v509, 0
      %v800 = vsel %vm793, %v511, 0
      %v802 = vsel %vm793, %v514, 0
      %v804 = vsel %vm793, %v516, 0
      %v806 = vsel %vm793, %v518, 0
      %v808 = vsel %vm793, %v520, 0
      %v810 = vsel %vm793, %v523, 0
      %v812 = vsel %vm793, %v525, 0
      %v814 = vsel %vm793, %v527, 0
      %v816 = vsel %vm793, %v529, 0
      %v818 = vsel %vm793, %v532, 0
      %v820 = vsel %vm793, %v534, 0
      %v822 = vsel %vm793, %v536, 0
      %v824 = vsel %vm793, %v538, 0
      %v826 = vsel %vm793, %v541, 0
      %v828 = vsel %vm793, %v543, 0
      %v830 = vsel %vm793, %v545, 0
      %v832 = vsel %vm793, %v547, 0
      %v834 = vsel %vm793, %v550, 0
      %v836 = vsel %vm793, %v552, 0
      %v838 = vsel %vm793, %v554, 0
      %v840 = vsel %vm793, %v556, 0
      %v842 = vsel %vm793, %v559, 0
      %v844 = vsel %vm793, %v561, 0
      %v846 = vsel %vm793, %v563, 0
      %v848 = vsel %vm793, %v565, 0
      %v850 = vsel %vm793, %v568, 0
      %v852 = vsel %vm793, %v570, 0
      %v854 = vsel %vm793, %v572, 0
      %v856 = vsel %vm793, %v574, 0
      %v858 = vsel %vm793, %v577, 0
      %v860 = vsel %vm793, %v579, 0
      %v862 = vsel %vm793, %v581, 0
      %v864 = vsel %vm793, %v583, 0
      %v866 = vsel %vm793, %v586, 0
      %v868 = vsel %vm793, %v588, 0
      %v870 = vsel %vm793, %v590, 0
      %v872 = vsel %vm793, %v592, 0
      %v874 = vsel %vm793, %v595, 0
      %v876 = vsel %vm793, %v597, 0
      %v878 = vsel %vm793, %v599, 0
      %v880 = vsel %vm793, %v601, 0
      %v882 = vsel %vm793, %v604, 0
      %v884 = vsel %vm793, %v606, 0
      %v886 = vsel %vm793, %v608, 0
      %v888 = vsel %vm793, %v610, 0
      %v890 = vsel %vm793, %v613, 0
      %v892 = vsel %vm793, %v615, 0
      %v894 = vsel %vm793, %v617, 0
      %v896 = vsel %vm793, %v619, 0
      %v898 = vsel %vm793, %v622, 0
      %v900 = vsel %vm793, %v624, 0
      %v902 = vsel %vm793, %v626, 0
      %v904 = vsel %vm793, %v628, 0
      %v906 = vsel %vm793, %v631, 0
      %v908 = vsel %vm793, %v633, 0
      %v910 = vsel %vm793, %v635, 0
      %v912 = vsel %vm793, %v637, 0
      %v914 = vsel %vm793, %v640, 0
      %v916 = vsel %vm793, %v642, 0
      %v918 = vsel %vm793, %v644, 0
      %v920 = vsel %vm793, %v646, 0
      %v922 = vsel %vm793, %v649, 0
      %v924 = vsel %vm793, %v651, 0
      %v926 = vsel %vm793, %v653, 0
      %v928 = vsel %vm793, %v655, 0
      %v930 = vsel %vm793, %v658, 0
      %v932 = vsel %vm793, %v660, 0
      %v934 = vsel %vm793, %v662, 0
      %v936 = vsel %vm793, %v664, 0
      %v938 = vsel %vm793, %v667, 0
      %v940 = vsel %vm793, %v669, 0
      %v942 = vsel %vm793, %v671, 0
      %v944 = vsel %vm793, %v673, 0
      %v946 = vsel %vm793, %v676, 0
      %v948 = vsel %vm793, %v678, 0
      %v950 = vsel %vm793, %v680, 0
      %v952 = vsel %vm793, %v682, 0
      %v954 = vsel %vm793, %v685, 0
      %v956 = vsel %vm793, %v687, 0
      %v958 = vsel %vm793, %v689, 0
      %v960 = vsel %vm793, %v691, 0
      %v962 = vsel %vm793, %v694, 0
      %v964 = vsel %vm793, %v696, 0
      %v966 = vsel %vm793, %v698, 0
      %v968 = vsel %vm793, %v700, 0
      %v970 = vsel %vm793, %v703, 0
      %v972 = vsel %vm793, %v705, 0
      %v974 = vsel %vm793, %v707, 0
      %v976 = vsel %vm793, %v709, 0
      %v978 = vsel %vm793, %v712, 0
      %v980 = vsel %vm793, %v714, 0
      %v982 = vsel %vm793, %v716, 0
      %v984 = vsel %vm793, %v718, 0
      %v986 = vsel %vm793, %v721, 0
      %v988 = vsel %vm793, %v723, 0
      %v990 = vsel %vm793, %v725, 0
      %v992 = vsel %vm793, %v727, 0
      %v994 = vsel %vm793, %v730, 0
      %v996 = vsel %vm793, %v732, 0
      %v998 = vsel %vm793, %v734, 0
      %v1000 = vsel %vm793, %v736, 0
      %v1002 = vsel %vm793, %v739, 0
      %v1004 = vsel %vm793, %v741, 0
      %v1006 = vsel %vm793, %v743, 0
      %v1008 = vsel %vm793, %v745, 0
      %v1010 = vsel %vm793, %v748, 0
      %v1012 = vsel %vm793, %v750, 0
      %v1014 = vsel %vm793, %v752, 0
      %v1016 = vsel %vm793, %v754, 0
      %v1018 = vsel %vm793, %v757, 0
      %v1020 = vsel %vm793, %v759, 0
      %v1022 = vsel %vm793, %v761, 0
      %v1024 = vsel %vm793, %v763, 0
      %v1026 = vsel %vm793, %v766, 0
      %v1028 = vsel %vm793, %v768, 0
      %v1030 = vsel %vm793, %v770, 0
      %v1032 = vsel %vm793, %v772, 0
      %v1034 = vsel %vm793, %v775, 0
      %v1036 = vsel %vm793, %v777, 0
      %v1038 = vsel %vm793, %v779, 0
      %v1040 = vsel %vm793, %v781, 0
      %v1042 = vsel %vm793, %v784, 0
      %v1044 = vsel %vm793, %v786, 0
      %v1046 = vsel %vm793, %v788, 0
      %v1048 = vsel %vm793, %v790, 0
      %vm1050 = vcmask 1043456
      %v1052 = vsel %vm1050, %v792, 0
      %1054 = vmatprep.subr.mxu0 0.0
      %1055 = vmatpush1.msra.mxu0 %v1052
      %1056 = vmatprep.subr.mxu0 0.0
      %1057 = vmatpush1.msra.mxu0 0.0
      %1058 = vmatprep.subr.mxu0 0.0
      %1059 = vmatpush1.msra.mxu0 0.0
      %1060 = vmatprep.subr.mxu0 0.0
      %1061 = vmatpush1.msra.mxu0 0.0
      %1062 = vmatprep.subr.mxu0 0.0
      %1063 = vmatpush1.msra.mxu0 0.0
      %1064 = vmatprep.subr.mxu0 0.0
      %1065 = vmatpush1.msra.mxu0 0.0
      %1066 = vmatprep.subr.mxu0 0.0
      %1067 = vmatpush1.msra.mxu0 0.0
      %1068 = vmatprep.subr.mxu0 0.0
      %1069 = vmatpush1.msra.mxu0 0.0
      %1070 = vmatprep.subr.mxu0 0.0
      %1071 = vmatpush1.msra.mxu0 0.0
      %1072 = vmatprep.subr.mxu0 0.0
      %1073 = vmatpush1.msra.mxu0 0.0
      %1074 = vmatprep.subr.mxu0 0.0
      %1075 = vmatpush1.msra.mxu0 0.0
      %1076 = vmatprep.subr.mxu0 0.0
      %1077 = vmatpush1.msra.mxu0 0.0
      %1078 = vmatprep.subr.mxu0 0.0
      %1079 = vmatpush1.msra.mxu0 0.0
      %1080 = vmatprep.subr.mxu0 0.0
      %1081 = vmatpush1.msra.mxu0 0.0
      %1082 = vmatprep.subr.mxu0 0.0
      %1083 = vmatpush1.msra.mxu0 0.0
      %1084 = vmatprep.subr.mxu0 0.0
      %1085 = vmatpush1.msra.mxu0 0.0
      %1086 = vmatprep.subr.mxu0 0.0
      %1087 = vmatpush1.msra.mxu0 0.0
      %1088 = vmatprep.subr.mxu0 0.0
      %1089 = vmatpush1.msra.mxu0 0.0
      %1090 = vmatprep.subr.mxu0 0.0
      %1091 = vmatpush1.msra.mxu0 0.0
      %1092 = vmatprep.subr.mxu0 0.0
      %1093 = vmatpush1.msra.mxu0 0.0
      %1094 = vmatprep.subr.mxu0 0.0
      %1095 = vmatpush1.msra.mxu0 0.0
      %1096 = vmatprep.subr.mxu0 0.0
      %1097 = vmatpush1.msra.mxu0 0.0
      %1098 = vmatprep.subr.mxu0 0.0
      %1099 = vmatpush1.msra.mxu0 0.0
      %1100 = vmatprep.subr.mxu0 0.0
      %1101 = vmatpush1.msra.mxu0 0.0
      %1102 = vmatprep.subr.mxu0 0.0
      %1103 = vmatpush1.msra.mxu0 0.0
      %1104 = vmatprep.subr.mxu0 0.0
      %1105 = vmatpush1.msra.mxu0 0.0
      %1106 = vmatprep.subr.mxu0 0.0
      %1107 = vmatpush1.msra.mxu0 0.0
      %1108 = vmatprep.subr.mxu0 0.0
      %1109 = vmatpush1.msra.mxu0 0.0
      %1110 = vmatprep.subr.mxu0 0.0
      %1111 = vmatpush1.msra.mxu0 0.0
      %1112 = vmatprep.subr.mxu0 0.0
      %1113 = vmatpush1.msra.mxu0 0.0
      %1114 = vmatprep.subr.mxu0 0.0
      %1115 = vmatpush1.msra.mxu0 0.0
      %1116 = vmatprep.subr.mxu0 0.0
      %1117 = vmatpush1.msra.mxu0 0.0
      %1118 = vmatprep.mubr.f32.mxu0 0.0
      %1119 = vmatmul.mubr.f32.gmra.mrb[0].mxu0 %v794
      %v1120 = vpop.f32.mrb[0].mxu0
      %v1121 = vadd.f32 0.0, %v1120
      %v1122 = vpop.f32.mrb[0].mxu0
      %1123 = vmatprep.mubr.f32.mxu0 0.0
      %1124 = vmatmul.mubr.f32.gmra.mrb[0].mxu0 %v796
      %v1125 = vpop.f32.mrb[0].mxu0
      %v1126 = vadd.f32 0.0, %v1125
      %v1127 = vpop.f32.mrb[0].mxu0
      %1128 = vmatprep.mubr.f32.mxu0 0.0
      %1129 = vmatmul.mubr.f32.gmra.mrb[0].mxu0 %v798
      %v1130 = vpop.f32.mrb[0].mxu0
      %v1131 = vadd.f32 0.0, %v1130
      %v1132 = vpop.f32.mrb[0].mxu0
      %1133 = vmatprep.mubr.f32.mxu0 0.0
      %1134 = vmatmul.mubr.f32.gmra.mrb[0].mxu0 %v800
      %v1135 = vpop.f32.mrb[0].mxu0
      %v1136 = vadd.f32 0.0, %v1135
      %v1137 = vpop.f32.mrb[0].mxu0
      %1138 = vmatprep.mubr.f32.mxu0 0.0
      %1139 = vmatmul.mubr.f32.gmra.mrb[0].mxu0 %v802
      %v1140 = vpop.f32.mrb[0].mxu0
      %v1141 = vadd.f32 0.0, %v1140
      %v1142 = vpop.f32.mrb[0].mxu0
      %1143 = vmatprep.mubr.f32.mxu0 0.0
      %1144 = vmatmul.mubr.f32.gmra.mrb[0].mxu0 %v804
      %v1145 = vpop.f32.mrb[0].mxu0
      %v1146 = vadd.f32 0.0, %v1145
      %v1147 = vpop.f32.mrb[0].mxu0
      %1148 = vmatprep.mubr.f32.mxu0 0.0
      %1149 = vmatmul.mubr.f32.gmra.mrb[0].mxu0 %v806
      %v1150 = vpop.f32.mrb[0].mxu0
      %v1151 = vadd.f32 0.0, %v1150
      %v1152 = vpop.f32.mrb[0].mxu0
      %1153 = vmatprep.mubr.f32.mxu0 0.0
      %1154 = vmatmul.mubr.f32.gmra.mrb[0].mxu0 %v808
      %v1155 = vpop.f32.mrb[0].mxu0
      %v1156 = vadd.f32 0.0, %v1155
      %v1157 = vpop.f32.mrb[0].mxu0
      %1158 = vmatprep.mubr.f32.mxu0 0.0
      %1159 = vmatmul.mubr.f32.gmra.mrb[0].mxu0 %v810
      %v1160 = vpop.f32.mrb[0].mxu0
      %v1161 = vadd.f32 0.0, %v1160
      %v1162 = vpop.f32.mrb[0].mxu0
      %1163 = vmatprep.mubr.f32.mxu0 0.0
      %1164 = vmatmul.mubr.f32.gmra.mrb[0].mxu0 %v812
      %v1165 = vpop.f32.mrb[0].mxu0
      %v1166 = vadd.f32 0.0, %v1165
      %v1167 = vpop.f32.mrb[0].mxu0
      %1168 = vmatprep.mubr.f32.mxu0 0.0
      %1169 = vmatmul.mubr.f32.gmra.mrb[0].mxu0 %v814
      %v1170 = vpop.f32.mrb[0].mxu0
      %v1171 = vadd.f32 0.0, %v1170
      %v1172 = vpop.f32.mrb[0].mxu0
      %1173 = vmatprep.mubr.f32.mxu0 0.0
      %1174 = vmatmul.mubr.f32.gmra.mrb[0].mxu0 %v816
      %v1175 = vpop.f32.mrb[0].mxu0
      %v1176 = vadd.f32 0.0, %v1175
      %v1177 = vpop.f32.mrb[0].mxu0
      %1178 = vmatprep.mubr.f32.mxu0 0.0
      %1179 = vmatmul.mubr.f32.gmra.mrb[0].mxu0 %v818
      %v1180 = vpop.f32.mrb[0].mxu0
      %v1181 = vadd.f32 0.0, %v1180
      %v1182 = vpop.f32.mrb[0].mxu0
      %1183 = vmatprep.mubr.f32.mxu0 0.0
      %1184 = vmatmul.mubr.f32.gmra.mrb[0].mxu0 %v820
      %v1185 = vpop.f32.mrb[0].mxu0
      %v1186 = vadd.f32 0.0, %v1185
      %v1187 = vpop.f32.mrb[0].mxu0
      %1188 = vmatprep.mubr.f32.mxu0 0.0
      %1189 = vmatmul.mubr.f32.gmra.mrb[0].mxu0 %v822
      %v1190 = vpop.f32.mrb[0].mxu0
      %v1191 = vadd.f32 0.0, %v1190
      %v1192 = vpop.f32.mrb[0].mxu0
      %1193 = vmatprep.mubr.f32.mxu0 0.0
      %1194 = vmatmul.mubr.f32.gmra.mrb[0].mxu0 %v824
      %v1195 = vpop.f32.mrb[0].mxu0
      %v1196 = vadd.f32 0.0, %v1195
      %v1197 = vpop.f32.mrb[0].mxu0
      %1198 = vmatprep.mubr.f32.mxu0 0.0
      %1199 = vmatmul.mubr.f32.gmra.mrb[0].mxu0 %v826
      %v1200 = vpop.f32.mrb[0].mxu0
      %v1201 = vadd.f32 0.0, %v1200
      %v1202 = vpop.f32.mrb[0].mxu0
      %1203 = vmatprep.mubr.f32.mxu0 0.0
      %1204 = vmatmul.mubr.f32.gmra.mrb[0].mxu0 %v828
      %v1205 = vpop.f32.mrb[0].mxu0
      %v1206 = vadd.f32 0.0, %v1205
      %v1207 = vpop.f32.mrb[0].mxu0
      %1208 = vmatprep.mubr.f32.mxu0 0.0
      %1209 = vmatmul.mubr.f32.gmra.mrb[0].mxu0 %v830
      %v1210 = vpop.f32.mrb[0].mxu0
      %v1211 = vadd.f32 0.0, %v1210
      %v1212 = vpop.f32.mrb[0].mxu0
      %1213 = vmatprep.mubr.f32.mxu0 0.0
      %1214 = vmatmul.mubr.f32.gmra.mrb[0].mxu0 %v832
      %v1215 = vpop.f32.mrb[0].mxu0
      %v1216 = vadd.f32 0.0, %v1215
      %v1217 = vpop.f32.mrb[0].mxu0
      %1218 = vmatprep.mubr.f32.mxu0 0.0
      %1219 = vmatmul.mubr.f32.gmra.mrb[0].mxu0 %v834
      %v1220 = vpop.f32.mrb[0].mxu0
      %v1221 = vadd.f32 0.0, %v1220
      %v1222 = vpop.f32.mrb[0].mxu0
      %1223 = vmatprep.mubr.f32.mxu0 0.0
      %1224 = vmatmul.mubr.f32.gmra.mrb[0].mxu0 %v836
      %v1225 = vpop.f32.mrb[0].mxu0
      %v1226 = vadd.f32 0.0, %v1225
      %v1227 = vpop.f32.mrb[0].mxu0
      %1228 = vmatprep.mubr.f32.mxu0 0.0
      %1229 = vmatmul.mubr.f32.gmra.mrb[0].mxu0 %v838
      %v1230 = vpop.f32.mrb[0].mxu0
      %v1231 = vadd.f32 0.0, %v1230
      %v1232 = vpop.f32.mrb[0].mxu0
      %1233 = vmatprep.mubr.f32.mxu0 0.0
      %1234 = vmatmul.mubr.f32.gmra.mrb[0].mxu0 %v840
      %v1235 = vpop.f32.mrb[0].mxu0
      %v1236 = vadd.f32 0.0, %v1235
      %v1237 = vpop.f32.mrb[0].mxu0
      %1238 = vmatprep.mubr.f32.mxu0 0.0
      %1239 = vmatmul.mubr.f32.gmra.mrb[0].mxu0 %v842
      %v1240 = vpop.f32.mrb[0].mxu0
      %v1241 = vadd.f32 0.0, %v1240
      %v1242 = vpop.f32.mrb[0].mxu0
      %1243 = vmatprep.mubr.f32.mxu0 0.0
      %1244 = vmatmul.mubr.f32.gmra.mrb[0].mxu0 %v844
      %v1245 = vpop.f32.mrb[0].mxu0
      %v1246 = vadd.f32 0.0, %v1245
      %v1247 = vpop.f32.mrb[0].mxu0
      %1248 = vmatprep.mubr.f32.mxu0 0.0
      %1249 = vmatmul.mubr.f32.gmra.mrb[0].mxu0 %v846
      %v1250 = vpop.f32.mrb[0].mxu0
      %v1251 = vadd.f32 0.0, %v1250
      %v1252 = vpop.f32.mrb[0].mxu0
      %1253 = vmatprep.mubr.f32.mxu0 0.0
      %1254 = vmatmul.mubr.f32.gmra.mrb[0].mxu0 %v848
      %v1255 = vpop.f32.mrb[0].mxu0
      %v1256 = vadd.f32 0.0, %v1255
      %v1257 = vpop.f32.mrb[0].mxu0
      %1258 = vmatprep.mubr.f32.mxu0 0.0
      %1259 = vmatmul.mubr.f32.gmra.mrb[0].mxu0 %v850
      %v1260 = vpop.f32.mrb[0].mxu0
      %v1261 = vadd.f32 0.0, %v1260
      %v1262 = vpop.f32.mrb[0].mxu0
      %1263 = vmatprep.mubr.f32.mxu0 0.0
      %1264 = vmatmul.mubr.f32.gmra.mrb[0].mxu0 %v852
      %v1265 = vpop.f32.mrb[0].mxu0
      %v1266 = vadd.f32 0.0, %v1265
      %v1267 = vpop.f32.mrb[0].mxu0
      %1268 = vmatprep.mubr.f32.mxu0 0.0
      %1269 = vmatmul.mubr.f32.gmra.mrb[0].mxu0 %v854
      %v1270 = vpop.f32.mrb[0].mxu0
      %v1271 = vadd.f32 0.0, %v1270
      %v1272 = vpop.f32.mrb[0].mxu0
      %1273 = vmatprep.mubr.f32.mxu0 0.0
      %1274 = vmatmul.mubr.f32.gmra.mrb[0].mxu0 %v856
      %v1275 = vpop.f32.mrb[0].mxu0
      %v1276 = vadd.f32 0.0, %v1275
      %v1277 = vpop.f32.mrb[0].mxu0
      %1278 = vmatprep.mubr.f32.mxu0 0.0
      %1279 = vmatmul.mubr.f32.gmra.mrb[0].mxu0 %v858
      %v1280 = vpop.f32.mrb[0].mxu0
      %v1281 = vadd.f32 0.0, %v1280
      %v1282 = vpop.f32.mrb[0].mxu0
      %1283 = vmatprep.mubr.f32.mxu0 0.0
      %1284 = vmatmul.mubr.f32.gmra.mrb[0].mxu0 %v860
      %v1285 = vpop.f32.mrb[0].mxu0
      %v1286 = vadd.f32 0.0, %v1285
      %v1287 = vpop.f32.mrb[0].mxu0
      %1288 = vmatprep.mubr.f32.mxu0 0.0
      %1289 = vmatmul.mubr.f32.gmra.mrb[0].mxu0 %v862
      %v1290 = vpop.f32.mrb[0].mxu0
      %v1291 = vadd.f32 0.0, %v1290
      %v1292 = vpop.f32.mrb[0].mxu0
      %1293 = vmatprep.mubr.f32.mxu0 0.0
      %1294 = vmatmul.mubr.f32.gmra.mrb[0].mxu0 %v864
      %v1295 = vpop.f32.mrb[0].mxu0
      %v1296 = vadd.f32 0.0, %v1295
      %v1297 = vpop.f32.mrb[0].mxu0
      %1298 = vmatprep.mubr.f32.mxu0 0.0
      %1299 = vmatmul.mubr.f32.gmra.mrb[0].mxu0 %v866
      %v1300 = vpop.f32.mrb[0].mxu0
      %v1301 = vadd.f32 0.0, %v1300
      %v1302 = vpop.f32.mrb[0].mxu0
      %1303 = vmatprep.mubr.f32.mxu0 0.0
      %1304 = vmatmul.mubr.f32.gmra.mrb[0].mxu0 %v868
      %v1305 = vpop.f32.mrb[0].mxu0
      %v1306 = vadd.f32 0.0, %v1305
      %v1307 = vpop.f32.mrb[0].mxu0
      %1308 = vmatprep.mubr.f32.mxu0 0.0
      %1309 = vmatmul.mubr.f32.gmra.mrb[0].mxu0 %v870
      %v1310 = vpop.f32.mrb[0].mxu0
      %v1311 = vadd.f32 0.0, %v1310
      %v1312 = vpop.f32.mrb[0].mxu0
      %1313 = vmatprep.mubr.f32.mxu0 0.0
      %1314 = vmatmul.mubr.f32.gmra.mrb[0].mxu0 %v872
      %v1315 = vpop.f32.mrb[0].mxu0
      %v1316 = vadd.f32 0.0, %v1315
      %v1317 = vpop.f32.mrb[0].mxu0
      %1318 = vmatprep.mubr.f32.mxu0 0.0
      %1319 = vmatmul.mubr.f32.gmra.mrb[0].mxu0 %v874
      %v1320 = vpop.f32.mrb[0].mxu0
      %v1321 = vadd.f32 0.0, %v1320
      %v1322 = vpop.f32.mrb[0].mxu0
      %1323 = vmatprep.mubr.f32.mxu0 0.0
      %1324 = vmatmul.mubr.f32.gmra.mrb[0].mxu0 %v876
      %v1325 = vpop.f32.mrb[0].mxu0
      %v1326 = vadd.f32 0.0, %v1325
      %v1327 = vpop.f32.mrb[0].mxu0
      %1328 = vmatprep.mubr.f32.mxu0 0.0
      %1329 = vmatmul.mubr.f32.gmra.mrb[0].mxu0 %v878
      %v1330 = vpop.f32.mrb[0].mxu0
      %v1331 = vadd.f32 0.0, %v1330
      %v1332 = vpop.f32.mrb[0].mxu0
      %1333 = vmatprep.mubr.f32.mxu0 0.0
      %1334 = vmatmul.mubr.f32.gmra.mrb[0].mxu0 %v880
      %v1335 = vpop.f32.mrb[0].mxu0
      %v1336 = vadd.f32 0.0, %v1335
      %v1337 = vpop.f32.mrb[0].mxu0
      %1338 = vmatprep.mubr.f32.mxu0 0.0
      %1339 = vmatmul.mubr.f32.gmra.mrb[0].mxu0 %v882
      %v1340 = vpop.f32.mrb[0].mxu0
      %v1341 = vadd.f32 0.0, %v1340
      %v1342 = vpop.f32.mrb[0].mxu0
      %1343 = vmatprep.mubr.f32.mxu0 0.0
      %1344 = vmatmul.mubr.f32.gmra.mrb[0].mxu0 %v884
      %v1345 = vpop.f32.mrb[0].mxu0
      %v1346 = vadd.f32 0.0, %v1345
      %v1347 = vpop.f32.mrb[0].mxu0
      %1348 = vmatprep.mubr.f32.mxu0 0.0
      %1349 = vmatmul.mubr.f32.gmra.mrb[0].mxu0 %v886
      %v1350 = vpop.f32.mrb[0].mxu0
      %v1351 = vadd.f32 0.0, %v1350
      %v1352 = vpop.f32.mrb[0].mxu0
      %1353 = vmatprep.mubr.f32.mxu0 0.0
      %1354 = vmatmul.mubr.f32.gmra.mrb[0].mxu0 %v888
      %v1355 = vpop.f32.mrb[0].mxu0
      %v1356 = vadd.f32 0.0, %v1355
      %v1357 = vpop.f32.mrb[0].mxu0
      %1358 = vmatprep.mubr.f32.mxu0 0.0
      %1359 = vmatmul.mubr.f32.gmra.mrb[0].mxu0 %v890
      %v1360 = vpop.f32.mrb[0].mxu0
      %v1361 = vadd.f32 0.0, %v1360
      %v1362 = vpop.f32.mrb[0].mxu0
      %1363 = vmatprep.mubr.f32.mxu0 0.0
      %1364 = vmatmul.mubr.f32.gmra.mrb[0].mxu0 %v892
      %v1365 = vpop.f32.mrb[0].mxu0
      %v1366 = vadd.f32 0.0, %v1365
      %v1367 = vpop.f32.mrb[0].mxu0
      %1368 = vmatprep.mubr.f32.mxu0 0.0
      %1369 = vmatmul.mubr.f32.gmra.mrb[0].mxu0 %v894
      %v1370 = vpop.f32.mrb[0].mxu0
      %v1371 = vadd.f32 0.0, %v1370
      %v1372 = vpop.f32.mrb[0].mxu0
      %1373 = vmatprep.mubr.f32.mxu0 0.0
      %1374 = vmatmul.mubr.f32.gmra.mrb[0].mxu0 %v896
      %v1375 = vpop.f32.mrb[0].mxu0
      %v1376 = vadd.f32 0.0, %v1375
      %v1377 = vpop.f32.mrb[0].mxu0
      %1378 = vmatprep.mubr.f32.mxu0 0.0
      %1379 = vmatmul.mubr.f32.gmra.mrb[0].mxu0 %v898
      %v1380 = vpop.f32.mrb[0].mxu0
      %v1381 = vadd.f32 0.0, %v1380
      %v1382 = vpop.f32.mrb[0].mxu0
      %1383 = vmatprep.mubr.f32.mxu0 0.0
      %1384 = vmatmul.mubr.f32.gmra.mrb[0].mxu0 %v900
      %v1385 = vpop.f32.mrb[0].mxu0
      %v1386 = vadd.f32 0.0, %v1385
      %v1387 = vpop.f32.mrb[0].mxu0
      %1388 = vmatprep.mubr.f32.mxu0 0.0
      %1389 = vmatmul.mubr.f32.gmra.mrb[0].mxu0 %v902
      %v1390 = vpop.f32.mrb[0].mxu0
      %v1391 = vadd.f32 0.0, %v1390
      %v1392 = vpop.f32.mrb[0].mxu0
      %1393 = vmatprep.mubr.f32.mxu0 0.0
      %1394 = vmatmul.mubr.f32.gmra.mrb[0].mxu0 %v904
      %v1395 = vpop.f32.mrb[0].mxu0
      %v1396 = vadd.f32 0.0, %v1395
      %v1397 = vpop.f32.mrb[0].mxu0
      %1398 = vmatprep.mubr.f32.mxu0 0.0
      %1399 = vmatmul.mubr.f32.gmra.mrb[0].mxu0 %v906
      %v1400 = vpop.f32.mrb[0].mxu0
      %v1401 = vadd.f32 0.0, %v1400
      %v1402 = vpop.f32.mrb[0].mxu0
      %1403 = vmatprep.mubr.f32.mxu0 0.0
      %1404 = vmatmul.mubr.f32.gmra.mrb[0].mxu0 %v908
      %v1405 = vpop.f32.mrb[0].mxu0
      %v1406 = vadd.f32 0.0, %v1405
      %v1407 = vpop.f32.mrb[0].mxu0
      %1408 = vmatprep.mubr.f32.mxu0 0.0
      %1409 = vmatmul.mubr.f32.gmra.mrb[0].mxu0 %v910
      %v1410 = vpop.f32.mrb[0].mxu0
      %v1411 = vadd.f32 0.0, %v1410
      %v1412 = vpop.f32.mrb[0].mxu0
      %1413 = vmatprep.mubr.f32.mxu0 0.0
      %1414 = vmatmul.mubr.f32.gmra.mrb[0].mxu0 %v912
      %v1415 = vpop.f32.mrb[0].mxu0
      %v1416 = vadd.f32 0.0, %v1415
      %v1417 = vpop.f32.mrb[0].mxu0
      %1418 = vmatprep.mubr.f32.mxu0 0.0
      %1419 = vmatmul.mubr.f32.gmra.mrb[0].mxu0 %v914
      %v1420 = vpop.f32.mrb[0].mxu0
      %v1421 = vadd.f32 0.0, %v1420
      %v1422 = vpop.f32.mrb[0].mxu0
      %1423 = vmatprep.mubr.f32.mxu0 0.0
      %1424 = vmatmul.mubr.f32.gmra.mrb[0].mxu0 %v916
      %v1425 = vpop.f32.mrb[0].mxu0
      %v1426 = vadd.f32 0.0, %v1425
      %v1427 = vpop.f32.mrb[0].mxu0
      %1428 = vmatprep.mubr.f32.mxu0 0.0
      %1429 = vmatmul.mubr.f32.gmra.mrb[0].mxu0 %v918
      %v1430 = vpop.f32.mrb[0].mxu0
      %v1431 = vadd.f32 0.0, %v1430
      %v1432 = vpop.f32.mrb[0].mxu0
      %1433 = vmatprep.mubr.f32.mxu0 0.0
      %1434 = vmatmul.mubr.f32.gmra.mrb[0].mxu0 %v920
      %v1435 = vpop.f32.mrb[0].mxu0
      %v1436 = vadd.f32 0.0, %v1435
      %v1437 = vpop.f32.mrb[0].mxu0
      %1438 = vmatprep.mubr.f32.mxu0 0.0
      %1439 = vmatmul.mubr.f32.gmra.mrb[0].mxu0 %v922
      %v1440 = vpop.f32.mrb[0].mxu0
      %v1441 = vadd.f32 0.0, %v1440
      %v1442 = vpop.f32.mrb[0].mxu0
      %1443 = vmatprep.mubr.f32.mxu0 0.0
      %1444 = vmatmul.mubr.f32.gmra.mrb[0].mxu0 %v924
      %v1445 = vpop.f32.mrb[0].mxu0
      %v1446 = vadd.f32 0.0, %v1445
      %v1447 = vpop.f32.mrb[0].mxu0
      %1448 = vmatprep.mubr.f32.mxu0 0.0
      %1449 = vmatmul.mubr.f32.gmra.mrb[0].mxu0 %v926
      %v1450 = vpop.f32.mrb[0].mxu0
      %v1451 = vadd.f32 0.0, %v1450
      %v1452 = vpop.f32.mrb[0].mxu0
      %1453 = vmatprep.mubr.f32.mxu0 0.0
      %1454 = vmatmul.mubr.f32.gmra.mrb[0].mxu0 %v928
      %v1455 = vpop.f32.mrb[0].mxu0
      %v1456 = vadd.f32 0.0, %v1455
      %v1457 = vpop.f32.mrb[0].mxu0
      %1458 = vmatprep.mubr.f32.mxu0 0.0
      %1459 = vmatmul.mubr.f32.gmra.mrb[0].mxu0 %v930
      %v1460 = vpop.f32.mrb[0].mxu0
      %v1461 = vadd.f32 0.0, %v1460
      %v1462 = vpop.f32.mrb[0].mxu0
      %1463 = vmatprep.mubr.f32.mxu0 0.0
      %1464 = vmatmul.mubr.f32.gmra.mrb[0].mxu0 %v932
      %v1465 = vpop.f32.mrb[0].mxu0
      %v1466 = vadd.f32 0.0, %v1465
      %v1467 = vpop.f32.mrb[0].mxu0
      %1468 = vmatprep.mubr.f32.mxu0 0.0
      %1469 = vmatmul.mubr.f32.gmra.mrb[0].mxu0 %v934
      %v1470 = vpop.f32.mrb[0].mxu0
      %v1471 = vadd.f32 0.0, %v1470
      %v1472 = vpop.f32.mrb[0].mxu0
      %1473 = vmatprep.mubr.f32.mxu0 0.0
      %1474 = vmatmul.mubr.f32.gmra.mrb[0].mxu0 %v936
      %v1475 = vpop.f32.mrb[0].mxu0
      %v1476 = vadd.f32 0.0, %v1475
      %v1477 = vpop.f32.mrb[0].mxu0
      %1478 = vmatprep.mubr.f32.mxu0 0.0
      %1479 = vmatmul.mubr.f32.gmra.mrb[0].mxu0 %v938
      %v1480 = vpop.f32.mrb[0].mxu0
      %v1481 = vadd.f32 0.0, %v1480
      %v1482 = vpop.f32.mrb[0].mxu0
      %1483 = vmatprep.mubr.f32.mxu0 0.0
      %1484 = vmatmul.mubr.f32.gmra.mrb[0].mxu0 %v940
      %v1485 = vpop.f32.mrb[0].mxu0
      %v1486 = vadd.f32 0.0, %v1485
      %v1487 = vpop.f32.mrb[0].mxu0
      %1488 = vmatprep.mubr.f32.mxu0 0.0
      %1489 = vmatmul.mubr.f32.gmra.mrb[0].mxu0 %v942
      %v1490 = vpop.f32.mrb[0].mxu0
      %v1491 = vadd.f32 0.0, %v1490
      %v1492 = vpop.f32.mrb[0].mxu0
      %1493 = vmatprep.mubr.f32.mxu0 0.0
      %1494 = vmatmul.mubr.f32.gmra.mrb[0].mxu0 %v944
      %v1495 = vpop.f32.mrb[0].mxu0
      %v1496 = vadd.f32 0.0, %v1495
      %v1497 = vpop.f32.mrb[0].mxu0
      %1498 = vmatprep.mubr.f32.mxu0 0.0
      %1499 = vmatmul.mubr.f32.gmra.mrb[0].mxu0 %v946
      %v1500 = vpop.f32.mrb[0].mxu0
      %v1501 = vadd.f32 0.0, %v1500
      %v1502 = vpop.f32.mrb[0].mxu0
      %1503 = vmatprep.mubr.f32.mxu0 0.0
      %1504 = vmatmul.mubr.f32.gmra.mrb[0].mxu0 %v948
      %v1505 = vpop.f32.mrb[0].mxu0
      %v1506 = vadd.f32 0.0, %v1505
      %v1507 = vpop.f32.mrb[0].mxu0
      %1508 = vmatprep.mubr.f32.mxu0 0.0
      %1509 = vmatmul.mubr.f32.gmra.mrb[0].mxu0 %v950
      %v1510 = vpop.f32.mrb[0].mxu0
      %v1511 = vadd.f32 0.0, %v1510
      %v1512 = vpop.f32.mrb[0].mxu0
      %1513 = vmatprep.mubr.f32.mxu0 0.0
      %1514 = vmatmul.mubr.f32.gmra.mrb[0].mxu0 %v952
      %v1515 = vpop.f32.mrb[0].mxu0
      %v1516 = vadd.f32 0.0, %v1515
      %v1517 = vpop.f32.mrb[0].mxu0
      %1518 = vmatprep.mubr.f32.mxu0 0.0
      %1519 = vmatmul.mubr.f32.gmra.mrb[0].mxu0 %v954
      %v1520 = vpop.f32.mrb[0].mxu0
      %v1521 = vadd.f32 0.0, %v1520
      %v1522 = vpop.f32.mrb[0].mxu0
      %1523 = vmatprep.mubr.f32.mxu0 0.0
      %1524 = vmatmul.mubr.f32.gmra.mrb[0].mxu0 %v956
      %v1525 = vpop.f32.mrb[0].mxu0
      %v1526 = vadd.f32 0.0, %v1525
      %v1527 = vpop.f32.mrb[0].mxu0
      %1528 = vmatprep.mubr.f32.mxu0 0.0
      %1529 = vmatmul.mubr.f32.gmra.mrb[0].mxu0 %v958
      %v1530 = vpop.f32.mrb[0].mxu0
      %v1531 = vadd.f32 0.0, %v1530
      %v1532 = vpop.f32.mrb[0].mxu0
      %1533 = vmatprep.mubr.f32.mxu0 0.0
      %1534 = vmatmul.mubr.f32.gmra.mrb[0].mxu0 %v960
      %v1535 = vpop.f32.mrb[0].mxu0
      %v1536 = vadd.f32 0.0, %v1535
      %v1537 = vpop.f32.mrb[0].mxu0
      %1538 = vmatprep.mubr.f32.mxu0 0.0
      %1539 = vmatmul.mubr.f32.gmra.mrb[0].mxu0 %v962
      %v1540 = vpop.f32.mrb[0].mxu0
      %v1541 = vadd.f32 0.0, %v1540
      %v1542 = vpop.f32.mrb[0].mxu0
      %1543 = vmatprep.mubr.f32.mxu0 0.0
      %1544 = vmatmul.mubr.f32.gmra.mrb[0].mxu0 %v964
      %v1545 = vpop.f32.mrb[0].mxu0
      %v1546 = vadd.f32 0.0, %v1545
      %v1547 = vpop.f32.mrb[0].mxu0
      %1548 = vmatprep.mubr.f32.mxu0 0.0
      %1549 = vmatmul.mubr.f32.gmra.mrb[0].mxu0 %v966
      %v1550 = vpop.f32.mrb[0].mxu0
      %v1551 = vadd.f32 0.0, %v1550
      %v1552 = vpop.f32.mrb[0].mxu0
      %1553 = vmatprep.mubr.f32.mxu0 0.0
      %1554 = vmatmul.mubr.f32.gmra.mrb[0].mxu0 %v968
      %v1555 = vpop.f32.mrb[0].mxu0
      %v1556 = vadd.f32 0.0, %v1555
      %v1557 = vpop.f32.mrb[0].mxu0
      %1558 = vmatprep.mubr.f32.mxu0 0.0
      %1559 = vmatmul.mubr.f32.gmra.mrb[0].mxu0 %v970
      %v1560 = vpop.f32.mrb[0].mxu0
      %v1561 = vadd.f32 0.0, %v1560
      %v1562 = vpop.f32.mrb[0].mxu0
      %1563 = vmatprep.mubr.f32.mxu0 0.0
      %1564 = vmatmul.mubr.f32.gmra.mrb[0].mxu0 %v972
      %v1565 = vpop.f32.mrb[0].mxu0
      %v1566 = vadd.f32 0.0, %v1565
      %v1567 = vpop.f32.mrb[0].mxu0
      %1568 = vmatprep.mubr.f32.mxu0 0.0
      %1569 = vmatmul.mubr.f32.gmra.mrb[0].mxu0 %v974
      %v1570 = vpop.f32.mrb[0].mxu0
      %v1571 = vadd.f32 0.0, %v1570
      %v1572 = vpop.f32.mrb[0].mxu0
      %1573 = vmatprep.mubr.f32.mxu0 0.0
      %1574 = vmatmul.mubr.f32.gmra.mrb[0].mxu0 %v976
      %v1575 = vpop.f32.mrb[0].mxu0
      %v1576 = vadd.f32 0.0, %v1575
      %v1577 = vpop.f32.mrb[0].mxu0
      %1578 = vmatprep.mubr.f32.mxu0 0.0
      %1579 = vmatmul.mubr.f32.gmra.mrb[0].mxu0 %v978
      %v1580 = vpop.f32.mrb[0].mxu0
      %v1581 = vadd.f32 0.0, %v1580
      %v1582 = vpop.f32.mrb[0].mxu0
      %1583 = vmatprep.mubr.f32.mxu0 0.0
      %1584 = vmatmul.mubr.f32.gmra.mrb[0].mxu0 %v980
      %v1585 = vpop.f32.mrb[0].mxu0
      %v1586 = vadd.f32 0.0, %v1585
      %v1587 = vpop.f32.mrb[0].mxu0
      %1588 = vmatprep.mubr.f32.mxu0 0.0
      %1589 = vmatmul.mubr.f32.gmra.mrb[0].mxu0 %v982
      %v1590 = vpop.f32.mrb[0].mxu0
      %v1591 = vadd.f32 0.0, %v1590
      %v1592 = vpop.f32.mrb[0].mxu0
      %1593 = vmatprep.mubr.f32.mxu0 0.0
      %1594 = vmatmul.mubr.f32.gmra.mrb[0].mxu0 %v984
      %v1595 = vpop.f32.mrb[0].mxu0
      %v1596 = vadd.f32 0.0, %v1595
      %v1597 = vpop.f32.mrb[0].mxu0
      %1598 = vmatprep.mubr.f32.mxu0 0.0
      %1599 = vmatmul.mubr.f32.gmra.mrb[0].mxu0 %v986
      %v1600 = vpop.f32.mrb[0].mxu0
      %v1601 = vadd.f32 0.0, %v1600
      %v1602 = vpop.f32.mrb[0].mxu0
      %1603 = vmatprep.mubr.f32.mxu0 0.0
      %1604 = vmatmul.mubr.f32.gmra.mrb[0].mxu0 %v988
      %v1605 = vpop.f32.mrb[0].mxu0
      %v1606 = vadd.f32 0.0, %v1605
      %v1607 = vpop.f32.mrb[0].mxu0
      %1608 = vmatprep.mubr.f32.mxu0 0.0
      %1609 = vmatmul.mubr.f32.gmra.mrb[0].mxu0 %v990
      %v1610 = vpop.f32.mrb[0].mxu0
      %v1611 = vadd.f32 0.0, %v1610
      %v1612 = vpop.f32.mrb[0].mxu0
      %1613 = vmatprep.mubr.f32.mxu0 0.0
      %1614 = vmatmul.mubr.f32.gmra.mrb[0].mxu0 %v992
      %v1615 = vpop.f32.mrb[0].mxu0
      %v1616 = vadd.f32 0.0, %v1615
      %v1617 = vpop.f32.mrb[0].mxu0
      %1618 = vmatprep.mubr.f32.mxu0 0.0
      %1619 = vmatmul.mubr.f32.gmra.mrb[0].mxu0 %v994
      %v1620 = vpop.f32.mrb[0].mxu0
      %v1621 = vadd.f32 0.0, %v1620
      %v1622 = vpop.f32.mrb[0].mxu0
      %1623 = vmatprep.mubr.f32.mxu0 0.0
      %1624 = vmatmul.mubr.f32.gmra.mrb[0].mxu0 %v996
      %v1625 = vpop.f32.mrb[0].mxu0
      %v1626 = vadd.f32 0.0, %v1625
      %v1627 = vpop.f32.mrb[0].mxu0
      %1628 = vmatprep.mubr.f32.mxu0 0.0
      %1629 = vmatmul.mubr.f32.gmra.mrb[0].mxu0 %v998
      %v1630 = vpop.f32.mrb[0].mxu0
      %v1631 = vadd.f32 0.0, %v1630
      %v1632 = vpop.f32.mrb[0].mxu0
      %1633 = vmatprep.mubr.f32.mxu0 0.0
      %1634 = vmatmul.mubr.f32.gmra.mrb[0].mxu0 %v1000
      %v1635 = vpop.f32.mrb[0].mxu0
      %v1636 = vadd.f32 0.0, %v1635
      %v1637 = vpop.f32.mrb[0].mxu0
      %1638 = vmatprep.mubr.f32.mxu0 0.0
      %1639 = vmatmul.mubr.f32.gmra.mrb[0].mxu0 %v1002
      %v1640 = vpop.f32.mrb[0].mxu0
      %v1641 = vadd.f32 0.0, %v1640
      %v1642 = vpop.f32.mrb[0].mxu0
      %1643 = vmatprep.mubr.f32.mxu0 0.0
      %1644 = vmatmul.mubr.f32.gmra.mrb[0].mxu0 %v1004
      %v1645 = vpop.f32.mrb[0].mxu0
      %v1646 = vadd.f32 0.0, %v1645
      %v1647 = vpop.f32.mrb[0].mxu0
      %1648 = vmatprep.mubr.f32.mxu0 0.0
      %1649 = vmatmul.mubr.f32.gmra.mrb[0].mxu0 %v1006
      %v1650 = vpop.f32.mrb[0].mxu0
      %v1651 = vadd.f32 0.0, %v1650
      %v1652 = vpop.f32.mrb[0].mxu0
      %1653 = vmatprep.mubr.f32.mxu0 0.0
      %1654 = vmatmul.mubr.f32.gmra.mrb[0].mxu0 %v1008
      %v1655 = vpop.f32.mrb[0].mxu0
      %v1656 = vadd.f32 0.0, %v1655
      %v1657 = vpop.f32.mrb[0].mxu0
      %1658 = vmatprep.mubr.f32.mxu0 0.0
      %1659 = vmatmul.mubr.f32.gmra.mrb[0].mxu0 %v1010
      %v1660 = vpop.f32.mrb[0].mxu0
      %v1661 = vadd.f32 0.0, %v1660
      %v1662 = vpop.f32.mrb[0].mxu0
      %1663 = vmatprep.mubr.f32.mxu0 0.0
      %1664 = vmatmul.mubr.f32.gmra.mrb[0].mxu0 %v1012
      %v1665 = vpop.f32.mrb[0].mxu0
      %v1666 = vadd.f32 0.0, %v1665
      %v1667 = vpop.f32.mrb[0].mxu0
      %1668 = vmatprep.mubr.f32.mxu0 0.0
      %1669 = vmatmul.mubr.f32.gmra.mrb[0].mxu0 %v1014
      %v1670 = vpop.f32.mrb[0].mxu0
      %v1671 = vadd.f32 0.0, %v1670
      %v1672 = vpop.f32.mrb[0].mxu0
      %1673 = vmatprep.mubr.f32.mxu0 0.0
      %1674 = vmatmul.mubr.f32.gmra.mrb[0].mxu0 %v1016
      %v1675 = vpop.f32.mrb[0].mxu0
      %v1676 = vadd.f32 0.0, %v1675
      %v1677 = vpop.f32.mrb[0].mxu0
      %1678 = vmatprep.mubr.f32.mxu0 0.0
      %1679 = vmatmul.mubr.f32.gmra.mrb[0].mxu0 %v1018
      %v1680 = vpop.f32.mrb[0].mxu0
      %v1681 = vadd.f32 0.0, %v1680
      %v1682 = vpop.f32.mrb[0].mxu0
      %1683 = vmatprep.mubr.f32.mxu0 0.0
      %1684 = vmatmul.mubr.f32.gmra.mrb[0].mxu0 %v1020
      %v1685 = vpop.f32.mrb[0].mxu0
      %v1686 = vadd.f32 0.0, %v1685
      %v1687 = vpop.f32.mrb[0].mxu0
      %1688 = vmatprep.mubr.f32.mxu0 0.0
      %1689 = vmatmul.mubr.f32.gmra.mrb[0].mxu0 %v1022
      %v1690 = vpop.f32.mrb[0].mxu0
      %v1691 = vadd.f32 0.0, %v1690
      %v1692 = vpop.f32.mrb[0].mxu0
      %1693 = vmatprep.mubr.f32.mxu0 0.0
      %1694 = vmatmul.mubr.f32.gmra.mrb[0].mxu0 %v1024
      %v1695 = vpop.f32.mrb[0].mxu0
      %v1696 = vadd.f32 0.0, %v1695
      %v1697 = vpop.f32.mrb[0].mxu0
      %1698 = vmatprep.mubr.f32.mxu0 0.0
      %1699 = vmatmul.mubr.f32.gmra.mrb[0].mxu0 %v1026
      %v1700 = vpop.f32.mrb[0].mxu0
      %v1701 = vadd.f32 0.0, %v1700
      %v1702 = vpop.f32.mrb[0].mxu0
      %1703 = vmatprep.mubr.f32.mxu0 0.0
      %1704 = vmatmul.mubr.f32.gmra.mrb[0].mxu0 %v1028
      %v1705 = vpop.f32.mrb[0].mxu0
      %v1706 = vadd.f32 0.0, %v1705
      %v1707 = vpop.f32.mrb[0].mxu0
      %1708 = vmatprep.mubr.f32.mxu0 0.0
      %1709 = vmatmul.mubr.f32.gmra.mrb[0].mxu0 %v1030
      %v1710 = vpop.f32.mrb[0].mxu0
      %v1711 = vadd.f32 0.0, %v1710
      %v1712 = vpop.f32.mrb[0].mxu0
      %1713 = vmatprep.mubr.f32.mxu0 0.0
      %1714 = vmatmul.mubr.f32.gmra.mrb[0].mxu0 %v1032
      %v1715 = vpop.f32.mrb[0].mxu0
      %v1716 = vadd.f32 0.0, %v1715
      %v1717 = vpop.f32.mrb[0].mxu0
      %1718 = vmatprep.mubr.f32.mxu0 0.0
      %1719 = vmatmul.mubr.f32.gmra.mrb[0].mxu0 %v1034
      %v1720 = vpop.f32.mrb[0].mxu0
      %v1721 = vadd.f32 0.0, %v1720
      %v1722 = vpop.f32.mrb[0].mxu0
      %1723 = vmatprep.mubr.f32.mxu0 0.0
      %1724 = vmatmul.mubr.f32.gmra.mrb[0].mxu0 %v1036
      %v1725 = vpop.f32.mrb[0].mxu0
      %v1726 = vadd.f32 0.0, %v1725
      %v1727 = vpop.f32.mrb[0].mxu0
      %1728 = vmatprep.mubr.f32.mxu0 0.0
      %1729 = vmatmul.mubr.f32.gmra.mrb[0].mxu0 %v1038
      %v1730 = vpop.f32.mrb[0].mxu0
      %v1731 = vadd.f32 0.0, %v1730
      %v1732 = vpop.f32.mrb[0].mxu0
      %1733 = vmatprep.mubr.f32.mxu0 0.0
      %1734 = vmatmul.mubr.f32.gmra.mrb[0].mxu0 %v1040
      %v1735 = vpop.f32.mrb[0].mxu0
      %v1736 = vadd.f32 0.0, %v1735
      %v1737 = vpop.f32.mrb[0].mxu0
      %1738 = vmatprep.mubr.f32.mxu0 0.0
      %1739 = vmatmul.mubr.f32.gmra.mrb[0].mxu0 %v1042
      %v1740 = vpop.f32.mrb[0].mxu0
      %v1741 = vadd.f32 0.0, %v1740
      %v1742 = vpop.f32.mrb[0].mxu0
      %1743 = vmatprep.mubr.f32.mxu0 0.0
      %1744 = vmatmul.mubr.f32.gmra.mrb[0].mxu0 %v1044
      %v1745 = vpop.f32.mrb[0].mxu0
      %v1746 = vadd.f32 0.0, %v1745
      %v1747 = vpop.f32.mrb[0].mxu0
      %1748 = vmatprep.mubr.f32.mxu0 0.0
      %1749 = vmatmul.mubr.f32.gmra.mrb[0].mxu0 %v1046
      %v1750 = vpop.f32.mrb[0].mxu0
      %v1751 = vadd.f32 0.0, %v1750
      %v1752 = vpop.f32.mrb[0].mxu0
      %1753 = vmatprep.mubr.f32.mxu0 0.0
      %1754 = vmatmul.mubr.f32.gmra.mrb[0].mxu0 %v1048
      %v1755 = vpop.f32.mrb[0].mxu0
      %v1756 = vadd.f32 0.0, %v1755
      %v1757 = vpop.f32.mrb[0].mxu0
      %1758 = vdwg.mxu0
      %v1759 = vsel %vm793, %v171, 0
      %v1761 = vsel %vm793, %v172, 0
      %v1763 = vsel %vm793, %v173, 0
      %v1765 = vsel %vm793, %v174, 0
      %v1767 = vsel %vm793, %v176, 0
      %v1769 = vsel %vm793, %v177, 0
      %v1771 = vsel %vm793, %v178, 0
      %v1773 = vsel %vm793, %v179, 0
      %v1775 = vsel %vm793, %v181, 0
      %v1777 = vsel %vm793, %v182, 0
      %v1779 = vsel %vm793, %v183, 0
      %v1781 = vsel %vm793, %v184, 0
      %v1783 = vsel %vm793, %v186, 0
      %v1785 = vsel %vm793, %v187, 0
      %v1787 = vsel %vm793, %v188, 0
      %v1789 = vsel %vm793, %v189, 0
      %v1791 = vsel %vm793, %v191, 0
      %v1793 = vsel %vm793, %v192, 0
      %v1795 = vsel %vm793, %v193, 0
      %v1797 = vsel %vm793, %v194, 0
      %v1799 = vsel %vm793, %v196, 0
      %v1801 = vsel %vm793, %v197, 0
      %v1803 = vsel %vm793, %v198, 0
      %v1805 = vsel %vm793, %v199, 0
      %v1807 = vsel %vm793, %v201, 0
      %v1809 = vsel %vm793, %v202, 0
      %v1811 = vsel %vm793, %v203, 0
      %v1813 = vsel %vm793, %v204, 0
      %v1815 = vsel %vm793, %v206, 0
      %v1817 = vsel %vm793, %v207, 0
      %v1819 = vsel %vm793, %v208, 0
      %v1821 = vsel %vm793, %v209, 0
      %v1823 = vsel %vm793, %v211, 0
      %v1825 = vsel %vm793, %v212, 0
      %v1827 = vsel %vm793, %v213, 0
      %v1829 = vsel %vm793, %v214, 0
      %v1831 = vsel %vm793, %v216, 0
      %v1833 = vsel %vm793, %v217, 0
      %v1835 = vsel %vm793, %v218, 0
      %v1837 = vsel %vm793, %v219, 0
      %v1839 = vsel %vm793, %v221, 0
      %v1841 = vsel %vm793, %v222, 0
      %v1843 = vsel %vm793, %v223, 0
      %v1845 = vsel %vm793, %v224, 0
      %v1847 = vsel %vm793, %v226, 0
      %v1849 = vsel %vm793, %v227, 0
      %v1851 = vsel %vm793, %v228, 0
      %v1853 = vsel %vm793, %v229, 0
      %v1855 = vsel %vm793, %v231, 0
      %v1857 = vsel %vm793, %v232, 0
      %v1859 = vsel %vm793, %v233, 0
      %v1861 = vsel %vm793, %v234, 0
      %v1863 = vsel %vm793, %v236, 0
      %v1865 = vsel %vm793, %v237, 0
      %v1867 = vsel %vm793, %v238, 0
      %v1869 = vsel %vm793, %v239, 0
      %v1871 = vsel %vm793, %v241, 0
      %v1873 = vsel %vm793, %v242, 0
      %v1875 = vsel %vm793, %v243, 0
      %v1877 = vsel %vm793, %v244, 0
      %v1879 = vsel %vm793, %v246, 0
      %v1881 = vsel %vm793, %v247, 0
      %v1883 = vsel %vm793, %v248, 0
      %v1885 = vsel %vm793, %v249, 0
      %v1887 = vsel %vm793, %v251, 0
      %v1889 = vsel %vm793, %v252, 0
      %v1891 = vsel %vm793, %v253, 0
      %v1893 = vsel %vm793, %v254, 0
      %v1895 = vsel %vm793, %v256, 0
      %v1897 = vsel %vm793, %v257, 0
      %v1899 = vsel %vm793, %v258, 0
      %v1901 = vsel %vm793, %v259, 0
      %v1903 = vsel %vm793, %v261, 0
      %v1905 = vsel %vm793, %v262, 0
      %v1907 = vsel %vm793, %v263, 0
      %v1909 = vsel %vm793, %v264, 0
      %v1911 = vsel %vm793, %v266, 0
      %v1913 = vsel %vm793, %v267, 0
      %v1915 = vsel %vm793, %v268, 0
      %v1917 = vsel %vm793, %v269, 0
      %v1919 = vsel %vm793, %v271, 0
      %v1921 = vsel %vm793, %v272, 0
      %v1923 = vsel %vm793, %v273, 0
      %v1925 = vsel %vm793, %v274, 0
      %v1927 = vsel %vm793, %v276, 0
      %v1929 = vsel %vm793, %v277, 0
      %v1931 = vsel %vm793, %v278, 0
      %v1933 = vsel %vm793, %v279, 0
      %v1935 = vsel %vm793, %v281, 0
      %v1937 = vsel %vm793, %v282, 0
      %v1939 = vsel %vm793, %v283, 0
      %v1941 = vsel %vm793, %v284, 0
      %v1943 = vsel %vm793, %v286, 0
      %v1945 = vsel %vm793, %v287, 0
      %v1947 = vsel %vm793, %v288, 0
      %v1949 = vsel %vm793, %v289, 0
      %v1951 = vsel %vm793, %v291, 0
      %v1953 = vsel %vm793, %v292, 0
      %v1955 = vsel %vm793, %v293, 0
      %v1957 = vsel %vm793, %v294, 0
      %v1959 = vsel %vm793, %v296, 0
      %v1961 = vsel %vm793, %v297, 0
      %v1963 = vsel %vm793, %v298, 0
      %v1965 = vsel %vm793, %v299, 0
      %v1967 = vsel %vm793, %v301, 0
      %v1969 = vsel %vm793, %v302, 0
      %v1971 = vsel %vm793, %v303, 0
      %v1973 = vsel %vm793, %v304, 0
      %v1975 = vsel %vm793, %v306, 0
      %v1977 = vsel %vm793, %v307, 0
      %v1979 = vsel %vm793, %v308, 0
      %v1981 = vsel %vm793, %v309, 0
      %v1983 = vsel %vm793, %v311, 0
      %v1985 = vsel %vm793, %v312, 0
      %v1987 = vsel %vm793, %v313, 0
      %v1989 = vsel %vm793, %v314, 0
      %v1991 = vsel %vm793, %v316, 0
      %v1993 = vsel %vm793, %v317, 0
      %v1995 = vsel %vm793, %v318, 0
      %v1997 = vsel %vm793, %v319, 0
      %v1999 = vsel %vm793, %v321, 0
      %v2001 = vsel %vm793, %v322, 0
      %v2003 = vsel %vm793, %v323, 0
      %v2005 = vsel %vm793, %v324, 0
      %v2007 = vsel %vm793, %v326, 0
      %v2009 = vsel %vm793, %v327, 0
      %v2011 = vsel %vm793, %v328, 0
      %v2013 = vsel %vm793, %v329, 0
      %v2016 = vsel %vm1050, %v341, 0
      %2018 = vmatprep.subr.mxu0 0.0
      %2019 = vmatpush1.msra.mxu0 %v2016
      %2020 = vmatprep.subr.mxu0 0.0
      %2021 = vmatpush1.msra.mxu0 0.0
      %2022 = vmatprep.subr.mxu0 0.0
      %2023 = vmatpush1.msra.mxu0 0.0
      %2024 = vmatprep.subr.mxu0 0.0
      %2025 = vmatpush1.msra.mxu0 0.0
      %2026 = vmatprep.subr.mxu0 0.0
      %2027 = vmatpush1.msra.mxu0 0.0
      %2028 = vmatprep.subr.mxu0 0.0
      %2029 = vmatpush1.msra.mxu0 0.0
      %2030 = vmatprep.subr.mxu0 0.0
      %2031 = vmatpush1.msra.mxu0 0.0
      %2032 = vmatprep.subr.mxu0 0.0
      %2033 = vmatpush1.msra.mxu0 0.0
      %2034 = vmatprep.subr.mxu0 0.0
      %2035 = vmatpush1.msra.mxu0 0.0
      %2036 = vmatprep.subr.mxu0 0.0
      %2037 = vmatpush1.msra.mxu0 0.0
      %2038 = vmatprep.subr.mxu0 0.0
      %2039 = vmatpush1.msra.mxu0 0.0
      %2040 = vmatprep.subr.mxu0 0.0
      %2041 = vmatpush1.msra.mxu0 0.0
      %2042 = vmatprep.subr.mxu0 0.0
      %2043 = vmatpush1.msra.mxu0 0.0
      %2044 = vmatprep.subr.mxu0 0.0
      %2045 = vmatpush1.msra.mxu0 0.0
      %2046 = vmatprep.subr.mxu0 0.0
      %2047 = vmatpush1.msra.mxu0 0.0
      %2048 = vmatprep.subr.mxu0 0.0
      %2049 = vmatpush1.msra.mxu0 0.0
      %2050 = vmatprep.subr.mxu0 0.0
      %2051 = vmatpush1.msra.mxu0 0.0
      %2052 = vmatprep.subr.mxu0 0.0
      %2053 = vmatpush1.msra.mxu0 0.0
      %2054 = vmatprep.subr.mxu0 0.0
      %2055 = vmatpush1.msra.mxu0 0.0
      %2056 = vmatprep.subr.mxu0 0.0
      %2057 = vmatpush1.msra.mxu0 0.0
      %2058 = vmatprep.subr.mxu0 0.0
      %2059 = vmatpush1.msra.mxu0 0.0
      %2060 = vmatprep.subr.mxu0 0.0
      %2061 = vmatpush1.msra.mxu0 0.0
      %2062 = vmatprep.subr.mxu0 0.0
      %2063 = vmatpush1.msra.mxu0 0.0
      %2064 = vmatprep.subr.mxu0 0.0
      %2065 = vmatpush1.msra.mxu0 0.0
      %2066 = vmatprep.subr.mxu0 0.0
      %2067 = vmatpush1.msra.mxu0 0.0
      %2068 = vmatprep.subr.mxu0 0.0
      %2069 = vmatpush1.msra.mxu0 0.0
      %2070 = vmatprep.subr.mxu0 0.0
      %2071 = vmatpush1.msra.mxu0 0.0
      %2072 = vmatprep.subr.mxu0 0.0
      %2073 = vmatpush1.msra.mxu0 0.0
      %2074 = vmatprep.subr.mxu0 0.0
      %2075 = vmatpush1.msra.mxu0 0.0
      %2076 = vmatprep.subr.mxu0 0.0
      %2077 = vmatpush1.msra.mxu0 0.0
      %2078 = vmatprep.subr.mxu0 0.0
      %2079 = vmatpush1.msra.mxu0 0.0
      %2080 = vmatprep.subr.mxu0 0.0
      %2081 = vmatpush1.msra.mxu0 0.0
      %2082 = vmatprep.mubr.f32.mxu0 0.0
      %2083 = vmatmul.mubr.f32.gmra.mrb[0].mxu0 %v1759
      %v2084 = vpop.f32.mrb[0].mxu0
      %v2085 = vadd.f32 %v1121, %v2084
      %v2086 = vpop.f32.mrb[0].mxu0
      %2087 = vmatprep.mubr.f32.mxu0 0.0
      %2088 = vmatmul.mubr.f32.gmra.mrb[0].mxu0 %v1761
      %v2089 = vpop.f32.mrb[0].mxu0
      %v2090 = vadd.f32 %v1126, %v2089
      %v2091 = vpop.f32.mrb[0].mxu0
      %2092 = vmatprep.mubr.f32.mxu0 0.0
      %2093 = vmatmul.mubr.f32.gmra.mrb[0].mxu0 %v1763
      %v2094 = vpop.f32.mrb[0].mxu0
      %v2095 = vadd.f32 %v1131, %v2094
      %v2096 = vpop.f32.mrb[0].mxu0
      %2097 = vmatprep.mubr.f32.mxu0 0.0
      %2098 = vmatmul.mubr.f32.gmra.mrb[0].mxu0 %v1765
      %v2099 = vpop.f32.mrb[0].mxu0
      %v2100 = vadd.f32 %v1136, %v2099
      %v2101 = vpop.f32.mrb[0].mxu0
      %2102 = vmatprep.mubr.f32.mxu0 0.0
      %2103 = vmatmul.mubr.f32.gmra.mrb[0].mxu0 %v1767
      %v2104 = vpop.f32.mrb[0].mxu0
      %v2105 = vadd.f32 %v1141, %v2104
      %v2106 = vpop.f32.mrb[0].mxu0
      %2107 = vmatprep.mubr.f32.mxu0 0.0
      %2108 = vmatmul.mubr.f32.gmra.mrb[0].mxu0 %v1769
      %v2109 = vpop.f32.mrb[0].mxu0
      %v2110 = vadd.f32 %v1146, %v2109
      %v2111 = vpop.f32.mrb[0].mxu0
      %2112 = vmatprep.mubr.f32.mxu0 0.0
      %2113 = vmatmul.mubr.f32.gmra.mrb[0].mxu0 %v1771
      %v2114 = vpop.f32.mrb[0].mxu0
      %v2115 = vadd.f32 %v1151, %v2114
      %v2116 = vpop.f32.mrb[0].mxu0
      %2117 = vmatprep.mubr.f32.mxu0 0.0
      %2118 = vmatmul.mubr.f32.gmra.mrb[0].mxu0 %v1773
      %v2119 = vpop.f32.mrb[0].mxu0
      %v2120 = vadd.f32 %v1156, %v2119
      %v2121 = vpop.f32.mrb[0].mxu0
      %2122 = vmatprep.mubr.f32.mxu0 0.0
      %2123 = vmatmul.mubr.f32.gmra.mrb[0].mxu0 %v1775
      %v2124 = vpop.f32.mrb[0].mxu0
      %v2125 = vadd.f32 %v1161, %v2124
      %v2126 = vpop.f32.mrb[0].mxu0
      %2127 = vmatprep.mubr.f32.mxu0 0.0
      %2128 = vmatmul.mubr.f32.gmra.mrb[0].mxu0 %v1777
      %v2129 = vpop.f32.mrb[0].mxu0
      %v2130 = vadd.f32 %v1166, %v2129
      %v2131 = vpop.f32.mrb[0].mxu0
      %2132 = vmatprep.mubr.f32.mxu0 0.0
      %2133 = vmatmul.mubr.f32.gmra.mrb[0].mxu0 %v1779
      %v2134 = vpop.f32.mrb[0].mxu0
      %v2135 = vadd.f32 %v1171, %v2134
      %v2136 = vpop.f32.mrb[0].mxu0
      %2137 = vmatprep.mubr.f32.mxu0 0.0
      %2138 = vmatmul.mubr.f32.gmra.mrb[0].mxu0 %v1781
      %v2139 = vpop.f32.mrb[0].mxu0
      %v2140 = vadd.f32 %v1176, %v2139
      %v2141 = vpop.f32.mrb[0].mxu0
      %2142 = vmatprep.mubr.f32.mxu0 0.0
      %2143 = vmatmul.mubr.f32.gmra.mrb[0].mxu0 %v1783
      %v2144 = vpop.f32.mrb[0].mxu0
      %v2145 = vadd.f32 %v1181, %v2144
      %v2146 = vpop.f32.mrb[0].mxu0
      %2147 = vmatprep.mubr.f32.mxu0 0.0
      %2148 = vmatmul.mubr.f32.gmra.mrb[0].mxu0 %v1785
      %v2149 = vpop.f32.mrb[0].mxu0
      %v2150 = vadd.f32 %v1186, %v2149
      %v2151 = vpop.f32.mrb[0].mxu0
      %2152 = vmatprep.mubr.f32.mxu0 0.0
      %2153 = vmatmul.mubr.f32.gmra.mrb[0].mxu0 %v1787
      %v2154 = vpop.f32.mrb[0].mxu0
      %v2155 = vadd.f32 %v1191, %v2154
      %v2156 = vpop.f32.mrb[0].mxu0
      %2157 = vmatprep.mubr.f32.mxu0 0.0
      %2158 = vmatmul.mubr.f32.gmra.mrb[0].mxu0 %v1789
      %v2159 = vpop.f32.mrb[0].mxu0
      %v2160 = vadd.f32 %v1196, %v2159
      %v2161 = vpop.f32.mrb[0].mxu0
      %2162 = vmatprep.mubr.f32.mxu0 0.0
      %2163 = vmatmul.mubr.f32.gmra.mrb[0].mxu0 %v1791
      %v2164 = vpop.f32.mrb[0].mxu0
      %v2165 = vadd.f32 %v1201, %v2164
      %v2166 = vpop.f32.mrb[0].mxu0
      %2167 = vmatprep.mubr.f32.mxu0 0.0
      %2168 = vmatmul.mubr.f32.gmra.mrb[0].mxu0 %v1793
      %v2169 = vpop.f32.mrb[0].mxu0
      %v2170 = vadd.f32 %v1206, %v2169
      %v2171 = vpop.f32.mrb[0].mxu0
      %2172 = vmatprep.mubr.f32.mxu0 0.0
      %2173 = vmatmul.mubr.f32.gmra.mrb[0].mxu0 %v1795
      %v2174 = vpop.f32.mrb[0].mxu0
      %v2175 = vadd.f32 %v1211, %v2174
      %v2176 = vpop.f32.mrb[0].mxu0
      %2177 = vmatprep.mubr.f32.mxu0 0.0
      %2178 = vmatmul.mubr.f32.gmra.mrb[0].mxu0 %v1797
      %v2179 = vpop.f32.mrb[0].mxu0
      %v2180 = vadd.f32 %v1216, %v2179
      %v2181 = vpop.f32.mrb[0].mxu0
      %2182 = vmatprep.mubr.f32.mxu0 0.0
      %2183 = vmatmul.mubr.f32.gmra.mrb[0].mxu0 %v1799
      %v2184 = vpop.f32.mrb[0].mxu0
      %v2185 = vadd.f32 %v1221, %v2184
      %v2186 = vpop.f32.mrb[0].mxu0
      %2187 = vmatprep.mubr.f32.mxu0 0.0
      %2188 = vmatmul.mubr.f32.gmra.mrb[0].mxu0 %v1801
      %v2189 = vpop.f32.mrb[0].mxu0
      %v2190 = vadd.f32 %v1226, %v2189
      %v2191 = vpop.f32.mrb[0].mxu0
      %2192 = vmatprep.mubr.f32.mxu0 0.0
      %2193 = vmatmul.mubr.f32.gmra.mrb[0].mxu0 %v1803
      %v2194 = vpop.f32.mrb[0].mxu0
      %v2195 = vadd.f32 %v1231, %v2194
      %v2196 = vpop.f32.mrb[0].mxu0
      %2197 = vmatprep.mubr.f32.mxu0 0.0
      %2198 = vmatmul.mubr.f32.gmra.mrb[0].mxu0 %v1805
      %v2199 = vpop.f32.mrb[0].mxu0
      %v2200 = vadd.f32 %v1236, %v2199
      %v2201 = vpop.f32.mrb[0].mxu0
      %2202 = vmatprep.mubr.f32.mxu0 0.0
      %2203 = vmatmul.mubr.f32.gmra.mrb[0].mxu0 %v1807
      %v2204 = vpop.f32.mrb[0].mxu0
      %v2205 = vadd.f32 %v1241, %v2204
      %v2206 = vpop.f32.mrb[0].mxu0
      %2207 = vmatprep.mubr.f32.mxu0 0.0
      %2208 = vmatmul.mubr.f32.gmra.mrb[0].mxu0 %v1809
      %v2209 = vpop.f32.mrb[0].mxu0
      %v2210 = vadd.f32 %v1246, %v2209
      %v2211 = vpop.f32.mrb[0].mxu0
      %2212 = vmatprep.mubr.f32.mxu0 0.0
      %2213 = vmatmul.mubr.f32.gmra.mrb[0].mxu0 %v1811
      %v2214 = vpop.f32.mrb[0].mxu0
      %v2215 = vadd.f32 %v1251, %v2214
      %v2216 = vpop.f32.mrb[0].mxu0
      %2217 = vmatprep.mubr.f32.mxu0 0.0
      %2218 = vmatmul.mubr.f32.gmra.mrb[0].mxu0 %v1813
      %v2219 = vpop.f32.mrb[0].mxu0
      %v2220 = vadd.f32 %v1256, %v2219
      %v2221 = vpop.f32.mrb[0].mxu0
      %2222 = vmatprep.mubr.f32.mxu0 0.0
      %2223 = vmatmul.mubr.f32.gmra.mrb[0].mxu0 %v1815
      %v2224 = vpop.f32.mrb[0].mxu0
      %v2225 = vadd.f32 %v1261, %v2224
      %v2226 = vpop.f32.mrb[0].mxu0
      %2227 = vmatprep.mubr.f32.mxu0 0.0
      %2228 = vmatmul.mubr.f32.gmra.mrb[0].mxu0 %v1817
      %v2229 = vpop.f32.mrb[0].mxu0
      %v2230 = vadd.f32 %v1266, %v2229
      %v2231 = vpop.f32.mrb[0].mxu0
      %2232 = vmatprep.mubr.f32.mxu0 0.0
      %2233 = vmatmul.mubr.f32.gmra.mrb[0].mxu0 %v1819
      %v2234 = vpop.f32.mrb[0].mxu0
      %v2235 = vadd.f32 %v1271, %v2234
      %v2236 = vpop.f32.mrb[0].mxu0
      %2237 = vmatprep.mubr.f32.mxu0 0.0
      %2238 = vmatmul.mubr.f32.gmra.mrb[0].mxu0 %v1821
      %v2239 = vpop.f32.mrb[0].mxu0
      %v2240 = vadd.f32 %v1276, %v2239
      %v2241 = vpop.f32.mrb[0].mxu0
      %2242 = vmatprep.mubr.f32.mxu0 0.0
      %2243 = vmatmul.mubr.f32.gmra.mrb[0].mxu0 %v1823
      %v2244 = vpop.f32.mrb[0].mxu0
      %v2245 = vadd.f32 %v1281, %v2244
      %v2246 = vpop.f32.mrb[0].mxu0
      %2247 = vmatprep.mubr.f32.mxu0 0.0
      %2248 = vmatmul.mubr.f32.gmra.mrb[0].mxu0 %v1825
      %v2249 = vpop.f32.mrb[0].mxu0
      %v2250 = vadd.f32 %v1286, %v2249
      %v2251 = vpop.f32.mrb[0].mxu0
      %2252 = vmatprep.mubr.f32.mxu0 0.0
      %2253 = vmatmul.mubr.f32.gmra.mrb[0].mxu0 %v1827
      %v2254 = vpop.f32.mrb[0].mxu0
      %v2255 = vadd.f32 %v1291, %v2254
      %v2256 = vpop.f32.mrb[0].mxu0
      %2257 = vmatprep.mubr.f32.mxu0 0.0
      %2258 = vmatmul.mubr.f32.gmra.mrb[0].mxu0 %v1829
      %v2259 = vpop.f32.mrb[0].mxu0
      %v2260 = vadd.f32 %v1296, %v2259
      %v2261 = vpop.f32.mrb[0].mxu0
      %2262 = vmatprep.mubr.f32.mxu0 0.0
      %2263 = vmatmul.mubr.f32.gmra.mrb[0].mxu0 %v1831
      %v2264 = vpop.f32.mrb[0].mxu0
      %v2265 = vadd.f32 %v1301, %v2264
      %v2266 = vpop.f32.mrb[0].mxu0
      %2267 = vmatprep.mubr.f32.mxu0 0.0
      %2268 = vmatmul.mubr.f32.gmra.mrb[0].mxu0 %v1833
      %v2269 = vpop.f32.mrb[0].mxu0
      %v2270 = vadd.f32 %v1306, %v2269
      %v2271 = vpop.f32.mrb[0].mxu0
      %2272 = vmatprep.mubr.f32.mxu0 0.0
      %2273 = vmatmul.mubr.f32.gmra.mrb[0].mxu0 %v1835
      %v2274 = vpop.f32.mrb[0].mxu0
      %v2275 = vadd.f32 %v1311, %v2274
      %v2276 = vpop.f32.mrb[0].mxu0
      %2277 = vmatprep.mubr.f32.mxu0 0.0
      %2278 = vmatmul.mubr.f32.gmra.mrb[0].mxu0 %v1837
      %v2279 = vpop.f32.mrb[0].mxu0
      %v2280 = vadd.f32 %v1316, %v2279
      %v2281 = vpop.f32.mrb[0].mxu0
      %2282 = vmatprep.mubr.f32.mxu0 0.0
      %2283 = vmatmul.mubr.f32.gmra.mrb[0].mxu0 %v1839
      %v2284 = vpop.f32.mrb[0].mxu0
      %v2285 = vadd.f32 %v1321, %v2284
      %v2286 = vpop.f32.mrb[0].mxu0
      %2287 = vmatprep.mubr.f32.mxu0 0.0
      %2288 = vmatmul.mubr.f32.gmra.mrb[0].mxu0 %v1841
      %v2289 = vpop.f32.mrb[0].mxu0
      %v2290 = vadd.f32 %v1326, %v2289
      %v2291 = vpop.f32.mrb[0].mxu0
      %2292 = vmatprep.mubr.f32.mxu0 0.0
      %2293 = vmatmul.mubr.f32.gmra.mrb[0].mxu0 %v1843
      %v2294 = vpop.f32.mrb[0].mxu0
      %v2295 = vadd.f32 %v1331, %v2294
      %v2296 = vpop.f32.mrb[0].mxu0
      %2297 = vmatprep.mubr.f32.mxu0 0.0
      %2298 = vmatmul.mubr.f32.gmra.mrb[0].mxu0 %v1845
      %v2299 = vpop.f32.mrb[0].mxu0
      %v2300 = vadd.f32 %v1336, %v2299
      %v2301 = vpop.f32.mrb[0].mxu0
      %2302 = vmatprep.mubr.f32.mxu0 0.0
      %2303 = vmatmul.mubr.f32.gmra.mrb[0].mxu0 %v1847
      %v2304 = vpop.f32.mrb[0].mxu0
      %v2305 = vadd.f32 %v1341, %v2304
      %v2306 = vpop.f32.mrb[0].mxu0
      %2307 = vmatprep.mubr.f32.mxu0 0.0
      %2308 = vmatmul.mubr.f32.gmra.mrb[0].mxu0 %v1849
      %v2309 = vpop.f32.mrb[0].mxu0
      %v2310 = vadd.f32 %v1346, %v2309
      %v2311 = vpop.f32.mrb[0].mxu0
      %2312 = vmatprep.mubr.f32.mxu0 0.0
      %2313 = vmatmul.mubr.f32.gmra.mrb[0].mxu0 %v1851
      %v2314 = vpop.f32.mrb[0].mxu0
      %v2315 = vadd.f32 %v1351, %v2314
      %v2316 = vpop.f32.mrb[0].mxu0
      %2317 = vmatprep.mubr.f32.mxu0 0.0
      %2318 = vmatmul.mubr.f32.gmra.mrb[0].mxu0 %v1853
      %v2319 = vpop.f32.mrb[0].mxu0
      %v2320 = vadd.f32 %v1356, %v2319
      %v2321 = vpop.f32.mrb[0].mxu0
      %2322 = vmatprep.mubr.f32.mxu0 0.0
      %2323 = vmatmul.mubr.f32.gmra.mrb[0].mxu0 %v1855
      %v2324 = vpop.f32.mrb[0].mxu0
      %v2325 = vadd.f32 %v1361, %v2324
      %v2326 = vpop.f32.mrb[0].mxu0
      %2327 = vmatprep.mubr.f32.mxu0 0.0
      %2328 = vmatmul.mubr.f32.gmra.mrb[0].mxu0 %v1857
      %v2329 = vpop.f32.mrb[0].mxu0
      %v2330 = vadd.f32 %v1366, %v2329
      %v2331 = vpop.f32.mrb[0].mxu0
      %2332 = vmatprep.mubr.f32.mxu0 0.0
      %2333 = vmatmul.mubr.f32.gmra.mrb[0].mxu0 %v1859
      %v2334 = vpop.f32.mrb[0].mxu0
      %v2335 = vadd.f32 %v1371, %v2334
      %v2336 = vpop.f32.mrb[0].mxu0
      %2337 = vmatprep.mubr.f32.mxu0 0.0
      %2338 = vmatmul.mubr.f32.gmra.mrb[0].mxu0 %v1861
      %v2339 = vpop.f32.mrb[0].mxu0
      %v2340 = vadd.f32 %v1376, %v2339
      %v2341 = vpop.f32.mrb[0].mxu0
      %2342 = vmatprep.mubr.f32.mxu0 0.0
      %2343 = vmatmul.mubr.f32.gmra.mrb[0].mxu0 %v1863
      %v2344 = vpop.f32.mrb[0].mxu0
      %v2345 = vadd.f32 %v1381, %v2344
      %v2346 = vpop.f32.mrb[0].mxu0
      %2347 = vmatprep.mubr.f32.mxu0 0.0
      %2348 = vmatmul.mubr.f32.gmra.mrb[0].mxu0 %v1865
      %v2349 = vpop.f32.mrb[0].mxu0
      %v2350 = vadd.f32 %v1386, %v2349
      %v2351 = vpop.f32.mrb[0].mxu0
      %2352 = vmatprep.mubr.f32.mxu0 0.0
      %2353 = vmatmul.mubr.f32.gmra.mrb[0].mxu0 %v1867
      %v2354 = vpop.f32.mrb[0].mxu0
      %v2355 = vadd.f32 %v1391, %v2354
      %v2356 = vpop.f32.mrb[0].mxu0
      %2357 = vmatprep.mubr.f32.mxu0 0.0
      %2358 = vmatmul.mubr.f32.gmra.mrb[0].mxu0 %v1869
      %v2359 = vpop.f32.mrb[0].mxu0
      %v2360 = vadd.f32 %v1396, %v2359
      %v2361 = vpop.f32.mrb[0].mxu0
      %2362 = vmatprep.mubr.f32.mxu0 0.0
      %2363 = vmatmul.mubr.f32.gmra.mrb[0].mxu0 %v1871
      %v2364 = vpop.f32.mrb[0].mxu0
      %v2365 = vadd.f32 %v1401, %v2364
      %v2366 = vpop.f32.mrb[0].mxu0
      %2367 = vmatprep.mubr.f32.mxu0 0.0
      %2368 = vmatmul.mubr.f32.gmra.mrb[0].mxu0 %v1873
      %v2369 = vpop.f32.mrb[0].mxu0
      %v2370 = vadd.f32 %v1406, %v2369
      %v2371 = vpop.f32.mrb[0].mxu0
      %2372 = vmatprep.mubr.f32.mxu0 0.0
      %2373 = vmatmul.mubr.f32.gmra.mrb[0].mxu0 %v1875
      %v2374 = vpop.f32.mrb[0].mxu0
      %v2375 = vadd.f32 %v1411, %v2374
      %v2376 = vpop.f32.mrb[0].mxu0
      %2377 = vmatprep.mubr.f32.mxu0 0.0
      %2378 = vmatmul.mubr.f32.gmra.mrb[0].mxu0 %v1877
      %v2379 = vpop.f32.mrb[0].mxu0
      %v2380 = vadd.f32 %v1416, %v2379
      %v2381 = vpop.f32.mrb[0].mxu0
      %2382 = vmatprep.mubr.f32.mxu0 0.0
      %2383 = vmatmul.mubr.f32.gmra.mrb[0].mxu0 %v1879
      %v2384 = vpop.f32.mrb[0].mxu0
      %v2385 = vadd.f32 %v1421, %v2384
      %v2386 = vpop.f32.mrb[0].mxu0
      %2387 = vmatprep.mubr.f32.mxu0 0.0
      %2388 = vmatmul.mubr.f32.gmra.mrb[0].mxu0 %v1881
      %v2389 = vpop.f32.mrb[0].mxu0
      %v2390 = vadd.f32 %v1426, %v2389
      %v2391 = vpop.f32.mrb[0].mxu0
      %2392 = vmatprep.mubr.f32.mxu0 0.0
      %2393 = vmatmul.mubr.f32.gmra.mrb[0].mxu0 %v1883
      %v2394 = vpop.f32.mrb[0].mxu0
      %v2395 = vadd.f32 %v1431, %v2394
      %v2396 = vpop.f32.mrb[0].mxu0
      %2397 = vmatprep.mubr.f32.mxu0 0.0
      %2398 = vmatmul.mubr.f32.gmra.mrb[0].mxu0 %v1885
      %v2399 = vpop.f32.mrb[0].mxu0
      %v2400 = vadd.f32 %v1436, %v2399
      %v2401 = vpop.f32.mrb[0].mxu0
      %2402 = vmatprep.mubr.f32.mxu0 0.0
      %2403 = vmatmul.mubr.f32.gmra.mrb[0].mxu0 %v1887
      %v2404 = vpop.f32.mrb[0].mxu0
      %v2405 = vadd.f32 %v1441, %v2404
      %v2406 = vpop.f32.mrb[0].mxu0
      %2407 = vmatprep.mubr.f32.mxu0 0.0
      %2408 = vmatmul.mubr.f32.gmra.mrb[0].mxu0 %v1889
      %v2409 = vpop.f32.mrb[0].mxu0
      %v2410 = vadd.f32 %v1446, %v2409
      %v2411 = vpop.f32.mrb[0].mxu0
      %2412 = vmatprep.mubr.f32.mxu0 0.0
      %2413 = vmatmul.mubr.f32.gmra.mrb[0].mxu0 %v1891
      %v2414 = vpop.f32.mrb[0].mxu0
      %v2415 = vadd.f32 %v1451, %v2414
      %v2416 = vpop.f32.mrb[0].mxu0
      %2417 = vmatprep.mubr.f32.mxu0 0.0
      %2418 = vmatmul.mubr.f32.gmra.mrb[0].mxu0 %v1893
      %v2419 = vpop.f32.mrb[0].mxu0
      %v2420 = vadd.f32 %v1456, %v2419
      %v2421 = vpop.f32.mrb[0].mxu0
      %2422 = vmatprep.mubr.f32.mxu0 0.0
      %2423 = vmatmul.mubr.f32.gmra.mrb[0].mxu0 %v1895
      %v2424 = vpop.f32.mrb[0].mxu0
      %v2425 = vadd.f32 %v1461, %v2424
      %v2426 = vpop.f32.mrb[0].mxu0
      %2427 = vmatprep.mubr.f32.mxu0 0.0
      %2428 = vmatmul.mubr.f32.gmra.mrb[0].mxu0 %v1897
      %v2429 = vpop.f32.mrb[0].mxu0
      %v2430 = vadd.f32 %v1466, %v2429
      %v2431 = vpop.f32.mrb[0].mxu0
      %2432 = vmatprep.mubr.f32.mxu0 0.0
      %2433 = vmatmul.mubr.f32.gmra.mrb[0].mxu0 %v1899
      %v2434 = vpop.f32.mrb[0].mxu0
      %v2435 = vadd.f32 %v1471, %v2434
      %v2436 = vpop.f32.mrb[0].mxu0
      %2437 = vmatprep.mubr.f32.mxu0 0.0
      %2438 = vmatmul.mubr.f32.gmra.mrb[0].mxu0 %v1901
      %v2439 = vpop.f32.mrb[0].mxu0
      %v2440 = vadd.f32 %v1476, %v2439
      %v2441 = vpop.f32.mrb[0].mxu0
      %2442 = vmatprep.mubr.f32.mxu0 0.0
      %2443 = vmatmul.mubr.f32.gmra.mrb[0].mxu0 %v1903
      %v2444 = vpop.f32.mrb[0].mxu0
      %v2445 = vadd.f32 %v1481, %v2444
      %v2446 = vpop.f32.mrb[0].mxu0
      %2447 = vmatprep.mubr.f32.mxu0 0.0
      %2448 = vmatmul.mubr.f32.gmra.mrb[0].mxu0 %v1905
      %v2449 = vpop.f32.mrb[0].mxu0
      %v2450 = vadd.f32 %v1486, %v2449
      %v2451 = vpop.f32.mrb[0].mxu0
      %2452 = vmatprep.mubr.f32.mxu0 0.0
      %2453 = vmatmul.mubr.f32.gmra.mrb[0].mxu0 %v1907
      %v2454 = vpop.f32.mrb[0].mxu0
      %v2455 = vadd.f32 %v1491, %v2454
      %v2456 = vpop.f32.mrb[0].mxu0
      %2457 = vmatprep.mubr.f32.mxu0 0.0
      %2458 = vmatmul.mubr.f32.gmra.mrb[0].mxu0 %v1909
      %v2459 = vpop.f32.mrb[0].mxu0
      %v2460 = vadd.f32 %v1496, %v2459
      %v2461 = vpop.f32.mrb[0].mxu0
      %2462 = vmatprep.mubr.f32.mxu0 0.0
      %2463 = vmatmul.mubr.f32.gmra.mrb[0].mxu0 %v1911
      %v2464 = vpop.f32.mrb[0].mxu0
      %v2465 = vadd.f32 %v1501, %v2464
      %v2466 = vpop.f32.mrb[0].mxu0
      %2467 = vmatprep.mubr.f32.mxu0 0.0
      %2468 = vmatmul.mubr.f32.gmra.mrb[0].mxu0 %v1913
      %v2469 = vpop.f32.mrb[0].mxu0
      %v2470 = vadd.f32 %v1506, %v2469
      %v2471 = vpop.f32.mrb[0].mxu0
      %2472 = vmatprep.mubr.f32.mxu0 0.0
      %2473 = vmatmul.mubr.f32.gmra.mrb[0].mxu0 %v1915
      %v2474 = vpop.f32.mrb[0].mxu0
      %v2475 = vadd.f32 %v1511, %v2474
      %v2476 = vpop.f32.mrb[0].mxu0
      %2477 = vmatprep.mubr.f32.mxu0 0.0
      %2478 = vmatmul.mubr.f32.gmra.mrb[0].mxu0 %v1917
      %v2479 = vpop.f32.mrb[0].mxu0
      %v2480 = vadd.f32 %v1516, %v2479
      %v2481 = vpop.f32.mrb[0].mxu0
      %2482 = vmatprep.mubr.f32.mxu0 0.0
      %2483 = vmatmul.mubr.f32.gmra.mrb[0].mxu0 %v1919
      %v2484 = vpop.f32.mrb[0].mxu0
      %v2485 = vadd.f32 %v1521, %v2484
      %v2486 = vpop.f32.mrb[0].mxu0
      %2487 = vmatprep.mubr.f32.mxu0 0.0
      %2488 = vmatmul.mubr.f32.gmra.mrb[0].mxu0 %v1921
      %v2489 = vpop.f32.mrb[0].mxu0
      %v2490 = vadd.f32 %v1526, %v2489
      %v2491 = vpop.f32.mrb[0].mxu0
      %2492 = vmatprep.mubr.f32.mxu0 0.0
      %2493 = vmatmul.mubr.f32.gmra.mrb[0].mxu0 %v1923
      %v2494 = vpop.f32.mrb[0].mxu0
      %v2495 = vadd.f32 %v1531, %v2494
      %v2496 = vpop.f32.mrb[0].mxu0
      %2497 = vmatprep.mubr.f32.mxu0 0.0
      %2498 = vmatmul.mubr.f32.gmra.mrb[0].mxu0 %v1925
      %v2499 = vpop.f32.mrb[0].mxu0
      %v2500 = vadd.f32 %v1536, %v2499
      %v2501 = vpop.f32.mrb[0].mxu0
      %2502 = vmatprep.mubr.f32.mxu0 0.0
      %2503 = vmatmul.mubr.f32.gmra.mrb[0].mxu0 %v1927
      %v2504 = vpop.f32.mrb[0].mxu0
      %v2505 = vadd.f32 %v1541, %v2504
      %v2506 = vpop.f32.mrb[0].mxu0
      %2507 = vmatprep.mubr.f32.mxu0 0.0
      %2508 = vmatmul.mubr.f32.gmra.mrb[0].mxu0 %v1929
      %v2509 = vpop.f32.mrb[0].mxu0
      %v2510 = vadd.f32 %v1546, %v2509
      %v2511 = vpop.f32.mrb[0].mxu0
      %2512 = vmatprep.mubr.f32.mxu0 0.0
      %2513 = vmatmul.mubr.f32.gmra.mrb[0].mxu0 %v1931
      %v2514 = vpop.f32.mrb[0].mxu0
      %v2515 = vadd.f32 %v1551, %v2514
      %v2516 = vpop.f32.mrb[0].mxu0
      %2517 = vmatprep.mubr.f32.mxu0 0.0
      %2518 = vmatmul.mubr.f32.gmra.mrb[0].mxu0 %v1933
      %v2519 = vpop.f32.mrb[0].mxu0
      %v2520 = vadd.f32 %v1556, %v2519
      %v2521 = vpop.f32.mrb[0].mxu0
      %2522 = vmatprep.mubr.f32.mxu0 0.0
      %2523 = vmatmul.mubr.f32.gmra.mrb[0].mxu0 %v1935
      %v2524 = vpop.f32.mrb[0].mxu0
      %v2525 = vadd.f32 %v1561, %v2524
      %v2526 = vpop.f32.mrb[0].mxu0
      %2527 = vmatprep.mubr.f32.mxu0 0.0
      %2528 = vmatmul.mubr.f32.gmra.mrb[0].mxu0 %v1937
      %v2529 = vpop.f32.mrb[0].mxu0
      %v2530 = vadd.f32 %v1566, %v2529
      %v2531 = vpop.f32.mrb[0].mxu0
      %2532 = vmatprep.mubr.f32.mxu0 0.0
      %2533 = vmatmul.mubr.f32.gmra.mrb[0].mxu0 %v1939
      %v2534 = vpop.f32.mrb[0].mxu0
      %v2535 = vadd.f32 %v1571, %v2534
      %v2536 = vpop.f32.mrb[0].mxu0
      %2537 = vmatprep.mubr.f32.mxu0 0.0
      %2538 = vmatmul.mubr.f32.gmra.mrb[0].mxu0 %v1941
      %v2539 = vpop.f32.mrb[0].mxu0
      %v2540 = vadd.f32 %v1576, %v2539
      %v2541 = vpop.f32.mrb[0].mxu0
      %2542 = vmatprep.mubr.f32.mxu0 0.0
      %2543 = vmatmul.mubr.f32.gmra.mrb[0].mxu0 %v1943
      %v2544 = vpop.f32.mrb[0].mxu0
      %v2545 = vadd.f32 %v1581, %v2544
      %v2546 = vpop.f32.mrb[0].mxu0
      %2547 = vmatprep.mubr.f32.mxu0 0.0
      %2548 = vmatmul.mubr.f32.gmra.mrb[0].mxu0 %v1945
      %v2549 = vpop.f32.mrb[0].mxu0
      %v2550 = vadd.f32 %v1586, %v2549
      %v2551 = vpop.f32.mrb[0].mxu0
      %2552 = vmatprep.mubr.f32.mxu0 0.0
      %2553 = vmatmul.mubr.f32.gmra.mrb[0].mxu0 %v1947
      %v2554 = vpop.f32.mrb[0].mxu0
      %v2555 = vadd.f32 %v1591, %v2554
      %v2556 = vpop.f32.mrb[0].mxu0
      %2557 = vmatprep.mubr.f32.mxu0 0.0
      %2558 = vmatmul.mubr.f32.gmra.mrb[0].mxu0 %v1949
      %v2559 = vpop.f32.mrb[0].mxu0
      %v2560 = vadd.f32 %v1596, %v2559
      %v2561 = vpop.f32.mrb[0].mxu0
      %2562 = vmatprep.mubr.f32.mxu0 0.0
      %2563 = vmatmul.mubr.f32.gmra.mrb[0].mxu0 %v1951
      %v2564 = vpop.f32.mrb[0].mxu0
      %v2565 = vadd.f32 %v1601, %v2564
      %v2566 = vpop.f32.mrb[0].mxu0
      %2567 = vmatprep.mubr.f32.mxu0 0.0
      %2568 = vmatmul.mubr.f32.gmra.mrb[0].mxu0 %v1953
      %v2569 = vpop.f32.mrb[0].mxu0
      %v2570 = vadd.f32 %v1606, %v2569
      %v2571 = vpop.f32.mrb[0].mxu0
      %2572 = vmatprep.mubr.f32.mxu0 0.0
      %2573 = vmatmul.mubr.f32.gmra.mrb[0].mxu0 %v1955
      %v2574 = vpop.f32.mrb[0].mxu0
      %v2575 = vadd.f32 %v1611, %v2574
      %v2576 = vpop.f32.mrb[0].mxu0
      %2577 = vmatprep.mubr.f32.mxu0 0.0
      %2578 = vmatmul.mubr.f32.gmra.mrb[0].mxu0 %v1957
      %v2579 = vpop.f32.mrb[0].mxu0
      %v2580 = vadd.f32 %v1616, %v2579
      %v2581 = vpop.f32.mrb[0].mxu0
      %2582 = vmatprep.mubr.f32.mxu0 0.0
      %2583 = vmatmul.mubr.f32.gmra.mrb[0].mxu0 %v1959
      %v2584 = vpop.f32.mrb[0].mxu0
      %v2585 = vadd.f32 %v1621, %v2584
      %v2586 = vpop.f32.mrb[0].mxu0
      %2587 = vmatprep.mubr.f32.mxu0 0.0
      %2588 = vmatmul.mubr.f32.gmra.mrb[0].mxu0 %v1961
      %v2589 = vpop.f32.mrb[0].mxu0
      %v2590 = vadd.f32 %v1626, %v2589
      %v2591 = vpop.f32.mrb[0].mxu0
      %2592 = vmatprep.mubr.f32.mxu0 0.0
      %2593 = vmatmul.mubr.f32.gmra.mrb[0].mxu0 %v1963
      %v2594 = vpop.f32.mrb[0].mxu0
      %v2595 = vadd.f32 %v1631, %v2594
      %v2596 = vpop.f32.mrb[0].mxu0
      %2597 = vmatprep.mubr.f32.mxu0 0.0
      %2598 = vmatmul.mubr.f32.gmra.mrb[0].mxu0 %v1965
      %v2599 = vpop.f32.mrb[0].mxu0
      %v2600 = vadd.f32 %v1636, %v2599
      %v2601 = vpop.f32.mrb[0].mxu0
      %2602 = vmatprep.mubr.f32.mxu0 0.0
      %2603 = vmatmul.mubr.f32.gmra.mrb[0].mxu0 %v1967
      %v2604 = vpop.f32.mrb[0].mxu0
      %v2605 = vadd.f32 %v1641, %v2604
      %v2606 = vpop.f32.mrb[0].mxu0
      %2607 = vmatprep.mubr.f32.mxu0 0.0
      %2608 = vmatmul.mubr.f32.gmra.mrb[0].mxu0 %v1969
      %v2609 = vpop.f32.mrb[0].mxu0
      %v2610 = vadd.f32 %v1646, %v2609
      %v2611 = vpop.f32.mrb[0].mxu0
      %2612 = vmatprep.mubr.f32.mxu0 0.0
      %2613 = vmatmul.mubr.f32.gmra.mrb[0].mxu0 %v1971
      %v2614 = vpop.f32.mrb[0].mxu0
      %v2615 = vadd.f32 %v1651, %v2614
      %v2616 = vpop.f32.mrb[0].mxu0
      %2617 = vmatprep.mubr.f32.mxu0 0.0
      %2618 = vmatmul.mubr.f32.gmra.mrb[0].mxu0 %v1973
      %v2619 = vpop.f32.mrb[0].mxu0
      %v2620 = vadd.f32 %v1656, %v2619
      %v2621 = vpop.f32.mrb[0].mxu0
      %2622 = vmatprep.mubr.f32.mxu0 0.0
      %2623 = vmatmul.mubr.f32.gmra.mrb[0].mxu0 %v1975
      %v2624 = vpop.f32.mrb[0].mxu0
      %v2625 = vadd.f32 %v1661, %v2624
      %v2626 = vpop.f32.mrb[0].mxu0
      %2627 = vmatprep.mubr.f32.mxu0 0.0
      %2628 = vmatmul.mubr.f32.gmra.mrb[0].mxu0 %v1977
      %v2629 = vpop.f32.mrb[0].mxu0
      %v2630 = vadd.f32 %v1666, %v2629
      %v2631 = vpop.f32.mrb[0].mxu0
      %2632 = vmatprep.mubr.f32.mxu0 0.0
      %2633 = vmatmul.mubr.f32.gmra.mrb[0].mxu0 %v1979
      %v2634 = vpop.f32.mrb[0].mxu0
      %v2635 = vadd.f32 %v1671, %v2634
      %v2636 = vpop.f32.mrb[0].mxu0
      %2637 = vmatprep.mubr.f32.mxu0 0.0
      %2638 = vmatmul.mubr.f32.gmra.mrb[0].mxu0 %v1981
      %v2639 = vpop.f32.mrb[0].mxu0
      %v2640 = vadd.f32 %v1676, %v2639
      %v2641 = vpop.f32.mrb[0].mxu0
      %2642 = vmatprep.mubr.f32.mxu0 0.0
      %2643 = vmatmul.mubr.f32.gmra.mrb[0].mxu0 %v1983
      %v2644 = vpop.f32.mrb[0].mxu0
      %v2645 = vadd.f32 %v1681, %v2644
      %v2646 = vpop.f32.mrb[0].mxu0
      %2647 = vmatprep.mubr.f32.mxu0 0.0
      %2648 = vmatmul.mubr.f32.gmra.mrb[0].mxu0 %v1985
      %v2649 = vpop.f32.mrb[0].mxu0
      %v2650 = vadd.f32 %v1686, %v2649
      %v2651 = vpop.f32.mrb[0].mxu0
      %2652 = vmatprep.mubr.f32.mxu0 0.0
      %2653 = vmatmul.mubr.f32.gmra.mrb[0].mxu0 %v1987
      %v2654 = vpop.f32.mrb[0].mxu0
      %v2655 = vadd.f32 %v1691, %v2654
      %v2656 = vpop.f32.mrb[0].mxu0
      %2657 = vmatprep.mubr.f32.mxu0 0.0
      %2658 = vmatmul.mubr.f32.gmra.mrb[0].mxu0 %v1989
      %v2659 = vpop.f32.mrb[0].mxu0
      %v2660 = vadd.f32 %v1696, %v2659
      %v2661 = vpop.f32.mrb[0].mxu0
      %2662 = vmatprep.mubr.f32.mxu0 0.0
      %2663 = vmatmul.mubr.f32.gmra.mrb[0].mxu0 %v1991
      %v2664 = vpop.f32.mrb[0].mxu0
      %v2665 = vadd.f32 %v1701, %v2664
      %v2666 = vpop.f32.mrb[0].mxu0
      %2667 = vmatprep.mubr.f32.mxu0 0.0
      %2668 = vmatmul.mubr.f32.gmra.mrb[0].mxu0 %v1993
      %v2669 = vpop.f32.mrb[0].mxu0
      %v2670 = vadd.f32 %v1706, %v2669
      %v2671 = vpop.f32.mrb[0].mxu0
      %2672 = vmatprep.mubr.f32.mxu0 0.0
      %2673 = vmatmul.mubr.f32.gmra.mrb[0].mxu0 %v1995
      %v2674 = vpop.f32.mrb[0].mxu0
      %v2675 = vadd.f32 %v1711, %v2674
      %v2676 = vpop.f32.mrb[0].mxu0
      %2677 = vmatprep.mubr.f32.mxu0 0.0
      %2678 = vmatmul.mubr.f32.gmra.mrb[0].mxu0 %v1997
      %v2679 = vpop.f32.mrb[0].mxu0
      %v2680 = vadd.f32 %v1716, %v2679
      %v2681 = vpop.f32.mrb[0].mxu0
      %2682 = vmatprep.mubr.f32.mxu0 0.0
      %2683 = vmatmul.mubr.f32.gmra.mrb[0].mxu0 %v1999
      %v2684 = vpop.f32.mrb[0].mxu0
      %v2685 = vadd.f32 %v1721, %v2684
      %v2686 = vpop.f32.mrb[0].mxu0
      %2687 = vmatprep.mubr.f32.mxu0 0.0
      %2688 = vmatmul.mubr.f32.gmra.mrb[0].mxu0 %v2001
      %v2689 = vpop.f32.mrb[0].mxu0
      %v2690 = vadd.f32 %v1726, %v2689
      %v2691 = vpop.f32.mrb[0].mxu0
      %2692 = vmatprep.mubr.f32.mxu0 0.0
      %2693 = vmatmul.mubr.f32.gmra.mrb[0].mxu0 %v2003
      %v2694 = vpop.f32.mrb[0].mxu0
      %v2695 = vadd.f32 %v1731, %v2694
      %v2696 = vpop.f32.mrb[0].mxu0
      %2697 = vmatprep.mubr.f32.mxu0 0.0
      %2698 = vmatmul.mubr.f32.gmra.mrb[0].mxu0 %v2005
      %v2699 = vpop.f32.mrb[0].mxu0
      %v2700 = vadd.f32 %v1736, %v2699
      %v2701 = vpop.f32.mrb[0].mxu0
      %2702 = vmatprep.mubr.f32.mxu0 0.0
      %2703 = vmatmul.mubr.f32.gmra.mrb[0].mxu0 %v2007
      %v2704 = vpop.f32.mrb[0].mxu0
      %v2705 = vadd.f32 %v1741, %v2704
      %v2706 = vpop.f32.mrb[0].mxu0
      %2707 = vmatprep.mubr.f32.mxu0 0.0
      %2708 = vmatmul.mubr.f32.gmra.mrb[0].mxu0 %v2009
      %v2709 = vpop.f32.mrb[0].mxu0
      %v2710 = vadd.f32 %v1746, %v2709
      %v2711 = vpop.f32.mrb[0].mxu0
      %2712 = vmatprep.mubr.f32.mxu0 0.0
      %2713 = vmatmul.mubr.f32.gmra.mrb[0].mxu0 %v2011
      %v2714 = vpop.f32.mrb[0].mxu0
      %v2715 = vadd.f32 %v1751, %v2714
      %v2716 = vpop.f32.mrb[0].mxu0
      %2717 = vmatprep.mubr.f32.mxu0 0.0
      %2718 = vmatmul.mubr.f32.gmra.mrb[0].mxu0 %v2013
      %v2719 = vpop.f32.mrb[0].mxu0
      %v2720 = vadd.f32 %v1756, %v2719
      %v2721 = vpop.f32.mrb[0].mxu0
      %2722 = vdwg.mxu0
      %vm2723 = vcmask 1045504
      %v2724 = vrot.slane %v171, 2
      %v2725 = vrot.slane %v172, 2
      %v2726 = vsel %vm2723, %v2724, %v2725
      %v2727 = vrot.slane %v173, 2
      %v2728 = vsel %vm2723, %v2725, %v2727
      %v2729 = vrot.slane %v174, 2
      %v2730 = vsel %vm2723, %v2727, %v2729
      %v2731 = vrot.slane %v175, 2
      %v2732 = vsel %vm2723, %v2729, %v2731
      %v2733 = vrot.slane %v176, 2
      %v2734 = vrot.slane %v177, 2
      %v2735 = vsel %vm2723, %v2733, %v2734
      %v2736 = vrot.slane %v178, 2
      %v2737 = vsel %vm2723, %v2734, %v2736
      %v2738 = vrot.slane %v179, 2
      %v2739 = vsel %vm2723, %v2736, %v2738
      %v2740 = vrot.slane %v180, 2
      %v2741 = vsel %vm2723, %v2738, %v2740
      %v2742 = vrot.slane %v181, 2
      %v2743 = vrot.slane %v182, 2
      %v2744 = vsel %vm2723, %v2742, %v2743
      %v2745 = vrot.slane %v183, 2
      %v2746 = vsel %vm2723, %v2743, %v2745
      %v2747 = vrot.slane %v184, 2
      %v2748 = vsel %vm2723, %v2745, %v2747
      %v2749 = vrot.slane %v185, 2
      %v2750 = vsel %vm2723, %v2747, %v2749
      %v2751 = vrot.slane %v186, 2
      %v2752 = vrot.slane %v187, 2
      %v2753 = vsel %vm2723, %v2751, %v2752
      %v2754 = vrot.slane %v188, 2
      %v2755 = vsel %vm2723, %v2752, %v2754
      %v2756 = vrot.slane %v189, 2
      %v2757 = vsel %vm2723, %v2754, %v2756
      %v2758 = vrot.slane %v190, 2
      %v2759 = vsel %vm2723, %v2756, %v2758
      %v2760 = vrot.slane %v191, 2
      %v2761 = vrot.slane %v192, 2
      %v2762 = vsel %vm2723, %v2760, %v2761
      %v2763 = vrot.slane %v193, 2
      %v2764 = vsel %vm2723, %v2761, %v2763
      %v2765 = vrot.slane %v194, 2
      %v2766 = vsel %vm2723, %v2763, %v2765
      %v2767 = vrot.slane %v195, 2
      %v2768 = vsel %vm2723, %v2765, %v2767
      %v2769 = vrot.slane %v196, 2
      %v2770 = vrot.slane %v197, 2
      %v2771 = vsel %vm2723, %v2769, %v2770
      %v2772 = vrot.slane %v198, 2
      %v2773 = vsel %vm2723, %v2770, %v2772
      %v2774 = vrot.slane %v199, 2
      %v2775 = vsel %vm2723, %v2772, %v2774
      %v2776 = vrot.slane %v200, 2
      %v2777 = vsel %vm2723, %v2774, %v2776
      %v2778 = vrot.slane %v201, 2
      %v2779 = vrot.slane %v202, 2
      %v2780 = vsel %vm2723, %v2778, %v2779
      %v2781 = vrot.slane %v203, 2
      %v2782 = vsel %vm2723, %v2779, %v2781
      %v2783 = vrot.slane %v204, 2
      %v2784 = vsel %vm2723, %v2781, %v2783
      %v2785 = vrot.slane %v205, 2
      %v2786 = vsel %vm2723, %v2783, %v2785
      %v2787 = vrot.slane %v206, 2
      %v2788 = vrot.slane %v207, 2
      %v2789 = vsel %vm2723, %v2787, %v2788
      %v2790 = vrot.slane %v208, 2
      %v2791 = vsel %vm2723, %v2788, %v2790
      %v2792 = vrot.slane %v209, 2
      %v2793 = vsel %vm2723, %v2790, %v2792
      %v2794 = vrot.slane %v210, 2
      %v2795 = vsel %vm2723, %v2792, %v2794
      %v2796 = vrot.slane %v211, 2
      %v2797 = vrot.slane %v212, 2
      %v2798 = vsel %vm2723, %v2796, %v2797
      %v2799 = vrot.slane %v213, 2
      %v2800 = vsel %vm2723, %v2797, %v2799
      %v2801 = vrot.slane %v214, 2
      %v2802 = vsel %vm2723, %v2799, %v2801
      %v2803 = vrot.slane %v215, 2
      %v2804 = vsel %vm2723, %v2801, %v2803
      %v2805 = vrot.slane %v216, 2
      %v2806 = vrot.slane %v217, 2
      %v2807 = vsel %vm2723, %v2805, %v2806
      %v2808 = vrot.slane %v218, 2
      %v2809 = vsel %vm2723, %v2806, %v2808
      %v2810 = vrot.slane %v219, 2
      %v2811 = vsel %vm2723, %v2808, %v2810
      %v2812 = vrot.slane %v220, 2
      %v2813 = vsel %vm2723, %v2810, %v2812
      %v2814 = vrot.slane %v221, 2
      %v2815 = vrot.slane %v222, 2
      %v2816 = vsel %vm2723, %v2814, %v2815
      %v2817 = vrot.slane %v223, 2
      %v2818 = vsel %vm2723, %v2815, %v2817
      %v2819 = vrot.slane %v224, 2
      %v2820 = vsel %vm2723, %v2817, %v2819
      %v2821 = vrot.slane %v225, 2
      %v2822 = vsel %vm2723, %v2819, %v2821
      %v2823 = vrot.slane %v226, 2
      %v2824 = vrot.slane %v227, 2
      %v2825 = vsel %vm2723, %v2823, %v2824
      %v2826 = vrot.slane %v228, 2
      %v2827 = vsel %vm2723, %v2824, %v2826
      %v2828 = vrot.slane %v229, 2
      %v2829 = vsel %vm2723, %v2826, %v2828
      %v2830 = vrot.slane %v230, 2
      %v2831 = vsel %vm2723, %v2828, %v2830
      %v2832 = vrot.slane %v231, 2
      %v2833 = vrot.slane %v232, 2
      %v2834 = vsel %vm2723, %v2832, %v2833
      %v2835 = vrot.slane %v233, 2
      %v2836 = vsel %vm2723, %v2833, %v2835
      %v2837 = vrot.slane %v234, 2
      %v2838 = vsel %vm2723, %v2835, %v2837
      %v2839 = vrot.slane %v235, 2
      %v2840 = vsel %vm2723, %v2837, %v2839
      %v2841 = vrot.slane %v236, 2
      %v2842 = vrot.slane %v237, 2
      %v2843 = vsel %vm2723, %v2841, %v2842
      %v2844 = vrot.slane %v238, 2
      %v2845 = vsel %vm2723, %v2842, %v2844
      %v2846 = vrot.slane %v239, 2
      %v2847 = vsel %vm2723, %v2844, %v2846
      %v2848 = vrot.slane %v240, 2
      %v2849 = vsel %vm2723, %v2846, %v2848
      %v2850 = vrot.slane %v241, 2
      %v2851 = vrot.slane %v242, 2
      %v2852 = vsel %vm2723, %v2850, %v2851
      %v2853 = vrot.slane %v243, 2
      %v2854 = vsel %vm2723, %v2851, %v2853
      %v2855 = vrot.slane %v244, 2
      %v2856 = vsel %vm2723, %v2853, %v2855
      %v2857 = vrot.slane %v245, 2
      %v2858 = vsel %vm2723, %v2855, %v2857
      %v2859 = vrot.slane %v246, 2
      %v2860 = vrot.slane %v247, 2
      %v2861 = vsel %vm2723, %v2859, %v2860
      %v2862 = vrot.slane %v248, 2
      %v2863 = vsel %vm2723, %v2860, %v2862
      %v2864 = vrot.slane %v249, 2
      %v2865 = vsel %vm2723, %v2862, %v2864
      %v2866 = vrot.slane %v250, 2
      %v2867 = vsel %vm2723, %v2864, %v2866
      %v2868 = vrot.slane %v251, 2
      %v2869 = vrot.slane %v252, 2
      %v2870 = vsel %vm2723, %v2868, %v2869
      %v2871 = vrot.slane %v253, 2
      %v2872 = vsel %vm2723, %v2869, %v2871
      %v2873 = vrot.slane %v254, 2
      %v2874 = vsel %vm2723, %v2871, %v2873
      %v2875 = vrot.slane %v255, 2
      %v2876 = vsel %vm2723, %v2873, %v2875
      %v2877 = vrot.slane %v256, 2
      %v2878 = vrot.slane %v257, 2
      %v2879 = vsel %vm2723, %v2877, %v2878
      %v2880 = vrot.slane %v258, 2
      %v2881 = vsel %vm2723, %v2878, %v2880
      %v2882 = vrot.slane %v259, 2
      %v2883 = vsel %vm2723, %v2880, %v2882
      %v2884 = vrot.slane %v260, 2
      %v2885 = vsel %vm2723, %v2882, %v2884
      %v2886 = vrot.slane %v261, 2
      %v2887 = vrot.slane %v262, 2
      %v2888 = vsel %vm2723, %v2886, %v2887
      %v2889 = vrot.slane %v263, 2
      %v2890 = vsel %vm2723, %v2887, %v2889
      %v2891 = vrot.slane %v264, 2
      %v2892 = vsel %vm2723, %v2889, %v2891
      %v2893 = vrot.slane %v265, 2
      %v2894 = vsel %vm2723, %v2891, %v2893
      %v2895 = vrot.slane %v266, 2
      %v2896 = vrot.slane %v267, 2
      %v2897 = vsel %vm2723, %v2895, %v2896
      %v2898 = vrot.slane %v268, 2
      %v2899 = vsel %vm2723, %v2896, %v2898
      %v2900 = vrot.slane %v269, 2
      %v2901 = vsel %vm2723, %v2898, %v2900
      %v2902 = vrot.slane %v270, 2
      %v2903 = vsel %vm2723, %v2900, %v2902
      %v2904 = vrot.slane %v271, 2
      %v2905 = vrot.slane %v272, 2
      %v2906 = vsel %vm2723, %v2904, %v2905
      %v2907 = vrot.slane %v273, 2
      %v2908 = vsel %vm2723, %v2905, %v2907
      %v2909 = vrot.slane %v274, 2
      %v2910 = vsel %vm2723, %v2907, %v2909
      %v2911 = vrot.slane %v275, 2
      %v2912 = vsel %vm2723, %v2909, %v2911
      %v2913 = vrot.slane %v276, 2
      %v2914 = vrot.slane %v277, 2
      %v2915 = vsel %vm2723, %v2913, %v2914
      %v2916 = vrot.slane %v278, 2
      %v2917 = vsel %vm2723, %v2914, %v2916
      %v2918 = vrot.slane %v279, 2
      %v2919 = vsel %vm2723, %v2916, %v2918
      %v2920 = vrot.slane %v280, 2
      %v2921 = vsel %vm2723, %v2918, %v2920
      %v2922 = vrot.slane %v281, 2
      %v2923 = vrot.slane %v282, 2
      %v2924 = vsel %vm2723, %v2922, %v2923
      %v2925 = vrot.slane %v283, 2
      %v2926 = vsel %vm2723, %v2923, %v2925
      %v2927 = vrot.slane %v284, 2
      %v2928 = vsel %vm2723, %v2925, %v2927
      %v2929 = vrot.slane %v285, 2
      %v2930 = vsel %vm2723, %v2927, %v2929
      %v2931 = vrot.slane %v286, 2
      %v2932 = vrot.slane %v287, 2
      %v2933 = vsel %vm2723, %v2931, %v2932
      %v2934 = vrot.slane %v288, 2
      %v2935 = vsel %vm2723, %v2932, %v2934
      %v2936 = vrot.slane %v289, 2
      %v2937 = vsel %vm2723, %v2934, %v2936
      %v2938 = vrot.slane %v290, 2
      %v2939 = vsel %vm2723, %v2936, %v2938
      %v2940 = vrot.slane %v291, 2
      %v2941 = vrot.slane %v292, 2
      %v2942 = vsel %vm2723, %v2940, %v2941
      %v2943 = vrot.slane %v293, 2
      %v2944 = vsel %vm2723, %v2941, %v2943
      %v2945 = vrot.slane %v294, 2
      %v2946 = vsel %vm2723, %v2943, %v2945
      %v2947 = vrot.slane %v295, 2
      %v2948 = vsel %vm2723, %v2945, %v2947
      %v2949 = vrot.slane %v296, 2
      %v2950 = vrot.slane %v297, 2
      %v2951 = vsel %vm2723, %v2949, %v2950
      %v2952 = vrot.slane %v298, 2
      %v2953 = vsel %vm2723, %v2950, %v2952
      %v2954 = vrot.slane %v299, 2
      %v2955 = vsel %vm2723, %v2952, %v2954
      %v2956 = vrot.slane %v300, 2
      %v2957 = vsel %vm2723, %v2954, %v2956
      %v2958 = vrot.slane %v301, 2
      %v2959 = vrot.slane %v302, 2
      %v2960 = vsel %vm2723, %v2958, %v2959
      %v2961 = vrot.slane %v303, 2
      %v2962 = vsel %vm2723, %v2959, %v2961
      %v2963 = vrot.slane %v304, 2
      %v2964 = vsel %vm2723, %v2961, %v2963
      %v2965 = vrot.slane %v305, 2
      %v2966 = vsel %vm2723, %v2963, %v2965
      %v2967 = vrot.slane %v306, 2
      %v2968 = vrot.slane %v307, 2
      %v2969 = vsel %vm2723, %v2967, %v2968
      %v2970 = vrot.slane %v308, 2
      %v2971 = vsel %vm2723, %v2968, %v2970
      %v2972 = vrot.slane %v309, 2
      %v2973 = vsel %vm2723, %v2970, %v2972
      %v2974 = vrot.slane %v310, 2
      %v2975 = vsel %vm2723, %v2972, %v2974
      %v2976 = vrot.slane %v311, 2
      %v2977 = vrot.slane %v312, 2
      %v2978 = vsel %vm2723, %v2976, %v2977
      %v2979 = vrot.slane %v313, 2
      %v2980 = vsel %vm2723, %v2977, %v2979
      %v2981 = vrot.slane %v314, 2
      %v2982 = vsel %vm2723, %v2979, %v2981
      %v2983 = vrot.slane %v315, 2
      %v2984 = vsel %vm2723, %v2981, %v2983
      %v2985 = vrot.slane %v316, 2
      %v2986 = vrot.slane %v317, 2
      %v2987 = vsel %vm2723, %v2985, %v2986
      %v2988 = vrot.slane %v318, 2
      %v2989 = vsel %vm2723, %v2986, %v2988
      %v2990 = vrot.slane %v319, 2
      %v2991 = vsel %vm2723, %v2988, %v2990
      %v2992 = vrot.slane %v320, 2
      %v2993 = vsel %vm2723, %v2990, %v2992
      %v2994 = vrot.slane %v321, 2
      %v2995 = vrot.slane %v322, 2
      %v2996 = vsel %vm2723, %v2994, %v2995
      %v2997 = vrot.slane %v323, 2
      %v2998 = vsel %vm2723, %v2995, %v2997
      %v2999 = vrot.slane %v324, 2
      %v3000 = vsel %vm2723, %v2997, %v2999
      %v3001 = vrot.slane %v325, 2
      %v3002 = vsel %vm2723, %v2999, %v3001
      %v3003 = vrot.slane %v326, 2
      %v3004 = vrot.slane %v327, 2
      %v3005 = vsel %vm2723, %v3003, %v3004
      %v3006 = vrot.slane %v328, 2
      %v3007 = vsel %vm2723, %v3004, %v3006
      %v3008 = vrot.slane %v329, 2
      %v3009 = vsel %vm2723, %v3006, %v3008
      %v3010 = vrot.slane %v330, 2
      %v3011 = vsel %vm2723, %v3008, %v3010
      %s3012 = scalar_lea.vmem %s1, 8
      %v3013 = vld [vmem:[%s3012] sm:$0xf]
      %v3014 = vsel %vm793, %v2726, 0
      %v3016 = vsel %vm793, %v2728, 0
      %v3018 = vsel %vm793, %v2730, 0
      %v3020 = vsel %vm793, %v2732, 0
      %v3022 = vsel %vm793, %v2735, 0
      %v3024 = vsel %vm793, %v2737, 0
      %v3026 = vsel %vm793, %v2739, 0
      %v3028 = vsel %vm793, %v2741, 0
      %v3030 = vsel %vm793, %v2744, 0
      %v3032 = vsel %vm793, %v2746, 0
      %v3034 = vsel %vm793, %v2748, 0
      %v3036 = vsel %vm793, %v2750, 0
      %v3038 = vsel %vm793, %v2753, 0
      %v3040 = vsel %vm793, %v2755, 0
      %v3042 = vsel %vm793, %v2757, 0
      %v3044 = vsel %vm793, %v2759, 0
      %v3046 = vsel %vm793, %v2762, 0
      %v3048 = vsel %vm793, %v2764, 0
      %v3050 = vsel %vm793, %v2766, 0
      %v3052 = vsel %vm793, %v2768, 0
      %v3054 = vsel %vm793, %v2771, 0
      %v3056 = vsel %vm793, %v2773, 0
      %v3058 = vsel %vm793, %v2775, 0
      %v3060 = vsel %vm793, %v2777, 0
      %v3062 = vsel %vm793, %v2780, 0
      %v3064 = vsel %vm793, %v2782, 0
      %v3066 = vsel %vm793, %v2784, 0
      %v3068 = vsel %vm793, %v2786, 0
      %v3070 = vsel %vm793, %v2789, 0
      %v3072 = vsel %vm793, %v2791, 0
      %v3074 = vsel %vm793, %v2793, 0
      %v3076 = vsel %vm793, %v2795, 0
      %v3078 = vsel %vm793, %v2798, 0
      %v3080 = vsel %vm793, %v2800, 0
      %v3082 = vsel %vm793, %v2802, 0
      %v3084 = vsel %vm793, %v2804, 0
      %v3086 = vsel %vm793, %v2807, 0
      %v3088 = vsel %vm793, %v2809, 0
      %v3090 = vsel %vm793, %v2811, 0
      %v3092 = vsel %vm793, %v2813, 0
      %v3094 = vsel %vm793, %v2816, 0
      %v3096 = vsel %vm793, %v2818, 0
      %v3098 = vsel %vm793, %v2820, 0
      %v3100 = vsel %vm793, %v2822, 0
      %v3102 = vsel %vm793, %v2825, 0
      %v3104 = vsel %vm793, %v2827, 0
      %v3106 = vsel %vm793, %v2829, 0
      %v3108 = vsel %vm793, %v2831, 0
      %v3110 = vsel %vm793, %v2834, 0
      %v3112 = vsel %vm793, %v2836, 0
      %v3114 = vsel %vm793, %v2838, 0
      %v3116 = vsel %vm793, %v2840, 0
      %v3118 = vsel %vm793, %v2843, 0
      %v3120 = vsel %vm793, %v2845, 0
      %v3122 = vsel %vm793, %v2847, 0
      %v3124 = vsel %vm793, %v2849, 0
      %v3126 = vsel %vm793, %v2852, 0
      %v3128 = vsel %vm793, %v2854, 0
      %v3130 = vsel %vm793, %v2856, 0
      %v3132 = vsel %vm793, %v2858, 0
      %v3134 = vsel %vm793, %v2861, 0
      %v3136 = vsel %vm793, %v2863, 0
      %v3138 = vsel %vm793, %v2865, 0
      %v3140 = vsel %vm793, %v2867, 0
      %v3142 = vsel %vm793, %v2870, 0
      %v3144 = vsel %vm793, %v2872, 0
      %v3146 = vsel %vm793, %v2874, 0
      %v3148 = vsel %vm793, %v2876, 0
      %v3150 = vsel %vm793, %v2879, 0
      %v3152 = vsel %vm793, %v2881, 0
      %v3154 = vsel %vm793, %v2883, 0
      %v3156 = vsel %vm793, %v2885, 0
      %v3158 = vsel %vm793, %v2888, 0
      %v3160 = vsel %vm793, %v2890, 0
      %v3162 = vsel %vm793, %v2892, 0
      %v3164 = vsel %vm793, %v2894, 0
      %v3166 = vsel %vm793, %v2897, 0
      %v3168 = vsel %vm793, %v2899, 0
      %v3170 = vsel %vm793, %v2901, 0
      %v3172 = vsel %vm793, %v2903, 0
      %v3174 = vsel %vm793, %v2906, 0
      %v3176 = vsel %vm793, %v2908, 0
      %v3178 = vsel %vm793, %v2910, 0
      %v3180 = vsel %vm793, %v2912, 0
      %v3182 = vsel %vm793, %v2915, 0
      %v3184 = vsel %vm793, %v2917, 0
      %v3186 = vsel %vm793, %v2919, 0
      %v3188 = vsel %vm793, %v2921, 0
      %v3190 = vsel %vm793, %v2924, 0
      %v3192 = vsel %vm793, %v2926, 0
      %v3194 = vsel %vm793, %v2928, 0
      %v3196 = vsel %vm793, %v2930, 0
      %v3198 = vsel %vm793, %v2933, 0
      %v3200 = vsel %vm793, %v2935, 0
      %v3202 = vsel %vm793, %v2937, 0
      %v3204 = vsel %vm793, %v2939, 0
      %v3206 = vsel %vm793, %v2942, 0
      %v3208 = vsel %vm793, %v2944, 0
      %v3210 = vsel %vm793, %v2946, 0
      %v3212 = vsel %vm793, %v2948, 0
      %v3214 = vsel %vm793, %v2951, 0
      %v3216 = vsel %vm793, %v2953, 0
      %v3218 = vsel %vm793, %v2955, 0
      %v3220 = vsel %vm793, %v2957, 0
      %v3222 = vsel %vm793, %v2960, 0
      %v3224 = vsel %vm793, %v2962, 0
      %v3226 = vsel %vm793, %v2964, 0
      %v3228 = vsel %vm793, %v2966, 0
      %v3230 = vsel %vm793, %v2969, 0
      %v3232 = vsel %vm793, %v2971, 0
      %v3234 = vsel %vm793, %v2973, 0
      %v3236 = vsel %vm793, %v2975, 0
      %v3238 = vsel %vm793, %v2978, 0
      %v3240 = vsel %vm793, %v2980, 0
      %v3242 = vsel %vm793, %v2982, 0
      %v3244 = vsel %vm793, %v2984, 0
      %v3246 = vsel %vm793, %v2987, 0
      %v3248 = vsel %vm793, %v2989, 0
      %v3250 = vsel %vm793, %v2991, 0
      %v3252 = vsel %vm793, %v2993, 0
      %v3254 = vsel %vm793, %v2996, 0
      %v3256 = vsel %vm793, %v2998, 0
      %v3258 = vsel %vm793, %v3000, 0
      %v3260 = vsel %vm793, %v3002, 0
      %v3262 = vsel %vm793, %v3005, 0
      %v3264 = vsel %vm793, %v3007, 0
      %v3266 = vsel %vm793, %v3009, 0
      %v3268 = vsel %vm793, %v3011, 0
      %v3271 = vsel %vm1050, %v3013, 0
      %3273 = vmatprep.subr.mxu0 0.0
      %3274 = vmatpush1.msra.mxu0 %v3271
      %3275 = vmatprep.subr.mxu0 0.0
      %3276 = vmatpush1.msra.mxu0 0.0
      %3277 = vmatprep.subr.mxu0 0.0
      %3278 = vmatpush1.msra.mxu0 0.0
      %3279 = vmatprep.subr.mxu0 0.0
      %3280 = vmatpush1.msra.mxu0 0.0
      %3281 = vmatprep.subr.mxu0 0.0
      %3282 = vmatpush1.msra.mxu0 0.0
      %3283 = vmatprep.subr.mxu0 0.0
      %3284 = vmatpush1.msra.mxu0 0.0
      %3285 = vmatprep.subr.mxu0 0.0
      %3286 = vmatpush1.msra.mxu0 0.0
      %3287 = vmatprep.subr.mxu0 0.0
      %3288 = vmatpush1.msra.mxu0 0.0
      %3289 = vmatprep.subr.mxu0 0.0
      %3290 = vmatpush1.msra.mxu0 0.0
      %3291 = vmatprep.subr.mxu0 0.0
      %3292 = vmatpush1.msra.mxu0 0.0
      %3293 = vmatprep.subr.mxu0 0.0
      %3294 = vmatpush1.msra.mxu0 0.0
      %3295 = vmatprep.subr.mxu0 0.0
      %3296 = vmatpush1.msra.mxu0 0.0
      %3297 = vmatprep.subr.mxu0 0.0
      %3298 = vmatpush1.msra.mxu0 0.0
      %3299 = vmatprep.subr.mxu0 0.0
      %3300 = vmatpush1.msra.mxu0 0.0
      %3301 = vmatprep.subr.mxu0 0.0
      %3302 = vmatpush1.msra.mxu0 0.0
      %3303 = vmatprep.subr.mxu0 0.0
      %3304 = vmatpush1.msra.mxu0 0.0
      %3305 = vmatprep.subr.mxu0 0.0
      %3306 = vmatpush1.msra.mxu0 0.0
      %3307 = vmatprep.subr.mxu0 0.0
      %3308 = vmatpush1.msra.mxu0 0.0
      %3309 = vmatprep.subr.mxu0 0.0
      %3310 = vmatpush1.msra.mxu0 0.0
      %3311 = vmatprep.subr.mxu0 0.0
      %3312 = vmatpush1.msra.mxu0 0.0
      %3313 = vmatprep.subr.mxu0 0.0
      %3314 = vmatpush1.msra.mxu0 0.0
      %3315 = vmatprep.subr.mxu0 0.0
      %3316 = vmatpush1.msra.mxu0 0.0
      %3317 = vmatprep.subr.mxu0 0.0
      %3318 = vmatpush1.msra.mxu0 0.0
      %3319 = vmatprep.subr.mxu0 0.0
      %3320 = vmatpush1.msra.mxu0 0.0
      %3321 = vmatprep.subr.mxu0 0.0
      %3322 = vmatpush1.msra.mxu0 0.0
      %3323 = vmatprep.subr.mxu0 0.0
      %3324 = vmatpush1.msra.mxu0 0.0
      %3325 = vmatprep.subr.mxu0 0.0
      %3326 = vmatpush1.msra.mxu0 0.0
      %3327 = vmatprep.subr.mxu0 0.0
      %3328 = vmatpush1.msra.mxu0 0.0
      %3329 = vmatprep.subr.mxu0 0.0
      %3330 = vmatpush1.msra.mxu0 0.0
      %3331 = vmatprep.subr.mxu0 0.0
      %3332 = vmatpush1.msra.mxu0 0.0
      %3333 = vmatprep.subr.mxu0 0.0
      %3334 = vmatpush1.msra.mxu0 0.0
      %3335 = vmatprep.subr.mxu0 0.0
      %3336 = vmatpush1.msra.mxu0 0.0
      %3337 = vmatprep.mubr.f32.mxu0 0.0
      %3338 = vmatmul.mubr.f32.gmra.mrb[0].mxu0 %v3014
      %v3339 = vpop.f32.mrb[0].mxu0
      %v3340 = vadd.f32 0.0, %v3339
      %v3341 = vpop.f32.mrb[0].mxu0
      %3342 = vmatprep.mubr.f32.mxu0 0.0
      %3343 = vmatmul.mubr.f32.gmra.mrb[0].mxu0 %v3016
      %v3344 = vpop.f32.mrb[0].mxu0
      %v3345 = vadd.f32 0.0, %v3344
      %v3346 = vpop.f32.mrb[0].mxu0
      %3347 = vmatprep.mubr.f32.mxu0 0.0
      %3348 = vmatmul.mubr.f32.gmra.mrb[0].mxu0 %v3018
      %v3349 = vpop.f32.mrb[0].mxu0
      %v3350 = vadd.f32 0.0, %v3349
      %v3351 = vpop.f32.mrb[0].mxu0
      %3352 = vmatprep.mubr.f32.mxu0 0.0
      %3353 = vmatmul.mubr.f32.gmra.mrb[0].mxu0 %v3020
      %v3354 = vpop.f32.mrb[0].mxu0
      %v3355 = vadd.f32 0.0, %v3354
      %v3356 = vpop.f32.mrb[0].mxu0
      %3357 = vmatprep.mubr.f32.mxu0 0.0
      %3358 = vmatmul.mubr.f32.gmra.mrb[0].mxu0 %v3022
      %v3359 = vpop.f32.mrb[0].mxu0
      %v3360 = vadd.f32 0.0, %v3359
      %v3361 = vpop.f32.mrb[0].mxu0
      %3362 = vmatprep.mubr.f32.mxu0 0.0
      %3363 = vmatmul.mubr.f32.gmra.mrb[0].mxu0 %v3024
      %v3364 = vpop.f32.mrb[0].mxu0
      %v3365 = vadd.f32 0.0, %v3364
      %v3366 = vpop.f32.mrb[0].mxu0
      %3367 = vmatprep.mubr.f32.mxu0 0.0
      %3368 = vmatmul.mubr.f32.gmra.mrb[0].mxu0 %v3026
      %v3369 = vpop.f32.mrb[0].mxu0
      %v3370 = vadd.f32 0.0, %v3369
      %v3371 = vpop.f32.mrb[0].mxu0
      %3372 = vmatprep.mubr.f32.mxu0 0.0
      %3373 = vmatmul.mubr.f32.gmra.mrb[0].mxu0 %v3028
      %v3374 = vpop.f32.mrb[0].mxu0
      %v3375 = vadd.f32 0.0, %v3374
      %v3376 = vpop.f32.mrb[0].mxu0
      %3377 = vmatprep.mubr.f32.mxu0 0.0
      %3378 = vmatmul.mubr.f32.gmra.mrb[0].mxu0 %v3030
      %v3379 = vpop.f32.mrb[0].mxu0
      %v3380 = vadd.f32 0.0, %v3379
      %v3381 = vpop.f32.mrb[0].mxu0
      %3382 = vmatprep.mubr.f32.mxu0 0.0
      %3383 = vmatmul.mubr.f32.gmra.mrb[0].mxu0 %v3032
      %v3384 = vpop.f32.mrb[0].mxu0
      %v3385 = vadd.f32 0.0, %v3384
      %v3386 = vpop.f32.mrb[0].mxu0
      %3387 = vmatprep.mubr.f32.mxu0 0.0
      %3388 = vmatmul.mubr.f32.gmra.mrb[0].mxu0 %v3034
      %v3389 = vpop.f32.mrb[0].mxu0
      %v3390 = vadd.f32 0.0, %v3389
      %v3391 = vpop.f32.mrb[0].mxu0
      %3392 = vmatprep.mubr.f32.mxu0 0.0
      %3393 = vmatmul.mubr.f32.gmra.mrb[0].mxu0 %v3036
      %v3394 = vpop.f32.mrb[0].mxu0
      %v3395 = vadd.f32 0.0, %v3394
      %v3396 = vpop.f32.mrb[0].mxu0
      %3397 = vmatprep.mubr.f32.mxu0 0.0
      %3398 = vmatmul.mubr.f32.gmra.mrb[0].mxu0 %v3038
      %v3399 = vpop.f32.mrb[0].mxu0
      %v3400 = vadd.f32 0.0, %v3399
      %v3401 = vpop.f32.mrb[0].mxu0
      %3402 = vmatprep.mubr.f32.mxu0 0.0
      %3403 = vmatmul.mubr.f32.gmra.mrb[0].mxu0 %v3040
      %v3404 = vpop.f32.mrb[0].mxu0
      %v3405 = vadd.f32 0.0, %v3404
      %v3406 = vpop.f32.mrb[0].mxu0
      %3407 = vmatprep.mubr.f32.mxu0 0.0
      %3408 = vmatmul.mubr.f32.gmra.mrb[0].mxu0 %v3042
      %v3409 = vpop.f32.mrb[0].mxu0
      %v3410 = vadd.f32 0.0, %v3409
      %v3411 = vpop.f32.mrb[0].mxu0
      %3412 = vmatprep.mubr.f32.mxu0 0.0
      %3413 = vmatmul.mubr.f32.gmra.mrb[0].mxu0 %v3044
      %v3414 = vpop.f32.mrb[0].mxu0
      %v3415 = vadd.f32 0.0, %v3414
      %v3416 = vpop.f32.mrb[0].mxu0
      %3417 = vmatprep.mubr.f32.mxu0 0.0
      %3418 = vmatmul.mubr.f32.gmra.mrb[0].mxu0 %v3046
      %v3419 = vpop.f32.mrb[0].mxu0
      %v3420 = vadd.f32 0.0, %v3419
      %v3421 = vpop.f32.mrb[0].mxu0
      %3422 = vmatprep.mubr.f32.mxu0 0.0
      %3423 = vmatmul.mubr.f32.gmra.mrb[0].mxu0 %v3048
      %v3424 = vpop.f32.mrb[0].mxu0
      %v3425 = vadd.f32 0.0, %v3424
      %v3426 = vpop.f32.mrb[0].mxu0
      %3427 = vmatprep.mubr.f32.mxu0 0.0
      %3428 = vmatmul.mubr.f32.gmra.mrb[0].mxu0 %v3050
      %v3429 = vpop.f32.mrb[0].mxu0
      %v3430 = vadd.f32 0.0, %v3429
      %v3431 = vpop.f32.mrb[0].mxu0
      %3432 = vmatprep.mubr.f32.mxu0 0.0
      %3433 = vmatmul.mubr.f32.gmra.mrb[0].mxu0 %v3052
      %v3434 = vpop.f32.mrb[0].mxu0
      %v3435 = vadd.f32 0.0, %v3434
      %v3436 = vpop.f32.mrb[0].mxu0
      %3437 = vmatprep.mubr.f32.mxu0 0.0
      %3438 = vmatmul.mubr.f32.gmra.mrb[0].mxu0 %v3054
      %v3439 = vpop.f32.mrb[0].mxu0
      %v3440 = vadd.f32 0.0, %v3439
      %v3441 = vpop.f32.mrb[0].mxu0
      %3442 = vmatprep.mubr.f32.mxu0 0.0
      %3443 = vmatmul.mubr.f32.gmra.mrb[0].mxu0 %v3056
      %v3444 = vpop.f32.mrb[0].mxu0
      %v3445 = vadd.f32 0.0, %v3444
      %v3446 = vpop.f32.mrb[0].mxu0
      %3447 = vmatprep.mubr.f32.mxu0 0.0
      %3448 = vmatmul.mubr.f32.gmra.mrb[0].mxu0 %v3058
      %v3449 = vpop.f32.mrb[0].mxu0
      %v3450 = vadd.f32 0.0, %v3449
      %v3451 = vpop.f32.mrb[0].mxu0
      %3452 = vmatprep.mubr.f32.mxu0 0.0
      %3453 = vmatmul.mubr.f32.gmra.mrb[0].mxu0 %v3060
      %v3454 = vpop.f32.mrb[0].mxu0
      %v3455 = vadd.f32 0.0, %v3454
      %v3456 = vpop.f32.mrb[0].mxu0
      %3457 = vmatprep.mubr.f32.mxu0 0.0
      %3458 = vmatmul.mubr.f32.gmra.mrb[0].mxu0 %v3062
      %v3459 = vpop.f32.mrb[0].mxu0
      %v3460 = vadd.f32 0.0, %v3459
      %v3461 = vpop.f32.mrb[0].mxu0
      %3462 = vmatprep.mubr.f32.mxu0 0.0
      %3463 = vmatmul.mubr.f32.gmra.mrb[0].mxu0 %v3064
      %v3464 = vpop.f32.mrb[0].mxu0
      %v3465 = vadd.f32 0.0, %v3464
      %v3466 = vpop.f32.mrb[0].mxu0
      %3467 = vmatprep.mubr.f32.mxu0 0.0
      %3468 = vmatmul.mubr.f32.gmra.mrb[0].mxu0 %v3066
      %v3469 = vpop.f32.mrb[0].mxu0
      %v3470 = vadd.f32 0.0, %v3469
      %v3471 = vpop.f32.mrb[0].mxu0
      %3472 = vmatprep.mubr.f32.mxu0 0.0
      %3473 = vmatmul.mubr.f32.gmra.mrb[0].mxu0 %v3068
      %v3474 = vpop.f32.mrb[0].mxu0
      %v3475 = vadd.f32 0.0, %v3474
      %v3476 = vpop.f32.mrb[0].mxu0
      %3477 = vmatprep.mubr.f32.mxu0 0.0
      %3478 = vmatmul.mubr.f32.gmra.mrb[0].mxu0 %v3070
      %v3479 = vpop.f32.mrb[0].mxu0
      %v3480 = vadd.f32 0.0, %v3479
      %v3481 = vpop.f32.mrb[0].mxu0
      %3482 = vmatprep.mubr.f32.mxu0 0.0
      %3483 = vmatmul.mubr.f32.gmra.mrb[0].mxu0 %v3072
      %v3484 = vpop.f32.mrb[0].mxu0
      %v3485 = vadd.f32 0.0, %v3484
      %v3486 = vpop.f32.mrb[0].mxu0
      %3487 = vmatprep.mubr.f32.mxu0 0.0
      %3488 = vmatmul.mubr.f32.gmra.mrb[0].mxu0 %v3074
      %v3489 = vpop.f32.mrb[0].mxu0
      %v3490 = vadd.f32 0.0, %v3489
      %v3491 = vpop.f32.mrb[0].mxu0
      %3492 = vmatprep.mubr.f32.mxu0 0.0
      %3493 = vmatmul.mubr.f32.gmra.mrb[0].mxu0 %v3076
      %v3494 = vpop.f32.mrb[0].mxu0
      %v3495 = vadd.f32 0.0, %v3494
      %v3496 = vpop.f32.mrb[0].mxu0
      %3497 = vmatprep.mubr.f32.mxu0 0.0
      %3498 = vmatmul.mubr.f32.gmra.mrb[0].mxu0 %v3078
      %v3499 = vpop.f32.mrb[0].mxu0
      %v3500 = vadd.f32 0.0, %v3499
      %v3501 = vpop.f32.mrb[0].mxu0
      %3502 = vmatprep.mubr.f32.mxu0 0.0
      %3503 = vmatmul.mubr.f32.gmra.mrb[0].mxu0 %v3080
      %v3504 = vpop.f32.mrb[0].mxu0
      %v3505 = vadd.f32 0.0, %v3504
      %v3506 = vpop.f32.mrb[0].mxu0
      %3507 = vmatprep.mubr.f32.mxu0 0.0
      %3508 = vmatmul.mubr.f32.gmra.mrb[0].mxu0 %v3082
      %v3509 = vpop.f32.mrb[0].mxu0
      %v3510 = vadd.f32 0.0, %v3509
      %v3511 = vpop.f32.mrb[0].mxu0
      %3512 = vmatprep.mubr.f32.mxu0 0.0
      %3513 = vmatmul.mubr.f32.gmra.mrb[0].mxu0 %v3084
      %v3514 = vpop.f32.mrb[0].mxu0
      %v3515 = vadd.f32 0.0, %v3514
      %v3516 = vpop.f32.mrb[0].mxu0
      %3517 = vmatprep.mubr.f32.mxu0 0.0
      %3518 = vmatmul.mubr.f32.gmra.mrb[0].mxu0 %v3086
      %v3519 = vpop.f32.mrb[0].mxu0
      %v3520 = vadd.f32 0.0, %v3519
      %v3521 = vpop.f32.mrb[0].mxu0
      %3522 = vmatprep.mubr.f32.mxu0 0.0
      %3523 = vmatmul.mubr.f32.gmra.mrb[0].mxu0 %v3088
      %v3524 = vpop.f32.mrb[0].mxu0
      %v3525 = vadd.f32 0.0, %v3524
      %v3526 = vpop.f32.mrb[0].mxu0
      %3527 = vmatprep.mubr.f32.mxu0 0.0
      %3528 = vmatmul.mubr.f32.gmra.mrb[0].mxu0 %v3090
      %v3529 = vpop.f32.mrb[0].mxu0
      %v3530 = vadd.f32 0.0, %v3529
      %v3531 = vpop.f32.mrb[0].mxu0
      %3532 = vmatprep.mubr.f32.mxu0 0.0
      %3533 = vmatmul.mubr.f32.gmra.mrb[0].mxu0 %v3092
      %v3534 = vpop.f32.mrb[0].mxu0
      %v3535 = vadd.f32 0.0, %v3534
      %v3536 = vpop.f32.mrb[0].mxu0
      %3537 = vmatprep.mubr.f32.mxu0 0.0
      %3538 = vmatmul.mubr.f32.gmra.mrb[0].mxu0 %v3094
      %v3539 = vpop.f32.mrb[0].mxu0
      %v3540 = vadd.f32 0.0, %v3539
      %v3541 = vpop.f32.mrb[0].mxu0
      %3542 = vmatprep.mubr.f32.mxu0 0.0
      %3543 = vmatmul.mubr.f32.gmra.mrb[0].mxu0 %v3096
      %v3544 = vpop.f32.mrb[0].mxu0
      %v3545 = vadd.f32 0.0, %v3544
      %v3546 = vpop.f32.mrb[0].mxu0
      %3547 = vmatprep.mubr.f32.mxu0 0.0
      %3548 = vmatmul.mubr.f32.gmra.mrb[0].mxu0 %v3098
      %v3549 = vpop.f32.mrb[0].mxu0
      %v3550 = vadd.f32 0.0, %v3549
      %v3551 = vpop.f32.mrb[0].mxu0
      %3552 = vmatprep.mubr.f32.mxu0 0.0
      %3553 = vmatmul.mubr.f32.gmra.mrb[0].mxu0 %v3100
      %v3554 = vpop.f32.mrb[0].mxu0
      %v3555 = vadd.f32 0.0, %v3554
      %v3556 = vpop.f32.mrb[0].mxu0
      %3557 = vmatprep.mubr.f32.mxu0 0.0
      %3558 = vmatmul.mubr.f32.gmra.mrb[0].mxu0 %v3102
      %v3559 = vpop.f32.mrb[0].mxu0
      %v3560 = vadd.f32 0.0, %v3559
      %v3561 = vpop.f32.mrb[0].mxu0
      %3562 = vmatprep.mubr.f32.mxu0 0.0
      %3563 = vmatmul.mubr.f32.gmra.mrb[0].mxu0 %v3104
      %v3564 = vpop.f32.mrb[0].mxu0
      %v3565 = vadd.f32 0.0, %v3564
      %v3566 = vpop.f32.mrb[0].mxu0
      %3567 = vmatprep.mubr.f32.mxu0 0.0
      %3568 = vmatmul.mubr.f32.gmra.mrb[0].mxu0 %v3106
      %v3569 = vpop.f32.mrb[0].mxu0
      %v3570 = vadd.f32 0.0, %v3569
      %v3571 = vpop.f32.mrb[0].mxu0
      %3572 = vmatprep.mubr.f32.mxu0 0.0
      %3573 = vmatmul.mubr.f32.gmra.mrb[0].mxu0 %v3108
      %v3574 = vpop.f32.mrb[0].mxu0
      %v3575 = vadd.f32 0.0, %v3574
      %v3576 = vpop.f32.mrb[0].mxu0
      %3577 = vmatprep.mubr.f32.mxu0 0.0
      %3578 = vmatmul.mubr.f32.gmra.mrb[0].mxu0 %v3110
      %v3579 = vpop.f32.mrb[0].mxu0
      %v3580 = vadd.f32 0.0, %v3579
      %v3581 = vpop.f32.mrb[0].mxu0
      %3582 = vmatprep.mubr.f32.mxu0 0.0
      %3583 = vmatmul.mubr.f32.gmra.mrb[0].mxu0 %v3112
      %v3584 = vpop.f32.mrb[0].mxu0
      %v3585 = vadd.f32 0.0, %v3584
      %v3586 = vpop.f32.mrb[0].mxu0
      %3587 = vmatprep.mubr.f32.mxu0 0.0
      %3588 = vmatmul.mubr.f32.gmra.mrb[0].mxu0 %v3114
      %v3589 = vpop.f32.mrb[0].mxu0
      %v3590 = vadd.f32 0.0, %v3589
      %v3591 = vpop.f32.mrb[0].mxu0
      %3592 = vmatprep.mubr.f32.mxu0 0.0
      %3593 = vmatmul.mubr.f32.gmra.mrb[0].mxu0 %v3116
      %v3594 = vpop.f32.mrb[0].mxu0
      %v3595 = vadd.f32 0.0, %v3594
      %v3596 = vpop.f32.mrb[0].mxu0
      %3597 = vmatprep.mubr.f32.mxu0 0.0
      %3598 = vmatmul.mubr.f32.gmra.mrb[0].mxu0 %v3118
      %v3599 = vpop.f32.mrb[0].mxu0
      %v3600 = vadd.f32 0.0, %v3599
      %v3601 = vpop.f32.mrb[0].mxu0
      %3602 = vmatprep.mubr.f32.mxu0 0.0
      %3603 = vmatmul.mubr.f32.gmra.mrb[0].mxu0 %v3120
      %v3604 = vpop.f32.mrb[0].mxu0
      %v3605 = vadd.f32 0.0, %v3604
      %v3606 = vpop.f32.mrb[0].mxu0
      %3607 = vmatprep.mubr.f32.mxu0 0.0
      %3608 = vmatmul.mubr.f32.gmra.mrb[0].mxu0 %v3122
      %v3609 = vpop.f32.mrb[0].mxu0
      %v3610 = vadd.f32 0.0, %v3609
      %v3611 = vpop.f32.mrb[0].mxu0
      %3612 = vmatprep.mubr.f32.mxu0 0.0
      %3613 = vmatmul.mubr.f32.gmra.mrb[0].mxu0 %v3124
      %v3614 = vpop.f32.mrb[0].mxu0
      %v3615 = vadd.f32 0.0, %v3614
      %v3616 = vpop.f32.mrb[0].mxu0
      %3617 = vmatprep.mubr.f32.mxu0 0.0
      %3618 = vmatmul.mubr.f32.gmra.mrb[0].mxu0 %v3126
      %v3619 = vpop.f32.mrb[0].mxu0
      %v3620 = vadd.f32 0.0, %v3619
      %v3621 = vpop.f32.mrb[0].mxu0
      %3622 = vmatprep.mubr.f32.mxu0 0.0
      %3623 = vmatmul.mubr.f32.gmra.mrb[0].mxu0 %v3128
      %v3624 = vpop.f32.mrb[0].mxu0
      %v3625 = vadd.f32 0.0, %v3624
      %v3626 = vpop.f32.mrb[0].mxu0
      %3627 = vmatprep.mubr.f32.mxu0 0.0
      %3628 = vmatmul.mubr.f32.gmra.mrb[0].mxu0 %v3130
      %v3629 = vpop.f32.mrb[0].mxu0
      %v3630 = vadd.f32 0.0, %v3629
      %v3631 = vpop.f32.mrb[0].mxu0
      %3632 = vmatprep.mubr.f32.mxu0 0.0
      %3633 = vmatmul.mubr.f32.gmra.mrb[0].mxu0 %v3132
      %v3634 = vpop.f32.mrb[0].mxu0
      %v3635 = vadd.f32 0.0, %v3634
      %v3636 = vpop.f32.mrb[0].mxu0
      %3637 = vmatprep.mubr.f32.mxu0 0.0
      %3638 = vmatmul.mubr.f32.gmra.mrb[0].mxu0 %v3134
      %v3639 = vpop.f32.mrb[0].mxu0
      %v3640 = vadd.f32 0.0, %v3639
      %v3641 = vpop.f32.mrb[0].mxu0
      %3642 = vmatprep.mubr.f32.mxu0 0.0
      %3643 = vmatmul.mubr.f32.gmra.mrb[0].mxu0 %v3136
      %v3644 = vpop.f32.mrb[0].mxu0
      %v3645 = vadd.f32 0.0, %v3644
      %v3646 = vpop.f32.mrb[0].mxu0
      %3647 = vmatprep.mubr.f32.mxu0 0.0
      %3648 = vmatmul.mubr.f32.gmra.mrb[0].mxu0 %v3138
      %v3649 = vpop.f32.mrb[0].mxu0
      %v3650 = vadd.f32 0.0, %v3649
      %v3651 = vpop.f32.mrb[0].mxu0
      %3652 = vmatprep.mubr.f32.mxu0 0.0
      %3653 = vmatmul.mubr.f32.gmra.mrb[0].mxu0 %v3140
      %v3654 = vpop.f32.mrb[0].mxu0
      %v3655 = vadd.f32 0.0, %v3654
      %v3656 = vpop.f32.mrb[0].mxu0
      %3657 = vmatprep.mubr.f32.mxu0 0.0
      %3658 = vmatmul.mubr.f32.gmra.mrb[0].mxu0 %v3142
      %v3659 = vpop.f32.mrb[0].mxu0
      %v3660 = vadd.f32 0.0, %v3659
      %v3661 = vpop.f32.mrb[0].mxu0
      %3662 = vmatprep.mubr.f32.mxu0 0.0
      %3663 = vmatmul.mubr.f32.gmra.mrb[0].mxu0 %v3144
      %v3664 = vpop.f32.mrb[0].mxu0
      %v3665 = vadd.f32 0.0, %v3664
      %v3666 = vpop.f32.mrb[0].mxu0
      %3667 = vmatprep.mubr.f32.mxu0 0.0
      %3668 = vmatmul.mubr.f32.gmra.mrb[0].mxu0 %v3146
      %v3669 = vpop.f32.mrb[0].mxu0
      %v3670 = vadd.f32 0.0, %v3669
      %v3671 = vpop.f32.mrb[0].mxu0
      %3672 = vmatprep.mubr.f32.mxu0 0.0
      %3673 = vmatmul.mubr.f32.gmra.mrb[0].mxu0 %v3148
      %v3674 = vpop.f32.mrb[0].mxu0
      %v3675 = vadd.f32 0.0, %v3674
      %v3676 = vpop.f32.mrb[0].mxu0
      %3677 = vmatprep.mubr.f32.mxu0 0.0
      %3678 = vmatmul.mubr.f32.gmra.mrb[0].mxu0 %v3150
      %v3679 = vpop.f32.mrb[0].mxu0
      %v3680 = vadd.f32 0.0, %v3679
      %v3681 = vpop.f32.mrb[0].mxu0
      %3682 = vmatprep.mubr.f32.mxu0 0.0
      %3683 = vmatmul.mubr.f32.gmra.mrb[0].mxu0 %v3152
      %v3684 = vpop.f32.mrb[0].mxu0
      %v3685 = vadd.f32 0.0, %v3684
      %v3686 = vpop.f32.mrb[0].mxu0
      %3687 = vmatprep.mubr.f32.mxu0 0.0
      %3688 = vmatmul.mubr.f32.gmra.mrb[0].mxu0 %v3154
      %v3689 = vpop.f32.mrb[0].mxu0
      %v3690 = vadd.f32 0.0, %v3689
      %v3691 = vpop.f32.mrb[0].mxu0
      %3692 = vmatprep.mubr.f32.mxu0 0.0
      %3693 = vmatmul.mubr.f32.gmra.mrb[0].mxu0 %v3156
      %v3694 = vpop.f32.mrb[0].mxu0
      %v3695 = vadd.f32 0.0, %v3694
      %v3696 = vpop.f32.mrb[0].mxu0
      %3697 = vmatprep.mubr.f32.mxu0 0.0
      %3698 = vmatmul.mubr.f32.gmra.mrb[0].mxu0 %v3158
      %v3699 = vpop.f32.mrb[0].mxu0
      %v3700 = vadd.f32 0.0, %v3699
      %v3701 = vpop.f32.mrb[0].mxu0
      %3702 = vmatprep.mubr.f32.mxu0 0.0
      %3703 = vmatmul.mubr.f32.gmra.mrb[0].mxu0 %v3160
      %v3704 = vpop.f32.mrb[0].mxu0
      %v3705 = vadd.f32 0.0, %v3704
      %v3706 = vpop.f32.mrb[0].mxu0
      %3707 = vmatprep.mubr.f32.mxu0 0.0
      %3708 = vmatmul.mubr.f32.gmra.mrb[0].mxu0 %v3162
      %v3709 = vpop.f32.mrb[0].mxu0
      %v3710 = vadd.f32 0.0, %v3709
      %v3711 = vpop.f32.mrb[0].mxu0
      %3712 = vmatprep.mubr.f32.mxu0 0.0
      %3713 = vmatmul.mubr.f32.gmra.mrb[0].mxu0 %v3164
      %v3714 = vpop.f32.mrb[0].mxu0
      %v3715 = vadd.f32 0.0, %v3714
      %v3716 = vpop.f32.mrb[0].mxu0
      %3717 = vmatprep.mubr.f32.mxu0 0.0
      %3718 = vmatmul.mubr.f32.gmra.mrb[0].mxu0 %v3166
      %v3719 = vpop.f32.mrb[0].mxu0
      %v3720 = vadd.f32 0.0, %v3719
      %v3721 = vpop.f32.mrb[0].mxu0
      %3722 = vmatprep.mubr.f32.mxu0 0.0
      %3723 = vmatmul.mubr.f32.gmra.mrb[0].mxu0 %v3168
      %v3724 = vpop.f32.mrb[0].mxu0
      %v3725 = vadd.f32 0.0, %v3724
      %v3726 = vpop.f32.mrb[0].mxu0
      %3727 = vmatprep.mubr.f32.mxu0 0.0
      %3728 = vmatmul.mubr.f32.gmra.mrb[0].mxu0 %v3170
      %v3729 = vpop.f32.mrb[0].mxu0
      %v3730 = vadd.f32 0.0, %v3729
      %v3731 = vpop.f32.mrb[0].mxu0
      %3732 = vmatprep.mubr.f32.mxu0 0.0
      %3733 = vmatmul.mubr.f32.gmra.mrb[0].mxu0 %v3172
      %v3734 = vpop.f32.mrb[0].mxu0
      %v3735 = vadd.f32 0.0, %v3734
      %v3736 = vpop.f32.mrb[0].mxu0
      %3737 = vmatprep.mubr.f32.mxu0 0.0
      %3738 = vmatmul.mubr.f32.gmra.mrb[0].mxu0 %v3174
      %v3739 = vpop.f32.mrb[0].mxu0
      %v3740 = vadd.f32 0.0, %v3739
      %v3741 = vpop.f32.mrb[0].mxu0
      %3742 = vmatprep.mubr.f32.mxu0 0.0
      %3743 = vmatmul.mubr.f32.gmra.mrb[0].mxu0 %v3176
      %v3744 = vpop.f32.mrb[0].mxu0
      %v3745 = vadd.f32 0.0, %v3744
      %v3746 = vpop.f32.mrb[0].mxu0
      %3747 = vmatprep.mubr.f32.mxu0 0.0
      %3748 = vmatmul.mubr.f32.gmra.mrb[0].mxu0 %v3178
      %v3749 = vpop.f32.mrb[0].mxu0
      %v3750 = vadd.f32 0.0, %v3749
      %v3751 = vpop.f32.mrb[0].mxu0
      %3752 = vmatprep.mubr.f32.mxu0 0.0
      %3753 = vmatmul.mubr.f32.gmra.mrb[0].mxu0 %v3180
      %v3754 = vpop.f32.mrb[0].mxu0
      %v3755 = vadd.f32 0.0, %v3754
      %v3756 = vpop.f32.mrb[0].mxu0
      %3757 = vmatprep.mubr.f32.mxu0 0.0
      %3758 = vmatmul.mubr.f32.gmra.mrb[0].mxu0 %v3182
      %v3759 = vpop.f32.mrb[0].mxu0
      %v3760 = vadd.f32 0.0, %v3759
      %v3761 = vpop.f32.mrb[0].mxu0
      %3762 = vmatprep.mubr.f32.mxu0 0.0
      %3763 = vmatmul.mubr.f32.gmra.mrb[0].mxu0 %v3184
      %v3764 = vpop.f32.mrb[0].mxu0
      %v3765 = vadd.f32 0.0, %v3764
      %v3766 = vpop.f32.mrb[0].mxu0
      %3767 = vmatprep.mubr.f32.mxu0 0.0
      %3768 = vmatmul.mubr.f32.gmra.mrb[0].mxu0 %v3186
      %v3769 = vpop.f32.mrb[0].mxu0
      %v3770 = vadd.f32 0.0, %v3769
      %v3771 = vpop.f32.mrb[0].mxu0
      %3772 = vmatprep.mubr.f32.mxu0 0.0
      %3773 = vmatmul.mubr.f32.gmra.mrb[0].mxu0 %v3188
      %v3774 = vpop.f32.mrb[0].mxu0
      %v3775 = vadd.f32 0.0, %v3774
      %v3776 = vpop.f32.mrb[0].mxu0
      %3777 = vmatprep.mubr.f32.mxu0 0.0
      %3778 = vmatmul.mubr.f32.gmra.mrb[0].mxu0 %v3190
      %v3779 = vpop.f32.mrb[0].mxu0
      %v3780 = vadd.f32 0.0, %v3779
      %v3781 = vpop.f32.mrb[0].mxu0
      %3782 = vmatprep.mubr.f32.mxu0 0.0
      %3783 = vmatmul.mubr.f32.gmra.mrb[0].mxu0 %v3192
      %v3784 = vpop.f32.mrb[0].mxu0
      %v3785 = vadd.f32 0.0, %v3784
      %v3786 = vpop.f32.mrb[0].mxu0
      %3787 = vmatprep.mubr.f32.mxu0 0.0
      %3788 = vmatmul.mubr.f32.gmra.mrb[0].mxu0 %v3194
      %v3789 = vpop.f32.mrb[0].mxu0
      %v3790 = vadd.f32 0.0, %v3789
      %v3791 = vpop.f32.mrb[0].mxu0
      %3792 = vmatprep.mubr.f32.mxu0 0.0
      %3793 = vmatmul.mubr.f32.gmra.mrb[0].mxu0 %v3196
      %v3794 = vpop.f32.mrb[0].mxu0
      %v3795 = vadd.f32 0.0, %v3794
      %v3796 = vpop.f32.mrb[0].mxu0
      %3797 = vmatprep.mubr.f32.mxu0 0.0
      %3798 = vmatmul.mubr.f32.gmra.mrb[0].mxu0 %v3198
      %v3799 = vpop.f32.mrb[0].mxu0
      %v3800 = vadd.f32 0.0, %v3799
      %v3801 = vpop.f32.mrb[0].mxu0
      %3802 = vmatprep.mubr.f32.mxu0 0.0
      %3803 = vmatmul.mubr.f32.gmra.mrb[0].mxu0 %v3200
      %v3804 = vpop.f32.mrb[0].mxu0
      %v3805 = vadd.f32 0.0, %v3804
      %v3806 = vpop.f32.mrb[0].mxu0
      %3807 = vmatprep.mubr.f32.mxu0 0.0
      %3808 = vmatmul.mubr.f32.gmra.mrb[0].mxu0 %v3202
      %v3809 = vpop.f32.mrb[0].mxu0
      %v3810 = vadd.f32 0.0, %v3809
      %v3811 = vpop.f32.mrb[0].mxu0
      %3812 = vmatprep.mubr.f32.mxu0 0.0
      %3813 = vmatmul.mubr.f32.gmra.mrb[0].mxu0 %v3204
      %v3814 = vpop.f32.mrb[0].mxu0
      %v3815 = vadd.f32 0.0, %v3814
      %v3816 = vpop.f32.mrb[0].mxu0
      %3817 = vmatprep.mubr.f32.mxu0 0.0
      %3818 = vmatmul.mubr.f32.gmra.mrb[0].mxu0 %v3206
      %v3819 = vpop.f32.mrb[0].mxu0
      %v3820 = vadd.f32 0.0, %v3819
      %v3821 = vpop.f32.mrb[0].mxu0
      %3822 = vmatprep.mubr.f32.mxu0 0.0
      %3823 = vmatmul.mubr.f32.gmra.mrb[0].mxu0 %v3208
      %v3824 = vpop.f32.mrb[0].mxu0
      %v3825 = vadd.f32 0.0, %v3824
      %v3826 = vpop.f32.mrb[0].mxu0
      %3827 = vmatprep.mubr.f32.mxu0 0.0
      %3828 = vmatmul.mubr.f32.gmra.mrb[0].mxu0 %v3210
      %v3829 = vpop.f32.mrb[0].mxu0
      %v3830 = vadd.f32 0.0, %v3829
      %v3831 = vpop.f32.mrb[0].mxu0
      %3832 = vmatprep.mubr.f32.mxu0 0.0
      %3833 = vmatmul.mubr.f32.gmra.mrb[0].mxu0 %v3212
      %v3834 = vpop.f32.mrb[0].mxu0
      %v3835 = vadd.f32 0.0, %v3834
      %v3836 = vpop.f32.mrb[0].mxu0
      %3837 = vmatprep.mubr.f32.mxu0 0.0
      %3838 = vmatmul.mubr.f32.gmra.mrb[0].mxu0 %v3214
      %v3839 = vpop.f32.mrb[0].mxu0
      %v3840 = vadd.f32 0.0, %v3839
      %v3841 = vpop.f32.mrb[0].mxu0
      %3842 = vmatprep.mubr.f32.mxu0 0.0
      %3843 = vmatmul.mubr.f32.gmra.mrb[0].mxu0 %v3216
      %v3844 = vpop.f32.mrb[0].mxu0
      %v3845 = vadd.f32 0.0, %v3844
      %v3846 = vpop.f32.mrb[0].mxu0
      %3847 = vmatprep.mubr.f32.mxu0 0.0
      %3848 = vmatmul.mubr.f32.gmra.mrb[0].mxu0 %v3218
      %v3849 = vpop.f32.mrb[0].mxu0
      %v3850 = vadd.f32 0.0, %v3849
      %v3851 = vpop.f32.mrb[0].mxu0
      %3852 = vmatprep.mubr.f32.mxu0 0.0
      %3853 = vmatmul.mubr.f32.gmra.mrb[0].mxu0 %v3220
      %v3854 = vpop.f32.mrb[0].mxu0
      %v3855 = vadd.f32 0.0, %v3854
      %v3856 = vpop.f32.mrb[0].mxu0
      %3857 = vmatprep.mubr.f32.mxu0 0.0
      %3858 = vmatmul.mubr.f32.gmra.mrb[0].mxu0 %v3222
      %v3859 = vpop.f32.mrb[0].mxu0
      %v3860 = vadd.f32 0.0, %v3859
      %v3861 = vpop.f32.mrb[0].mxu0
      %3862 = vmatprep.mubr.f32.mxu0 0.0
      %3863 = vmatmul.mubr.f32.gmra.mrb[0].mxu0 %v3224
      %v3864 = vpop.f32.mrb[0].mxu0
      %v3865 = vadd.f32 0.0, %v3864
      %v3866 = vpop.f32.mrb[0].mxu0
      %3867 = vmatprep.mubr.f32.mxu0 0.0
      %3868 = vmatmul.mubr.f32.gmra.mrb[0].mxu0 %v3226
      %v3869 = vpop.f32.mrb[0].mxu0
      %v3870 = vadd.f32 0.0, %v3869
      %v3871 = vpop.f32.mrb[0].mxu0
      %3872 = vmatprep.mubr.f32.mxu0 0.0
      %3873 = vmatmul.mubr.f32.gmra.mrb[0].mxu0 %v3228
      %v3874 = vpop.f32.mrb[0].mxu0
      %v3875 = vadd.f32 0.0, %v3874
      %v3876 = vpop.f32.mrb[0].mxu0
      %3877 = vmatprep.mubr.f32.mxu0 0.0
      %3878 = vmatmul.mubr.f32.gmra.mrb[0].mxu0 %v3230
      %v3879 = vpop.f32.mrb[0].mxu0
      %v3880 = vadd.f32 0.0, %v3879
      %v3881 = vpop.f32.mrb[0].mxu0
      %3882 = vmatprep.mubr.f32.mxu0 0.0
      %3883 = vmatmul.mubr.f32.gmra.mrb[0].mxu0 %v3232
      %v3884 = vpop.f32.mrb[0].mxu0
      %v3885 = vadd.f32 0.0, %v3884
      %v3886 = vpop.f32.mrb[0].mxu0
      %3887 = vmatprep.mubr.f32.mxu0 0.0
      %3888 = vmatmul.mubr.f32.gmra.mrb[0].mxu0 %v3234
      %v3889 = vpop.f32.mrb[0].mxu0
      %v3890 = vadd.f32 0.0, %v3889
      %v3891 = vpop.f32.mrb[0].mxu0
      %3892 = vmatprep.mubr.f32.mxu0 0.0
      %3893 = vmatmul.mubr.f32.gmra.mrb[0].mxu0 %v3236
      %v3894 = vpop.f32.mrb[0].mxu0
      %v3895 = vadd.f32 0.0, %v3894
      %v3896 = vpop.f32.mrb[0].mxu0
      %3897 = vmatprep.mubr.f32.mxu0 0.0
      %3898 = vmatmul.mubr.f32.gmra.mrb[0].mxu0 %v3238
      %v3899 = vpop.f32.mrb[0].mxu0
      %v3900 = vadd.f32 0.0, %v3899
      %v3901 = vpop.f32.mrb[0].mxu0
      %3902 = vmatprep.mubr.f32.mxu0 0.0
      %3903 = vmatmul.mubr.f32.gmra.mrb[0].mxu0 %v3240
      %v3904 = vpop.f32.mrb[0].mxu0
      %v3905 = vadd.f32 0.0, %v3904
      %v3906 = vpop.f32.mrb[0].mxu0
      %3907 = vmatprep.mubr.f32.mxu0 0.0
      %3908 = vmatmul.mubr.f32.gmra.mrb[0].mxu0 %v3242
      %v3909 = vpop.f32.mrb[0].mxu0
      %v3910 = vadd.f32 0.0, %v3909
      %v3911 = vpop.f32.mrb[0].mxu0
      %3912 = vmatprep.mubr.f32.mxu0 0.0
      %3913 = vmatmul.mubr.f32.gmra.mrb[0].mxu0 %v3244
      %v3914 = vpop.f32.mrb[0].mxu0
      %v3915 = vadd.f32 0.0, %v3914
      %v3916 = vpop.f32.mrb[0].mxu0
      %3917 = vmatprep.mubr.f32.mxu0 0.0
      %3918 = vmatmul.mubr.f32.gmra.mrb[0].mxu0 %v3246
      %v3919 = vpop.f32.mrb[0].mxu0
      %v3920 = vadd.f32 0.0, %v3919
      %v3921 = vpop.f32.mrb[0].mxu0
      %3922 = vmatprep.mubr.f32.mxu0 0.0
      %3923 = vmatmul.mubr.f32.gmra.mrb[0].mxu0 %v3248
      %v3924 = vpop.f32.mrb[0].mxu0
      %v3925 = vadd.f32 0.0, %v3924
      %v3926 = vpop.f32.mrb[0].mxu0
      %3927 = vmatprep.mubr.f32.mxu0 0.0
      %3928 = vmatmul.mubr.f32.gmra.mrb[0].mxu0 %v3250
      %v3929 = vpop.f32.mrb[0].mxu0
      %v3930 = vadd.f32 0.0, %v3929
      %v3931 = vpop.f32.mrb[0].mxu0
      %3932 = vmatprep.mubr.f32.mxu0 0.0
      %3933 = vmatmul.mubr.f32.gmra.mrb[0].mxu0 %v3252
      %v3934 = vpop.f32.mrb[0].mxu0
      %v3935 = vadd.f32 0.0, %v3934
      %v3936 = vpop.f32.mrb[0].mxu0
      %3937 = vmatprep.mubr.f32.mxu0 0.0
      %3938 = vmatmul.mubr.f32.gmra.mrb[0].mxu0 %v3254
      %v3939 = vpop.f32.mrb[0].mxu0
      %v3940 = vadd.f32 0.0, %v3939
      %v3941 = vpop.f32.mrb[0].mxu0
      %3942 = vmatprep.mubr.f32.mxu0 0.0
      %3943 = vmatmul.mubr.f32.gmra.mrb[0].mxu0 %v3256
      %v3944 = vpop.f32.mrb[0].mxu0
      %v3945 = vadd.f32 0.0, %v3944
      %v3946 = vpop.f32.mrb[0].mxu0
      %3947 = vmatprep.mubr.f32.mxu0 0.0
      %3948 = vmatmul.mubr.f32.gmra.mrb[0].mxu0 %v3258
      %v3949 = vpop.f32.mrb[0].mxu0
      %v3950 = vadd.f32 0.0, %v3949
      %v3951 = vpop.f32.mrb[0].mxu0
      %3952 = vmatprep.mubr.f32.mxu0 0.0
      %3953 = vmatmul.mubr.f32.gmra.mrb[0].mxu0 %v3260
      %v3954 = vpop.f32.mrb[0].mxu0
      %v3955 = vadd.f32 0.0, %v3954
      %v3956 = vpop.f32.mrb[0].mxu0
      %3957 = vmatprep.mubr.f32.mxu0 0.0
      %3958 = vmatmul.mubr.f32.gmra.mrb[0].mxu0 %v3262
      %v3959 = vpop.f32.mrb[0].mxu0
      %v3960 = vadd.f32 0.0, %v3959
      %v3961 = vpop.f32.mrb[0].mxu0
      %3962 = vmatprep.mubr.f32.mxu0 0.0
      %3963 = vmatmul.mubr.f32.gmra.mrb[0].mxu0 %v3264
      %v3964 = vpop.f32.mrb[0].mxu0
      %v3965 = vadd.f32 0.0, %v3964
      %v3966 = vpop.f32.mrb[0].mxu0
      %3967 = vmatprep.mubr.f32.mxu0 0.0
      %3968 = vmatmul.mubr.f32.gmra.mrb[0].mxu0 %v3266
      %v3969 = vpop.f32.mrb[0].mxu0
      %v3970 = vadd.f32 0.0, %v3969
      %v3971 = vpop.f32.mrb[0].mxu0
      %3972 = vmatprep.mubr.f32.mxu0 0.0
      %3973 = vmatmul.mubr.f32.gmra.mrb[0].mxu0 %v3268
      %v3974 = vpop.f32.mrb[0].mxu0
      %v3975 = vadd.f32 0.0, %v3974
      %v3976 = vpop.f32.mrb[0].mxu0
      %3977 = vdwg.mxu0
      %v3978 = vadd.f32 %v2085, %v3340
      %v3979 = vadd.f32 %v2090, %v3345
      %v3980 = vadd.f32 %v2095, %v3350
      %v3981 = vadd.f32 %v2100, %v3355
      %v3982 = vadd.f32 %v2105, %v3360
      %v3983 = vadd.f32 %v2110, %v3365
      %v3984 = vadd.f32 %v2115, %v3370
      %v3985 = vadd.f32 %v2120, %v3375
      %v3986 = vadd.f32 %v2125, %v3380
      %v3987 = vadd.f32 %v2130, %v3385
      %v3988 = vadd.f32 %v2135, %v3390
      %v3989 = vadd.f32 %v2140, %v3395
      %v3990 = vadd.f32 %v2145, %v3400
      %v3991 = vadd.f32 %v2150, %v3405
      %v3992 = vadd.f32 %v2155, %v3410
      %v3993 = vadd.f32 %v2160, %v3415
      %v3994 = vadd.f32 %v2165, %v3420
      %v3995 = vadd.f32 %v2170, %v3425
      %v3996 = vadd.f32 %v2175, %v3430
      %v3997 = vadd.f32 %v2180, %v3435
      %v3998 = vadd.f32 %v2185, %v3440
      %v3999 = vadd.f32 %v2190, %v3445
      %v4000 = vadd.f32 %v2195, %v3450
      %v4001 = vadd.f32 %v2200, %v3455
      %v4002 = vadd.f32 %v2205, %v3460
      %v4003 = vadd.f32 %v2210, %v3465
      %v4004 = vadd.f32 %v2215, %v3470
      %v4005 = vadd.f32 %v2220, %v3475
      %v4006 = vadd.f32 %v2225, %v3480
      %v4007 = vadd.f32 %v2230, %v3485
      %v4008 = vadd.f32 %v2235, %v3490
      %v4009 = vadd.f32 %v2240, %v3495
      %v4010 = vadd.f32 %v2245, %v3500
      %v4011 = vadd.f32 %v2250, %v3505
      %v4012 = vadd.f32 %v2255, %v3510
      %v4013 = vadd.f32 %v2260, %v3515
      %v4014 = vadd.f32 %v2265, %v3520
      %v4015 = vadd.f32 %v2270, %v3525
      %v4016 = vadd.f32 %v2275, %v3530
      %v4017 = vadd.f32 %v2280, %v3535
      %v4018 = vadd.f32 %v2285, %v3540
      %v4019 = vadd.f32 %v2290, %v3545
      %v4020 = vadd.f32 %v2295, %v3550
      %v4021 = vadd.f32 %v2300, %v3555
      %v4022 = vadd.f32 %v2305, %v3560
      %v4023 = vadd.f32 %v2310, %v3565
      %v4024 = vadd.f32 %v2315, %v3570
      %v4025 = vadd.f32 %v2320, %v3575
      %v4026 = vadd.f32 %v2325, %v3580
      %v4027 = vadd.f32 %v2330, %v3585
      %v4028 = vadd.f32 %v2335, %v3590
      %v4029 = vadd.f32 %v2340, %v3595
      %v4030 = vadd.f32 %v2345, %v3600
      %v4031 = vadd.f32 %v2350, %v3605
      %v4032 = vadd.f32 %v2355, %v3610
      %v4033 = vadd.f32 %v2360, %v3615
      %v4034 = vadd.f32 %v2365, %v3620
      %v4035 = vadd.f32 %v2370, %v3625
      %v4036 = vadd.f32 %v2375, %v3630
      %v4037 = vadd.f32 %v2380, %v3635
      %v4038 = vadd.f32 %v2385, %v3640
      %v4039 = vadd.f32 %v2390, %v3645
      %v4040 = vadd.f32 %v2395, %v3650
      %v4041 = vadd.f32 %v2400, %v3655
      %v4042 = vadd.f32 %v2405, %v3660
      %v4043 = vadd.f32 %v2410, %v3665
      %v4044 = vadd.f32 %v2415, %v3670
      %v4045 = vadd.f32 %v2420, %v3675
      %v4046 = vadd.f32 %v2425, %v3680
      %v4047 = vadd.f32 %v2430, %v3685
      %v4048 = vadd.f32 %v2435, %v3690
      %v4049 = vadd.f32 %v2440, %v3695
      %v4050 = vadd.f32 %v2445, %v3700
      %v4051 = vadd.f32 %v2450, %v3705
      %v4052 = vadd.f32 %v2455, %v3710
      %v4053 = vadd.f32 %v2460, %v3715
      %v4054 = vadd.f32 %v2465, %v3720
      %v4055 = vadd.f32 %v2470, %v3725
      %v4056 = vadd.f32 %v2475, %v3730
      %v4057 = vadd.f32 %v2480, %v3735
      %v4058 = vadd.f32 %v2485, %v3740
      %v4059 = vadd.f32 %v2490, %v3745
      %v4060 = vadd.f32 %v2495, %v3750
      %v4061 = vadd.f32 %v2500, %v3755
      %v4062 = vadd.f32 %v2505, %v3760
      %v4063 = vadd.f32 %v2510, %v3765
      %v4064 = vadd.f32 %v2515, %v3770
      %v4065 = vadd.f32 %v2520, %v3775
      %v4066 = vadd.f32 %v2525, %v3780
      %v4067 = vadd.f32 %v2530, %v3785
      %v4068 = vadd.f32 %v2535, %v3790
      %v4069 = vadd.f32 %v2540, %v3795
      %v4070 = vadd.f32 %v2545, %v3800
      %v4071 = vadd.f32 %v2550, %v3805
      %v4072 = vadd.f32 %v2555, %v3810
      %v4073 = vadd.f32 %v2560, %v3815
      %v4074 = vadd.f32 %v2565, %v3820
      %v4075 = vadd.f32 %v2570, %v3825
      %v4076 = vadd.f32 %v2575, %v3830
      %v4077 = vadd.f32 %v2580, %v3835
      %v4078 = vadd.f32 %v2585, %v3840
      %v4079 = vadd.f32 %v2590, %v3845
      %v4080 = vadd.f32 %v2595, %v3850
      %v4081 = vadd.f32 %v2600, %v3855
      %v4082 = vadd.f32 %v2605, %v3860
      %v4083 = vadd.f32 %v2610, %v3865
      %v4084 = vadd.f32 %v2615, %v3870
      %v4085 = vadd.f32 %v2620, %v3875
      %v4086 = vadd.f32 %v2625, %v3880
      %v4087 = vadd.f32 %v2630, %v3885
      %v4088 = vadd.f32 %v2635, %v3890
      %v4089 = vadd.f32 %v2640, %v3895
      %v4090 = vadd.f32 %v2645, %v3900
      %v4091 = vadd.f32 %v2650, %v3905
      %v4092 = vadd.f32 %v2655, %v3910
      %v4093 = vadd.f32 %v2660, %v3915
      %v4094 = vadd.f32 %v2665, %v3920
      %v4095 = vadd.f32 %v2670, %v3925
      %v4096 = vadd.f32 %v2675, %v3930
      %v4097 = vadd.f32 %v2680, %v3935
      %v4098 = vadd.f32 %v2685, %v3940
      %v4099 = vadd.f32 %v2690, %v3945
      %v4100 = vadd.f32 %v2695, %v3950
      %v4101 = vadd.f32 %v2700, %v3955
      %v4102 = vadd.f32 %v2705, %v3960
      %v4103 = vadd.f32 %v2710, %v3965
      %v4104 = vadd.f32 %v2715, %v3970
      %v4105 = vadd.f32 %v2720, %v3975
      %s4106 = scalar_lea.vmem %s1, 12
      %v4107 = vld [vmem:[%s4106] sm:$0xf]
      %v4109 = vsel %vm793, %v331, 0
      %v4112 = vsel %vm793, %v332, 0
      %v4115 = vsel %vm793, %v333, 0
      %v4118 = vsel %vm793, %v334, 0
      %v4121 = vsel %vm1050, %v4107, 0
      %4123 = vmatprep.subr.mxu0 0.0
      %4124 = vmatpush1.msra.mxu0 %v4121
      %4125 = vmatprep.subr.mxu0 0.0
      %4126 = vmatpush1.msra.mxu0 0.0
      %4127 = vmatprep.subr.mxu0 0.0
      %4128 = vmatpush1.msra.mxu0 0.0
      %4129 = vmatprep.subr.mxu0 0.0
      %4130 = vmatpush1.msra.mxu0 0.0
      %4131 = vmatprep.subr.mxu0 0.0
      %4132 = vmatpush1.msra.mxu0 0.0
      %4133 = vmatprep.subr.mxu0 0.0
      %4134 = vmatpush1.msra.mxu0 0.0
      %4135 = vmatprep.subr.mxu0 0.0
      %4136 = vmatpush1.msra.mxu0 0.0
      %4137 = vmatprep.subr.mxu0 0.0
      %4138 = vmatpush1.msra.mxu0 0.0
      %4139 = vmatprep.subr.mxu0 0.0
      %4140 = vmatpush1.msra.mxu0 0.0
      %4141 = vmatprep.subr.mxu0 0.0
      %4142 = vmatpush1.msra.mxu0 0.0
      %4143 = vmatprep.subr.mxu0 0.0
      %4144 = vmatpush1.msra.mxu0 0.0
      %4145 = vmatprep.subr.mxu0 0.0
      %4146 = vmatpush1.msra.mxu0 0.0
      %4147 = vmatprep.subr.mxu0 0.0
      %4148 = vmatpush1.msra.mxu0 0.0
      %4149 = vmatprep.subr.mxu0 0.0
      %4150 = vmatpush1.msra.mxu0 0.0
      %4151 = vmatprep.subr.mxu0 0.0
      %4152 = vmatpush1.msra.mxu0 0.0
      %4153 = vmatprep.subr.mxu0 0.0
      %4154 = vmatpush1.msra.mxu0 0.0
      %4155 = vmatprep.subr.mxu0 0.0
      %4156 = vmatpush1.msra.mxu0 0.0
      %4157 = vmatprep.subr.mxu0 0.0
      %4158 = vmatpush1.msra.mxu0 0.0
      %4159 = vmatprep.subr.mxu0 0.0
      %4160 = vmatpush1.msra.mxu0 0.0
      %4161 = vmatprep.subr.mxu0 0.0
      %4162 = vmatpush1.msra.mxu0 0.0
      %4163 = vmatprep.subr.mxu0 0.0
      %4164 = vmatpush1.msra.mxu0 0.0
      %4165 = vmatprep.subr.mxu0 0.0
      %4166 = vmatpush1.msra.mxu0 0.0
      %4167 = vmatprep.subr.mxu0 0.0
      %4168 = vmatpush1.msra.mxu0 0.0
      %4169 = vmatprep.subr.mxu0 0.0
      %4170 = vmatpush1.msra.mxu0 0.0
      %4171 = vmatprep.subr.mxu0 0.0
      %4172 = vmatpush1.msra.mxu0 0.0
      %4173 = vmatprep.subr.mxu0 0.0
      %4174 = vmatpush1.msra.mxu0 0.0
      %4175 = vmatprep.subr.mxu0 0.0
      %4176 = vmatpush1.msra.mxu0 0.0
      %4177 = vmatprep.subr.mxu0 0.0
      %4178 = vmatpush1.msra.mxu0 0.0
      %4179 = vmatprep.subr.mxu0 0.0
      %4180 = vmatpush1.msra.mxu0 0.0
      %4181 = vmatprep.subr.mxu0 0.0
      %4182 = vmatpush1.msra.mxu0 0.0
      %4183 = vmatprep.subr.mxu0 0.0
      %4184 = vmatpush1.msra.mxu0 0.0
      %4185 = vmatprep.subr.mxu0 0.0
      %4186 = vmatpush1.msra.mxu0 0.0
      %4187 = vmatprep.mubr.f32.mxu0 0.0
      %4188 = vmatmul.mubr.f32.gmra.mrb[0].mxu0 %v1767
      %v4189 = vpop.f32.mrb[0].mxu0
      %v4190 = vadd.f32 0.0, %v4189
      %v4191 = vpop.f32.mrb[0].mxu0
      %4192 = vmatprep.mubr.f32.mxu0 0.0
      %4193 = vmatmul.mubr.f32.gmra.mrb[0].mxu0 %v1769
      %v4194 = vpop.f32.mrb[0].mxu0
      %v4195 = vadd.f32 0.0, %v4194
      %v4196 = vpop.f32.mrb[0].mxu0
      %4197 = vmatprep.mubr.f32.mxu0 0.0
      %4198 = vmatmul.mubr.f32.gmra.mrb[0].mxu0 %v1771
      %v4199 = vpop.f32.mrb[0].mxu0
      %v4200 = vadd.f32 0.0, %v4199
      %v4201 = vpop.f32.mrb[0].mxu0
      %4202 = vmatprep.mubr.f32.mxu0 0.0
      %4203 = vmatmul.mubr.f32.gmra.mrb[0].mxu0 %v1773
      %v4204 = vpop.f32.mrb[0].mxu0
      %v4205 = vadd.f32 0.0, %v4204
      %v4206 = vpop.f32.mrb[0].mxu0
      %4207 = vmatprep.mubr.f32.mxu0 0.0
      %4208 = vmatmul.mubr.f32.gmra.mrb[0].mxu0 %v1775
      %v4209 = vpop.f32.mrb[0].mxu0
      %v4210 = vadd.f32 0.0, %v4209
      %v4211 = vpop.f32.mrb[0].mxu0
      %4212 = vmatprep.mubr.f32.mxu0 0.0
      %4213 = vmatmul.mubr.f32.gmra.mrb[0].mxu0 %v1777
      %v4214 = vpop.f32.mrb[0].mxu0
      %v4215 = vadd.f32 0.0, %v4214
      %v4216 = vpop.f32.mrb[0].mxu0
      %4217 = vmatprep.mubr.f32.mxu0 0.0
      %4218 = vmatmul.mubr.f32.gmra.mrb[0].mxu0 %v1779
      %v4219 = vpop.f32.mrb[0].mxu0
      %v4220 = vadd.f32 0.0, %v4219
      %v4221 = vpop.f32.mrb[0].mxu0
      %4222 = vmatprep.mubr.f32.mxu0 0.0
      %4223 = vmatmul.mubr.f32.gmra.mrb[0].mxu0 %v1781
      %v4224 = vpop.f32.mrb[0].mxu0
      %v4225 = vadd.f32 0.0, %v4224
      %v4226 = vpop.f32.mrb[0].mxu0
      %4227 = vmatprep.mubr.f32.mxu0 0.0
      %4228 = vmatmul.mubr.f32.gmra.mrb[0].mxu0 %v1783
      %v4229 = vpop.f32.mrb[0].mxu0
      %v4230 = vadd.f32 0.0, %v4229
      %v4231 = vpop.f32.mrb[0].mxu0
      %4232 = vmatprep.mubr.f32.mxu0 0.0
      %4233 = vmatmul.mubr.f32.gmra.mrb[0].mxu0 %v1785
      %v4234 = vpop.f32.mrb[0].mxu0
      %v4235 = vadd.f32 0.0, %v4234
      %v4236 = vpop.f32.mrb[0].mxu0
      %4237 = vmatprep.mubr.f32.mxu0 0.0
      %4238 = vmatmul.mubr.f32.gmra.mrb[0].mxu0 %v1787
      %v4239 = vpop.f32.mrb[0].mxu0
      %v4240 = vadd.f32 0.0, %v4239
      %v4241 = vpop.f32.mrb[0].mxu0
      %4242 = vmatprep.mubr.f32.mxu0 0.0
      %4243 = vmatmul.mubr.f32.gmra.mrb[0].mxu0 %v1789
      %v4244 = vpop.f32.mrb[0].mxu0
      %v4245 = vadd.f32 0.0, %v4244
      %v4246 = vpop.f32.mrb[0].mxu0
      %4247 = vmatprep.mubr.f32.mxu0 0.0
      %4248 = vmatmul.mubr.f32.gmra.mrb[0].mxu0 %v1791
      %v4249 = vpop.f32.mrb[0].mxu0
      %v4250 = vadd.f32 0.0, %v4249
      %v4251 = vpop.f32.mrb[0].mxu0
      %4252 = vmatprep.mubr.f32.mxu0 0.0
      %4253 = vmatmul.mubr.f32.gmra.mrb[0].mxu0 %v1793
      %v4254 = vpop.f32.mrb[0].mxu0
      %v4255 = vadd.f32 0.0, %v4254
      %v4256 = vpop.f32.mrb[0].mxu0
      %4257 = vmatprep.mubr.f32.mxu0 0.0
      %4258 = vmatmul.mubr.f32.gmra.mrb[0].mxu0 %v1795
      %v4259 = vpop.f32.mrb[0].mxu0
      %v4260 = vadd.f32 0.0, %v4259
      %v4261 = vpop.f32.mrb[0].mxu0
      %4262 = vmatprep.mubr.f32.mxu0 0.0
      %4263 = vmatmul.mubr.f32.gmra.mrb[0].mxu0 %v1797
      %v4264 = vpop.f32.mrb[0].mxu0
      %v4265 = vadd.f32 0.0, %v4264
      %v4266 = vpop.f32.mrb[0].mxu0
      %4267 = vmatprep.mubr.f32.mxu0 0.0
      %4268 = vmatmul.mubr.f32.gmra.mrb[0].mxu0 %v1799
      %v4269 = vpop.f32.mrb[0].mxu0
      %v4270 = vadd.f32 0.0, %v4269
      %v4271 = vpop.f32.mrb[0].mxu0
      %4272 = vmatprep.mubr.f32.mxu0 0.0
      %4273 = vmatmul.mubr.f32.gmra.mrb[0].mxu0 %v1801
      %v4274 = vpop.f32.mrb[0].mxu0
      %v4275 = vadd.f32 0.0, %v4274
      %v4276 = vpop.f32.mrb[0].mxu0
      %4277 = vmatprep.mubr.f32.mxu0 0.0
      %4278 = vmatmul.mubr.f32.gmra.mrb[0].mxu0 %v1803
      %v4279 = vpop.f32.mrb[0].mxu0
      %v4280 = vadd.f32 0.0, %v4279
      %v4281 = vpop.f32.mrb[0].mxu0
      %4282 = vmatprep.mubr.f32.mxu0 0.0
      %4283 = vmatmul.mubr.f32.gmra.mrb[0].mxu0 %v1805
      %v4284 = vpop.f32.mrb[0].mxu0
      %v4285 = vadd.f32 0.0, %v4284
      %v4286 = vpop.f32.mrb[0].mxu0
      %4287 = vmatprep.mubr.f32.mxu0 0.0
      %4288 = vmatmul.mubr.f32.gmra.mrb[0].mxu0 %v1807
      %v4289 = vpop.f32.mrb[0].mxu0
      %v4290 = vadd.f32 0.0, %v4289
      %v4291 = vpop.f32.mrb[0].mxu0
      %4292 = vmatprep.mubr.f32.mxu0 0.0
      %4293 = vmatmul.mubr.f32.gmra.mrb[0].mxu0 %v1809
      %v4294 = vpop.f32.mrb[0].mxu0
      %v4295 = vadd.f32 0.0, %v4294
      %v4296 = vpop.f32.mrb[0].mxu0
      %4297 = vmatprep.mubr.f32.mxu0 0.0
      %4298 = vmatmul.mubr.f32.gmra.mrb[0].mxu0 %v1811
      %v4299 = vpop.f32.mrb[0].mxu0
      %v4300 = vadd.f32 0.0, %v4299
      %v4301 = vpop.f32.mrb[0].mxu0
      %4302 = vmatprep.mubr.f32.mxu0 0.0
      %4303 = vmatmul.mubr.f32.gmra.mrb[0].mxu0 %v1813
      %v4304 = vpop.f32.mrb[0].mxu0
      %v4305 = vadd.f32 0.0, %v4304
      %v4306 = vpop.f32.mrb[0].mxu0
      %4307 = vmatprep.mubr.f32.mxu0 0.0
      %4308 = vmatmul.mubr.f32.gmra.mrb[0].mxu0 %v1815
      %v4309 = vpop.f32.mrb[0].mxu0
      %v4310 = vadd.f32 0.0, %v4309
      %v4311 = vpop.f32.mrb[0].mxu0
      %4312 = vmatprep.mubr.f32.mxu0 0.0
      %4313 = vmatmul.mubr.f32.gmra.mrb[0].mxu0 %v1817
      %v4314 = vpop.f32.mrb[0].mxu0
      %v4315 = vadd.f32 0.0, %v4314
      %v4316 = vpop.f32.mrb[0].mxu0
      %4317 = vmatprep.mubr.f32.mxu0 0.0
      %4318 = vmatmul.mubr.f32.gmra.mrb[0].mxu0 %v1819
      %v4319 = vpop.f32.mrb[0].mxu0
      %v4320 = vadd.f32 0.0, %v4319
      %v4321 = vpop.f32.mrb[0].mxu0
      %4322 = vmatprep.mubr.f32.mxu0 0.0
      %4323 = vmatmul.mubr.f32.gmra.mrb[0].mxu0 %v1821
      %v4324 = vpop.f32.mrb[0].mxu0
      %v4325 = vadd.f32 0.0, %v4324
      %v4326 = vpop.f32.mrb[0].mxu0
      %4327 = vmatprep.mubr.f32.mxu0 0.0
      %4328 = vmatmul.mubr.f32.gmra.mrb[0].mxu0 %v1823
      %v4329 = vpop.f32.mrb[0].mxu0
      %v4330 = vadd.f32 0.0, %v4329
      %v4331 = vpop.f32.mrb[0].mxu0
      %4332 = vmatprep.mubr.f32.mxu0 0.0
      %4333 = vmatmul.mubr.f32.gmra.mrb[0].mxu0 %v1825
      %v4334 = vpop.f32.mrb[0].mxu0
      %v4335 = vadd.f32 0.0, %v4334
      %v4336 = vpop.f32.mrb[0].mxu0
      %4337 = vmatprep.mubr.f32.mxu0 0.0
      %4338 = vmatmul.mubr.f32.gmra.mrb[0].mxu0 %v1827
      %v4339 = vpop.f32.mrb[0].mxu0
      %v4340 = vadd.f32 0.0, %v4339
      %v4341 = vpop.f32.mrb[0].mxu0
      %4342 = vmatprep.mubr.f32.mxu0 0.0
      %4343 = vmatmul.mubr.f32.gmra.mrb[0].mxu0 %v1829
      %v4344 = vpop.f32.mrb[0].mxu0
      %v4345 = vadd.f32 0.0, %v4344
      %v4346 = vpop.f32.mrb[0].mxu0
      %4347 = vmatprep.mubr.f32.mxu0 0.0
      %4348 = vmatmul.mubr.f32.gmra.mrb[0].mxu0 %v1831
      %v4349 = vpop.f32.mrb[0].mxu0
      %v4350 = vadd.f32 0.0, %v4349
      %v4351 = vpop.f32.mrb[0].mxu0
      %4352 = vmatprep.mubr.f32.mxu0 0.0
      %4353 = vmatmul.mubr.f32.gmra.mrb[0].mxu0 %v1833
      %v4354 = vpop.f32.mrb[0].mxu0
      %v4355 = vadd.f32 0.0, %v4354
      %v4356 = vpop.f32.mrb[0].mxu0
      %4357 = vmatprep.mubr.f32.mxu0 0.0
      %4358 = vmatmul.mubr.f32.gmra.mrb[0].mxu0 %v1835
      %v4359 = vpop.f32.mrb[0].mxu0
      %v4360 = vadd.f32 0.0, %v4359
      %v4361 = vpop.f32.mrb[0].mxu0
      %4362 = vmatprep.mubr.f32.mxu0 0.0
      %4363 = vmatmul.mubr.f32.gmra.mrb[0].mxu0 %v1837
      %v4364 = vpop.f32.mrb[0].mxu0
      %v4365 = vadd.f32 0.0, %v4364
      %v4366 = vpop.f32.mrb[0].mxu0
      %4367 = vmatprep.mubr.f32.mxu0 0.0
      %4368 = vmatmul.mubr.f32.gmra.mrb[0].mxu0 %v1839
      %v4369 = vpop.f32.mrb[0].mxu0
      %v4370 = vadd.f32 0.0, %v4369
      %v4371 = vpop.f32.mrb[0].mxu0
      %4372 = vmatprep.mubr.f32.mxu0 0.0
      %4373 = vmatmul.mubr.f32.gmra.mrb[0].mxu0 %v1841
      %v4374 = vpop.f32.mrb[0].mxu0
      %v4375 = vadd.f32 0.0, %v4374
      %v4376 = vpop.f32.mrb[0].mxu0
      %4377 = vmatprep.mubr.f32.mxu0 0.0
      %4378 = vmatmul.mubr.f32.gmra.mrb[0].mxu0 %v1843
      %v4379 = vpop.f32.mrb[0].mxu0
      %v4380 = vadd.f32 0.0, %v4379
      %v4381 = vpop.f32.mrb[0].mxu0
      %4382 = vmatprep.mubr.f32.mxu0 0.0
      %4383 = vmatmul.mubr.f32.gmra.mrb[0].mxu0 %v1845
      %v4384 = vpop.f32.mrb[0].mxu0
      %v4385 = vadd.f32 0.0, %v4384
      %v4386 = vpop.f32.mrb[0].mxu0
      %4387 = vmatprep.mubr.f32.mxu0 0.0
      %4388 = vmatmul.mubr.f32.gmra.mrb[0].mxu0 %v1847
      %v4389 = vpop.f32.mrb[0].mxu0
      %v4390 = vadd.f32 0.0, %v4389
      %v4391 = vpop.f32.mrb[0].mxu0
      %4392 = vmatprep.mubr.f32.mxu0 0.0
      %4393 = vmatmul.mubr.f32.gmra.mrb[0].mxu0 %v1849
      %v4394 = vpop.f32.mrb[0].mxu0
      %v4395 = vadd.f32 0.0, %v4394
      %v4396 = vpop.f32.mrb[0].mxu0
      %4397 = vmatprep.mubr.f32.mxu0 0.0
      %4398 = vmatmul.mubr.f32.gmra.mrb[0].mxu0 %v1851
      %v4399 = vpop.f32.mrb[0].mxu0
      %v4400 = vadd.f32 0.0, %v4399
      %v4401 = vpop.f32.mrb[0].mxu0
      %4402 = vmatprep.mubr.f32.mxu0 0.0
      %4403 = vmatmul.mubr.f32.gmra.mrb[0].mxu0 %v1853
      %v4404 = vpop.f32.mrb[0].mxu0
      %v4405 = vadd.f32 0.0, %v4404
      %v4406 = vpop.f32.mrb[0].mxu0
      %4407 = vmatprep.mubr.f32.mxu0 0.0
      %4408 = vmatmul.mubr.f32.gmra.mrb[0].mxu0 %v1855
      %v4409 = vpop.f32.mrb[0].mxu0
      %v4410 = vadd.f32 0.0, %v4409
      %v4411 = vpop.f32.mrb[0].mxu0
      %4412 = vmatprep.mubr.f32.mxu0 0.0
      %4413 = vmatmul.mubr.f32.gmra.mrb[0].mxu0 %v1857
      %v4414 = vpop.f32.mrb[0].mxu0
      %v4415 = vadd.f32 0.0, %v4414
      %v4416 = vpop.f32.mrb[0].mxu0
      %4417 = vmatprep.mubr.f32.mxu0 0.0
      %4418 = vmatmul.mubr.f32.gmra.mrb[0].mxu0 %v1859
      %v4419 = vpop.f32.mrb[0].mxu0
      %v4420 = vadd.f32 0.0, %v4419
      %v4421 = vpop.f32.mrb[0].mxu0
      %4422 = vmatprep.mubr.f32.mxu0 0.0
      %4423 = vmatmul.mubr.f32.gmra.mrb[0].mxu0 %v1861
      %v4424 = vpop.f32.mrb[0].mxu0
      %v4425 = vadd.f32 0.0, %v4424
      %v4426 = vpop.f32.mrb[0].mxu0
      %4427 = vmatprep.mubr.f32.mxu0 0.0
      %4428 = vmatmul.mubr.f32.gmra.mrb[0].mxu0 %v1863
      %v4429 = vpop.f32.mrb[0].mxu0
      %v4430 = vadd.f32 0.0, %v4429
      %v4431 = vpop.f32.mrb[0].mxu0
      %4432 = vmatprep.mubr.f32.mxu0 0.0
      %4433 = vmatmul.mubr.f32.gmra.mrb[0].mxu0 %v1865
      %v4434 = vpop.f32.mrb[0].mxu0
      %v4435 = vadd.f32 0.0, %v4434
      %v4436 = vpop.f32.mrb[0].mxu0
      %4437 = vmatprep.mubr.f32.mxu0 0.0
      %4438 = vmatmul.mubr.f32.gmra.mrb[0].mxu0 %v1867
      %v4439 = vpop.f32.mrb[0].mxu0
      %v4440 = vadd.f32 0.0, %v4439
      %v4441 = vpop.f32.mrb[0].mxu0
      %4442 = vmatprep.mubr.f32.mxu0 0.0
      %4443 = vmatmul.mubr.f32.gmra.mrb[0].mxu0 %v1869
      %v4444 = vpop.f32.mrb[0].mxu0
      %v4445 = vadd.f32 0.0, %v4444
      %v4446 = vpop.f32.mrb[0].mxu0
      %4447 = vmatprep.mubr.f32.mxu0 0.0
      %4448 = vmatmul.mubr.f32.gmra.mrb[0].mxu0 %v1871
      %v4449 = vpop.f32.mrb[0].mxu0
      %v4450 = vadd.f32 0.0, %v4449
      %v4451 = vpop.f32.mrb[0].mxu0
      %4452 = vmatprep.mubr.f32.mxu0 0.0
      %4453 = vmatmul.mubr.f32.gmra.mrb[0].mxu0 %v1873
      %v4454 = vpop.f32.mrb[0].mxu0
      %v4455 = vadd.f32 0.0, %v4454
      %v4456 = vpop.f32.mrb[0].mxu0
      %4457 = vmatprep.mubr.f32.mxu0 0.0
      %4458 = vmatmul.mubr.f32.gmra.mrb[0].mxu0 %v1875
      %v4459 = vpop.f32.mrb[0].mxu0
      %v4460 = vadd.f32 0.0, %v4459
      %v4461 = vpop.f32.mrb[0].mxu0
      %4462 = vmatprep.mubr.f32.mxu0 0.0
      %4463 = vmatmul.mubr.f32.gmra.mrb[0].mxu0 %v1877
      %v4464 = vpop.f32.mrb[0].mxu0
      %v4465 = vadd.f32 0.0, %v4464
      %v4466 = vpop.f32.mrb[0].mxu0
      %4467 = vmatprep.mubr.f32.mxu0 0.0
      %4468 = vmatmul.mubr.f32.gmra.mrb[0].mxu0 %v1879
      %v4469 = vpop.f32.mrb[0].mxu0
      %v4470 = vadd.f32 0.0, %v4469
      %v4471 = vpop.f32.mrb[0].mxu0
      %4472 = vmatprep.mubr.f32.mxu0 0.0
      %4473 = vmatmul.mubr.f32.gmra.mrb[0].mxu0 %v1881
      %v4474 = vpop.f32.mrb[0].mxu0
      %v4475 = vadd.f32 0.0, %v4474
      %v4476 = vpop.f32.mrb[0].mxu0
      %4477 = vmatprep.mubr.f32.mxu0 0.0
      %4478 = vmatmul.mubr.f32.gmra.mrb[0].mxu0 %v1883
      %v4479 = vpop.f32.mrb[0].mxu0
      %v4480 = vadd.f32 0.0, %v4479
      %v4481 = vpop.f32.mrb[0].mxu0
      %4482 = vmatprep.mubr.f32.mxu0 0.0
      %4483 = vmatmul.mubr.f32.gmra.mrb[0].mxu0 %v1885
      %v4484 = vpop.f32.mrb[0].mxu0
      %v4485 = vadd.f32 0.0, %v4484
      %v4486 = vpop.f32.mrb[0].mxu0
      %4487 = vmatprep.mubr.f32.mxu0 0.0
      %4488 = vmatmul.mubr.f32.gmra.mrb[0].mxu0 %v1887
      %v4489 = vpop.f32.mrb[0].mxu0
      %v4490 = vadd.f32 0.0, %v4489
      %v4491 = vpop.f32.mrb[0].mxu0
      %4492 = vmatprep.mubr.f32.mxu0 0.0
      %4493 = vmatmul.mubr.f32.gmra.mrb[0].mxu0 %v1889
      %v4494 = vpop.f32.mrb[0].mxu0
      %v4495 = vadd.f32 0.0, %v4494
      %v4496 = vpop.f32.mrb[0].mxu0
      %4497 = vmatprep.mubr.f32.mxu0 0.0
      %4498 = vmatmul.mubr.f32.gmra.mrb[0].mxu0 %v1891
      %v4499 = vpop.f32.mrb[0].mxu0
      %v4500 = vadd.f32 0.0, %v4499
      %v4501 = vpop.f32.mrb[0].mxu0
      %4502 = vmatprep.mubr.f32.mxu0 0.0
      %4503 = vmatmul.mubr.f32.gmra.mrb[0].mxu0 %v1893
      %v4504 = vpop.f32.mrb[0].mxu0
      %v4505 = vadd.f32 0.0, %v4504
      %v4506 = vpop.f32.mrb[0].mxu0
      %4507 = vmatprep.mubr.f32.mxu0 0.0
      %4508 = vmatmul.mubr.f32.gmra.mrb[0].mxu0 %v1895
      %v4509 = vpop.f32.mrb[0].mxu0
      %v4510 = vadd.f32 0.0, %v4509
      %v4511 = vpop.f32.mrb[0].mxu0
      %4512 = vmatprep.mubr.f32.mxu0 0.0
      %4513 = vmatmul.mubr.f32.gmra.mrb[0].mxu0 %v1897
      %v4514 = vpop.f32.mrb[0].mxu0
      %v4515 = vadd.f32 0.0, %v4514
      %v4516 = vpop.f32.mrb[0].mxu0
      %4517 = vmatprep.mubr.f32.mxu0 0.0
      %4518 = vmatmul.mubr.f32.gmra.mrb[0].mxu0 %v1899
      %v4519 = vpop.f32.mrb[0].mxu0
      %v4520 = vadd.f32 0.0, %v4519
      %v4521 = vpop.f32.mrb[0].mxu0
      %4522 = vmatprep.mubr.f32.mxu0 0.0
      %4523 = vmatmul.mubr.f32.gmra.mrb[0].mxu0 %v1901
      %v4524 = vpop.f32.mrb[0].mxu0
      %v4525 = vadd.f32 0.0, %v4524
      %v4526 = vpop.f32.mrb[0].mxu0
      %4527 = vmatprep.mubr.f32.mxu0 0.0
      %4528 = vmatmul.mubr.f32.gmra.mrb[0].mxu0 %v1903
      %v4529 = vpop.f32.mrb[0].mxu0
      %v4530 = vadd.f32 0.0, %v4529
      %v4531 = vpop.f32.mrb[0].mxu0
      %4532 = vmatprep.mubr.f32.mxu0 0.0
      %4533 = vmatmul.mubr.f32.gmra.mrb[0].mxu0 %v1905
      %v4534 = vpop.f32.mrb[0].mxu0
      %v4535 = vadd.f32 0.0, %v4534
      %v4536 = vpop.f32.mrb[0].mxu0
      %4537 = vmatprep.mubr.f32.mxu0 0.0
      %4538 = vmatmul.mubr.f32.gmra.mrb[0].mxu0 %v1907
      %v4539 = vpop.f32.mrb[0].mxu0
      %v4540 = vadd.f32 0.0, %v4539
      %v4541 = vpop.f32.mrb[0].mxu0
      %4542 = vmatprep.mubr.f32.mxu0 0.0
      %4543 = vmatmul.mubr.f32.gmra.mrb[0].mxu0 %v1909
      %v4544 = vpop.f32.mrb[0].mxu0
      %v4545 = vadd.f32 0.0, %v4544
      %v4546 = vpop.f32.mrb[0].mxu0
      %4547 = vmatprep.mubr.f32.mxu0 0.0
      %4548 = vmatmul.mubr.f32.gmra.mrb[0].mxu0 %v1911
      %v4549 = vpop.f32.mrb[0].mxu0
      %v4550 = vadd.f32 0.0, %v4549
      %v4551 = vpop.f32.mrb[0].mxu0
      %4552 = vmatprep.mubr.f32.mxu0 0.0
      %4553 = vmatmul.mubr.f32.gmra.mrb[0].mxu0 %v1913
      %v4554 = vpop.f32.mrb[0].mxu0
      %v4555 = vadd.f32 0.0, %v4554
      %v4556 = vpop.f32.mrb[0].mxu0
      %4557 = vmatprep.mubr.f32.mxu0 0.0
      %4558 = vmatmul.mubr.f32.gmra.mrb[0].mxu0 %v1915
      %v4559 = vpop.f32.mrb[0].mxu0
      %v4560 = vadd.f32 0.0, %v4559
      %v4561 = vpop.f32.mrb[0].mxu0
      %4562 = vmatprep.mubr.f32.mxu0 0.0
      %4563 = vmatmul.mubr.f32.gmra.mrb[0].mxu0 %v1917
      %v4564 = vpop.f32.mrb[0].mxu0
      %v4565 = vadd.f32 0.0, %v4564
      %v4566 = vpop.f32.mrb[0].mxu0
      %4567 = vmatprep.mubr.f32.mxu0 0.0
      %4568 = vmatmul.mubr.f32.gmra.mrb[0].mxu0 %v1919
      %v4569 = vpop.f32.mrb[0].mxu0
      %v4570 = vadd.f32 0.0, %v4569
      %v4571 = vpop.f32.mrb[0].mxu0
      %4572 = vmatprep.mubr.f32.mxu0 0.0
      %4573 = vmatmul.mubr.f32.gmra.mrb[0].mxu0 %v1921
      %v4574 = vpop.f32.mrb[0].mxu0
      %v4575 = vadd.f32 0.0, %v4574
      %v4576 = vpop.f32.mrb[0].mxu0
      %4577 = vmatprep.mubr.f32.mxu0 0.0
      %4578 = vmatmul.mubr.f32.gmra.mrb[0].mxu0 %v1923
      %v4579 = vpop.f32.mrb[0].mxu0
      %v4580 = vadd.f32 0.0, %v4579
      %v4581 = vpop.f32.mrb[0].mxu0
      %4582 = vmatprep.mubr.f32.mxu0 0.0
      %4583 = vmatmul.mubr.f32.gmra.mrb[0].mxu0 %v1925
      %v4584 = vpop.f32.mrb[0].mxu0
      %v4585 = vadd.f32 0.0, %v4584
      %v4586 = vpop.f32.mrb[0].mxu0
      %4587 = vmatprep.mubr.f32.mxu0 0.0
      %4588 = vmatmul.mubr.f32.gmra.mrb[0].mxu0 %v1927
      %v4589 = vpop.f32.mrb[0].mxu0
      %v4590 = vadd.f32 0.0, %v4589
      %v4591 = vpop.f32.mrb[0].mxu0
      %4592 = vmatprep.mubr.f32.mxu0 0.0
      %4593 = vmatmul.mubr.f32.gmra.mrb[0].mxu0 %v1929
      %v4594 = vpop.f32.mrb[0].mxu0
      %v4595 = vadd.f32 0.0, %v4594
      %v4596 = vpop.f32.mrb[0].mxu0
      %4597 = vmatprep.mubr.f32.mxu0 0.0
      %4598 = vmatmul.mubr.f32.gmra.mrb[0].mxu0 %v1931
      %v4599 = vpop.f32.mrb[0].mxu0
      %v4600 = vadd.f32 0.0, %v4599
      %v4601 = vpop.f32.mrb[0].mxu0
      %4602 = vmatprep.mubr.f32.mxu0 0.0
      %4603 = vmatmul.mubr.f32.gmra.mrb[0].mxu0 %v1933
      %v4604 = vpop.f32.mrb[0].mxu0
      %v4605 = vadd.f32 0.0, %v4604
      %v4606 = vpop.f32.mrb[0].mxu0
      %4607 = vmatprep.mubr.f32.mxu0 0.0
      %4608 = vmatmul.mubr.f32.gmra.mrb[0].mxu0 %v1935
      %v4609 = vpop.f32.mrb[0].mxu0
      %v4610 = vadd.f32 0.0, %v4609
      %v4611 = vpop.f32.mrb[0].mxu0
      %4612 = vmatprep.mubr.f32.mxu0 0.0
      %4613 = vmatmul.mubr.f32.gmra.mrb[0].mxu0 %v1937
      %v4614 = vpop.f32.mrb[0].mxu0
      %v4615 = vadd.f32 0.0, %v4614
      %v4616 = vpop.f32.mrb[0].mxu0
      %4617 = vmatprep.mubr.f32.mxu0 0.0
      %4618 = vmatmul.mubr.f32.gmra.mrb[0].mxu0 %v1939
      %v4619 = vpop.f32.mrb[0].mxu0
      %v4620 = vadd.f32 0.0, %v4619
      %v4621 = vpop.f32.mrb[0].mxu0
      %4622 = vmatprep.mubr.f32.mxu0 0.0
      %4623 = vmatmul.mubr.f32.gmra.mrb[0].mxu0 %v1941
      %v4624 = vpop.f32.mrb[0].mxu0
      %v4625 = vadd.f32 0.0, %v4624
      %v4626 = vpop.f32.mrb[0].mxu0
      %4627 = vmatprep.mubr.f32.mxu0 0.0
      %4628 = vmatmul.mubr.f32.gmra.mrb[0].mxu0 %v1943
      %v4629 = vpop.f32.mrb[0].mxu0
      %v4630 = vadd.f32 0.0, %v4629
      %v4631 = vpop.f32.mrb[0].mxu0
      %4632 = vmatprep.mubr.f32.mxu0 0.0
      %4633 = vmatmul.mubr.f32.gmra.mrb[0].mxu0 %v1945
      %v4634 = vpop.f32.mrb[0].mxu0
      %v4635 = vadd.f32 0.0, %v4634
      %v4636 = vpop.f32.mrb[0].mxu0
      %4637 = vmatprep.mubr.f32.mxu0 0.0
      %4638 = vmatmul.mubr.f32.gmra.mrb[0].mxu0 %v1947
      %v4639 = vpop.f32.mrb[0].mxu0
      %v4640 = vadd.f32 0.0, %v4639
      %v4641 = vpop.f32.mrb[0].mxu0
      %4642 = vmatprep.mubr.f32.mxu0 0.0
      %4643 = vmatmul.mubr.f32.gmra.mrb[0].mxu0 %v1949
      %v4644 = vpop.f32.mrb[0].mxu0
      %v4645 = vadd.f32 0.0, %v4644
      %v4646 = vpop.f32.mrb[0].mxu0
      %4647 = vmatprep.mubr.f32.mxu0 0.0
      %4648 = vmatmul.mubr.f32.gmra.mrb[0].mxu0 %v1951
      %v4649 = vpop.f32.mrb[0].mxu0
      %v4650 = vadd.f32 0.0, %v4649
      %v4651 = vpop.f32.mrb[0].mxu0
      %4652 = vmatprep.mubr.f32.mxu0 0.0
      %4653 = vmatmul.mubr.f32.gmra.mrb[0].mxu0 %v1953
      %v4654 = vpop.f32.mrb[0].mxu0
      %v4655 = vadd.f32 0.0, %v4654
      %v4656 = vpop.f32.mrb[0].mxu0
      %4657 = vmatprep.mubr.f32.mxu0 0.0
      %4658 = vmatmul.mubr.f32.gmra.mrb[0].mxu0 %v1955
      %v4659 = vpop.f32.mrb[0].mxu0
      %v4660 = vadd.f32 0.0, %v4659
      %v4661 = vpop.f32.mrb[0].mxu0
      %4662 = vmatprep.mubr.f32.mxu0 0.0
      %4663 = vmatmul.mubr.f32.gmra.mrb[0].mxu0 %v1957
      %v4664 = vpop.f32.mrb[0].mxu0
      %v4665 = vadd.f32 0.0, %v4664
      %v4666 = vpop.f32.mrb[0].mxu0
      %4667 = vmatprep.mubr.f32.mxu0 0.0
      %4668 = vmatmul.mubr.f32.gmra.mrb[0].mxu0 %v1959
      %v4669 = vpop.f32.mrb[0].mxu0
      %v4670 = vadd.f32 0.0, %v4669
      %v4671 = vpop.f32.mrb[0].mxu0
      %4672 = vmatprep.mubr.f32.mxu0 0.0
      %4673 = vmatmul.mubr.f32.gmra.mrb[0].mxu0 %v1961
      %v4674 = vpop.f32.mrb[0].mxu0
      %v4675 = vadd.f32 0.0, %v4674
      %v4676 = vpop.f32.mrb[0].mxu0
      %4677 = vmatprep.mubr.f32.mxu0 0.0
      %4678 = vmatmul.mubr.f32.gmra.mrb[0].mxu0 %v1963
      %v4679 = vpop.f32.mrb[0].mxu0
      %v4680 = vadd.f32 0.0, %v4679
      %v4681 = vpop.f32.mrb[0].mxu0
      %4682 = vmatprep.mubr.f32.mxu0 0.0
      %4683 = vmatmul.mubr.f32.gmra.mrb[0].mxu0 %v1965
      %v4684 = vpop.f32.mrb[0].mxu0
      %v4685 = vadd.f32 0.0, %v4684
      %v4686 = vpop.f32.mrb[0].mxu0
      %4687 = vmatprep.mubr.f32.mxu0 0.0
      %4688 = vmatmul.mubr.f32.gmra.mrb[0].mxu0 %v1967
      %v4689 = vpop.f32.mrb[0].mxu0
      %v4690 = vadd.f32 0.0, %v4689
      %v4691 = vpop.f32.mrb[0].mxu0
      %4692 = vmatprep.mubr.f32.mxu0 0.0
      %4693 = vmatmul.mubr.f32.gmra.mrb[0].mxu0 %v1969
      %v4694 = vpop.f32.mrb[0].mxu0
      %v4695 = vadd.f32 0.0, %v4694
      %v4696 = vpop.f32.mrb[0].mxu0
      %4697 = vmatprep.mubr.f32.mxu0 0.0
      %4698 = vmatmul.mubr.f32.gmra.mrb[0].mxu0 %v1971
      %v4699 = vpop.f32.mrb[0].mxu0
      %v4700 = vadd.f32 0.0, %v4699
      %v4701 = vpop.f32.mrb[0].mxu0
      %4702 = vmatprep.mubr.f32.mxu0 0.0
      %4703 = vmatmul.mubr.f32.gmra.mrb[0].mxu0 %v1973
      %v4704 = vpop.f32.mrb[0].mxu0
      %v4705 = vadd.f32 0.0, %v4704
      %v4706 = vpop.f32.mrb[0].mxu0
      %4707 = vmatprep.mubr.f32.mxu0 0.0
      %4708 = vmatmul.mubr.f32.gmra.mrb[0].mxu0 %v1975
      %v4709 = vpop.f32.mrb[0].mxu0
      %v4710 = vadd.f32 0.0, %v4709
      %v4711 = vpop.f32.mrb[0].mxu0
      %4712 = vmatprep.mubr.f32.mxu0 0.0
      %4713 = vmatmul.mubr.f32.gmra.mrb[0].mxu0 %v1977
      %v4714 = vpop.f32.mrb[0].mxu0
      %v4715 = vadd.f32 0.0, %v4714
      %v4716 = vpop.f32.mrb[0].mxu0
      %4717 = vmatprep.mubr.f32.mxu0 0.0
      %4718 = vmatmul.mubr.f32.gmra.mrb[0].mxu0 %v1979
      %v4719 = vpop.f32.mrb[0].mxu0
      %v4720 = vadd.f32 0.0, %v4719
      %v4721 = vpop.f32.mrb[0].mxu0
      %4722 = vmatprep.mubr.f32.mxu0 0.0
      %4723 = vmatmul.mubr.f32.gmra.mrb[0].mxu0 %v1981
      %v4724 = vpop.f32.mrb[0].mxu0
      %v4725 = vadd.f32 0.0, %v4724
      %v4726 = vpop.f32.mrb[0].mxu0
      %4727 = vmatprep.mubr.f32.mxu0 0.0
      %4728 = vmatmul.mubr.f32.gmra.mrb[0].mxu0 %v1983
      %v4729 = vpop.f32.mrb[0].mxu0
      %v4730 = vadd.f32 0.0, %v4729
      %v4731 = vpop.f32.mrb[0].mxu0
      %4732 = vmatprep.mubr.f32.mxu0 0.0
      %4733 = vmatmul.mubr.f32.gmra.mrb[0].mxu0 %v1985
      %v4734 = vpop.f32.mrb[0].mxu0
      %v4735 = vadd.f32 0.0, %v4734
      %v4736 = vpop.f32.mrb[0].mxu0
      %4737 = vmatprep.mubr.f32.mxu0 0.0
      %4738 = vmatmul.mubr.f32.gmra.mrb[0].mxu0 %v1987
      %v4739 = vpop.f32.mrb[0].mxu0
      %v4740 = vadd.f32 0.0, %v4739
      %v4741 = vpop.f32.mrb[0].mxu0
      %4742 = vmatprep.mubr.f32.mxu0 0.0
      %4743 = vmatmul.mubr.f32.gmra.mrb[0].mxu0 %v1989
      %v4744 = vpop.f32.mrb[0].mxu0
      %v4745 = vadd.f32 0.0, %v4744
      %v4746 = vpop.f32.mrb[0].mxu0
      %4747 = vmatprep.mubr.f32.mxu0 0.0
      %4748 = vmatmul.mubr.f32.gmra.mrb[0].mxu0 %v1991
      %v4749 = vpop.f32.mrb[0].mxu0
      %v4750 = vadd.f32 0.0, %v4749
      %v4751 = vpop.f32.mrb[0].mxu0
      %4752 = vmatprep.mubr.f32.mxu0 0.0
      %4753 = vmatmul.mubr.f32.gmra.mrb[0].mxu0 %v1993
      %v4754 = vpop.f32.mrb[0].mxu0
      %v4755 = vadd.f32 0.0, %v4754
      %v4756 = vpop.f32.mrb[0].mxu0
      %4757 = vmatprep.mubr.f32.mxu0 0.0
      %4758 = vmatmul.mubr.f32.gmra.mrb[0].mxu0 %v1995
      %v4759 = vpop.f32.mrb[0].mxu0
      %v4760 = vadd.f32 0.0, %v4759
      %v4761 = vpop.f32.mrb[0].mxu0
      %4762 = vmatprep.mubr.f32.mxu0 0.0
      %4763 = vmatmul.mubr.f32.gmra.mrb[0].mxu0 %v1997
      %v4764 = vpop.f32.mrb[0].mxu0
      %v4765 = vadd.f32 0.0, %v4764
      %v4766 = vpop.f32.mrb[0].mxu0
      %4767 = vmatprep.mubr.f32.mxu0 0.0
      %4768 = vmatmul.mubr.f32.gmra.mrb[0].mxu0 %v1999
      %v4769 = vpop.f32.mrb[0].mxu0
      %v4770 = vadd.f32 0.0, %v4769
      %v4771 = vpop.f32.mrb[0].mxu0
      %4772 = vmatprep.mubr.f32.mxu0 0.0
      %4773 = vmatmul.mubr.f32.gmra.mrb[0].mxu0 %v2001
      %v4774 = vpop.f32.mrb[0].mxu0
      %v4775 = vadd.f32 0.0, %v4774
      %v4776 = vpop.f32.mrb[0].mxu0
      %4777 = vmatprep.mubr.f32.mxu0 0.0
      %4778 = vmatmul.mubr.f32.gmra.mrb[0].mxu0 %v2003
      %v4779 = vpop.f32.mrb[0].mxu0
      %v4780 = vadd.f32 0.0, %v4779
      %v4781 = vpop.f32.mrb[0].mxu0
      %4782 = vmatprep.mubr.f32.mxu0 0.0
      %4783 = vmatmul.mubr.f32.gmra.mrb[0].mxu0 %v2005
      %v4784 = vpop.f32.mrb[0].mxu0
      %v4785 = vadd.f32 0.0, %v4784
      %v4786 = vpop.f32.mrb[0].mxu0
      %4787 = vmatprep.mubr.f32.mxu0 0.0
      %4788 = vmatmul.mubr.f32.gmra.mrb[0].mxu0 %v2007
      %v4789 = vpop.f32.mrb[0].mxu0
      %v4790 = vadd.f32 0.0, %v4789
      %v4791 = vpop.f32.mrb[0].mxu0
      %4792 = vmatprep.mubr.f32.mxu0 0.0
      %4793 = vmatmul.mubr.f32.gmra.mrb[0].mxu0 %v2009
      %v4794 = vpop.f32.mrb[0].mxu0
      %v4795 = vadd.f32 0.0, %v4794
      %v4796 = vpop.f32.mrb[0].mxu0
      %4797 = vmatprep.mubr.f32.mxu0 0.0
      %4798 = vmatmul.mubr.f32.gmra.mrb[0].mxu0 %v2011
      %v4799 = vpop.f32.mrb[0].mxu0
      %v4800 = vadd.f32 0.0, %v4799
      %v4801 = vpop.f32.mrb[0].mxu0
      %4802 = vmatprep.mubr.f32.mxu0 0.0
      %4803 = vmatmul.mubr.f32.gmra.mrb[0].mxu0 %v2013
      %v4804 = vpop.f32.mrb[0].mxu0
      %v4805 = vadd.f32 0.0, %v4804
      %v4806 = vpop.f32.mrb[0].mxu0
      %4807 = vmatprep.mubr.f32.mxu0 0.0
      %4808 = vmatmul.mubr.f32.gmra.mrb[0].mxu0 %v4109
      %v4809 = vpop.f32.mrb[0].mxu0
      %v4810 = vadd.f32 0.0, %v4809
      %v4811 = vpop.f32.mrb[0].mxu0
      %4812 = vmatprep.mubr.f32.mxu0 0.0
      %4813 = vmatmul.mubr.f32.gmra.mrb[0].mxu0 %v4112
      %v4814 = vpop.f32.mrb[0].mxu0
      %v4815 = vadd.f32 0.0, %v4814
      %v4816 = vpop.f32.mrb[0].mxu0
      %4817 = vmatprep.mubr.f32.mxu0 0.0
      %4818 = vmatmul.mubr.f32.gmra.mrb[0].mxu0 %v4115
      %v4819 = vpop.f32.mrb[0].mxu0
      %v4820 = vadd.f32 0.0, %v4819
      %v4821 = vpop.f32.mrb[0].mxu0
      %4822 = vmatprep.mubr.f32.mxu0 0.0
      %4823 = vmatmul.mubr.f32.gmra.mrb[0].mxu0 %v4118
      %v4824 = vpop.f32.mrb[0].mxu0
      %v4825 = vadd.f32 0.0, %v4824
      %v4826 = vpop.f32.mrb[0].mxu0
      %4827 = vdwg.mxu0
      %v4828 = vadd.f32 %v3978, %v4190
      %v4829 = vadd.f32 %v3979, %v4195
      %v4830 = vadd.f32 %v3980, %v4200
      %v4831 = vadd.f32 %v3981, %v4205
      %v4832 = vadd.f32 %v3982, %v4210
      %v4833 = vadd.f32 %v3983, %v4215
      %v4834 = vadd.f32 %v3984, %v4220
      %v4835 = vadd.f32 %v3985, %v4225
      %v4836 = vadd.f32 %v3986, %v4230
      %v4837 = vadd.f32 %v3987, %v4235
      %v4838 = vadd.f32 %v3988, %v4240
      %v4839 = vadd.f32 %v3989, %v4245
      %v4840 = vadd.f32 %v3990, %v4250
      %v4841 = vadd.f32 %v3991, %v4255
      %v4842 = vadd.f32 %v3992, %v4260
      %v4843 = vadd.f32 %v3993, %v4265
      %v4844 = vadd.f32 %v3994, %v4270
      %v4845 = vadd.f32 %v3995, %v4275
      %v4846 = vadd.f32 %v3996, %v4280
      %v4847 = vadd.f32 %v3997, %v4285
      %v4848 = vadd.f32 %v3998, %v4290
      %v4849 = vadd.f32 %v3999, %v4295
      %v4850 = vadd.f32 %v4000, %v4300
      %v4851 = vadd.f32 %v4001, %v4305
      %v4852 = vadd.f32 %v4002, %v4310
      %v4853 = vadd.f32 %v4003, %v4315
      %v4854 = vadd.f32 %v4004, %v4320
      %v4855 = vadd.f32 %v4005, %v4325
      %v4856 = vadd.f32 %v4006, %v4330
      %v4857 = vadd.f32 %v4007, %v4335
      %v4858 = vadd.f32 %v4008, %v4340
      %v4859 = vadd.f32 %v4009, %v4345
      %v4860 = vadd.f32 %v4010, %v4350
      %v4861 = vadd.f32 %v4011, %v4355
      %v4862 = vadd.f32 %v4012, %v4360
      %v4863 = vadd.f32 %v4013, %v4365
      %v4864 = vadd.f32 %v4014, %v4370
      %v4865 = vadd.f32 %v4015, %v4375
      %v4866 = vadd.f32 %v4016, %v4380
      %v4867 = vadd.f32 %v4017, %v4385
      %v4868 = vadd.f32 %v4018, %v4390
      %v4869 = vadd.f32 %v4019, %v4395
      %v4870 = vadd.f32 %v4020, %v4400
      %v4871 = vadd.f32 %v4021, %v4405
      %v4872 = vadd.f32 %v4022, %v4410
      %v4873 = vadd.f32 %v4023, %v4415
      %v4874 = vadd.f32 %v4024, %v4420
      %v4875 = vadd.f32 %v4025, %v4425
      %v4876 = vadd.f32 %v4026, %v4430
      %v4877 = vadd.f32 %v4027, %v4435
      %v4878 = vadd.f32 %v4028, %v4440
      %v4879 = vadd.f32 %v4029, %v4445
      %v4880 = vadd.f32 %v4030, %v4450
      %v4881 = vadd.f32 %v4031, %v4455
      %v4882 = vadd.f32 %v4032, %v4460
      %v4883 = vadd.f32 %v4033, %v4465
      %v4884 = vadd.f32 %v4034, %v4470
      %v4885 = vadd.f32 %v4035, %v4475
      %v4886 = vadd.f32 %v4036, %v4480
      %v4887 = vadd.f32 %v4037, %v4485
      %v4888 = vadd.f32 %v4038, %v4490
      %v4889 = vadd.f32 %v4039, %v4495
      %v4890 = vadd.f32 %v4040, %v4500
      %v4891 = vadd.f32 %v4041, %v4505
      %v4892 = vadd.f32 %v4042, %v4510
      %v4893 = vadd.f32 %v4043, %v4515
      %v4894 = vadd.f32 %v4044, %v4520
      %v4895 = vadd.f32 %v4045, %v4525
      %v4896 = vadd.f32 %v4046, %v4530
      %v4897 = vadd.f32 %v4047, %v4535
      %v4898 = vadd.f32 %v4048, %v4540
      %v4899 = vadd.f32 %v4049, %v4545
      %v4900 = vadd.f32 %v4050, %v4550
      %v4901 = vadd.f32 %v4051, %v4555
      %v4902 = vadd.f32 %v4052, %v4560
      %v4903 = vadd.f32 %v4053, %v4565
      %v4904 = vadd.f32 %v4054, %v4570
      %v4905 = vadd.f32 %v4055, %v4575
      %v4906 = vadd.f32 %v4056, %v4580
      %v4907 = vadd.f32 %v4057, %v4585
      %v4908 = vadd.f32 %v4058, %v4590
      %v4909 = vadd.f32 %v4059, %v4595
      %v4910 = vadd.f32 %v4060, %v4600
      %v4911 = vadd.f32 %v4061, %v4605
      %v4912 = vadd.f32 %v4062, %v4610
      %v4913 = vadd.f32 %v4063, %v4615
      %v4914 = vadd.f32 %v4064, %v4620
      %v4915 = vadd.f32 %v4065, %v4625
      %v4916 = vadd.f32 %v4066, %v4630
      %v4917 = vadd.f32 %v4067, %v4635
      %v4918 = vadd.f32 %v4068, %v4640
      %v4919 = vadd.f32 %v4069, %v4645
      %v4920 = vadd.f32 %v4070, %v4650
      %v4921 = vadd.f32 %v4071, %v4655
      %v4922 = vadd.f32 %v4072, %v4660
      %v4923 = vadd.f32 %v4073, %v4665
      %v4924 = vadd.f32 %v4074, %v4670
      %v4925 = vadd.f32 %v4075, %v4675
      %v4926 = vadd.f32 %v4076, %v4680
      %v4927 = vadd.f32 %v4077, %v4685
      %v4928 = vadd.f32 %v4078, %v4690
      %v4929 = vadd.f32 %v4079, %v4695
      %v4930 = vadd.f32 %v4080, %v4700
      %v4931 = vadd.f32 %v4081, %v4705
      %v4932 = vadd.f32 %v4082, %v4710
      %v4933 = vadd.f32 %v4083, %v4715
      %v4934 = vadd.f32 %v4084, %v4720
      %v4935 = vadd.f32 %v4085, %v4725
      %v4936 = vadd.f32 %v4086, %v4730
      %v4937 = vadd.f32 %v4087, %v4735
      %v4938 = vadd.f32 %v4088, %v4740
      %v4939 = vadd.f32 %v4089, %v4745
      %v4940 = vadd.f32 %v4090, %v4750
      %v4941 = vadd.f32 %v4091, %v4755
      %v4942 = vadd.f32 %v4092, %v4760
      %v4943 = vadd.f32 %v4093, %v4765
      %v4944 = vadd.f32 %v4094, %v4770
      %v4945 = vadd.f32 %v4095, %v4775
      %v4946 = vadd.f32 %v4096, %v4780
      %v4947 = vadd.f32 %v4097, %v4785
      %v4948 = vadd.f32 %v4098, %v4790
      %v4949 = vadd.f32 %v4099, %v4795
      %v4950 = vadd.f32 %v4100, %v4800
      %v4951 = vadd.f32 %v4101, %v4805
      %v4952 = vadd.f32 %v4102, %v4810
      %v4953 = vadd.f32 %v4103, %v4815
      %v4954 = vadd.f32 %v4104, %v4820
      %v4955 = vadd.f32 %v4105, %v4825
      %v4957 = vrot.slane %v331, 1
      %v4958 = vrot.slane %v332, 1
      %v4959 = vsel %vm502, %v4957, %v4958
      %v4960 = vrot.slane %v333, 1
      %v4961 = vsel %vm502, %v4958, %v4960
      %v4962 = vrot.slane %v334, 1
      %v4963 = vsel %vm502, %v4960, %v4962
      %v4964 = vrot.slane %v335, 1
      %v4965 = vsel %vm502, %v4962, %v4964
      %s4966 = scalar_lea.vmem %s1, 16
      %v4967 = vld [vmem:[%s4966] sm:$0xf]
      %v4968 = vsel %vm793, %v4959, 0
      %v4970 = vsel %vm793, %v4961, 0
      %v4972 = vsel %vm793, %v4963, 0
      %v4974 = vsel %vm793, %v4965, 0
      %v4977 = vsel %vm1050, %v4967, 0
      %4979 = vmatprep.subr.mxu0 0.0
      %4980 = vmatpush1.msra.mxu0 %v4977
      %4981 = vmatprep.subr.mxu0 0.0
      %4982 = vmatpush1.msra.mxu0 0.0
      %4983 = vmatprep.subr.mxu0 0.0
      %4984 = vmatpush1.msra.mxu0 0.0
      %4985 = vmatprep.subr.mxu0 0.0
      %4986 = vmatpush1.msra.mxu0 0.0
      %4987 = vmatprep.subr.mxu0 0.0
      %4988 = vmatpush1.msra.mxu0 0.0
      %4989 = vmatprep.subr.mxu0 0.0
      %4990 = vmatpush1.msra.mxu0 0.0
      %4991 = vmatprep.subr.mxu0 0.0
      %4992 = vmatpush1.msra.mxu0 0.0
      %4993 = vmatprep.subr.mxu0 0.0
      %4994 = vmatpush1.msra.mxu0 0.0
      %4995 = vmatprep.subr.mxu0 0.0
      %4996 = vmatpush1.msra.mxu0 0.0
      %4997 = vmatprep.subr.mxu0 0.0
      %4998 = vmatpush1.msra.mxu0 0.0
      %4999 = vmatprep.subr.mxu0 0.0
      %5000 = vmatpush1.msra.mxu0 0.0
      %5001 = vmatprep.subr.mxu0 0.0
      %5002 = vmatpush1.msra.mxu0 0.0
      %5003 = vmatprep.subr.mxu0 0.0
      %5004 = vmatpush1.msra.mxu0 0.0
      %5005 = vmatprep.subr.mxu0 0.0
      %5006 = vmatpush1.msra.mxu0 0.0
      %5007 = vmatprep.subr.mxu0 0.0
      %5008 = vmatpush1.msra.mxu0 0.0
      %5009 = vmatprep.subr.mxu0 0.0
      %5010 = vmatpush1.msra.mxu0 0.0
      %5011 = vmatprep.subr.mxu0 0.0
      %5012 = vmatpush1.msra.mxu0 0.0
      %5013 = vmatprep.subr.mxu0 0.0
      %5014 = vmatpush1.msra.mxu0 0.0
      %5015 = vmatprep.subr.mxu0 0.0
      %5016 = vmatpush1.msra.mxu0 0.0
      %5017 = vmatprep.subr.mxu0 0.0
      %5018 = vmatpush1.msra.mxu0 0.0
      %5019 = vmatprep.subr.mxu0 0.0
      %5020 = vmatpush1.msra.mxu0 0.0
      %5021 = vmatprep.subr.mxu0 0.0
      %5022 = vmatpush1.msra.mxu0 0.0
      %5023 = vmatprep.subr.mxu0 0.0
      %5024 = vmatpush1.msra.mxu0 0.0
      %5025 = vmatprep.subr.mxu0 0.0
      %5026 = vmatpush1.msra.mxu0 0.0
      %5027 = vmatprep.subr.mxu0 0.0
      %5028 = vmatpush1.msra.mxu0 0.0
      %5029 = vmatprep.subr.mxu0 0.0
      %5030 = vmatpush1.msra.mxu0 0.0
      %5031 = vmatprep.subr.mxu0 0.0
      %5032 = vmatpush1.msra.mxu0 0.0
      %5033 = vmatprep.subr.mxu0 0.0
      %5034 = vmatpush1.msra.mxu0 0.0
      %5035 = vmatprep.subr.mxu0 0.0
      %5036 = vmatpush1.msra.mxu0 0.0
      %5037 = vmatprep.subr.mxu0 0.0
      %5038 = vmatpush1.msra.mxu0 0.0
      %5039 = vmatprep.subr.mxu0 0.0
      %5040 = vmatpush1.msra.mxu0 0.0
      %5041 = vmatprep.subr.mxu0 0.0
      %5042 = vmatpush1.msra.mxu0 0.0
      %5043 = vmatprep.mubr.f32.mxu0 0.0
      %5044 = vmatmul.mubr.f32.gmra.mrb[0].mxu0 %v802
      %v5045 = vpop.f32.mrb[0].mxu0
      %v5046 = vadd.f32 0.0, %v5045
      %v5047 = vpop.f32.mrb[0].mxu0
      %5048 = vmatprep.mubr.f32.mxu0 0.0
      %5049 = vmatmul.mubr.f32.gmra.mrb[0].mxu0 %v804
      %v5050 = vpop.f32.mrb[0].mxu0
      %v5051 = vadd.f32 0.0, %v5050
      %v5052 = vpop.f32.mrb[0].mxu0
      %5053 = vmatprep.mubr.f32.mxu0 0.0
      %5054 = vmatmul.mubr.f32.gmra.mrb[0].mxu0 %v806
      %v5055 = vpop.f32.mrb[0].mxu0
      %v5056 = vadd.f32 0.0, %v5055
      %v5057 = vpop.f32.mrb[0].mxu0
      %5058 = vmatprep.mubr.f32.mxu0 0.0
      %5059 = vmatmul.mubr.f32.gmra.mrb[0].mxu0 %v808
      %v5060 = vpop.f32.mrb[0].mxu0
      %v5061 = vadd.f32 0.0, %v5060
      %v5062 = vpop.f32.mrb[0].mxu0
      %5063 = vmatprep.mubr.f32.mxu0 0.0
      %5064 = vmatmul.mubr.f32.gmra.mrb[0].mxu0 %v810
      %v5065 = vpop.f32.mrb[0].mxu0
      %v5066 = vadd.f32 0.0, %v5065
      %v5067 = vpop.f32.mrb[0].mxu0
      %5068 = vmatprep.mubr.f32.mxu0 0.0
      %5069 = vmatmul.mubr.f32.gmra.mrb[0].mxu0 %v812
      %v5070 = vpop.f32.mrb[0].mxu0
      %v5071 = vadd.f32 0.0, %v5070
      %v5072 = vpop.f32.mrb[0].mxu0
      %5073 = vmatprep.mubr.f32.mxu0 0.0
      %5074 = vmatmul.mubr.f32.gmra.mrb[0].mxu0 %v814
      %v5075 = vpop.f32.mrb[0].mxu0
      %v5076 = vadd.f32 0.0, %v5075
      %v5077 = vpop.f32.mrb[0].mxu0
      %5078 = vmatprep.mubr.f32.mxu0 0.0
      %5079 = vmatmul.mubr.f32.gmra.mrb[0].mxu0 %v816
      %v5080 = vpop.f32.mrb[0].mxu0
      %v5081 = vadd.f32 0.0, %v5080
      %v5082 = vpop.f32.mrb[0].mxu0
      %5083 = vmatprep.mubr.f32.mxu0 0.0
      %5084 = vmatmul.mubr.f32.gmra.mrb[0].mxu0 %v818
      %v5085 = vpop.f32.mrb[0].mxu0
      %v5086 = vadd.f32 0.0, %v5085
      %v5087 = vpop.f32.mrb[0].mxu0
      %5088 = vmatprep.mubr.f32.mxu0 0.0
      %5089 = vmatmul.mubr.f32.gmra.mrb[0].mxu0 %v820
      %v5090 = vpop.f32.mrb[0].mxu0
      %v5091 = vadd.f32 0.0, %v5090
      %v5092 = vpop.f32.mrb[0].mxu0
      %5093 = vmatprep.mubr.f32.mxu0 0.0
      %5094 = vmatmul.mubr.f32.gmra.mrb[0].mxu0 %v822
      %v5095 = vpop.f32.mrb[0].mxu0
      %v5096 = vadd.f32 0.0, %v5095
      %v5097 = vpop.f32.mrb[0].mxu0
      %5098 = vmatprep.mubr.f32.mxu0 0.0
      %5099 = vmatmul.mubr.f32.gmra.mrb[0].mxu0 %v824
      %v5100 = vpop.f32.mrb[0].mxu0
      %v5101 = vadd.f32 0.0, %v5100
      %v5102 = vpop.f32.mrb[0].mxu0
      %5103 = vmatprep.mubr.f32.mxu0 0.0
      %5104 = vmatmul.mubr.f32.gmra.mrb[0].mxu0 %v826
      %v5105 = vpop.f32.mrb[0].mxu0
      %v5106 = vadd.f32 0.0, %v5105
      %v5107 = vpop.f32.mrb[0].mxu0
      %5108 = vmatprep.mubr.f32.mxu0 0.0
      %5109 = vmatmul.mubr.f32.gmra.mrb[0].mxu0 %v828
      %v5110 = vpop.f32.mrb[0].mxu0
      %v5111 = vadd.f32 0.0, %v5110
      %v5112 = vpop.f32.mrb[0].mxu0
      %5113 = vmatprep.mubr.f32.mxu0 0.0
      %5114 = vmatmul.mubr.f32.gmra.mrb[0].mxu0 %v830
      %v5115 = vpop.f32.mrb[0].mxu0
      %v5116 = vadd.f32 0.0, %v5115
      %v5117 = vpop.f32.mrb[0].mxu0
      %5118 = vmatprep.mubr.f32.mxu0 0.0
      %5119 = vmatmul.mubr.f32.gmra.mrb[0].mxu0 %v832
      %v5120 = vpop.f32.mrb[0].mxu0
      %v5121 = vadd.f32 0.0, %v5120
      %v5122 = vpop.f32.mrb[0].mxu0
      %5123 = vmatprep.mubr.f32.mxu0 0.0
      %5124 = vmatmul.mubr.f32.gmra.mrb[0].mxu0 %v834
      %v5125 = vpop.f32.mrb[0].mxu0
      %v5126 = vadd.f32 0.0, %v5125
      %v5127 = vpop.f32.mrb[0].mxu0
      %5128 = vmatprep.mubr.f32.mxu0 0.0
      %5129 = vmatmul.mubr.f32.gmra.mrb[0].mxu0 %v836
      %v5130 = vpop.f32.mrb[0].mxu0
      %v5131 = vadd.f32 0.0, %v5130
      %v5132 = vpop.f32.mrb[0].mxu0
      %5133 = vmatprep.mubr.f32.mxu0 0.0
      %5134 = vmatmul.mubr.f32.gmra.mrb[0].mxu0 %v838
      %v5135 = vpop.f32.mrb[0].mxu0
      %v5136 = vadd.f32 0.0, %v5135
      %v5137 = vpop.f32.mrb[0].mxu0
      %5138 = vmatprep.mubr.f32.mxu0 0.0
      %5139 = vmatmul.mubr.f32.gmra.mrb[0].mxu0 %v840
      %v5140 = vpop.f32.mrb[0].mxu0
      %v5141 = vadd.f32 0.0, %v5140
      %v5142 = vpop.f32.mrb[0].mxu0
      %5143 = vmatprep.mubr.f32.mxu0 0.0
      %5144 = vmatmul.mubr.f32.gmra.mrb[0].mxu0 %v842
      %v5145 = vpop.f32.mrb[0].mxu0
      %v5146 = vadd.f32 0.0, %v5145
      %v5147 = vpop.f32.mrb[0].mxu0
      %5148 = vmatprep.mubr.f32.mxu0 0.0
      %5149 = vmatmul.mubr.f32.gmra.mrb[0].mxu0 %v844
      %v5150 = vpop.f32.mrb[0].mxu0
      %v5151 = vadd.f32 0.0, %v5150
      %v5152 = vpop.f32.mrb[0].mxu0
      %5153 = vmatprep.mubr.f32.mxu0 0.0
      %5154 = vmatmul.mubr.f32.gmra.mrb[0].mxu0 %v846
      %v5155 = vpop.f32.mrb[0].mxu0
      %v5156 = vadd.f32 0.0, %v5155
      %v5157 = vpop.f32.mrb[0].mxu0
      %5158 = vmatprep.mubr.f32.mxu0 0.0
      %5159 = vmatmul.mubr.f32.gmra.mrb[0].mxu0 %v848
      %v5160 = vpop.f32.mrb[0].mxu0
      %v5161 = vadd.f32 0.0, %v5160
      %v5162 = vpop.f32.mrb[0].mxu0
      %5163 = vmatprep.mubr.f32.mxu0 0.0
      %5164 = vmatmul.mubr.f32.gmra.mrb[0].mxu0 %v850
      %v5165 = vpop.f32.mrb[0].mxu0
      %v5166 = vadd.f32 0.0, %v5165
      %v5167 = vpop.f32.mrb[0].mxu0
      %5168 = vmatprep.mubr.f32.mxu0 0.0
      %5169 = vmatmul.mubr.f32.gmra.mrb[0].mxu0 %v852
      %v5170 = vpop.f32.mrb[0].mxu0
      %v5171 = vadd.f32 0.0, %v5170
      %v5172 = vpop.f32.mrb[0].mxu0
      %5173 = vmatprep.mubr.f32.mxu0 0.0
      %5174 = vmatmul.mubr.f32.gmra.mrb[0].mxu0 %v854
      %v5175 = vpop.f32.mrb[0].mxu0
      %v5176 = vadd.f32 0.0, %v5175
      %v5177 = vpop.f32.mrb[0].mxu0
      %5178 = vmatprep.mubr.f32.mxu0 0.0
      %5179 = vmatmul.mubr.f32.gmra.mrb[0].mxu0 %v856
      %v5180 = vpop.f32.mrb[0].mxu0
      %v5181 = vadd.f32 0.0, %v5180
      %v5182 = vpop.f32.mrb[0].mxu0
      %5183 = vmatprep.mubr.f32.mxu0 0.0
      %5184 = vmatmul.mubr.f32.gmra.mrb[0].mxu0 %v858
      %v5185 = vpop.f32.mrb[0].mxu0
      %v5186 = vadd.f32 0.0, %v5185
      %v5187 = vpop.f32.mrb[0].mxu0
      %5188 = vmatprep.mubr.f32.mxu0 0.0
      %5189 = vmatmul.mubr.f32.gmra.mrb[0].mxu0 %v860
      %v5190 = vpop.f32.mrb[0].mxu0
      %v5191 = vadd.f32 0.0, %v5190
      %v5192 = vpop.f32.mrb[0].mxu0
      %5193 = vmatprep.mubr.f32.mxu0 0.0
      %5194 = vmatmul.mubr.f32.gmra.mrb[0].mxu0 %v862
      %v5195 = vpop.f32.mrb[0].mxu0
      %v5196 = vadd.f32 0.0, %v5195
      %v5197 = vpop.f32.mrb[0].mxu0
      %5198 = vmatprep.mubr.f32.mxu0 0.0
      %5199 = vmatmul.mubr.f32.gmra.mrb[0].mxu0 %v864
      %v5200 = vpop.f32.mrb[0].mxu0
      %v5201 = vadd.f32 0.0, %v5200
      %v5202 = vpop.f32.mrb[0].mxu0
      %5203 = vmatprep.mubr.f32.mxu0 0.0
      %5204 = vmatmul.mubr.f32.gmra.mrb[0].mxu0 %v866
      %v5205 = vpop.f32.mrb[0].mxu0
      %v5206 = vadd.f32 0.0, %v5205
      %v5207 = vpop.f32.mrb[0].mxu0
      %5208 = vmatprep.mubr.f32.mxu0 0.0
      %5209 = vmatmul.mubr.f32.gmra.mrb[0].mxu0 %v868
      %v5210 = vpop.f32.mrb[0].mxu0
      %v5211 = vadd.f32 0.0, %v5210
      %v5212 = vpop.f32.mrb[0].mxu0
      %5213 = vmatprep.mubr.f32.mxu0 0.0
      %5214 = vmatmul.mubr.f32.gmra.mrb[0].mxu0 %v870
      %v5215 = vpop.f32.mrb[0].mxu0
      %v5216 = vadd.f32 0.0, %v5215
      %v5217 = vpop.f32.mrb[0].mxu0
      %5218 = vmatprep.mubr.f32.mxu0 0.0
      %5219 = vmatmul.mubr.f32.gmra.mrb[0].mxu0 %v872
      %v5220 = vpop.f32.mrb[0].mxu0
      %v5221 = vadd.f32 0.0, %v5220
      %v5222 = vpop.f32.mrb[0].mxu0
      %5223 = vmatprep.mubr.f32.mxu0 0.0
      %5224 = vmatmul.mubr.f32.gmra.mrb[0].mxu0 %v874
      %v5225 = vpop.f32.mrb[0].mxu0
      %v5226 = vadd.f32 0.0, %v5225
      %v5227 = vpop.f32.mrb[0].mxu0
      %5228 = vmatprep.mubr.f32.mxu0 0.0
      %5229 = vmatmul.mubr.f32.gmra.mrb[0].mxu0 %v876
      %v5230 = vpop.f32.mrb[0].mxu0
      %v5231 = vadd.f32 0.0, %v5230
      %v5232 = vpop.f32.mrb[0].mxu0
      %5233 = vmatprep.mubr.f32.mxu0 0.0
      %5234 = vmatmul.mubr.f32.gmra.mrb[0].mxu0 %v878
      %v5235 = vpop.f32.mrb[0].mxu0
      %v5236 = vadd.f32 0.0, %v5235
      %v5237 = vpop.f32.mrb[0].mxu0
      %5238 = vmatprep.mubr.f32.mxu0 0.0
      %5239 = vmatmul.mubr.f32.gmra.mrb[0].mxu0 %v880
      %v5240 = vpop.f32.mrb[0].mxu0
      %v5241 = vadd.f32 0.0, %v5240
      %v5242 = vpop.f32.mrb[0].mxu0
      %5243 = vmatprep.mubr.f32.mxu0 0.0
      %5244 = vmatmul.mubr.f32.gmra.mrb[0].mxu0 %v882
      %v5245 = vpop.f32.mrb[0].mxu0
      %v5246 = vadd.f32 0.0, %v5245
      %v5247 = vpop.f32.mrb[0].mxu0
      %5248 = vmatprep.mubr.f32.mxu0 0.0
      %5249 = vmatmul.mubr.f32.gmra.mrb[0].mxu0 %v884
      %v5250 = vpop.f32.mrb[0].mxu0
      %v5251 = vadd.f32 0.0, %v5250
      %v5252 = vpop.f32.mrb[0].mxu0
      %5253 = vmatprep.mubr.f32.mxu0 0.0
      %5254 = vmatmul.mubr.f32.gmra.mrb[0].mxu0 %v886
      %v5255 = vpop.f32.mrb[0].mxu0
      %v5256 = vadd.f32 0.0, %v5255
      %v5257 = vpop.f32.mrb[0].mxu0
      %5258 = vmatprep.mubr.f32.mxu0 0.0
      %5259 = vmatmul.mubr.f32.gmra.mrb[0].mxu0 %v888
      %v5260 = vpop.f32.mrb[0].mxu0
      %v5261 = vadd.f32 0.0, %v5260
      %v5262 = vpop.f32.mrb[0].mxu0
      %5263 = vmatprep.mubr.f32.mxu0 0.0
      %5264 = vmatmul.mubr.f32.gmra.mrb[0].mxu0 %v890
      %v5265 = vpop.f32.mrb[0].mxu0
      %v5266 = vadd.f32 0.0, %v5265
      %v5267 = vpop.f32.mrb[0].mxu0
      %5268 = vmatprep.mubr.f32.mxu0 0.0
      %5269 = vmatmul.mubr.f32.gmra.mrb[0].mxu0 %v892
      %v5270 = vpop.f32.mrb[0].mxu0
      %v5271 = vadd.f32 0.0, %v5270
      %v5272 = vpop.f32.mrb[0].mxu0
      %5273 = vmatprep.mubr.f32.mxu0 0.0
      %5274 = vmatmul.mubr.f32.gmra.mrb[0].mxu0 %v894
      %v5275 = vpop.f32.mrb[0].mxu0
      %v5276 = vadd.f32 0.0, %v5275
      %v5277 = vpop.f32.mrb[0].mxu0
      %5278 = vmatprep.mubr.f32.mxu0 0.0
      %5279 = vmatmul.mubr.f32.gmra.mrb[0].mxu0 %v896
      %v5280 = vpop.f32.mrb[0].mxu0
      %v5281 = vadd.f32 0.0, %v5280
      %v5282 = vpop.f32.mrb[0].mxu0
      %5283 = vmatprep.mubr.f32.mxu0 0.0
      %5284 = vmatmul.mubr.f32.gmra.mrb[0].mxu0 %v898
      %v5285 = vpop.f32.mrb[0].mxu0
      %v5286 = vadd.f32 0.0, %v5285
      %v5287 = vpop.f32.mrb[0].mxu0
      %5288 = vmatprep.mubr.f32.mxu0 0.0
      %5289 = vmatmul.mubr.f32.gmra.mrb[0].mxu0 %v900
      %v5290 = vpop.f32.mrb[0].mxu0
      %v5291 = vadd.f32 0.0, %v5290
      %v5292 = vpop.f32.mrb[0].mxu0
      %5293 = vmatprep.mubr.f32.mxu0 0.0
      %5294 = vmatmul.mubr.f32.gmra.mrb[0].mxu0 %v902
      %v5295 = vpop.f32.mrb[0].mxu0
      %v5296 = vadd.f32 0.0, %v5295
      %v5297 = vpop.f32.mrb[0].mxu0
      %5298 = vmatprep.mubr.f32.mxu0 0.0
      %5299 = vmatmul.mubr.f32.gmra.mrb[0].mxu0 %v904
      %v5300 = vpop.f32.mrb[0].mxu0
      %v5301 = vadd.f32 0.0, %v5300
      %v5302 = vpop.f32.mrb[0].mxu0
      %5303 = vmatprep.mubr.f32.mxu0 0.0
      %5304 = vmatmul.mubr.f32.gmra.mrb[0].mxu0 %v906
      %v5305 = vpop.f32.mrb[0].mxu0
      %v5306 = vadd.f32 0.0, %v5305
      %v5307 = vpop.f32.mrb[0].mxu0
      %5308 = vmatprep.mubr.f32.mxu0 0.0
      %5309 = vmatmul.mubr.f32.gmra.mrb[0].mxu0 %v908
      %v5310 = vpop.f32.mrb[0].mxu0
      %v5311 = vadd.f32 0.0, %v5310
      %v5312 = vpop.f32.mrb[0].mxu0
      %5313 = vmatprep.mubr.f32.mxu0 0.0
      %5314 = vmatmul.mubr.f32.gmra.mrb[0].mxu0 %v910
      %v5315 = vpop.f32.mrb[0].mxu0
      %v5316 = vadd.f32 0.0, %v5315
      %v5317 = vpop.f32.mrb[0].mxu0
      %5318 = vmatprep.mubr.f32.mxu0 0.0
      %5319 = vmatmul.mubr.f32.gmra.mrb[0].mxu0 %v912
      %v5320 = vpop.f32.mrb[0].mxu0
      %v5321 = vadd.f32 0.0, %v5320
      %v5322 = vpop.f32.mrb[0].mxu0
      %5323 = vmatprep.mubr.f32.mxu0 0.0
      %5324 = vmatmul.mubr.f32.gmra.mrb[0].mxu0 %v914
      %v5325 = vpop.f32.mrb[0].mxu0
      %v5326 = vadd.f32 0.0, %v5325
      %v5327 = vpop.f32.mrb[0].mxu0
      %5328 = vmatprep.mubr.f32.mxu0 0.0
      %5329 = vmatmul.mubr.f32.gmra.mrb[0].mxu0 %v916
      %v5330 = vpop.f32.mrb[0].mxu0
      %v5331 = vadd.f32 0.0, %v5330
      %v5332 = vpop.f32.mrb[0].mxu0
      %5333 = vmatprep.mubr.f32.mxu0 0.0
      %5334 = vmatmul.mubr.f32.gmra.mrb[0].mxu0 %v918
      %v5335 = vpop.f32.mrb[0].mxu0
      %v5336 = vadd.f32 0.0, %v5335
      %v5337 = vpop.f32.mrb[0].mxu0
      %5338 = vmatprep.mubr.f32.mxu0 0.0
      %5339 = vmatmul.mubr.f32.gmra.mrb[0].mxu0 %v920
      %v5340 = vpop.f32.mrb[0].mxu0
      %v5341 = vadd.f32 0.0, %v5340
      %v5342 = vpop.f32.mrb[0].mxu0
      %5343 = vmatprep.mubr.f32.mxu0 0.0
      %5344 = vmatmul.mubr.f32.gmra.mrb[0].mxu0 %v922
      %v5345 = vpop.f32.mrb[0].mxu0
      %v5346 = vadd.f32 0.0, %v5345
      %v5347 = vpop.f32.mrb[0].mxu0
      %5348 = vmatprep.mubr.f32.mxu0 0.0
      %5349 = vmatmul.mubr.f32.gmra.mrb[0].mxu0 %v924
      %v5350 = vpop.f32.mrb[0].mxu0
      %v5351 = vadd.f32 0.0, %v5350
      %v5352 = vpop.f32.mrb[0].mxu0
      %5353 = vmatprep.mubr.f32.mxu0 0.0
      %5354 = vmatmul.mubr.f32.gmra.mrb[0].mxu0 %v926
      %v5355 = vpop.f32.mrb[0].mxu0
      %v5356 = vadd.f32 0.0, %v5355
      %v5357 = vpop.f32.mrb[0].mxu0
      %5358 = vmatprep.mubr.f32.mxu0 0.0
      %5359 = vmatmul.mubr.f32.gmra.mrb[0].mxu0 %v928
      %v5360 = vpop.f32.mrb[0].mxu0
      %v5361 = vadd.f32 0.0, %v5360
      %v5362 = vpop.f32.mrb[0].mxu0
      %5363 = vmatprep.mubr.f32.mxu0 0.0
      %5364 = vmatmul.mubr.f32.gmra.mrb[0].mxu0 %v930
      %v5365 = vpop.f32.mrb[0].mxu0
      %v5366 = vadd.f32 0.0, %v5365
      %v5367 = vpop.f32.mrb[0].mxu0
      %5368 = vmatprep.mubr.f32.mxu0 0.0
      %5369 = vmatmul.mubr.f32.gmra.mrb[0].mxu0 %v932
      %v5370 = vpop.f32.mrb[0].mxu0
      %v5371 = vadd.f32 0.0, %v5370
      %v5372 = vpop.f32.mrb[0].mxu0
      %5373 = vmatprep.mubr.f32.mxu0 0.0
      %5374 = vmatmul.mubr.f32.gmra.mrb[0].mxu0 %v934
      %v5375 = vpop.f32.mrb[0].mxu0
      %v5376 = vadd.f32 0.0, %v5375
      %v5377 = vpop.f32.mrb[0].mxu0
      %5378 = vmatprep.mubr.f32.mxu0 0.0
      %5379 = vmatmul.mubr.f32.gmra.mrb[0].mxu0 %v936
      %v5380 = vpop.f32.mrb[0].mxu0
      %v5381 = vadd.f32 0.0, %v5380
      %v5382 = vpop.f32.mrb[0].mxu0
      %5383 = vmatprep.mubr.f32.mxu0 0.0
      %5384 = vmatmul.mubr.f32.gmra.mrb[0].mxu0 %v938
      %v5385 = vpop.f32.mrb[0].mxu0
      %v5386 = vadd.f32 0.0, %v5385
      %v5387 = vpop.f32.mrb[0].mxu0
      %5388 = vmatprep.mubr.f32.mxu0 0.0
      %5389 = vmatmul.mubr.f32.gmra.mrb[0].mxu0 %v940
      %v5390 = vpop.f32.mrb[0].mxu0
      %v5391 = vadd.f32 0.0, %v5390
      %v5392 = vpop.f32.mrb[0].mxu0
      %5393 = vmatprep.mubr.f32.mxu0 0.0
      %5394 = vmatmul.mubr.f32.gmra.mrb[0].mxu0 %v942
      %v5395 = vpop.f32.mrb[0].mxu0
      %v5396 = vadd.f32 0.0, %v5395
      %v5397 = vpop.f32.mrb[0].mxu0
      %5398 = vmatprep.mubr.f32.mxu0 0.0
      %5399 = vmatmul.mubr.f32.gmra.mrb[0].mxu0 %v944
      %v5400 = vpop.f32.mrb[0].mxu0
      %v5401 = vadd.f32 0.0, %v5400
      %v5402 = vpop.f32.mrb[0].mxu0
      %5403 = vmatprep.mubr.f32.mxu0 0.0
      %5404 = vmatmul.mubr.f32.gmra.mrb[0].mxu0 %v946
      %v5405 = vpop.f32.mrb[0].mxu0
      %v5406 = vadd.f32 0.0, %v5405
      %v5407 = vpop.f32.mrb[0].mxu0
      %5408 = vmatprep.mubr.f32.mxu0 0.0
      %5409 = vmatmul.mubr.f32.gmra.mrb[0].mxu0 %v948
      %v5410 = vpop.f32.mrb[0].mxu0
      %v5411 = vadd.f32 0.0, %v5410
      %v5412 = vpop.f32.mrb[0].mxu0
      %5413 = vmatprep.mubr.f32.mxu0 0.0
      %5414 = vmatmul.mubr.f32.gmra.mrb[0].mxu0 %v950
      %v5415 = vpop.f32.mrb[0].mxu0
      %v5416 = vadd.f32 0.0, %v5415
      %v5417 = vpop.f32.mrb[0].mxu0
      %5418 = vmatprep.mubr.f32.mxu0 0.0
      %5419 = vmatmul.mubr.f32.gmra.mrb[0].mxu0 %v952
      %v5420 = vpop.f32.mrb[0].mxu0
      %v5421 = vadd.f32 0.0, %v5420
      %v5422 = vpop.f32.mrb[0].mxu0
      %5423 = vmatprep.mubr.f32.mxu0 0.0
      %5424 = vmatmul.mubr.f32.gmra.mrb[0].mxu0 %v954
      %v5425 = vpop.f32.mrb[0].mxu0
      %v5426 = vadd.f32 0.0, %v5425
      %v5427 = vpop.f32.mrb[0].mxu0
      %5428 = vmatprep.mubr.f32.mxu0 0.0
      %5429 = vmatmul.mubr.f32.gmra.mrb[0].mxu0 %v956
      %v5430 = vpop.f32.mrb[0].mxu0
      %v5431 = vadd.f32 0.0, %v5430
      %v5432 = vpop.f32.mrb[0].mxu0
      %5433 = vmatprep.mubr.f32.mxu0 0.0
      %5434 = vmatmul.mubr.f32.gmra.mrb[0].mxu0 %v958
      %v5435 = vpop.f32.mrb[0].mxu0
      %v5436 = vadd.f32 0.0, %v5435
      %v5437 = vpop.f32.mrb[0].mxu0
      %5438 = vmatprep.mubr.f32.mxu0 0.0
      %5439 = vmatmul.mubr.f32.gmra.mrb[0].mxu0 %v960
      %v5440 = vpop.f32.mrb[0].mxu0
      %v5441 = vadd.f32 0.0, %v5440
      %v5442 = vpop.f32.mrb[0].mxu0
      %5443 = vmatprep.mubr.f32.mxu0 0.0
      %5444 = vmatmul.mubr.f32.gmra.mrb[0].mxu0 %v962
      %v5445 = vpop.f32.mrb[0].mxu0
      %v5446 = vadd.f32 0.0, %v5445
      %v5447 = vpop.f32.mrb[0].mxu0
      %5448 = vmatprep.mubr.f32.mxu0 0.0
      %5449 = vmatmul.mubr.f32.gmra.mrb[0].mxu0 %v964
      %v5450 = vpop.f32.mrb[0].mxu0
      %v5451 = vadd.f32 0.0, %v5450
      %v5452 = vpop.f32.mrb[0].mxu0
      %5453 = vmatprep.mubr.f32.mxu0 0.0
      %5454 = vmatmul.mubr.f32.gmra.mrb[0].mxu0 %v966
      %v5455 = vpop.f32.mrb[0].mxu0
      %v5456 = vadd.f32 0.0, %v5455
      %v5457 = vpop.f32.mrb[0].mxu0
      %5458 = vmatprep.mubr.f32.mxu0 0.0
      %5459 = vmatmul.mubr.f32.gmra.mrb[0].mxu0 %v968
      %v5460 = vpop.f32.mrb[0].mxu0
      %v5461 = vadd.f32 0.0, %v5460
      %v5462 = vpop.f32.mrb[0].mxu0
      %5463 = vmatprep.mubr.f32.mxu0 0.0
      %5464 = vmatmul.mubr.f32.gmra.mrb[0].mxu0 %v970
      %v5465 = vpop.f32.mrb[0].mxu0
      %v5466 = vadd.f32 0.0, %v5465
      %v5467 = vpop.f32.mrb[0].mxu0
      %5468 = vmatprep.mubr.f32.mxu0 0.0
      %5469 = vmatmul.mubr.f32.gmra.mrb[0].mxu0 %v972
      %v5470 = vpop.f32.mrb[0].mxu0
      %v5471 = vadd.f32 0.0, %v5470
      %v5472 = vpop.f32.mrb[0].mxu0
      %5473 = vmatprep.mubr.f32.mxu0 0.0
      %5474 = vmatmul.mubr.f32.gmra.mrb[0].mxu0 %v974
      %v5475 = vpop.f32.mrb[0].mxu0
      %v5476 = vadd.f32 0.0, %v5475
      %v5477 = vpop.f32.mrb[0].mxu0
      %5478 = vmatprep.mubr.f32.mxu0 0.0
      %5479 = vmatmul.mubr.f32.gmra.mrb[0].mxu0 %v976
      %v5480 = vpop.f32.mrb[0].mxu0
      %v5481 = vadd.f32 0.0, %v5480
      %v5482 = vpop.f32.mrb[0].mxu0
      %5483 = vmatprep.mubr.f32.mxu0 0.0
      %5484 = vmatmul.mubr.f32.gmra.mrb[0].mxu0 %v978
      %v5485 = vpop.f32.mrb[0].mxu0
      %v5486 = vadd.f32 0.0, %v5485
      %v5487 = vpop.f32.mrb[0].mxu0
      %5488 = vmatprep.mubr.f32.mxu0 0.0
      %5489 = vmatmul.mubr.f32.gmra.mrb[0].mxu0 %v980
      %v5490 = vpop.f32.mrb[0].mxu0
      %v5491 = vadd.f32 0.0, %v5490
      %v5492 = vpop.f32.mrb[0].mxu0
      %5493 = vmatprep.mubr.f32.mxu0 0.0
      %5494 = vmatmul.mubr.f32.gmra.mrb[0].mxu0 %v982
      %v5495 = vpop.f32.mrb[0].mxu0
      %v5496 = vadd.f32 0.0, %v5495
      %v5497 = vpop.f32.mrb[0].mxu0
      %5498 = vmatprep.mubr.f32.mxu0 0.0
      %5499 = vmatmul.mubr.f32.gmra.mrb[0].mxu0 %v984
      %v5500 = vpop.f32.mrb[0].mxu0
      %v5501 = vadd.f32 0.0, %v5500
      %v5502 = vpop.f32.mrb[0].mxu0
      %5503 = vmatprep.mubr.f32.mxu0 0.0
      %5504 = vmatmul.mubr.f32.gmra.mrb[0].mxu0 %v986
      %v5505 = vpop.f32.mrb[0].mxu0
      %v5506 = vadd.f32 0.0, %v5505
      %v5507 = vpop.f32.mrb[0].mxu0
      %5508 = vmatprep.mubr.f32.mxu0 0.0
      %5509 = vmatmul.mubr.f32.gmra.mrb[0].mxu0 %v988
      %v5510 = vpop.f32.mrb[0].mxu0
      %v5511 = vadd.f32 0.0, %v5510
      %v5512 = vpop.f32.mrb[0].mxu0
      %5513 = vmatprep.mubr.f32.mxu0 0.0
      %5514 = vmatmul.mubr.f32.gmra.mrb[0].mxu0 %v990
      %v5515 = vpop.f32.mrb[0].mxu0
      %v5516 = vadd.f32 0.0, %v5515
      %v5517 = vpop.f32.mrb[0].mxu0
      %5518 = vmatprep.mubr.f32.mxu0 0.0
      %5519 = vmatmul.mubr.f32.gmra.mrb[0].mxu0 %v992
      %v5520 = vpop.f32.mrb[0].mxu0
      %v5521 = vadd.f32 0.0, %v5520
      %v5522 = vpop.f32.mrb[0].mxu0
      %5523 = vmatprep.mubr.f32.mxu0 0.0
      %5524 = vmatmul.mubr.f32.gmra.mrb[0].mxu0 %v994
      %v5525 = vpop.f32.mrb[0].mxu0
      %v5526 = vadd.f32 0.0, %v5525
      %v5527 = vpop.f32.mrb[0].mxu0
      %5528 = vmatprep.mubr.f32.mxu0 0.0
      %5529 = vmatmul.mubr.f32.gmra.mrb[0].mxu0 %v996
      %v5530 = vpop.f32.mrb[0].mxu0
      %v5531 = vadd.f32 0.0, %v5530
      %v5532 = vpop.f32.mrb[0].mxu0
      %5533 = vmatprep.mubr.f32.mxu0 0.0
      %5534 = vmatmul.mubr.f32.gmra.mrb[0].mxu0 %v998
      %v5535 = vpop.f32.mrb[0].mxu0
      %v5536 = vadd.f32 0.0, %v5535
      %v5537 = vpop.f32.mrb[0].mxu0
      %5538 = vmatprep.mubr.f32.mxu0 0.0
      %5539 = vmatmul.mubr.f32.gmra.mrb[0].mxu0 %v1000
      %v5540 = vpop.f32.mrb[0].mxu0
      %v5541 = vadd.f32 0.0, %v5540
      %v5542 = vpop.f32.mrb[0].mxu0
      %5543 = vmatprep.mubr.f32.mxu0 0.0
      %5544 = vmatmul.mubr.f32.gmra.mrb[0].mxu0 %v1002
      %v5545 = vpop.f32.mrb[0].mxu0
      %v5546 = vadd.f32 0.0, %v5545
      %v5547 = vpop.f32.mrb[0].mxu0
      %5548 = vmatprep.mubr.f32.mxu0 0.0
      %5549 = vmatmul.mubr.f32.gmra.mrb[0].mxu0 %v1004
      %v5550 = vpop.f32.mrb[0].mxu0
      %v5551 = vadd.f32 0.0, %v5550
      %v5552 = vpop.f32.mrb[0].mxu0
      %5553 = vmatprep.mubr.f32.mxu0 0.0
      %5554 = vmatmul.mubr.f32.gmra.mrb[0].mxu0 %v1006
      %v5555 = vpop.f32.mrb[0].mxu0
      %v5556 = vadd.f32 0.0, %v5555
      %v5557 = vpop.f32.mrb[0].mxu0
      %5558 = vmatprep.mubr.f32.mxu0 0.0
      %5559 = vmatmul.mubr.f32.gmra.mrb[0].mxu0 %v1008
      %v5560 = vpop.f32.mrb[0].mxu0
      %v5561 = vadd.f32 0.0, %v5560
      %v5562 = vpop.f32.mrb[0].mxu0
      %5563 = vmatprep.mubr.f32.mxu0 0.0
      %5564 = vmatmul.mubr.f32.gmra.mrb[0].mxu0 %v1010
      %v5565 = vpop.f32.mrb[0].mxu0
      %v5566 = vadd.f32 0.0, %v5565
      %v5567 = vpop.f32.mrb[0].mxu0
      %5568 = vmatprep.mubr.f32.mxu0 0.0
      %5569 = vmatmul.mubr.f32.gmra.mrb[0].mxu0 %v1012
      %v5570 = vpop.f32.mrb[0].mxu0
      %v5571 = vadd.f32 0.0, %v5570
      %v5572 = vpop.f32.mrb[0].mxu0
      %5573 = vmatprep.mubr.f32.mxu0 0.0
      %5574 = vmatmul.mubr.f32.gmra.mrb[0].mxu0 %v1014
      %v5575 = vpop.f32.mrb[0].mxu0
      %v5576 = vadd.f32 0.0, %v5575
      %v5577 = vpop.f32.mrb[0].mxu0
      %5578 = vmatprep.mubr.f32.mxu0 0.0
      %5579 = vmatmul.mubr.f32.gmra.mrb[0].mxu0 %v1016
      %v5580 = vpop.f32.mrb[0].mxu0
      %v5581 = vadd.f32 0.0, %v5580
      %v5582 = vpop.f32.mrb[0].mxu0
      %5583 = vmatprep.mubr.f32.mxu0 0.0
      %5584 = vmatmul.mubr.f32.gmra.mrb[0].mxu0 %v1018
      %v5585 = vpop.f32.mrb[0].mxu0
      %v5586 = vadd.f32 0.0, %v5585
      %v5587 = vpop.f32.mrb[0].mxu0
      %5588 = vmatprep.mubr.f32.mxu0 0.0
      %5589 = vmatmul.mubr.f32.gmra.mrb[0].mxu0 %v1020
      %v5590 = vpop.f32.mrb[0].mxu0
      %v5591 = vadd.f32 0.0, %v5590
      %v5592 = vpop.f32.mrb[0].mxu0
      %5593 = vmatprep.mubr.f32.mxu0 0.0
      %5594 = vmatmul.mubr.f32.gmra.mrb[0].mxu0 %v1022
      %v5595 = vpop.f32.mrb[0].mxu0
      %v5596 = vadd.f32 0.0, %v5595
      %v5597 = vpop.f32.mrb[0].mxu0
      %5598 = vmatprep.mubr.f32.mxu0 0.0
      %5599 = vmatmul.mubr.f32.gmra.mrb[0].mxu0 %v1024
      %v5600 = vpop.f32.mrb[0].mxu0
      %v5601 = vadd.f32 0.0, %v5600
      %v5602 = vpop.f32.mrb[0].mxu0
      %5603 = vmatprep.mubr.f32.mxu0 0.0
      %5604 = vmatmul.mubr.f32.gmra.mrb[0].mxu0 %v1026
      %v5605 = vpop.f32.mrb[0].mxu0
      %v5606 = vadd.f32 0.0, %v5605
      %v5607 = vpop.f32.mrb[0].mxu0
      %5608 = vmatprep.mubr.f32.mxu0 0.0
      %5609 = vmatmul.mubr.f32.gmra.mrb[0].mxu0 %v1028
      %v5610 = vpop.f32.mrb[0].mxu0
      %v5611 = vadd.f32 0.0, %v5610
      %v5612 = vpop.f32.mrb[0].mxu0
      %5613 = vmatprep.mubr.f32.mxu0 0.0
      %5614 = vmatmul.mubr.f32.gmra.mrb[0].mxu0 %v1030
      %v5615 = vpop.f32.mrb[0].mxu0
      %v5616 = vadd.f32 0.0, %v5615
      %v5617 = vpop.f32.mrb[0].mxu0
      %5618 = vmatprep.mubr.f32.mxu0 0.0
      %5619 = vmatmul.mubr.f32.gmra.mrb[0].mxu0 %v1032
      %v5620 = vpop.f32.mrb[0].mxu0
      %v5621 = vadd.f32 0.0, %v5620
      %v5622 = vpop.f32.mrb[0].mxu0
      %5623 = vmatprep.mubr.f32.mxu0 0.0
      %5624 = vmatmul.mubr.f32.gmra.mrb[0].mxu0 %v1034
      %v5625 = vpop.f32.mrb[0].mxu0
      %v5626 = vadd.f32 0.0, %v5625
      %v5627 = vpop.f32.mrb[0].mxu0
      %5628 = vmatprep.mubr.f32.mxu0 0.0
      %5629 = vmatmul.mubr.f32.gmra.mrb[0].mxu0 %v1036
      %v5630 = vpop.f32.mrb[0].mxu0
      %v5631 = vadd.f32 0.0, %v5630
      %v5632 = vpop.f32.mrb[0].mxu0
      %5633 = vmatprep.mubr.f32.mxu0 0.0
      %5634 = vmatmul.mubr.f32.gmra.mrb[0].mxu0 %v1038
      %v5635 = vpop.f32.mrb[0].mxu0
      %v5636 = vadd.f32 0.0, %v5635
      %v5637 = vpop.f32.mrb[0].mxu0
      %5638 = vmatprep.mubr.f32.mxu0 0.0
      %5639 = vmatmul.mubr.f32.gmra.mrb[0].mxu0 %v1040
      %v5640 = vpop.f32.mrb[0].mxu0
      %v5641 = vadd.f32 0.0, %v5640
      %v5642 = vpop.f32.mrb[0].mxu0
      %5643 = vmatprep.mubr.f32.mxu0 0.0
      %5644 = vmatmul.mubr.f32.gmra.mrb[0].mxu0 %v1042
      %v5645 = vpop.f32.mrb[0].mxu0
      %v5646 = vadd.f32 0.0, %v5645
      %v5647 = vpop.f32.mrb[0].mxu0
      %5648 = vmatprep.mubr.f32.mxu0 0.0
      %5649 = vmatmul.mubr.f32.gmra.mrb[0].mxu0 %v1044
      %v5650 = vpop.f32.mrb[0].mxu0
      %v5651 = vadd.f32 0.0, %v5650
      %v5652 = vpop.f32.mrb[0].mxu0
      %5653 = vmatprep.mubr.f32.mxu0 0.0
      %5654 = vmatmul.mubr.f32.gmra.mrb[0].mxu0 %v1046
      %v5655 = vpop.f32.mrb[0].mxu0
      %v5656 = vadd.f32 0.0, %v5655
      %v5657 = vpop.f32.mrb[0].mxu0
      %5658 = vmatprep.mubr.f32.mxu0 0.0
      %5659 = vmatmul.mubr.f32.gmra.mrb[0].mxu0 %v1048
      %v5660 = vpop.f32.mrb[0].mxu0
      %v5661 = vadd.f32 0.0, %v5660
      %v5662 = vpop.f32.mrb[0].mxu0
      %5663 = vmatprep.mubr.f32.mxu0 0.0
      %5664 = vmatmul.mubr.f32.gmra.mrb[0].mxu0 %v4968
      %v5665 = vpop.f32.mrb[0].mxu0
      %v5666 = vadd.f32 0.0, %v5665
      %v5667 = vpop.f32.mrb[0].mxu0
      %5668 = vmatprep.mubr.f32.mxu0 0.0
      %5669 = vmatmul.mubr.f32.gmra.mrb[0].mxu0 %v4970
      %v5670 = vpop.f32.mrb[0].mxu0
      %v5671 = vadd.f32 0.0, %v5670
      %v5672 = vpop.f32.mrb[0].mxu0
      %5673 = vmatprep.mubr.f32.mxu0 0.0
      %5674 = vmatmul.mubr.f32.gmra.mrb[0].mxu0 %v4972
      %v5675 = vpop.f32.mrb[0].mxu0
      %v5676 = vadd.f32 0.0, %v5675
      %v5677 = vpop.f32.mrb[0].mxu0
      %5678 = vmatprep.mubr.f32.mxu0 0.0
      %5679 = vmatmul.mubr.f32.gmra.mrb[0].mxu0 %v4974
      %v5680 = vpop.f32.mrb[0].mxu0
      %v5681 = vadd.f32 0.0, %v5680
      %v5682 = vpop.f32.mrb[0].mxu0
      %5683 = vdwg.mxu0
      %v5684 = vadd.f32 %v4828, %v5046
      %v5685 = vadd.f32 %v4829, %v5051
      %v5686 = vadd.f32 %v4830, %v5056
      %v5687 = vadd.f32 %v4831, %v5061
      %v5688 = vadd.f32 %v4832, %v5066
      %v5689 = vadd.f32 %v4833, %v5071
      %v5690 = vadd.f32 %v4834, %v5076
      %v5691 = vadd.f32 %v4835, %v5081
      %v5692 = vadd.f32 %v4836, %v5086
      %v5693 = vadd.f32 %v4837, %v5091
      %v5694 = vadd.f32 %v4838, %v5096
      %v5695 = vadd.f32 %v4839, %v5101
      %v5696 = vadd.f32 %v4840, %v5106
      %v5697 = vadd.f32 %v4841, %v5111
      %v5698 = vadd.f32 %v4842, %v5116
      %v5699 = vadd.f32 %v4843, %v5121
      %v5700 = vadd.f32 %v4844, %v5126
      %v5701 = vadd.f32 %v4845, %v5131
      %v5702 = vadd.f32 %v4846, %v5136
      %v5703 = vadd.f32 %v4847, %v5141
      %v5704 = vadd.f32 %v4848, %v5146
      %v5705 = vadd.f32 %v4849, %v5151
      %v5706 = vadd.f32 %v4850, %v5156
      %v5707 = vadd.f32 %v4851, %v5161
      %v5708 = vadd.f32 %v4852, %v5166
      %v5709 = vadd.f32 %v4853, %v5171
      %v5710 = vadd.f32 %v4854, %v5176
      %v5711 = vadd.f32 %v4855, %v5181
      %v5712 = vadd.f32 %v4856, %v5186
      %v5713 = vadd.f32 %v4857, %v5191
      %v5714 = vadd.f32 %v4858, %v5196
      %v5715 = vadd.f32 %v4859, %v5201
      %v5716 = vadd.f32 %v4860, %v5206
      %v5717 = vadd.f32 %v4861, %v5211
      %v5718 = vadd.f32 %v4862, %v5216
      %v5719 = vadd.f32 %v4863, %v5221
      %v5720 = vadd.f32 %v4864, %v5226
      %v5721 = vadd.f32 %v4865, %v5231
      %v5722 = vadd.f32 %v4866, %v5236
      %v5723 = vadd.f32 %v4867, %v5241
      %v5724 = vadd.f32 %v4868, %v5246
      %v5725 = vadd.f32 %v4869, %v5251
      %v5726 = vadd.f32 %v4870, %v5256
      %v5727 = vadd.f32 %v4871, %v5261
      %v5728 = vadd.f32 %v4872, %v5266
      %v5729 = vadd.f32 %v4873, %v5271
      %v5730 = vadd.f32 %v4874, %v5276
      %v5731 = vadd.f32 %v4875, %v5281
      %v5732 = vadd.f32 %v4876, %v5286
      %v5733 = vadd.f32 %v4877, %v5291
      %v5734 = vadd.f32 %v4878, %v5296
      %v5735 = vadd.f32 %v4879, %v5301
      %v5736 = vadd.f32 %v4880, %v5306
      %v5737 = vadd.f32 %v4881, %v5311
      %v5738 = vadd.f32 %v4882, %v5316
      %v5739 = vadd.f32 %v4883, %v5321
      %v5740 = vadd.f32 %v4884, %v5326
      %v5741 = vadd.f32 %v4885, %v5331
      %v5742 = vadd.f32 %v4886, %v5336
      %v5743 = vadd.f32 %v4887, %v5341
      %v5744 = vadd.f32 %v4888, %v5346
      %v5745 = vadd.f32 %v4889, %v5351
      %v5746 = vadd.f32 %v4890, %v5356
      %v5747 = vadd.f32 %v4891, %v5361
      %v5748 = vadd.f32 %v4892, %v5366
      %v5749 = vadd.f32 %v4893, %v5371
      %v5750 = vadd.f32 %v4894, %v5376
      %v5751 = vadd.f32 %v4895, %v5381
      %v5752 = vadd.f32 %v4896, %v5386
      %v5753 = vadd.f32 %v4897, %v5391
      %v5754 = vadd.f32 %v4898, %v5396
      %v5755 = vadd.f32 %v4899, %v5401
      %v5756 = vadd.f32 %v4900, %v5406
      %v5757 = vadd.f32 %v4901, %v5411
      %v5758 = vadd.f32 %v4902, %v5416
      %v5759 = vadd.f32 %v4903, %v5421
      %v5760 = vadd.f32 %v4904, %v5426
      %v5761 = vadd.f32 %v4905, %v5431
      %v5762 = vadd.f32 %v4906, %v5436
      %v5763 = vadd.f32 %v4907, %v5441
      %v5764 = vadd.f32 %v4908, %v5446
      %v5765 = vadd.f32 %v4909, %v5451
      %v5766 = vadd.f32 %v4910, %v5456
      %v5767 = vadd.f32 %v4911, %v5461
      %v5768 = vadd.f32 %v4912, %v5466
      %v5769 = vadd.f32 %v4913, %v5471
      %v5770 = vadd.f32 %v4914, %v5476
      %v5771 = vadd.f32 %v4915, %v5481
      %v5772 = vadd.f32 %v4916, %v5486
      %v5773 = vadd.f32 %v4917, %v5491
      %v5774 = vadd.f32 %v4918, %v5496
      %v5775 = vadd.f32 %v4919, %v5501
      %v5776 = vadd.f32 %v4920, %v5506
      %v5777 = vadd.f32 %v4921, %v5511
      %v5778 = vadd.f32 %v4922, %v5516
      %v5779 = vadd.f32 %v4923, %v5521
      %v5780 = vadd.f32 %v4924, %v5526
      %v5781 = vadd.f32 %v4925, %v5531
      %v5782 = vadd.f32 %v4926, %v5536
      %v5783 = vadd.f32 %v4927, %v5541
      %v5784 = vadd.f32 %v4928, %v5546
      %v5785 = vadd.f32 %v4929, %v5551
      %v5786 = vadd.f32 %v4930, %v5556
      %v5787 = vadd.f32 %v4931, %v5561
      %v5788 = vadd.f32 %v4932, %v5566
      %v5789 = vadd.f32 %v4933, %v5571
      %v5790 = vadd.f32 %v4934, %v5576
      %v5791 = vadd.f32 %v4935, %v5581
      %v5792 = vadd.f32 %v4936, %v5586
      %v5793 = vadd.f32 %v4937, %v5591
      %v5794 = vadd.f32 %v4938, %v5596
      %v5795 = vadd.f32 %v4939, %v5601
      %v5796 = vadd.f32 %v4940, %v5606
      %v5797 = vadd.f32 %v4941, %v5611
      %v5798 = vadd.f32 %v4942, %v5616
      %v5799 = vadd.f32 %v4943, %v5621
      %v5800 = vadd.f32 %v4944, %v5626
      %v5801 = vadd.f32 %v4945, %v5631
      %v5802 = vadd.f32 %v4946, %v5636
      %v5803 = vadd.f32 %v4947, %v5641
      %v5804 = vadd.f32 %v4948, %v5646
      %v5805 = vadd.f32 %v4949, %v5651
      %v5806 = vadd.f32 %v4950, %v5656
      %v5807 = vadd.f32 %v4951, %v5661
      %v5808 = vadd.f32 %v4952, %v5666
      %v5809 = vadd.f32 %v4953, %v5671
      %v5810 = vadd.f32 %v4954, %v5676
      %v5811 = vadd.f32 %v4955, %v5681
      %v5812 = vrot.slane %v331, 2
      %v5813 = vrot.slane %v332, 2
      %v5814 = vsel %vm2723, %v5812, %v5813
      %v5815 = vrot.slane %v333, 2
      %v5816 = vsel %vm2723, %v5813, %v5815
      %v5817 = vrot.slane %v334, 2
      %v5818 = vsel %vm2723, %v5815, %v5817
      %v5819 = vrot.slane %v335, 2
      %v5820 = vsel %vm2723, %v5817, %v5819
      %s5821 = scalar_lea.vmem %s1, 20
      %v5822 = vld [vmem:[%s5821] sm:$0xf]
      %v5823 = vsel %vm793, %v5814, 0
      %v5825 = vsel %vm793, %v5816, 0
      %v5827 = vsel %vm793, %v5818, 0
      %v5829 = vsel %vm793, %v5820, 0
      %v5832 = vsel %vm1050, %v5822, 0
      %5834 = vmatprep.subr.mxu0 0.0
      %5835 = vmatpush1.msra.mxu0 %v5832
      %5836 = vmatprep.subr.mxu0 0.0
      %5837 = vmatpush1.msra.mxu0 0.0
      %5838 = vmatprep.subr.mxu0 0.0
      %5839 = vmatpush1.msra.mxu0 0.0
      %5840 = vmatprep.subr.mxu0 0.0
      %5841 = vmatpush1.msra.mxu0 0.0
      %5842 = vmatprep.subr.mxu0 0.0
      %5843 = vmatpush1.msra.mxu0 0.0
      %5844 = vmatprep.subr.mxu0 0.0
      %5845 = vmatpush1.msra.mxu0 0.0
      %5846 = vmatprep.subr.mxu0 0.0
      %5847 = vmatpush1.msra.mxu0 0.0
      %5848 = vmatprep.subr.mxu0 0.0
      %5849 = vmatpush1.msra.mxu0 0.0
      %5850 = vmatprep.subr.mxu0 0.0
      %5851 = vmatpush1.msra.mxu0 0.0
      %5852 = vmatprep.subr.mxu0 0.0
      %5853 = vmatpush1.msra.mxu0 0.0
      %5854 = vmatprep.subr.mxu0 0.0
      %5855 = vmatpush1.msra.mxu0 0.0
      %5856 = vmatprep.subr.mxu0 0.0
      %5857 = vmatpush1.msra.mxu0 0.0
      %5858 = vmatprep.subr.mxu0 0.0
      %5859 = vmatpush1.msra.mxu0 0.0
      %5860 = vmatprep.subr.mxu0 0.0
      %5861 = vmatpush1.msra.mxu0 0.0
      %5862 = vmatprep.subr.mxu0 0.0
      %5863 = vmatpush1.msra.mxu0 0.0
      %5864 = vmatprep.subr.mxu0 0.0
      %5865 = vmatpush1.msra.mxu0 0.0
      %5866 = vmatprep.subr.mxu0 0.0
      %5867 = vmatpush1.msra.mxu0 0.0
      %5868 = vmatprep.subr.mxu0 0.0
      %5869 = vmatpush1.msra.mxu0 0.0
      %5870 = vmatprep.subr.mxu0 0.0
      %5871 = vmatpush1.msra.mxu0 0.0
      %5872 = vmatprep.subr.mxu0 0.0
      %5873 = vmatpush1.msra.mxu0 0.0
      %5874 = vmatprep.subr.mxu0 0.0
      %5875 = vmatpush1.msra.mxu0 0.0
      %5876 = vmatprep.subr.mxu0 0.0
      %5877 = vmatpush1.msra.mxu0 0.0
      %5878 = vmatprep.subr.mxu0 0.0
      %5879 = vmatpush1.msra.mxu0 0.0
      %5880 = vmatprep.subr.mxu0 0.0
      %5881 = vmatpush1.msra.mxu0 0.0
      %5882 = vmatprep.subr.mxu0 0.0
      %5883 = vmatpush1.msra.mxu0 0.0
      %5884 = vmatprep.subr.mxu0 0.0
      %5885 = vmatpush1.msra.mxu0 0.0
      %5886 = vmatprep.subr.mxu0 0.0
      %5887 = vmatpush1.msra.mxu0 0.0
      %5888 = vmatprep.subr.mxu0 0.0
      %5889 = vmatpush1.msra.mxu0 0.0
      %5890 = vmatprep.subr.mxu0 0.0
      %5891 = vmatpush1.msra.mxu0 0.0
      %5892 = vmatprep.subr.mxu0 0.0
      %5893 = vmatpush1.msra.mxu0 0.0
      %5894 = vmatprep.subr.mxu0 0.0
      %5895 = vmatpush1.msra.mxu0 0.0
      %5896 = vmatprep.subr.mxu0 0.0
      %5897 = vmatpush1.msra.mxu0 0.0
      %5898 = vmatprep.mubr.f32.mxu0 0.0
      %5899 = vmatmul.mubr.f32.gmra.mrb[0].mxu0 %v3022
      %v5900 = vpop.f32.mrb[0].mxu0
      %v5901 = vadd.f32 0.0, %v5900
      %v5902 = vpop.f32.mrb[0].mxu0
      %5903 = vmatprep.mubr.f32.mxu0 0.0
      %5904 = vmatmul.mubr.f32.gmra.mrb[0].mxu0 %v3024
      %v5905 = vpop.f32.mrb[0].mxu0
      %v5906 = vadd.f32 0.0, %v5905
      %v5907 = vpop.f32.mrb[0].mxu0
      %5908 = vmatprep.mubr.f32.mxu0 0.0
      %5909 = vmatmul.mubr.f32.gmra.mrb[0].mxu0 %v3026
      %v5910 = vpop.f32.mrb[0].mxu0
      %v5911 = vadd.f32 0.0, %v5910
      %v5912 = vpop.f32.mrb[0].mxu0
      %5913 = vmatprep.mubr.f32.mxu0 0.0
      %5914 = vmatmul.mubr.f32.gmra.mrb[0].mxu0 %v3028
      %v5915 = vpop.f32.mrb[0].mxu0
      %v5916 = vadd.f32 0.0, %v5915
      %v5917 = vpop.f32.mrb[0].mxu0
      %5918 = vmatprep.mubr.f32.mxu0 0.0
      %5919 = vmatmul.mubr.f32.gmra.mrb[0].mxu0 %v3030
      %v5920 = vpop.f32.mrb[0].mxu0
      %v5921 = vadd.f32 0.0, %v5920
      %v5922 = vpop.f32.mrb[0].mxu0
      %5923 = vmatprep.mubr.f32.mxu0 0.0
      %5924 = vmatmul.mubr.f32.gmra.mrb[0].mxu0 %v3032
      %v5925 = vpop.f32.mrb[0].mxu0
      %v5926 = vadd.f32 0.0, %v5925
      %v5927 = vpop.f32.mrb[0].mxu0
      %5928 = vmatprep.mubr.f32.mxu0 0.0
      %5929 = vmatmul.mubr.f32.gmra.mrb[0].mxu0 %v3034
      %v5930 = vpop.f32.mrb[0].mxu0
      %v5931 = vadd.f32 0.0, %v5930
      %v5932 = vpop.f32.mrb[0].mxu0
      %5933 = vmatprep.mubr.f32.mxu0 0.0
      %5934 = vmatmul.mubr.f32.gmra.mrb[0].mxu0 %v3036
      %v5935 = vpop.f32.mrb[0].mxu0
      %v5936 = vadd.f32 0.0, %v5935
      %v5937 = vpop.f32.mrb[0].mxu0
      %5938 = vmatprep.mubr.f32.mxu0 0.0
      %5939 = vmatmul.mubr.f32.gmra.mrb[0].mxu0 %v3038
      %v5940 = vpop.f32.mrb[0].mxu0
      %v5941 = vadd.f32 0.0, %v5940
      %v5942 = vpop.f32.mrb[0].mxu0
      %5943 = vmatprep.mubr.f32.mxu0 0.0
      %5944 = vmatmul.mubr.f32.gmra.mrb[0].mxu0 %v3040
      %v5945 = vpop.f32.mrb[0].mxu0
      %v5946 = vadd.f32 0.0, %v5945
      %v5947 = vpop.f32.mrb[0].mxu0
      %5948 = vmatprep.mubr.f32.mxu0 0.0
      %5949 = vmatmul.mubr.f32.gmra.mrb[0].mxu0 %v3042
      %v5950 = vpop.f32.mrb[0].mxu0
      %v5951 = vadd.f32 0.0, %v5950
      %v5952 = vpop.f32.mrb[0].mxu0
      %5953 = vmatprep.mubr.f32.mxu0 0.0
      %5954 = vmatmul.mubr.f32.gmra.mrb[0].mxu0 %v3044
      %v5955 = vpop.f32.mrb[0].mxu0
      %v5956 = vadd.f32 0.0, %v5955
      %v5957 = vpop.f32.mrb[0].mxu0
      %5958 = vmatprep.mubr.f32.mxu0 0.0
      %5959 = vmatmul.mubr.f32.gmra.mrb[0].mxu0 %v3046
      %v5960 = vpop.f32.mrb[0].mxu0
      %v5961 = vadd.f32 0.0, %v5960
      %v5962 = vpop.f32.mrb[0].mxu0
      %5963 = vmatprep.mubr.f32.mxu0 0.0
      %5964 = vmatmul.mubr.f32.gmra.mrb[0].mxu0 %v3048
      %v5965 = vpop.f32.mrb[0].mxu0
      %v5966 = vadd.f32 0.0, %v5965
      %v5967 = vpop.f32.mrb[0].mxu0
      %5968 = vmatprep.mubr.f32.mxu0 0.0
      %5969 = vmatmul.mubr.f32.gmra.mrb[0].mxu0 %v3050
      %v5970 = vpop.f32.mrb[0].mxu0
      %v5971 = vadd.f32 0.0, %v5970
      %v5972 = vpop.f32.mrb[0].mxu0
      %5973 = vmatprep.mubr.f32.mxu0 0.0
      %5974 = vmatmul.mubr.f32.gmra.mrb[0].mxu0 %v3052
      %v5975 = vpop.f32.mrb[0].mxu0
      %v5976 = vadd.f32 0.0, %v5975
      %v5977 = vpop.f32.mrb[0].mxu0
      %5978 = vmatprep.mubr.f32.mxu0 0.0
      %5979 = vmatmul.mubr.f32.gmra.mrb[0].mxu0 %v3054
      %v5980 = vpop.f32.mrb[0].mxu0
      %v5981 = vadd.f32 0.0, %v5980
      %v5982 = vpop.f32.mrb[0].mxu0
      %5983 = vmatprep.mubr.f32.mxu0 0.0
      %5984 = vmatmul.mubr.f32.gmra.mrb[0].mxu0 %v3056
      %v5985 = vpop.f32.mrb[0].mxu0
      %v5986 = vadd.f32 0.0, %v5985
      %v5987 = vpop.f32.mrb[0].mxu0
      %5988 = vmatprep.mubr.f32.mxu0 0.0
      %5989 = vmatmul.mubr.f32.gmra.mrb[0].mxu0 %v3058
      %v5990 = vpop.f32.mrb[0].mxu0
      %v5991 = vadd.f32 0.0, %v5990
      %v5992 = vpop.f32.mrb[0].mxu0
      %5993 = vmatprep.mubr.f32.mxu0 0.0
      %5994 = vmatmul.mubr.f32.gmra.mrb[0].mxu0 %v3060
      %v5995 = vpop.f32.mrb[0].mxu0
      %v5996 = vadd.f32 0.0, %v5995
      %v5997 = vpop.f32.mrb[0].mxu0
      %5998 = vmatprep.mubr.f32.mxu0 0.0
      %5999 = vmatmul.mubr.f32.gmra.mrb[0].mxu0 %v3062
      %v6000 = vpop.f32.mrb[0].mxu0
      %v6001 = vadd.f32 0.0, %v6000
      %v6002 = vpop.f32.mrb[0].mxu0
      %6003 = vmatprep.mubr.f32.mxu0 0.0
      %6004 = vmatmul.mubr.f32.gmra.mrb[0].mxu0 %v3064
      %v6005 = vpop.f32.mrb[0].mxu0
      %v6006 = vadd.f32 0.0, %v6005
      %v6007 = vpop.f32.mrb[0].mxu0
      %6008 = vmatprep.mubr.f32.mxu0 0.0
      %6009 = vmatmul.mubr.f32.gmra.mrb[0].mxu0 %v3066
      %v6010 = vpop.f32.mrb[0].mxu0
      %v6011 = vadd.f32 0.0, %v6010
      %v6012 = vpop.f32.mrb[0].mxu0
      %6013 = vmatprep.mubr.f32.mxu0 0.0
      %6014 = vmatmul.mubr.f32.gmra.mrb[0].mxu0 %v3068
      %v6015 = vpop.f32.mrb[0].mxu0
      %v6016 = vadd.f32 0.0, %v6015
      %v6017 = vpop.f32.mrb[0].mxu0
      %6018 = vmatprep.mubr.f32.mxu0 0.0
      %6019 = vmatmul.mubr.f32.gmra.mrb[0].mxu0 %v3070
      %v6020 = vpop.f32.mrb[0].mxu0
      %v6021 = vadd.f32 0.0, %v6020
      %v6022 = vpop.f32.mrb[0].mxu0
      %6023 = vmatprep.mubr.f32.mxu0 0.0
      %6024 = vmatmul.mubr.f32.gmra.mrb[0].mxu0 %v3072
      %v6025 = vpop.f32.mrb[0].mxu0
      %v6026 = vadd.f32 0.0, %v6025
      %v6027 = vpop.f32.mrb[0].mxu0
      %6028 = vmatprep.mubr.f32.mxu0 0.0
      %6029 = vmatmul.mubr.f32.gmra.mrb[0].mxu0 %v3074
      %v6030 = vpop.f32.mrb[0].mxu0
      %v6031 = vadd.f32 0.0, %v6030
      %v6032 = vpop.f32.mrb[0].mxu0
      %6033 = vmatprep.mubr.f32.mxu0 0.0
      %6034 = vmatmul.mubr.f32.gmra.mrb[0].mxu0 %v3076
      %v6035 = vpop.f32.mrb[0].mxu0
      %v6036 = vadd.f32 0.0, %v6035
      %v6037 = vpop.f32.mrb[0].mxu0
      %6038 = vmatprep.mubr.f32.mxu0 0.0
      %6039 = vmatmul.mubr.f32.gmra.mrb[0].mxu0 %v3078
      %v6040 = vpop.f32.mrb[0].mxu0
      %v6041 = vadd.f32 0.0, %v6040
      %v6042 = vpop.f32.mrb[0].mxu0
      %6043 = vmatprep.mubr.f32.mxu0 0.0
      %6044 = vmatmul.mubr.f32.gmra.mrb[0].mxu0 %v3080
      %v6045 = vpop.f32.mrb[0].mxu0
      %v6046 = vadd.f32 0.0, %v6045
      %v6047 = vpop.f32.mrb[0].mxu0
      %6048 = vmatprep.mubr.f32.mxu0 0.0
      %6049 = vmatmul.mubr.f32.gmra.mrb[0].mxu0 %v3082
      %v6050 = vpop.f32.mrb[0].mxu0
      %v6051 = vadd.f32 0.0, %v6050
      %v6052 = vpop.f32.mrb[0].mxu0
      %6053 = vmatprep.mubr.f32.mxu0 0.0
      %6054 = vmatmul.mubr.f32.gmra.mrb[0].mxu0 %v3084
      %v6055 = vpop.f32.mrb[0].mxu0
      %v6056 = vadd.f32 0.0, %v6055
      %v6057 = vpop.f32.mrb[0].mxu0
      %6058 = vmatprep.mubr.f32.mxu0 0.0
      %6059 = vmatmul.mubr.f32.gmra.mrb[0].mxu0 %v3086
      %v6060 = vpop.f32.mrb[0].mxu0
      %v6061 = vadd.f32 0.0, %v6060
      %v6062 = vpop.f32.mrb[0].mxu0
      %6063 = vmatprep.mubr.f32.mxu0 0.0
      %6064 = vmatmul.mubr.f32.gmra.mrb[0].mxu0 %v3088
      %v6065 = vpop.f32.mrb[0].mxu0
      %v6066 = vadd.f32 0.0, %v6065
      %v6067 = vpop.f32.mrb[0].mxu0
      %6068 = vmatprep.mubr.f32.mxu0 0.0
      %6069 = vmatmul.mubr.f32.gmra.mrb[0].mxu0 %v3090
      %v6070 = vpop.f32.mrb[0].mxu0
      %v6071 = vadd.f32 0.0, %v6070
      %v6072 = vpop.f32.mrb[0].mxu0
      %6073 = vmatprep.mubr.f32.mxu0 0.0
      %6074 = vmatmul.mubr.f32.gmra.mrb[0].mxu0 %v3092
      %v6075 = vpop.f32.mrb[0].mxu0
      %v6076 = vadd.f32 0.0, %v6075
      %v6077 = vpop.f32.mrb[0].mxu0
      %6078 = vmatprep.mubr.f32.mxu0 0.0
      %6079 = vmatmul.mubr.f32.gmra.mrb[0].mxu0 %v3094
      %v6080 = vpop.f32.mrb[0].mxu0
      %v6081 = vadd.f32 0.0, %v6080
      %v6082 = vpop.f32.mrb[0].mxu0
      %6083 = vmatprep.mubr.f32.mxu0 0.0
      %6084 = vmatmul.mubr.f32.gmra.mrb[0].mxu0 %v3096
      %v6085 = vpop.f32.mrb[0].mxu0
      %v6086 = vadd.f32 0.0, %v6085
      %v6087 = vpop.f32.mrb[0].mxu0
      %6088 = vmatprep.mubr.f32.mxu0 0.0
      %6089 = vmatmul.mubr.f32.gmra.mrb[0].mxu0 %v3098
      %v6090 = vpop.f32.mrb[0].mxu0
      %v6091 = vadd.f32 0.0, %v6090
      %v6092 = vpop.f32.mrb[0].mxu0
      %6093 = vmatprep.mubr.f32.mxu0 0.0
      %6094 = vmatmul.mubr.f32.gmra.mrb[0].mxu0 %v3100
      %v6095 = vpop.f32.mrb[0].mxu0
      %v6096 = vadd.f32 0.0, %v6095
      %v6097 = vpop.f32.mrb[0].mxu0
      %6098 = vmatprep.mubr.f32.mxu0 0.0
      %6099 = vmatmul.mubr.f32.gmra.mrb[0].mxu0 %v3102
      %v6100 = vpop.f32.mrb[0].mxu0
      %v6101 = vadd.f32 0.0, %v6100
      %v6102 = vpop.f32.mrb[0].mxu0
      %6103 = vmatprep.mubr.f32.mxu0 0.0
      %6104 = vmatmul.mubr.f32.gmra.mrb[0].mxu0 %v3104
      %v6105 = vpop.f32.mrb[0].mxu0
      %v6106 = vadd.f32 0.0, %v6105
      %v6107 = vpop.f32.mrb[0].mxu0
      %6108 = vmatprep.mubr.f32.mxu0 0.0
      %6109 = vmatmul.mubr.f32.gmra.mrb[0].mxu0 %v3106
      %v6110 = vpop.f32.mrb[0].mxu0
      %v6111 = vadd.f32 0.0, %v6110
      %v6112 = vpop.f32.mrb[0].mxu0
      %6113 = vmatprep.mubr.f32.mxu0 0.0
      %6114 = vmatmul.mubr.f32.gmra.mrb[0].mxu0 %v3108
      %v6115 = vpop.f32.mrb[0].mxu0
      %v6116 = vadd.f32 0.0, %v6115
      %v6117 = vpop.f32.mrb[0].mxu0
      %6118 = vmatprep.mubr.f32.mxu0 0.0
      %6119 = vmatmul.mubr.f32.gmra.mrb[0].mxu0 %v3110
      %v6120 = vpop.f32.mrb[0].mxu0
      %v6121 = vadd.f32 0.0, %v6120
      %v6122 = vpop.f32.mrb[0].mxu0
      %6123 = vmatprep.mubr.f32.mxu0 0.0
      %6124 = vmatmul.mubr.f32.gmra.mrb[0].mxu0 %v3112
      %v6125 = vpop.f32.mrb[0].mxu0
      %v6126 = vadd.f32 0.0, %v6125
      %v6127 = vpop.f32.mrb[0].mxu0
      %6128 = vmatprep.mubr.f32.mxu0 0.0
      %6129 = vmatmul.mubr.f32.gmra.mrb[0].mxu0 %v3114
      %v6130 = vpop.f32.mrb[0].mxu0
      %v6131 = vadd.f32 0.0, %v6130
      %v6132 = vpop.f32.mrb[0].mxu0
      %6133 = vmatprep.mubr.f32.mxu0 0.0
      %6134 = vmatmul.mubr.f32.gmra.mrb[0].mxu0 %v3116
      %v6135 = vpop.f32.mrb[0].mxu0
      %v6136 = vadd.f32 0.0, %v6135
      %v6137 = vpop.f32.mrb[0].mxu0
      %6138 = vmatprep.mubr.f32.mxu0 0.0
      %6139 = vmatmul.mubr.f32.gmra.mrb[0].mxu0 %v3118
      %v6140 = vpop.f32.mrb[0].mxu0
      %v6141 = vadd.f32 0.0, %v6140
      %v6142 = vpop.f32.mrb[0].mxu0
      %6143 = vmatprep.mubr.f32.mxu0 0.0
      %6144 = vmatmul.mubr.f32.gmra.mrb[0].mxu0 %v3120
      %v6145 = vpop.f32.mrb[0].mxu0
      %v6146 = vadd.f32 0.0, %v6145
      %v6147 = vpop.f32.mrb[0].mxu0
      %6148 = vmatprep.mubr.f32.mxu0 0.0
      %6149 = vmatmul.mubr.f32.gmra.mrb[0].mxu0 %v3122
      %v6150 = vpop.f32.mrb[0].mxu0
      %v6151 = vadd.f32 0.0, %v6150
      %v6152 = vpop.f32.mrb[0].mxu0
      %6153 = vmatprep.mubr.f32.mxu0 0.0
      %6154 = vmatmul.mubr.f32.gmra.mrb[0].mxu0 %v3124
      %v6155 = vpop.f32.mrb[0].mxu0
      %v6156 = vadd.f32 0.0, %v6155
      %v6157 = vpop.f32.mrb[0].mxu0
      %6158 = vmatprep.mubr.f32.mxu0 0.0
      %6159 = vmatmul.mubr.f32.gmra.mrb[0].mxu0 %v3126
      %v6160 = vpop.f32.mrb[0].mxu0
      %v6161 = vadd.f32 0.0, %v6160
      %v6162 = vpop.f32.mrb[0].mxu0
      %6163 = vmatprep.mubr.f32.mxu0 0.0
      %6164 = vmatmul.mubr.f32.gmra.mrb[0].mxu0 %v3128
      %v6165 = vpop.f32.mrb[0].mxu0
      %v6166 = vadd.f32 0.0, %v6165
      %v6167 = vpop.f32.mrb[0].mxu0
      %6168 = vmatprep.mubr.f32.mxu0 0.0
      %6169 = vmatmul.mubr.f32.gmra.mrb[0].mxu0 %v3130
      %v6170 = vpop.f32.mrb[0].mxu0
      %v6171 = vadd.f32 0.0, %v6170
      %v6172 = vpop.f32.mrb[0].mxu0
      %6173 = vmatprep.mubr.f32.mxu0 0.0
      %6174 = vmatmul.mubr.f32.gmra.mrb[0].mxu0 %v3132
      %v6175 = vpop.f32.mrb[0].mxu0
      %v6176 = vadd.f32 0.0, %v6175
      %v6177 = vpop.f32.mrb[0].mxu0
      %6178 = vmatprep.mubr.f32.mxu0 0.0
      %6179 = vmatmul.mubr.f32.gmra.mrb[0].mxu0 %v3134
      %v6180 = vpop.f32.mrb[0].mxu0
      %v6181 = vadd.f32 0.0, %v6180
      %v6182 = vpop.f32.mrb[0].mxu0
      %6183 = vmatprep.mubr.f32.mxu0 0.0
      %6184 = vmatmul.mubr.f32.gmra.mrb[0].mxu0 %v3136
      %v6185 = vpop.f32.mrb[0].mxu0
      %v6186 = vadd.f32 0.0, %v6185
      %v6187 = vpop.f32.mrb[0].mxu0
      %6188 = vmatprep.mubr.f32.mxu0 0.0
      %6189 = vmatmul.mubr.f32.gmra.mrb[0].mxu0 %v3138
      %v6190 = vpop.f32.mrb[0].mxu0
      %v6191 = vadd.f32 0.0, %v6190
      %v6192 = vpop.f32.mrb[0].mxu0
      %6193 = vmatprep.mubr.f32.mxu0 0.0
      %6194 = vmatmul.mubr.f32.gmra.mrb[0].mxu0 %v3140
      %v6195 = vpop.f32.mrb[0].mxu0
      %v6196 = vadd.f32 0.0, %v6195
      %v6197 = vpop.f32.mrb[0].mxu0
      %6198 = vmatprep.mubr.f32.mxu0 0.0
      %6199 = vmatmul.mubr.f32.gmra.mrb[0].mxu0 %v3142
      %v6200 = vpop.f32.mrb[0].mxu0
      %v6201 = vadd.f32 0.0, %v6200
      %v6202 = vpop.f32.mrb[0].mxu0
      %6203 = vmatprep.mubr.f32.mxu0 0.0
      %6204 = vmatmul.mubr.f32.gmra.mrb[0].mxu0 %v3144
      %v6205 = vpop.f32.mrb[0].mxu0
      %v6206 = vadd.f32 0.0, %v6205
      %v6207 = vpop.f32.mrb[0].mxu0
      %6208 = vmatprep.mubr.f32.mxu0 0.0
      %6209 = vmatmul.mubr.f32.gmra.mrb[0].mxu0 %v3146
      %v6210 = vpop.f32.mrb[0].mxu0
      %v6211 = vadd.f32 0.0, %v6210
      %v6212 = vpop.f32.mrb[0].mxu0
      %6213 = vmatprep.mubr.f32.mxu0 0.0
      %6214 = vmatmul.mubr.f32.gmra.mrb[0].mxu0 %v3148
      %v6215 = vpop.f32.mrb[0].mxu0
      %v6216 = vadd.f32 0.0, %v6215
      %v6217 = vpop.f32.mrb[0].mxu0
      %6218 = vmatprep.mubr.f32.mxu0 0.0
      %6219 = vmatmul.mubr.f32.gmra.mrb[0].mxu0 %v3150
      %v6220 = vpop.f32.mrb[0].mxu0
      %v6221 = vadd.f32 0.0, %v6220
      %v6222 = vpop.f32.mrb[0].mxu0
      %6223 = vmatprep.mubr.f32.mxu0 0.0
      %6224 = vmatmul.mubr.f32.gmra.mrb[0].mxu0 %v3152
      %v6225 = vpop.f32.mrb[0].mxu0
      %v6226 = vadd.f32 0.0, %v6225
      %v6227 = vpop.f32.mrb[0].mxu0
      %6228 = vmatprep.mubr.f32.mxu0 0.0
      %6229 = vmatmul.mubr.f32.gmra.mrb[0].mxu0 %v3154
      %v6230 = vpop.f32.mrb[0].mxu0
      %v6231 = vadd.f32 0.0, %v6230
      %v6232 = vpop.f32.mrb[0].mxu0
      %6233 = vmatprep.mubr.f32.mxu0 0.0
      %6234 = vmatmul.mubr.f32.gmra.mrb[0].mxu0 %v3156
      %v6235 = vpop.f32.mrb[0].mxu0
      %v6236 = vadd.f32 0.0, %v6235
      %v6237 = vpop.f32.mrb[0].mxu0
      %6238 = vmatprep.mubr.f32.mxu0 0.0
      %6239 = vmatmul.mubr.f32.gmra.mrb[0].mxu0 %v3158
      %v6240 = vpop.f32.mrb[0].mxu0
      %v6241 = vadd.f32 0.0, %v6240
      %v6242 = vpop.f32.mrb[0].mxu0
      %6243 = vmatprep.mubr.f32.mxu0 0.0
      %6244 = vmatmul.mubr.f32.gmra.mrb[0].mxu0 %v3160
      %v6245 = vpop.f32.mrb[0].mxu0
      %v6246 = vadd.f32 0.0, %v6245
      %v6247 = vpop.f32.mrb[0].mxu0
      %6248 = vmatprep.mubr.f32.mxu0 0.0
      %6249 = vmatmul.mubr.f32.gmra.mrb[0].mxu0 %v3162
      %v6250 = vpop.f32.mrb[0].mxu0
      %v6251 = vadd.f32 0.0, %v6250
      %v6252 = vpop.f32.mrb[0].mxu0
      %6253 = vmatprep.mubr.f32.mxu0 0.0
      %6254 = vmatmul.mubr.f32.gmra.mrb[0].mxu0 %v3164
      %v6255 = vpop.f32.mrb[0].mxu0
      %v6256 = vadd.f32 0.0, %v6255
      %v6257 = vpop.f32.mrb[0].mxu0
      %6258 = vmatprep.mubr.f32.mxu0 0.0
      %6259 = vmatmul.mubr.f32.gmra.mrb[0].mxu0 %v3166
      %v6260 = vpop.f32.mrb[0].mxu0
      %v6261 = vadd.f32 0.0, %v6260
      %v6262 = vpop.f32.mrb[0].mxu0
      %6263 = vmatprep.mubr.f32.mxu0 0.0
      %6264 = vmatmul.mubr.f32.gmra.mrb[0].mxu0 %v3168
      %v6265 = vpop.f32.mrb[0].mxu0
      %v6266 = vadd.f32 0.0, %v6265
      %v6267 = vpop.f32.mrb[0].mxu0
      %6268 = vmatprep.mubr.f32.mxu0 0.0
      %6269 = vmatmul.mubr.f32.gmra.mrb[0].mxu0 %v3170
      %v6270 = vpop.f32.mrb[0].mxu0
      %v6271 = vadd.f32 0.0, %v6270
      %v6272 = vpop.f32.mrb[0].mxu0
      %6273 = vmatprep.mubr.f32.mxu0 0.0
      %6274 = vmatmul.mubr.f32.gmra.mrb[0].mxu0 %v3172
      %v6275 = vpop.f32.mrb[0].mxu0
      %v6276 = vadd.f32 0.0, %v6275
      %v6277 = vpop.f32.mrb[0].mxu0
      %6278 = vmatprep.mubr.f32.mxu0 0.0
      %6279 = vmatmul.mubr.f32.gmra.mrb[0].mxu0 %v3174
      %v6280 = vpop.f32.mrb[0].mxu0
      %v6281 = vadd.f32 0.0, %v6280
      %v6282 = vpop.f32.mrb[0].mxu0
      %6283 = vmatprep.mubr.f32.mxu0 0.0
      %6284 = vmatmul.mubr.f32.gmra.mrb[0].mxu0 %v3176
      %v6285 = vpop.f32.mrb[0].mxu0
      %v6286 = vadd.f32 0.0, %v6285
      %v6287 = vpop.f32.mrb[0].mxu0
      %6288 = vmatprep.mubr.f32.mxu0 0.0
      %6289 = vmatmul.mubr.f32.gmra.mrb[0].mxu0 %v3178
      %v6290 = vpop.f32.mrb[0].mxu0
      %v6291 = vadd.f32 0.0, %v6290
      %v6292 = vpop.f32.mrb[0].mxu0
      %6293 = vmatprep.mubr.f32.mxu0 0.0
      %6294 = vmatmul.mubr.f32.gmra.mrb[0].mxu0 %v3180
      %v6295 = vpop.f32.mrb[0].mxu0
      %v6296 = vadd.f32 0.0, %v6295
      %v6297 = vpop.f32.mrb[0].mxu0
      %6298 = vmatprep.mubr.f32.mxu0 0.0
      %6299 = vmatmul.mubr.f32.gmra.mrb[0].mxu0 %v3182
      %v6300 = vpop.f32.mrb[0].mxu0
      %v6301 = vadd.f32 0.0, %v6300
      %v6302 = vpop.f32.mrb[0].mxu0
      %6303 = vmatprep.mubr.f32.mxu0 0.0
      %6304 = vmatmul.mubr.f32.gmra.mrb[0].mxu0 %v3184
      %v6305 = vpop.f32.mrb[0].mxu0
      %v6306 = vadd.f32 0.0, %v6305
      %v6307 = vpop.f32.mrb[0].mxu0
      %6308 = vmatprep.mubr.f32.mxu0 0.0
      %6309 = vmatmul.mubr.f32.gmra.mrb[0].mxu0 %v3186
      %v6310 = vpop.f32.mrb[0].mxu0
      %v6311 = vadd.f32 0.0, %v6310
      %v6312 = vpop.f32.mrb[0].mxu0
      %6313 = vmatprep.mubr.f32.mxu0 0.0
      %6314 = vmatmul.mubr.f32.gmra.mrb[0].mxu0 %v3188
      %v6315 = vpop.f32.mrb[0].mxu0
      %v6316 = vadd.f32 0.0, %v6315
      %v6317 = vpop.f32.mrb[0].mxu0
      %6318 = vmatprep.mubr.f32.mxu0 0.0
      %6319 = vmatmul.mubr.f32.gmra.mrb[0].mxu0 %v3190
      %v6320 = vpop.f32.mrb[0].mxu0
      %v6321 = vadd.f32 0.0, %v6320
      %v6322 = vpop.f32.mrb[0].mxu0
      %6323 = vmatprep.mubr.f32.mxu0 0.0
      %6324 = vmatmul.mubr.f32.gmra.mrb[0].mxu0 %v3192
      %v6325 = vpop.f32.mrb[0].mxu0
      %v6326 = vadd.f32 0.0, %v6325
      %v6327 = vpop.f32.mrb[0].mxu0
      %6328 = vmatprep.mubr.f32.mxu0 0.0
      %6329 = vmatmul.mubr.f32.gmra.mrb[0].mxu0 %v3194
      %v6330 = vpop.f32.mrb[0].mxu0
      %v6331 = vadd.f32 0.0, %v6330
      %v6332 = vpop.f32.mrb[0].mxu0
      %6333 = vmatprep.mubr.f32.mxu0 0.0
      %6334 = vmatmul.mubr.f32.gmra.mrb[0].mxu0 %v3196
      %v6335 = vpop.f32.mrb[0].mxu0
      %v6336 = vadd.f32 0.0, %v6335
      %v6337 = vpop.f32.mrb[0].mxu0
      %6338 = vmatprep.mubr.f32.mxu0 0.0
      %6339 = vmatmul.mubr.f32.gmra.mrb[0].mxu0 %v3198
      %v6340 = vpop.f32.mrb[0].mxu0
      %v6341 = vadd.f32 0.0, %v6340
      %v6342 = vpop.f32.mrb[0].mxu0
      %6343 = vmatprep.mubr.f32.mxu0 0.0
      %6344 = vmatmul.mubr.f32.gmra.mrb[0].mxu0 %v3200
      %v6345 = vpop.f32.mrb[0].mxu0
      %v6346 = vadd.f32 0.0, %v6345
      %v6347 = vpop.f32.mrb[0].mxu0
      %6348 = vmatprep.mubr.f32.mxu0 0.0
      %6349 = vmatmul.mubr.f32.gmra.mrb[0].mxu0 %v3202
      %v6350 = vpop.f32.mrb[0].mxu0
      %v6351 = vadd.f32 0.0, %v6350
      %v6352 = vpop.f32.mrb[0].mxu0
      %6353 = vmatprep.mubr.f32.mxu0 0.0
      %6354 = vmatmul.mubr.f32.gmra.mrb[0].mxu0 %v3204
      %v6355 = vpop.f32.mrb[0].mxu0
      %v6356 = vadd.f32 0.0, %v6355
      %v6357 = vpop.f32.mrb[0].mxu0
      %6358 = vmatprep.mubr.f32.mxu0 0.0
      %6359 = vmatmul.mubr.f32.gmra.mrb[0].mxu0 %v3206
      %v6360 = vpop.f32.mrb[0].mxu0
      %v6361 = vadd.f32 0.0, %v6360
      %v6362 = vpop.f32.mrb[0].mxu0
      %6363 = vmatprep.mubr.f32.mxu0 0.0
      %6364 = vmatmul.mubr.f32.gmra.mrb[0].mxu0 %v3208
      %v6365 = vpop.f32.mrb[0].mxu0
      %v6366 = vadd.f32 0.0, %v6365
      %v6367 = vpop.f32.mrb[0].mxu0
      %6368 = vmatprep.mubr.f32.mxu0 0.0
      %6369 = vmatmul.mubr.f32.gmra.mrb[0].mxu0 %v3210
      %v6370 = vpop.f32.mrb[0].mxu0
      %v6371 = vadd.f32 0.0, %v6370
      %v6372 = vpop.f32.mrb[0].mxu0
      %6373 = vmatprep.mubr.f32.mxu0 0.0
      %6374 = vmatmul.mubr.f32.gmra.mrb[0].mxu0 %v3212
      %v6375 = vpop.f32.mrb[0].mxu0
      %v6376 = vadd.f32 0.0, %v6375
      %v6377 = vpop.f32.mrb[0].mxu0
      %6378 = vmatprep.mubr.f32.mxu0 0.0
      %6379 = vmatmul.mubr.f32.gmra.mrb[0].mxu0 %v3214
      %v6380 = vpop.f32.mrb[0].mxu0
      %v6381 = vadd.f32 0.0, %v6380
      %v6382 = vpop.f32.mrb[0].mxu0
      %6383 = vmatprep.mubr.f32.mxu0 0.0
      %6384 = vmatmul.mubr.f32.gmra.mrb[0].mxu0 %v3216
      %v6385 = vpop.f32.mrb[0].mxu0
      %v6386 = vadd.f32 0.0, %v6385
      %v6387 = vpop.f32.mrb[0].mxu0
      %6388 = vmatprep.mubr.f32.mxu0 0.0
      %6389 = vmatmul.mubr.f32.gmra.mrb[0].mxu0 %v3218
      %v6390 = vpop.f32.mrb[0].mxu0
      %v6391 = vadd.f32 0.0, %v6390
      %v6392 = vpop.f32.mrb[0].mxu0
      %6393 = vmatprep.mubr.f32.mxu0 0.0
      %6394 = vmatmul.mubr.f32.gmra.mrb[0].mxu0 %v3220
      %v6395 = vpop.f32.mrb[0].mxu0
      %v6396 = vadd.f32 0.0, %v6395
      %v6397 = vpop.f32.mrb[0].mxu0
      %6398 = vmatprep.mubr.f32.mxu0 0.0
      %6399 = vmatmul.mubr.f32.gmra.mrb[0].mxu0 %v3222
      %v6400 = vpop.f32.mrb[0].mxu0
      %v6401 = vadd.f32 0.0, %v6400
      %v6402 = vpop.f32.mrb[0].mxu0
      %6403 = vmatprep.mubr.f32.mxu0 0.0
      %6404 = vmatmul.mubr.f32.gmra.mrb[0].mxu0 %v3224
      %v6405 = vpop.f32.mrb[0].mxu0
      %v6406 = vadd.f32 0.0, %v6405
      %v6407 = vpop.f32.mrb[0].mxu0
      %6408 = vmatprep.mubr.f32.mxu0 0.0
      %6409 = vmatmul.mubr.f32.gmra.mrb[0].mxu0 %v3226
      %v6410 = vpop.f32.mrb[0].mxu0
      %v6411 = vadd.f32 0.0, %v6410
      %v6412 = vpop.f32.mrb[0].mxu0
      %6413 = vmatprep.mubr.f32.mxu0 0.0
      %6414 = vmatmul.mubr.f32.gmra.mrb[0].mxu0 %v3228
      %v6415 = vpop.f32.mrb[0].mxu0
      %v6416 = vadd.f32 0.0, %v6415
      %v6417 = vpop.f32.mrb[0].mxu0
      %6418 = vmatprep.mubr.f32.mxu0 0.0
      %6419 = vmatmul.mubr.f32.gmra.mrb[0].mxu0 %v3230
      %v6420 = vpop.f32.mrb[0].mxu0
      %v6421 = vadd.f32 0.0, %v6420
      %v6422 = vpop.f32.mrb[0].mxu0
      %6423 = vmatprep.mubr.f32.mxu0 0.0
      %6424 = vmatmul.mubr.f32.gmra.mrb[0].mxu0 %v3232
      %v6425 = vpop.f32.mrb[0].mxu0
      %v6426 = vadd.f32 0.0, %v6425
      %v6427 = vpop.f32.mrb[0].mxu0
      %6428 = vmatprep.mubr.f32.mxu0 0.0
      %6429 = vmatmul.mubr.f32.gmra.mrb[0].mxu0 %v3234
      %v6430 = vpop.f32.mrb[0].mxu0
      %v6431 = vadd.f32 0.0, %v6430
      %v6432 = vpop.f32.mrb[0].mxu0
      %6433 = vmatprep.mubr.f32.mxu0 0.0
      %6434 = vmatmul.mubr.f32.gmra.mrb[0].mxu0 %v3236
      %v6435 = vpop.f32.mrb[0].mxu0
      %v6436 = vadd.f32 0.0, %v6435
      %v6437 = vpop.f32.mrb[0].mxu0
      %6438 = vmatprep.mubr.f32.mxu0 0.0
      %6439 = vmatmul.mubr.f32.gmra.mrb[0].mxu0 %v3238
      %v6440 = vpop.f32.mrb[0].mxu0
      %v6441 = vadd.f32 0.0, %v6440
      %v6442 = vpop.f32.mrb[0].mxu0
      %6443 = vmatprep.mubr.f32.mxu0 0.0
      %6444 = vmatmul.mubr.f32.gmra.mrb[0].mxu0 %v3240
      %v6445 = vpop.f32.mrb[0].mxu0
      %v6446 = vadd.f32 0.0, %v6445
      %v6447 = vpop.f32.mrb[0].mxu0
      %6448 = vmatprep.mubr.f32.mxu0 0.0
      %6449 = vmatmul.mubr.f32.gmra.mrb[0].mxu0 %v3242
      %v6450 = vpop.f32.mrb[0].mxu0
      %v6451 = vadd.f32 0.0, %v6450
      %v6452 = vpop.f32.mrb[0].mxu0
      %6453 = vmatprep.mubr.f32.mxu0 0.0
      %6454 = vmatmul.mubr.f32.gmra.mrb[0].mxu0 %v3244
      %v6455 = vpop.f32.mrb[0].mxu0
      %v6456 = vadd.f32 0.0, %v6455
      %v6457 = vpop.f32.mrb[0].mxu0
      %6458 = vmatprep.mubr.f32.mxu0 0.0
      %6459 = vmatmul.mubr.f32.gmra.mrb[0].mxu0 %v3246
      %v6460 = vpop.f32.mrb[0].mxu0
      %v6461 = vadd.f32 0.0, %v6460
      %v6462 = vpop.f32.mrb[0].mxu0
      %6463 = vmatprep.mubr.f32.mxu0 0.0
      %6464 = vmatmul.mubr.f32.gmra.mrb[0].mxu0 %v3248
      %v6465 = vpop.f32.mrb[0].mxu0
      %v6466 = vadd.f32 0.0, %v6465
      %v6467 = vpop.f32.mrb[0].mxu0
      %6468 = vmatprep.mubr.f32.mxu0 0.0
      %6469 = vmatmul.mubr.f32.gmra.mrb[0].mxu0 %v3250
      %v6470 = vpop.f32.mrb[0].mxu0
      %v6471 = vadd.f32 0.0, %v6470
      %v6472 = vpop.f32.mrb[0].mxu0
      %6473 = vmatprep.mubr.f32.mxu0 0.0
      %6474 = vmatmul.mubr.f32.gmra.mrb[0].mxu0 %v3252
      %v6475 = vpop.f32.mrb[0].mxu0
      %v6476 = vadd.f32 0.0, %v6475
      %v6477 = vpop.f32.mrb[0].mxu0
      %6478 = vmatprep.mubr.f32.mxu0 0.0
      %6479 = vmatmul.mubr.f32.gmra.mrb[0].mxu0 %v3254
      %v6480 = vpop.f32.mrb[0].mxu0
      %v6481 = vadd.f32 0.0, %v6480
      %v6482 = vpop.f32.mrb[0].mxu0
      %6483 = vmatprep.mubr.f32.mxu0 0.0
      %6484 = vmatmul.mubr.f32.gmra.mrb[0].mxu0 %v3256
      %v6485 = vpop.f32.mrb[0].mxu0
      %v6486 = vadd.f32 0.0, %v6485
      %v6487 = vpop.f32.mrb[0].mxu0
      %6488 = vmatprep.mubr.f32.mxu0 0.0
      %6489 = vmatmul.mubr.f32.gmra.mrb[0].mxu0 %v3258
      %v6490 = vpop.f32.mrb[0].mxu0
      %v6491 = vadd.f32 0.0, %v6490
      %v6492 = vpop.f32.mrb[0].mxu0
      %6493 = vmatprep.mubr.f32.mxu0 0.0
      %6494 = vmatmul.mubr.f32.gmra.mrb[0].mxu0 %v3260
      %v6495 = vpop.f32.mrb[0].mxu0
      %v6496 = vadd.f32 0.0, %v6495
      %v6497 = vpop.f32.mrb[0].mxu0
      %6498 = vmatprep.mubr.f32.mxu0 0.0
      %6499 = vmatmul.mubr.f32.gmra.mrb[0].mxu0 %v3262
      %v6500 = vpop.f32.mrb[0].mxu0
      %v6501 = vadd.f32 0.0, %v6500
      %v6502 = vpop.f32.mrb[0].mxu0
      %6503 = vmatprep.mubr.f32.mxu0 0.0
      %6504 = vmatmul.mubr.f32.gmra.mrb[0].mxu0 %v3264
      %v6505 = vpop.f32.mrb[0].mxu0
      %v6506 = vadd.f32 0.0, %v6505
      %v6507 = vpop.f32.mrb[0].mxu0
      %6508 = vmatprep.mubr.f32.mxu0 0.0
      %6509 = vmatmul.mubr.f32.gmra.mrb[0].mxu0 %v3266
      %v6510 = vpop.f32.mrb[0].mxu0
      %v6511 = vadd.f32 0.0, %v6510
      %v6512 = vpop.f32.mrb[0].mxu0
      %6513 = vmatprep.mubr.f32.mxu0 0.0
      %6514 = vmatmul.mubr.f32.gmra.mrb[0].mxu0 %v3268
      %v6515 = vpop.f32.mrb[0].mxu0
      %v6516 = vadd.f32 0.0, %v6515
      %v6517 = vpop.f32.mrb[0].mxu0
      %6518 = vmatprep.mubr.f32.mxu0 0.0
      %6519 = vmatmul.mubr.f32.gmra.mrb[0].mxu0 %v5823
      %v6520 = vpop.f32.mrb[0].mxu0
      %v6521 = vadd.f32 0.0, %v6520
      %v6522 = vpop.f32.mrb[0].mxu0
      %6523 = vmatprep.mubr.f32.mxu0 0.0
      %6524 = vmatmul.mubr.f32.gmra.mrb[0].mxu0 %v5825
      %v6525 = vpop.f32.mrb[0].mxu0
      %v6526 = vadd.f32 0.0, %v6525
      %v6527 = vpop.f32.mrb[0].mxu0
      %6528 = vmatprep.mubr.f32.mxu0 0.0
      %6529 = vmatmul.mubr.f32.gmra.mrb[0].mxu0 %v5827
      %v6530 = vpop.f32.mrb[0].mxu0
      %v6531 = vadd.f32 0.0, %v6530
      %v6532 = vpop.f32.mrb[0].mxu0
      %6533 = vmatprep.mubr.f32.mxu0 0.0
      %6534 = vmatmul.mubr.f32.gmra.mrb[0].mxu0 %v5829
      %v6535 = vpop.f32.mrb[0].mxu0
      %v6536 = vadd.f32 0.0, %v6535
      %v6537 = vpop.f32.mrb[0].mxu0
      %6538 = vdwg.mxu0
      %v6539 = vadd.f32 %v5684, %v5901
      %v6540 = vadd.f32 %v5685, %v5906
      %v6541 = vadd.f32 %v5686, %v5911
      %v6542 = vadd.f32 %v5687, %v5916
      %v6543 = vadd.f32 %v5688, %v5921
      %v6544 = vadd.f32 %v5689, %v5926
      %v6545 = vadd.f32 %v5690, %v5931
      %v6546 = vadd.f32 %v5691, %v5936
      %v6547 = vadd.f32 %v5692, %v5941
      %v6548 = vadd.f32 %v5693, %v5946
      %v6549 = vadd.f32 %v5694, %v5951
      %v6550 = vadd.f32 %v5695, %v5956
      %v6551 = vadd.f32 %v5696, %v5961
      %v6552 = vadd.f32 %v5697, %v5966
      %v6553 = vadd.f32 %v5698, %v5971
      %v6554 = vadd.f32 %v5699, %v5976
      %v6555 = vadd.f32 %v5700, %v5981
      %v6556 = vadd.f32 %v5701, %v5986
      %v6557 = vadd.f32 %v5702, %v5991
      %v6558 = vadd.f32 %v5703, %v5996
      %v6559 = vadd.f32 %v5704, %v6001
      %v6560 = vadd.f32 %v5705, %v6006
      %v6561 = vadd.f32 %v5706, %v6011
      %v6562 = vadd.f32 %v5707, %v6016
      %v6563 = vadd.f32 %v5708, %v6021
      %v6564 = vadd.f32 %v5709, %v6026
      %v6565 = vadd.f32 %v5710, %v6031
      %v6566 = vadd.f32 %v5711, %v6036
      %v6567 = vadd.f32 %v5712, %v6041
      %v6568 = vadd.f32 %v5713, %v6046
      %v6569 = vadd.f32 %v5714, %v6051
      %v6570 = vadd.f32 %v5715, %v6056
      %v6571 = vadd.f32 %v5716, %v6061
      %v6572 = vadd.f32 %v5717, %v6066
      %v6573 = vadd.f32 %v5718, %v6071
      %v6574 = vadd.f32 %v5719, %v6076
      %v6575 = vadd.f32 %v5720, %v6081
      %v6576 = vadd.f32 %v5721, %v6086
      %v6577 = vadd.f32 %v5722, %v6091
      %v6578 = vadd.f32 %v5723, %v6096
      %v6579 = vadd.f32 %v5724, %v6101
      %v6580 = vadd.f32 %v5725, %v6106
      %v6581 = vadd.f32 %v5726, %v6111
      %v6582 = vadd.f32 %v5727, %v6116
      %v6583 = vadd.f32 %v5728, %v6121
      %v6584 = vadd.f32 %v5729, %v6126
      %v6585 = vadd.f32 %v5730, %v6131
      %v6586 = vadd.f32 %v5731, %v6136
      %v6587 = vadd.f32 %v5732, %v6141
      %v6588 = vadd.f32 %v5733, %v6146
      %v6589 = vadd.f32 %v5734, %v6151
      %v6590 = vadd.f32 %v5735, %v6156
      %v6591 = vadd.f32 %v5736, %v6161
      %v6592 = vadd.f32 %v5737, %v6166
      %v6593 = vadd.f32 %v5738, %v6171
      %v6594 = vadd.f32 %v5739, %v6176
      %v6595 = vadd.f32 %v5740, %v6181
      %v6596 = vadd.f32 %v5741, %v6186
      %v6597 = vadd.f32 %v5742, %v6191
      %v6598 = vadd.f32 %v5743, %v6196
      %v6599 = vadd.f32 %v5744, %v6201
      %v6600 = vadd.f32 %v5745, %v6206
      %v6601 = vadd.f32 %v5746, %v6211
      %v6602 = vadd.f32 %v5747, %v6216
      %v6603 = vadd.f32 %v5748, %v6221
      %v6604 = vadd.f32 %v5749, %v6226
      %v6605 = vadd.f32 %v5750, %v6231
      %v6606 = vadd.f32 %v5751, %v6236
      %v6607 = vadd.f32 %v5752, %v6241
      %v6608 = vadd.f32 %v5753, %v6246
      %v6609 = vadd.f32 %v5754, %v6251
      %v6610 = vadd.f32 %v5755, %v6256
      %v6611 = vadd.f32 %v5756, %v6261
      %v6612 = vadd.f32 %v5757, %v6266
      %v6613 = vadd.f32 %v5758, %v6271
      %v6614 = vadd.f32 %v5759, %v6276
      %v6615 = vadd.f32 %v5760, %v6281
      %v6616 = vadd.f32 %v5761, %v6286
      %v6617 = vadd.f32 %v5762, %v6291
      %v6618 = vadd.f32 %v5763, %v6296
      %v6619 = vadd.f32 %v5764, %v6301
      %v6620 = vadd.f32 %v5765, %v6306
      %v6621 = vadd.f32 %v5766, %v6311
      %v6622 = vadd.f32 %v5767, %v6316
      %v6623 = vadd.f32 %v5768, %v6321
      %v6624 = vadd.f32 %v5769, %v6326
      %v6625 = vadd.f32 %v5770, %v6331
      %v6626 = vadd.f32 %v5771, %v6336
      %v6627 = vadd.f32 %v5772, %v6341
      %v6628 = vadd.f32 %v5773, %v6346
      %v6629 = vadd.f32 %v5774, %v6351
      %v6630 = vadd.f32 %v5775, %v6356
      %v6631 = vadd.f32 %v5776, %v6361
      %v6632 = vadd.f32 %v5777, %v6366
      %v6633 = vadd.f32 %v5778, %v6371
      %v6634 = vadd.f32 %v5779, %v6376
      %v6635 = vadd.f32 %v5780, %v6381
      %v6636 = vadd.f32 %v5781, %v6386
      %v6637 = vadd.f32 %v5782, %v6391
      %v6638 = vadd.f32 %v5783, %v6396
      %v6639 = vadd.f32 %v5784, %v6401
      %v6640 = vadd.f32 %v5785, %v6406
      %v6641 = vadd.f32 %v5786, %v6411
      %v6642 = vadd.f32 %v5787, %v6416
      %v6643 = vadd.f32 %v5788, %v6421
      %v6644 = vadd.f32 %v5789, %v6426
      %v6645 = vadd.f32 %v5790, %v6431
      %v6646 = vadd.f32 %v5791, %v6436
      %v6647 = vadd.f32 %v5792, %v6441
      %v6648 = vadd.f32 %v5793, %v6446
      %v6649 = vadd.f32 %v5794, %v6451
      %v6650 = vadd.f32 %v5795, %v6456
      %v6651 = vadd.f32 %v5796, %v6461
      %v6652 = vadd.f32 %v5797, %v6466
      %v6653 = vadd.f32 %v5798, %v6471
      %v6654 = vadd.f32 %v5799, %v6476
      %v6655 = vadd.f32 %v5800, %v6481
      %v6656 = vadd.f32 %v5801, %v6486
      %v6657 = vadd.f32 %v5802, %v6491
      %v6658 = vadd.f32 %v5803, %v6496
      %v6659 = vadd.f32 %v5804, %v6501
      %v6660 = vadd.f32 %v5805, %v6506
      %v6661 = vadd.f32 %v5806, %v6511
      %v6662 = vadd.f32 %v5807, %v6516
      %v6663 = vadd.f32 %v5808, %v6521
      %v6664 = vadd.f32 %v5809, %v6526
      %v6665 = vadd.f32 %v5810, %v6531
      %v6666 = vadd.f32 %v5811, %v6536
      %s6667 = scalar_lea.vmem %s1, 24
      %v6668 = vld [vmem:[%s6667] sm:$0xf]
      %v6670 = vsel %vm793, %v336, 0
      %v6673 = vsel %vm793, %v337, 0
      %v6676 = vsel %vm793, %v338, 0
      %v6679 = vsel %vm793, %v339, 0
      %v6682 = vsel %vm1050, %v6668, 0
      %6684 = vmatprep.subr.mxu0 0.0
      %6685 = vmatpush1.msra.mxu0 %v6682
      %6686 = vmatprep.subr.mxu0 0.0
      %6687 = vmatpush1.msra.mxu0 0.0
      %6688 = vmatprep.subr.mxu0 0.0
      %6689 = vmatpush1.msra.mxu0 0.0
      %6690 = vmatprep.subr.mxu0 0.0
      %6691 = vmatpush1.msra.mxu0 0.0
      %6692 = vmatprep.subr.mxu0 0.0
      %6693 = vmatpush1.msra.mxu0 0.0
      %6694 = vmatprep.subr.mxu0 0.0
      %6695 = vmatpush1.msra.mxu0 0.0
      %6696 = vmatprep.subr.mxu0 0.0
      %6697 = vmatpush1.msra.mxu0 0.0
      %6698 = vmatprep.subr.mxu0 0.0
      %6699 = vmatpush1.msra.mxu0 0.0
      %6700 = vmatprep.subr.mxu0 0.0
      %6701 = vmatpush1.msra.mxu0 0.0
      %6702 = vmatprep.subr.mxu0 0.0
      %6703 = vmatpush1.msra.mxu0 0.0
      %6704 = vmatprep.subr.mxu0 0.0
      %6705 = vmatpush1.msra.mxu0 0.0
      %6706 = vmatprep.subr.mxu0 0.0
      %6707 = vmatpush1.msra.mxu0 0.0
      %6708 = vmatprep.subr.mxu0 0.0
      %6709 = vmatpush1.msra.mxu0 0.0
      %6710 = vmatprep.subr.mxu0 0.0
      %6711 = vmatpush1.msra.mxu0 0.0
      %6712 = vmatprep.subr.mxu0 0.0
      %6713 = vmatpush1.msra.mxu0 0.0
      %6714 = vmatprep.subr.mxu0 0.0
      %6715 = vmatpush1.msra.mxu0 0.0
      %6716 = vmatprep.subr.mxu0 0.0
      %6717 = vmatpush1.msra.mxu0 0.0
      %6718 = vmatprep.subr.mxu0 0.0
      %6719 = vmatpush1.msra.mxu0 0.0
      %6720 = vmatprep.subr.mxu0 0.0
      %6721 = vmatpush1.msra.mxu0 0.0
      %6722 = vmatprep.subr.mxu0 0.0
      %6723 = vmatpush1.msra.mxu0 0.0
      %6724 = vmatprep.subr.mxu0 0.0
      %6725 = vmatpush1.msra.mxu0 0.0
      %6726 = vmatprep.subr.mxu0 0.0
      %6727 = vmatpush1.msra.mxu0 0.0
      %6728 = vmatprep.subr.mxu0 0.0
      %6729 = vmatpush1.msra.mxu0 0.0
      %6730 = vmatprep.subr.mxu0 0.0
      %6731 = vmatpush1.msra.mxu0 0.0
      %6732 = vmatprep.subr.mxu0 0.0
      %6733 = vmatpush1.msra.mxu0 0.0
      %6734 = vmatprep.subr.mxu0 0.0
      %6735 = vmatpush1.msra.mxu0 0.0
      %6736 = vmatprep.subr.mxu0 0.0
      %6737 = vmatpush1.msra.mxu0 0.0
      %6738 = vmatprep.subr.mxu0 0.0
      %6739 = vmatpush1.msra.mxu0 0.0
      %6740 = vmatprep.subr.mxu0 0.0
      %6741 = vmatpush1.msra.mxu0 0.0
      %6742 = vmatprep.subr.mxu0 0.0
      %6743 = vmatpush1.msra.mxu0 0.0
      %6744 = vmatprep.subr.mxu0 0.0
      %6745 = vmatpush1.msra.mxu0 0.0
      %6746 = vmatprep.subr.mxu0 0.0
      %6747 = vmatpush1.msra.mxu0 0.0
      %6748 = vmatprep.mubr.f32.mxu0 0.0
      %6749 = vmatmul.mubr.f32.gmra.mrb[0].mxu0 %v1775
      %v6750 = vpop.f32.mrb[0].mxu0
      %v6751 = vadd.f32 0.0, %v6750
      %v6752 = vpop.f32.mrb[0].mxu0
      %6753 = vmatprep.mubr.f32.mxu0 0.0
      %6754 = vmatmul.mubr.f32.gmra.mrb[0].mxu0 %v1777
      %v6755 = vpop.f32.mrb[0].mxu0
      %v6756 = vadd.f32 0.0, %v6755
      %v6757 = vpop.f32.mrb[0].mxu0
      %6758 = vmatprep.mubr.f32.mxu0 0.0
      %6759 = vmatmul.mubr.f32.gmra.mrb[0].mxu0 %v1779
      %v6760 = vpop.f32.mrb[0].mxu0
      %v6761 = vadd.f32 0.0, %v6760
      %v6762 = vpop.f32.mrb[0].mxu0
      %6763 = vmatprep.mubr.f32.mxu0 0.0
      %6764 = vmatmul.mubr.f32.gmra.mrb[0].mxu0 %v1781
      %v6765 = vpop.f32.mrb[0].mxu0
      %v6766 = vadd.f32 0.0, %v6765
      %v6767 = vpop.f32.mrb[0].mxu0
      %6768 = vmatprep.mubr.f32.mxu0 0.0
      %6769 = vmatmul.mubr.f32.gmra.mrb[0].mxu0 %v1783
      %v6770 = vpop.f32.mrb[0].mxu0
      %v6771 = vadd.f32 0.0, %v6770
      %v6772 = vpop.f32.mrb[0].mxu0
      %6773 = vmatprep.mubr.f32.mxu0 0.0
      %6774 = vmatmul.mubr.f32.gmra.mrb[0].mxu0 %v1785
      %v6775 = vpop.f32.mrb[0].mxu0
      %v6776 = vadd.f32 0.0, %v6775
      %v6777 = vpop.f32.mrb[0].mxu0
      %6778 = vmatprep.mubr.f32.mxu0 0.0
      %6779 = vmatmul.mubr.f32.gmra.mrb[0].mxu0 %v1787
      %v6780 = vpop.f32.mrb[0].mxu0
      %v6781 = vadd.f32 0.0, %v6780
      %v6782 = vpop.f32.mrb[0].mxu0
      %6783 = vmatprep.mubr.f32.mxu0 0.0
      %6784 = vmatmul.mubr.f32.gmra.mrb[0].mxu0 %v1789
      %v6785 = vpop.f32.mrb[0].mxu0
      %v6786 = vadd.f32 0.0, %v6785
      %v6787 = vpop.f32.mrb[0].mxu0
      %6788 = vmatprep.mubr.f32.mxu0 0.0
      %6789 = vmatmul.mubr.f32.gmra.mrb[0].mxu0 %v1791
      %v6790 = vpop.f32.mrb[0].mxu0
      %v6791 = vadd.f32 0.0, %v6790
      %v6792 = vpop.f32.mrb[0].mxu0
      %6793 = vmatprep.mubr.f32.mxu0 0.0
      %6794 = vmatmul.mubr.f32.gmra.mrb[0].mxu0 %v1793
      %v6795 = vpop.f32.mrb[0].mxu0
      %v6796 = vadd.f32 0.0, %v6795
      %v6797 = vpop.f32.mrb[0].mxu0
      %6798 = vmatprep.mubr.f32.mxu0 0.0
      %6799 = vmatmul.mubr.f32.gmra.mrb[0].mxu0 %v1795
      %v6800 = vpop.f32.mrb[0].mxu0
      %v6801 = vadd.f32 0.0, %v6800
      %v6802 = vpop.f32.mrb[0].mxu0
      %6803 = vmatprep.mubr.f32.mxu0 0.0
      %6804 = vmatmul.mubr.f32.gmra.mrb[0].mxu0 %v1797
      %v6805 = vpop.f32.mrb[0].mxu0
      %v6806 = vadd.f32 0.0, %v6805
      %v6807 = vpop.f32.mrb[0].mxu0
      %6808 = vmatprep.mubr.f32.mxu0 0.0
      %6809 = vmatmul.mubr.f32.gmra.mrb[0].mxu0 %v1799
      %v6810 = vpop.f32.mrb[0].mxu0
      %v6811 = vadd.f32 0.0, %v6810
      %v6812 = vpop.f32.mrb[0].mxu0
      %6813 = vmatprep.mubr.f32.mxu0 0.0
      %6814 = vmatmul.mubr.f32.gmra.mrb[0].mxu0 %v1801
      %v6815 = vpop.f32.mrb[0].mxu0
      %v6816 = vadd.f32 0.0, %v6815
      %v6817 = vpop.f32.mrb[0].mxu0
      %6818 = vmatprep.mubr.f32.mxu0 0.0
      %6819 = vmatmul.mubr.f32.gmra.mrb[0].mxu0 %v1803
      %v6820 = vpop.f32.mrb[0].mxu0
      %v6821 = vadd.f32 0.0, %v6820
      %v6822 = vpop.f32.mrb[0].mxu0
      %6823 = vmatprep.mubr.f32.mxu0 0.0
      %6824 = vmatmul.mubr.f32.gmra.mrb[0].mxu0 %v1805
      %v6825 = vpop.f32.mrb[0].mxu0
      %v6826 = vadd.f32 0.0, %v6825
      %v6827 = vpop.f32.mrb[0].mxu0
      %6828 = vmatprep.mubr.f32.mxu0 0.0
      %6829 = vmatmul.mubr.f32.gmra.mrb[0].mxu0 %v1807
      %v6830 = vpop.f32.mrb[0].mxu0
      %v6831 = vadd.f32 0.0, %v6830
      %v6832 = vpop.f32.mrb[0].mxu0
      %6833 = vmatprep.mubr.f32.mxu0 0.0
      %6834 = vmatmul.mubr.f32.gmra.mrb[0].mxu0 %v1809
      %v6835 = vpop.f32.mrb[0].mxu0
      %v6836 = vadd.f32 0.0, %v6835
      %v6837 = vpop.f32.mrb[0].mxu0
      %6838 = vmatprep.mubr.f32.mxu0 0.0
      %6839 = vmatmul.mubr.f32.gmra.mrb[0].mxu0 %v1811
      %v6840 = vpop.f32.mrb[0].mxu0
      %v6841 = vadd.f32 0.0, %v6840
      %v6842 = vpop.f32.mrb[0].mxu0
      %6843 = vmatprep.mubr.f32.mxu0 0.0
      %6844 = vmatmul.mubr.f32.gmra.mrb[0].mxu0 %v1813
      %v6845 = vpop.f32.mrb[0].mxu0
      %v6846 = vadd.f32 0.0, %v6845
      %v6847 = vpop.f32.mrb[0].mxu0
      %6848 = vmatprep.mubr.f32.mxu0 0.0
      %6849 = vmatmul.mubr.f32.gmra.mrb[0].mxu0 %v1815
      %v6850 = vpop.f32.mrb[0].mxu0
      %v6851 = vadd.f32 0.0, %v6850
      %v6852 = vpop.f32.mrb[0].mxu0
      %6853 = vmatprep.mubr.f32.mxu0 0.0
      %6854 = vmatmul.mubr.f32.gmra.mrb[0].mxu0 %v1817
      %v6855 = vpop.f32.mrb[0].mxu0
      %v6856 = vadd.f32 0.0, %v6855
      %v6857 = vpop.f32.mrb[0].mxu0
      %6858 = vmatprep.mubr.f32.mxu0 0.0
      %6859 = vmatmul.mubr.f32.gmra.mrb[0].mxu0 %v1819
      %v6860 = vpop.f32.mrb[0].mxu0
      %v6861 = vadd.f32 0.0, %v6860
      %v6862 = vpop.f32.mrb[0].mxu0
      %6863 = vmatprep.mubr.f32.mxu0 0.0
      %6864 = vmatmul.mubr.f32.gmra.mrb[0].mxu0 %v1821
      %v6865 = vpop.f32.mrb[0].mxu0
      %v6866 = vadd.f32 0.0, %v6865
      %v6867 = vpop.f32.mrb[0].mxu0
      %6868 = vmatprep.mubr.f32.mxu0 0.0
      %6869 = vmatmul.mubr.f32.gmra.mrb[0].mxu0 %v1823
      %v6870 = vpop.f32.mrb[0].mxu0
      %v6871 = vadd.f32 0.0, %v6870
      %v6872 = vpop.f32.mrb[0].mxu0
      %6873 = vmatprep.mubr.f32.mxu0 0.0
      %6874 = vmatmul.mubr.f32.gmra.mrb[0].mxu0 %v1825
      %v6875 = vpop.f32.mrb[0].mxu0
      %v6876 = vadd.f32 0.0, %v6875
      %v6877 = vpop.f32.mrb[0].mxu0
      %6878 = vmatprep.mubr.f32.mxu0 0.0
      %6879 = vmatmul.mubr.f32.gmra.mrb[0].mxu0 %v1827
      %v6880 = vpop.f32.mrb[0].mxu0
      %v6881 = vadd.f32 0.0, %v6880
      %v6882 = vpop.f32.mrb[0].mxu0
      %6883 = vmatprep.mubr.f32.mxu0 0.0
      %6884 = vmatmul.mubr.f32.gmra.mrb[0].mxu0 %v1829
      %v6885 = vpop.f32.mrb[0].mxu0
      %v6886 = vadd.f32 0.0, %v6885
      %v6887 = vpop.f32.mrb[0].mxu0
      %6888 = vmatprep.mubr.f32.mxu0 0.0
      %6889 = vmatmul.mubr.f32.gmra.mrb[0].mxu0 %v1831
      %v6890 = vpop.f32.mrb[0].mxu0
      %v6891 = vadd.f32 0.0, %v6890
      %v6892 = vpop.f32.mrb[0].mxu0
      %6893 = vmatprep.mubr.f32.mxu0 0.0
      %6894 = vmatmul.mubr.f32.gmra.mrb[0].mxu0 %v1833
      %v6895 = vpop.f32.mrb[0].mxu0
      %v6896 = vadd.f32 0.0, %v6895
      %v6897 = vpop.f32.mrb[0].mxu0
      %6898 = vmatprep.mubr.f32.mxu0 0.0
      %6899 = vmatmul.mubr.f32.gmra.mrb[0].mxu0 %v1835
      %v6900 = vpop.f32.mrb[0].mxu0
      %v6901 = vadd.f32 0.0, %v6900
      %v6902 = vpop.f32.mrb[0].mxu0
      %6903 = vmatprep.mubr.f32.mxu0 0.0
      %6904 = vmatmul.mubr.f32.gmra.mrb[0].mxu0 %v1837
      %v6905 = vpop.f32.mrb[0].mxu0
      %v6906 = vadd.f32 0.0, %v6905
      %v6907 = vpop.f32.mrb[0].mxu0
      %6908 = vmatprep.mubr.f32.mxu0 0.0
      %6909 = vmatmul.mubr.f32.gmra.mrb[0].mxu0 %v1839
      %v6910 = vpop.f32.mrb[0].mxu0
      %v6911 = vadd.f32 0.0, %v6910
      %v6912 = vpop.f32.mrb[0].mxu0
      %6913 = vmatprep.mubr.f32.mxu0 0.0
      %6914 = vmatmul.mubr.f32.gmra.mrb[0].mxu0 %v1841
      %v6915 = vpop.f32.mrb[0].mxu0
      %v6916 = vadd.f32 0.0, %v6915
      %v6917 = vpop.f32.mrb[0].mxu0
      %6918 = vmatprep.mubr.f32.mxu0 0.0
      %6919 = vmatmul.mubr.f32.gmra.mrb[0].mxu0 %v1843
      %v6920 = vpop.f32.mrb[0].mxu0
      %v6921 = vadd.f32 0.0, %v6920
      %v6922 = vpop.f32.mrb[0].mxu0
      %6923 = vmatprep.mubr.f32.mxu0 0.0
      %6924 = vmatmul.mubr.f32.gmra.mrb[0].mxu0 %v1845
      %v6925 = vpop.f32.mrb[0].mxu0
      %v6926 = vadd.f32 0.0, %v6925
      %v6927 = vpop.f32.mrb[0].mxu0
      %6928 = vmatprep.mubr.f32.mxu0 0.0
      %6929 = vmatmul.mubr.f32.gmra.mrb[0].mxu0 %v1847
      %v6930 = vpop.f32.mrb[0].mxu0
      %v6931 = vadd.f32 0.0, %v6930
      %v6932 = vpop.f32.mrb[0].mxu0
      %6933 = vmatprep.mubr.f32.mxu0 0.0
      %6934 = vmatmul.mubr.f32.gmra.mrb[0].mxu0 %v1849
      %v6935 = vpop.f32.mrb[0].mxu0
      %v6936 = vadd.f32 0.0, %v6935
      %v6937 = vpop.f32.mrb[0].mxu0
      %6938 = vmatprep.mubr.f32.mxu0 0.0
      %6939 = vmatmul.mubr.f32.gmra.mrb[0].mxu0 %v1851
      %v6940 = vpop.f32.mrb[0].mxu0
      %v6941 = vadd.f32 0.0, %v6940
      %v6942 = vpop.f32.mrb[0].mxu0
      %6943 = vmatprep.mubr.f32.mxu0 0.0
      %6944 = vmatmul.mubr.f32.gmra.mrb[0].mxu0 %v1853
      %v6945 = vpop.f32.mrb[0].mxu0
      %v6946 = vadd.f32 0.0, %v6945
      %v6947 = vpop.f32.mrb[0].mxu0
      %6948 = vmatprep.mubr.f32.mxu0 0.0
      %6949 = vmatmul.mubr.f32.gmra.mrb[0].mxu0 %v1855
      %v6950 = vpop.f32.mrb[0].mxu0
      %v6951 = vadd.f32 0.0, %v6950
      %v6952 = vpop.f32.mrb[0].mxu0
      %6953 = vmatprep.mubr.f32.mxu0 0.0
      %6954 = vmatmul.mubr.f32.gmra.mrb[0].mxu0 %v1857
      %v6955 = vpop.f32.mrb[0].mxu0
      %v6956 = vadd.f32 0.0, %v6955
      %v6957 = vpop.f32.mrb[0].mxu0
      %6958 = vmatprep.mubr.f32.mxu0 0.0
      %6959 = vmatmul.mubr.f32.gmra.mrb[0].mxu0 %v1859
      %v6960 = vpop.f32.mrb[0].mxu0
      %v6961 = vadd.f32 0.0, %v6960
      %v6962 = vpop.f32.mrb[0].mxu0
      %6963 = vmatprep.mubr.f32.mxu0 0.0
      %6964 = vmatmul.mubr.f32.gmra.mrb[0].mxu0 %v1861
      %v6965 = vpop.f32.mrb[0].mxu0
      %v6966 = vadd.f32 0.0, %v6965
      %v6967 = vpop.f32.mrb[0].mxu0
      %6968 = vmatprep.mubr.f32.mxu0 0.0
      %6969 = vmatmul.mubr.f32.gmra.mrb[0].mxu0 %v1863
      %v6970 = vpop.f32.mrb[0].mxu0
      %v6971 = vadd.f32 0.0, %v6970
      %v6972 = vpop.f32.mrb[0].mxu0
      %6973 = vmatprep.mubr.f32.mxu0 0.0
      %6974 = vmatmul.mubr.f32.gmra.mrb[0].mxu0 %v1865
      %v6975 = vpop.f32.mrb[0].mxu0
      %v6976 = vadd.f32 0.0, %v6975
      %v6977 = vpop.f32.mrb[0].mxu0
      %6978 = vmatprep.mubr.f32.mxu0 0.0
      %6979 = vmatmul.mubr.f32.gmra.mrb[0].mxu0 %v1867
      %v6980 = vpop.f32.mrb[0].mxu0
      %v6981 = vadd.f32 0.0, %v6980
      %v6982 = vpop.f32.mrb[0].mxu0
      %6983 = vmatprep.mubr.f32.mxu0 0.0
      %6984 = vmatmul.mubr.f32.gmra.mrb[0].mxu0 %v1869
      %v6985 = vpop.f32.mrb[0].mxu0
      %v6986 = vadd.f32 0.0, %v6985
      %v6987 = vpop.f32.mrb[0].mxu0
      %6988 = vmatprep.mubr.f32.mxu0 0.0
      %6989 = vmatmul.mubr.f32.gmra.mrb[0].mxu0 %v1871
      %v6990 = vpop.f32.mrb[0].mxu0
      %v6991 = vadd.f32 0.0, %v6990
      %v6992 = vpop.f32.mrb[0].mxu0
      %6993 = vmatprep.mubr.f32.mxu0 0.0
      %6994 = vmatmul.mubr.f32.gmra.mrb[0].mxu0 %v1873
      %v6995 = vpop.f32.mrb[0].mxu0
      %v6996 = vadd.f32 0.0, %v6995
      %v6997 = vpop.f32.mrb[0].mxu0
      %6998 = vmatprep.mubr.f32.mxu0 0.0
      %6999 = vmatmul.mubr.f32.gmra.mrb[0].mxu0 %v1875
      %v7000 = vpop.f32.mrb[0].mxu0
      %v7001 = vadd.f32 0.0, %v7000
      %v7002 = vpop.f32.mrb[0].mxu0
      %7003 = vmatprep.mubr.f32.mxu0 0.0
      %7004 = vmatmul.mubr.f32.gmra.mrb[0].mxu0 %v1877
      %v7005 = vpop.f32.mrb[0].mxu0
      %v7006 = vadd.f32 0.0, %v7005
      %v7007 = vpop.f32.mrb[0].mxu0
      %7008 = vmatprep.mubr.f32.mxu0 0.0
      %7009 = vmatmul.mubr.f32.gmra.mrb[0].mxu0 %v1879
      %v7010 = vpop.f32.mrb[0].mxu0
      %v7011 = vadd.f32 0.0, %v7010
      %v7012 = vpop.f32.mrb[0].mxu0
      %7013 = vmatprep.mubr.f32.mxu0 0.0
      %7014 = vmatmul.mubr.f32.gmra.mrb[0].mxu0 %v1881
      %v7015 = vpop.f32.mrb[0].mxu0
      %v7016 = vadd.f32 0.0, %v7015
      %v7017 = vpop.f32.mrb[0].mxu0
      %7018 = vmatprep.mubr.f32.mxu0 0.0
      %7019 = vmatmul.mubr.f32.gmra.mrb[0].mxu0 %v1883
      %v7020 = vpop.f32.mrb[0].mxu0
      %v7021 = vadd.f32 0.0, %v7020
      %v7022 = vpop.f32.mrb[0].mxu0
      %7023 = vmatprep.mubr.f32.mxu0 0.0
      %7024 = vmatmul.mubr.f32.gmra.mrb[0].mxu0 %v1885
      %v7025 = vpop.f32.mrb[0].mxu0
      %v7026 = vadd.f32 0.0, %v7025
      %v7027 = vpop.f32.mrb[0].mxu0
      %7028 = vmatprep.mubr.f32.mxu0 0.0
      %7029 = vmatmul.mubr.f32.gmra.mrb[0].mxu0 %v1887
      %v7030 = vpop.f32.mrb[0].mxu0
      %v7031 = vadd.f32 0.0, %v7030
      %v7032 = vpop.f32.mrb[0].mxu0
      %7033 = vmatprep.mubr.f32.mxu0 0.0
      %7034 = vmatmul.mubr.f32.gmra.mrb[0].mxu0 %v1889
      %v7035 = vpop.f32.mrb[0].mxu0
      %v7036 = vadd.f32 0.0, %v7035
      %v7037 = vpop.f32.mrb[0].mxu0
      %7038 = vmatprep.mubr.f32.mxu0 0.0
      %7039 = vmatmul.mubr.f32.gmra.mrb[0].mxu0 %v1891
      %v7040 = vpop.f32.mrb[0].mxu0
      %v7041 = vadd.f32 0.0, %v7040
      %v7042 = vpop.f32.mrb[0].mxu0
      %7043 = vmatprep.mubr.f32.mxu0 0.0
      %7044 = vmatmul.mubr.f32.gmra.mrb[0].mxu0 %v1893
      %v7045 = vpop.f32.mrb[0].mxu0
      %v7046 = vadd.f32 0.0, %v7045
      %v7047 = vpop.f32.mrb[0].mxu0
      %7048 = vmatprep.mubr.f32.mxu0 0.0
      %7049 = vmatmul.mubr.f32.gmra.mrb[0].mxu0 %v1895
      %v7050 = vpop.f32.mrb[0].mxu0
      %v7051 = vadd.f32 0.0, %v7050
      %v7052 = vpop.f32.mrb[0].mxu0
      %7053 = vmatprep.mubr.f32.mxu0 0.0
      %7054 = vmatmul.mubr.f32.gmra.mrb[0].mxu0 %v1897
      %v7055 = vpop.f32.mrb[0].mxu0
      %v7056 = vadd.f32 0.0, %v7055
      %v7057 = vpop.f32.mrb[0].mxu0
      %7058 = vmatprep.mubr.f32.mxu0 0.0
      %7059 = vmatmul.mubr.f32.gmra.mrb[0].mxu0 %v1899
      %v7060 = vpop.f32.mrb[0].mxu0
      %v7061 = vadd.f32 0.0, %v7060
      %v7062 = vpop.f32.mrb[0].mxu0
      %7063 = vmatprep.mubr.f32.mxu0 0.0
      %7064 = vmatmul.mubr.f32.gmra.mrb[0].mxu0 %v1901
      %v7065 = vpop.f32.mrb[0].mxu0
      %v7066 = vadd.f32 0.0, %v7065
      %v7067 = vpop.f32.mrb[0].mxu0
      %7068 = vmatprep.mubr.f32.mxu0 0.0
      %7069 = vmatmul.mubr.f32.gmra.mrb[0].mxu0 %v1903
      %v7070 = vpop.f32.mrb[0].mxu0
      %v7071 = vadd.f32 0.0, %v7070
      %v7072 = vpop.f32.mrb[0].mxu0
      %7073 = vmatprep.mubr.f32.mxu0 0.0
      %7074 = vmatmul.mubr.f32.gmra.mrb[0].mxu0 %v1905
      %v7075 = vpop.f32.mrb[0].mxu0
      %v7076 = vadd.f32 0.0, %v7075
      %v7077 = vpop.f32.mrb[0].mxu0
      %7078 = vmatprep.mubr.f32.mxu0 0.0
      %7079 = vmatmul.mubr.f32.gmra.mrb[0].mxu0 %v1907
      %v7080 = vpop.f32.mrb[0].mxu0
      %v7081 = vadd.f32 0.0, %v7080
      %v7082 = vpop.f32.mrb[0].mxu0
      %7083 = vmatprep.mubr.f32.mxu0 0.0
      %7084 = vmatmul.mubr.f32.gmra.mrb[0].mxu0 %v1909
      %v7085 = vpop.f32.mrb[0].mxu0
      %v7086 = vadd.f32 0.0, %v7085
      %v7087 = vpop.f32.mrb[0].mxu0
      %7088 = vmatprep.mubr.f32.mxu0 0.0
      %7089 = vmatmul.mubr.f32.gmra.mrb[0].mxu0 %v1911
      %v7090 = vpop.f32.mrb[0].mxu0
      %v7091 = vadd.f32 0.0, %v7090
      %v7092 = vpop.f32.mrb[0].mxu0
      %7093 = vmatprep.mubr.f32.mxu0 0.0
      %7094 = vmatmul.mubr.f32.gmra.mrb[0].mxu0 %v1913
      %v7095 = vpop.f32.mrb[0].mxu0
      %v7096 = vadd.f32 0.0, %v7095
      %v7097 = vpop.f32.mrb[0].mxu0
      %7098 = vmatprep.mubr.f32.mxu0 0.0
      %7099 = vmatmul.mubr.f32.gmra.mrb[0].mxu0 %v1915
      %v7100 = vpop.f32.mrb[0].mxu0
      %v7101 = vadd.f32 0.0, %v7100
      %v7102 = vpop.f32.mrb[0].mxu0
      %7103 = vmatprep.mubr.f32.mxu0 0.0
      %7104 = vmatmul.mubr.f32.gmra.mrb[0].mxu0 %v1917
      %v7105 = vpop.f32.mrb[0].mxu0
      %v7106 = vadd.f32 0.0, %v7105
      %v7107 = vpop.f32.mrb[0].mxu0
      %7108 = vmatprep.mubr.f32.mxu0 0.0
      %7109 = vmatmul.mubr.f32.gmra.mrb[0].mxu0 %v1919
      %v7110 = vpop.f32.mrb[0].mxu0
      %v7111 = vadd.f32 0.0, %v7110
      %v7112 = vpop.f32.mrb[0].mxu0
      %7113 = vmatprep.mubr.f32.mxu0 0.0
      %7114 = vmatmul.mubr.f32.gmra.mrb[0].mxu0 %v1921
      %v7115 = vpop.f32.mrb[0].mxu0
      %v7116 = vadd.f32 0.0, %v7115
      %v7117 = vpop.f32.mrb[0].mxu0
      %7118 = vmatprep.mubr.f32.mxu0 0.0
      %7119 = vmatmul.mubr.f32.gmra.mrb[0].mxu0 %v1923
      %v7120 = vpop.f32.mrb[0].mxu0
      %v7121 = vadd.f32 0.0, %v7120
      %v7122 = vpop.f32.mrb[0].mxu0
      %7123 = vmatprep.mubr.f32.mxu0 0.0
      %7124 = vmatmul.mubr.f32.gmra.mrb[0].mxu0 %v1925
      %v7125 = vpop.f32.mrb[0].mxu0
      %v7126 = vadd.f32 0.0, %v7125
      %v7127 = vpop.f32.mrb[0].mxu0
      %7128 = vmatprep.mubr.f32.mxu0 0.0
      %7129 = vmatmul.mubr.f32.gmra.mrb[0].mxu0 %v1927
      %v7130 = vpop.f32.mrb[0].mxu0
      %v7131 = vadd.f32 0.0, %v7130
      %v7132 = vpop.f32.mrb[0].mxu0
      %7133 = vmatprep.mubr.f32.mxu0 0.0
      %7134 = vmatmul.mubr.f32.gmra.mrb[0].mxu0 %v1929
      %v7135 = vpop.f32.mrb[0].mxu0
      %v7136 = vadd.f32 0.0, %v7135
      %v7137 = vpop.f32.mrb[0].mxu0
      %7138 = vmatprep.mubr.f32.mxu0 0.0
      %7139 = vmatmul.mubr.f32.gmra.mrb[0].mxu0 %v1931
      %v7140 = vpop.f32.mrb[0].mxu0
      %v7141 = vadd.f32 0.0, %v7140
      %v7142 = vpop.f32.mrb[0].mxu0
      %7143 = vmatprep.mubr.f32.mxu0 0.0
      %7144 = vmatmul.mubr.f32.gmra.mrb[0].mxu0 %v1933
      %v7145 = vpop.f32.mrb[0].mxu0
      %v7146 = vadd.f32 0.0, %v7145
      %v7147 = vpop.f32.mrb[0].mxu0
      %7148 = vmatprep.mubr.f32.mxu0 0.0
      %7149 = vmatmul.mubr.f32.gmra.mrb[0].mxu0 %v1935
      %v7150 = vpop.f32.mrb[0].mxu0
      %v7151 = vadd.f32 0.0, %v7150
      %v7152 = vpop.f32.mrb[0].mxu0
      %7153 = vmatprep.mubr.f32.mxu0 0.0
      %7154 = vmatmul.mubr.f32.gmra.mrb[0].mxu0 %v1937
      %v7155 = vpop.f32.mrb[0].mxu0
      %v7156 = vadd.f32 0.0, %v7155
      %v7157 = vpop.f32.mrb[0].mxu0
      %7158 = vmatprep.mubr.f32.mxu0 0.0
      %7159 = vmatmul.mubr.f32.gmra.mrb[0].mxu0 %v1939
      %v7160 = vpop.f32.mrb[0].mxu0
      %v7161 = vadd.f32 0.0, %v7160
      %v7162 = vpop.f32.mrb[0].mxu0
      %7163 = vmatprep.mubr.f32.mxu0 0.0
      %7164 = vmatmul.mubr.f32.gmra.mrb[0].mxu0 %v1941
      %v7165 = vpop.f32.mrb[0].mxu0
      %v7166 = vadd.f32 0.0, %v7165
      %v7167 = vpop.f32.mrb[0].mxu0
      %7168 = vmatprep.mubr.f32.mxu0 0.0
      %7169 = vmatmul.mubr.f32.gmra.mrb[0].mxu0 %v1943
      %v7170 = vpop.f32.mrb[0].mxu0
      %v7171 = vadd.f32 0.0, %v7170
      %v7172 = vpop.f32.mrb[0].mxu0
      %7173 = vmatprep.mubr.f32.mxu0 0.0
      %7174 = vmatmul.mubr.f32.gmra.mrb[0].mxu0 %v1945
      %v7175 = vpop.f32.mrb[0].mxu0
      %v7176 = vadd.f32 0.0, %v7175
      %v7177 = vpop.f32.mrb[0].mxu0
      %7178 = vmatprep.mubr.f32.mxu0 0.0
      %7179 = vmatmul.mubr.f32.gmra.mrb[0].mxu0 %v1947
      %v7180 = vpop.f32.mrb[0].mxu0
      %v7181 = vadd.f32 0.0, %v7180
      %v7182 = vpop.f32.mrb[0].mxu0
      %7183 = vmatprep.mubr.f32.mxu0 0.0
      %7184 = vmatmul.mubr.f32.gmra.mrb[0].mxu0 %v1949
      %v7185 = vpop.f32.mrb[0].mxu0
      %v7186 = vadd.f32 0.0, %v7185
      %v7187 = vpop.f32.mrb[0].mxu0
      %7188 = vmatprep.mubr.f32.mxu0 0.0
      %7189 = vmatmul.mubr.f32.gmra.mrb[0].mxu0 %v1951
      %v7190 = vpop.f32.mrb[0].mxu0
      %v7191 = vadd.f32 0.0, %v7190
      %v7192 = vpop.f32.mrb[0].mxu0
      %7193 = vmatprep.mubr.f32.mxu0 0.0
      %7194 = vmatmul.mubr.f32.gmra.mrb[0].mxu0 %v1953
      %v7195 = vpop.f32.mrb[0].mxu0
      %v7196 = vadd.f32 0.0, %v7195
      %v7197 = vpop.f32.mrb[0].mxu0
      %7198 = vmatprep.mubr.f32.mxu0 0.0
      %7199 = vmatmul.mubr.f32.gmra.mrb[0].mxu0 %v1955
      %v7200 = vpop.f32.mrb[0].mxu0
      %v7201 = vadd.f32 0.0, %v7200
      %v7202 = vpop.f32.mrb[0].mxu0
      %7203 = vmatprep.mubr.f32.mxu0 0.0
      %7204 = vmatmul.mubr.f32.gmra.mrb[0].mxu0 %v1957
      %v7205 = vpop.f32.mrb[0].mxu0
      %v7206 = vadd.f32 0.0, %v7205
      %v7207 = vpop.f32.mrb[0].mxu0
      %7208 = vmatprep.mubr.f32.mxu0 0.0
      %7209 = vmatmul.mubr.f32.gmra.mrb[0].mxu0 %v1959
      %v7210 = vpop.f32.mrb[0].mxu0
      %v7211 = vadd.f32 0.0, %v7210
      %v7212 = vpop.f32.mrb[0].mxu0
      %7213 = vmatprep.mubr.f32.mxu0 0.0
      %7214 = vmatmul.mubr.f32.gmra.mrb[0].mxu0 %v1961
      %v7215 = vpop.f32.mrb[0].mxu0
      %v7216 = vadd.f32 0.0, %v7215
      %v7217 = vpop.f32.mrb[0].mxu0
      %7218 = vmatprep.mubr.f32.mxu0 0.0
      %7219 = vmatmul.mubr.f32.gmra.mrb[0].mxu0 %v1963
      %v7220 = vpop.f32.mrb[0].mxu0
      %v7221 = vadd.f32 0.0, %v7220
      %v7222 = vpop.f32.mrb[0].mxu0
      %7223 = vmatprep.mubr.f32.mxu0 0.0
      %7224 = vmatmul.mubr.f32.gmra.mrb[0].mxu0 %v1965
      %v7225 = vpop.f32.mrb[0].mxu0
      %v7226 = vadd.f32 0.0, %v7225
      %v7227 = vpop.f32.mrb[0].mxu0
      %7228 = vmatprep.mubr.f32.mxu0 0.0
      %7229 = vmatmul.mubr.f32.gmra.mrb[0].mxu0 %v1967
      %v7230 = vpop.f32.mrb[0].mxu0
      %v7231 = vadd.f32 0.0, %v7230
      %v7232 = vpop.f32.mrb[0].mxu0
      %7233 = vmatprep.mubr.f32.mxu0 0.0
      %7234 = vmatmul.mubr.f32.gmra.mrb[0].mxu0 %v1969
      %v7235 = vpop.f32.mrb[0].mxu0
      %v7236 = vadd.f32 0.0, %v7235
      %v7237 = vpop.f32.mrb[0].mxu0
      %7238 = vmatprep.mubr.f32.mxu0 0.0
      %7239 = vmatmul.mubr.f32.gmra.mrb[0].mxu0 %v1971
      %v7240 = vpop.f32.mrb[0].mxu0
      %v7241 = vadd.f32 0.0, %v7240
      %v7242 = vpop.f32.mrb[0].mxu0
      %7243 = vmatprep.mubr.f32.mxu0 0.0
      %7244 = vmatmul.mubr.f32.gmra.mrb[0].mxu0 %v1973
      %v7245 = vpop.f32.mrb[0].mxu0
      %v7246 = vadd.f32 0.0, %v7245
      %v7247 = vpop.f32.mrb[0].mxu0
      %7248 = vmatprep.mubr.f32.mxu0 0.0
      %7249 = vmatmul.mubr.f32.gmra.mrb[0].mxu0 %v1975
      %v7250 = vpop.f32.mrb[0].mxu0
      %v7251 = vadd.f32 0.0, %v7250
      %v7252 = vpop.f32.mrb[0].mxu0
      %7253 = vmatprep.mubr.f32.mxu0 0.0
      %7254 = vmatmul.mubr.f32.gmra.mrb[0].mxu0 %v1977
      %v7255 = vpop.f32.mrb[0].mxu0
      %v7256 = vadd.f32 0.0, %v7255
      %v7257 = vpop.f32.mrb[0].mxu0
      %7258 = vmatprep.mubr.f32.mxu0 0.0
      %7259 = vmatmul.mubr.f32.gmra.mrb[0].mxu0 %v1979
      %v7260 = vpop.f32.mrb[0].mxu0
      %v7261 = vadd.f32 0.0, %v7260
      %v7262 = vpop.f32.mrb[0].mxu0
      %7263 = vmatprep.mubr.f32.mxu0 0.0
      %7264 = vmatmul.mubr.f32.gmra.mrb[0].mxu0 %v1981
      %v7265 = vpop.f32.mrb[0].mxu0
      %v7266 = vadd.f32 0.0, %v7265
      %v7267 = vpop.f32.mrb[0].mxu0
      %7268 = vmatprep.mubr.f32.mxu0 0.0
      %7269 = vmatmul.mubr.f32.gmra.mrb[0].mxu0 %v1983
      %v7270 = vpop.f32.mrb[0].mxu0
      %v7271 = vadd.f32 0.0, %v7270
      %v7272 = vpop.f32.mrb[0].mxu0
      %7273 = vmatprep.mubr.f32.mxu0 0.0
      %7274 = vmatmul.mubr.f32.gmra.mrb[0].mxu0 %v1985
      %v7275 = vpop.f32.mrb[0].mxu0
      %v7276 = vadd.f32 0.0, %v7275
      %v7277 = vpop.f32.mrb[0].mxu0
      %7278 = vmatprep.mubr.f32.mxu0 0.0
      %7279 = vmatmul.mubr.f32.gmra.mrb[0].mxu0 %v1987
      %v7280 = vpop.f32.mrb[0].mxu0
      %v7281 = vadd.f32 0.0, %v7280
      %v7282 = vpop.f32.mrb[0].mxu0
      %7283 = vmatprep.mubr.f32.mxu0 0.0
      %7284 = vmatmul.mubr.f32.gmra.mrb[0].mxu0 %v1989
      %v7285 = vpop.f32.mrb[0].mxu0
      %v7286 = vadd.f32 0.0, %v7285
      %v7287 = vpop.f32.mrb[0].mxu0
      %7288 = vmatprep.mubr.f32.mxu0 0.0
      %7289 = vmatmul.mubr.f32.gmra.mrb[0].mxu0 %v1991
      %v7290 = vpop.f32.mrb[0].mxu0
      %v7291 = vadd.f32 0.0, %v7290
      %v7292 = vpop.f32.mrb[0].mxu0
      %7293 = vmatprep.mubr.f32.mxu0 0.0
      %7294 = vmatmul.mubr.f32.gmra.mrb[0].mxu0 %v1993
      %v7295 = vpop.f32.mrb[0].mxu0
      %v7296 = vadd.f32 0.0, %v7295
      %v7297 = vpop.f32.mrb[0].mxu0
      %7298 = vmatprep.mubr.f32.mxu0 0.0
      %7299 = vmatmul.mubr.f32.gmra.mrb[0].mxu0 %v1995
      %v7300 = vpop.f32.mrb[0].mxu0
      %v7301 = vadd.f32 0.0, %v7300
      %v7302 = vpop.f32.mrb[0].mxu0
      %7303 = vmatprep.mubr.f32.mxu0 0.0
      %7304 = vmatmul.mubr.f32.gmra.mrb[0].mxu0 %v1997
      %v7305 = vpop.f32.mrb[0].mxu0
      %v7306 = vadd.f32 0.0, %v7305
      %v7307 = vpop.f32.mrb[0].mxu0
      %7308 = vmatprep.mubr.f32.mxu0 0.0
      %7309 = vmatmul.mubr.f32.gmra.mrb[0].mxu0 %v1999
      %v7310 = vpop.f32.mrb[0].mxu0
      %v7311 = vadd.f32 0.0, %v7310
      %v7312 = vpop.f32.mrb[0].mxu0
      %7313 = vmatprep.mubr.f32.mxu0 0.0
      %7314 = vmatmul.mubr.f32.gmra.mrb[0].mxu0 %v2001
      %v7315 = vpop.f32.mrb[0].mxu0
      %v7316 = vadd.f32 0.0, %v7315
      %v7317 = vpop.f32.mrb[0].mxu0
      %7318 = vmatprep.mubr.f32.mxu0 0.0
      %7319 = vmatmul.mubr.f32.gmra.mrb[0].mxu0 %v2003
      %v7320 = vpop.f32.mrb[0].mxu0
      %v7321 = vadd.f32 0.0, %v7320
      %v7322 = vpop.f32.mrb[0].mxu0
      %7323 = vmatprep.mubr.f32.mxu0 0.0
      %7324 = vmatmul.mubr.f32.gmra.mrb[0].mxu0 %v2005
      %v7325 = vpop.f32.mrb[0].mxu0
      %v7326 = vadd.f32 0.0, %v7325
      %v7327 = vpop.f32.mrb[0].mxu0
      %7328 = vmatprep.mubr.f32.mxu0 0.0
      %7329 = vmatmul.mubr.f32.gmra.mrb[0].mxu0 %v2007
      %v7330 = vpop.f32.mrb[0].mxu0
      %v7331 = vadd.f32 0.0, %v7330
      %v7332 = vpop.f32.mrb[0].mxu0
      %7333 = vmatprep.mubr.f32.mxu0 0.0
      %7334 = vmatmul.mubr.f32.gmra.mrb[0].mxu0 %v2009
      %v7335 = vpop.f32.mrb[0].mxu0
      %v7336 = vadd.f32 0.0, %v7335
      %v7337 = vpop.f32.mrb[0].mxu0
      %7338 = vmatprep.mubr.f32.mxu0 0.0
      %7339 = vmatmul.mubr.f32.gmra.mrb[0].mxu0 %v2011
      %v7340 = vpop.f32.mrb[0].mxu0
      %v7341 = vadd.f32 0.0, %v7340
      %v7342 = vpop.f32.mrb[0].mxu0
      %7343 = vmatprep.mubr.f32.mxu0 0.0
      %7344 = vmatmul.mubr.f32.gmra.mrb[0].mxu0 %v2013
      %v7345 = vpop.f32.mrb[0].mxu0
      %v7346 = vadd.f32 0.0, %v7345
      %v7347 = vpop.f32.mrb[0].mxu0
      %7348 = vmatprep.mubr.f32.mxu0 0.0
      %7349 = vmatmul.mubr.f32.gmra.mrb[0].mxu0 %v4109
      %v7350 = vpop.f32.mrb[0].mxu0
      %v7351 = vadd.f32 0.0, %v7350
      %v7352 = vpop.f32.mrb[0].mxu0
      %7353 = vmatprep.mubr.f32.mxu0 0.0
      %7354 = vmatmul.mubr.f32.gmra.mrb[0].mxu0 %v4112
      %v7355 = vpop.f32.mrb[0].mxu0
      %v7356 = vadd.f32 0.0, %v7355
      %v7357 = vpop.f32.mrb[0].mxu0
      %7358 = vmatprep.mubr.f32.mxu0 0.0
      %7359 = vmatmul.mubr.f32.gmra.mrb[0].mxu0 %v4115
      %v7360 = vpop.f32.mrb[0].mxu0
      %v7361 = vadd.f32 0.0, %v7360
      %v7362 = vpop.f32.mrb[0].mxu0
      %7363 = vmatprep.mubr.f32.mxu0 0.0
      %7364 = vmatmul.mubr.f32.gmra.mrb[0].mxu0 %v4118
      %v7365 = vpop.f32.mrb[0].mxu0
      %v7366 = vadd.f32 0.0, %v7365
      %v7367 = vpop.f32.mrb[0].mxu0
      %7368 = vmatprep.mubr.f32.mxu0 0.0
      %7369 = vmatmul.mubr.f32.gmra.mrb[0].mxu0 %v6670
      %v7370 = vpop.f32.mrb[0].mxu0
      %v7371 = vadd.f32 0.0, %v7370
      %v7372 = vpop.f32.mrb[0].mxu0
      %7373 = vmatprep.mubr.f32.mxu0 0.0
      %7374 = vmatmul.mubr.f32.gmra.mrb[0].mxu0 %v6673
      %v7375 = vpop.f32.mrb[0].mxu0
      %v7376 = vadd.f32 0.0, %v7375
      %v7377 = vpop.f32.mrb[0].mxu0
      %7378 = vmatprep.mubr.f32.mxu0 0.0
      %7379 = vmatmul.mubr.f32.gmra.mrb[0].mxu0 %v6676
      %v7380 = vpop.f32.mrb[0].mxu0
      %v7381 = vadd.f32 0.0, %v7380
      %v7382 = vpop.f32.mrb[0].mxu0
      %7383 = vmatprep.mubr.f32.mxu0 0.0
      %7384 = vmatmul.mubr.f32.gmra.mrb[0].mxu0 %v6679
      %v7385 = vpop.f32.mrb[0].mxu0
      %v7386 = vadd.f32 0.0, %v7385
      %v7387 = vpop.f32.mrb[0].mxu0
      %7388 = vdwg.mxu0
      %v7389 = vadd.f32 %v6539, %v6751
      %v7390 = vadd.f32 %v6540, %v6756
      %v7391 = vadd.f32 %v6541, %v6761
      %v7392 = vadd.f32 %v6542, %v6766
      %v7393 = vadd.f32 %v6543, %v6771
      %v7394 = vadd.f32 %v6544, %v6776
      %v7395 = vadd.f32 %v6545, %v6781
      %v7396 = vadd.f32 %v6546, %v6786
      %v7397 = vadd.f32 %v6547, %v6791
      %v7398 = vadd.f32 %v6548, %v6796
      %v7399 = vadd.f32 %v6549, %v6801
      %v7400 = vadd.f32 %v6550, %v6806
      %v7401 = vadd.f32 %v6551, %v6811
      %v7402 = vadd.f32 %v6552, %v6816
      %v7403 = vadd.f32 %v6553, %v6821
      %v7404 = vadd.f32 %v6554, %v6826
      %v7405 = vadd.f32 %v6555, %v6831
      %v7406 = vadd.f32 %v6556, %v6836
      %v7407 = vadd.f32 %v6557, %v6841
      %v7408 = vadd.f32 %v6558, %v6846
      %v7409 = vadd.f32 %v6559, %v6851
      %v7410 = vadd.f32 %v6560, %v6856
      %v7411 = vadd.f32 %v6561, %v6861
      %v7412 = vadd.f32 %v6562, %v6866
      %v7413 = vadd.f32 %v6563, %v6871
      %v7414 = vadd.f32 %v6564, %v6876
      %v7415 = vadd.f32 %v6565, %v6881
      %v7416 = vadd.f32 %v6566, %v6886
      %v7417 = vadd.f32 %v6567, %v6891
      %v7418 = vadd.f32 %v6568, %v6896
      %v7419 = vadd.f32 %v6569, %v6901
      %v7420 = vadd.f32 %v6570, %v6906
      %v7421 = vadd.f32 %v6571, %v6911
      %v7422 = vadd.f32 %v6572, %v6916
      %v7423 = vadd.f32 %v6573, %v6921
      %v7424 = vadd.f32 %v6574, %v6926
      %v7425 = vadd.f32 %v6575, %v6931
      %v7426 = vadd.f32 %v6576, %v6936
      %v7427 = vadd.f32 %v6577, %v6941
      %v7428 = vadd.f32 %v6578, %v6946
      %v7429 = vadd.f32 %v6579, %v6951
      %v7430 = vadd.f32 %v6580, %v6956
      %v7431 = vadd.f32 %v6581, %v6961
      %v7432 = vadd.f32 %v6582, %v6966
      %v7433 = vadd.f32 %v6583, %v6971
      %v7434 = vadd.f32 %v6584, %v6976
      %v7435 = vadd.f32 %v6585, %v6981
      %v7436 = vadd.f32 %v6586, %v6986
      %v7437 = vadd.f32 %v6587, %v6991
      %v7438 = vadd.f32 %v6588, %v6996
      %v7439 = vadd.f32 %v6589, %v7001
      %v7440 = vadd.f32 %v6590, %v7006
      %v7441 = vadd.f32 %v6591, %v7011
      %v7442 = vadd.f32 %v6592, %v7016
      %v7443 = vadd.f32 %v6593, %v7021
      %v7444 = vadd.f32 %v6594, %v7026
      %v7445 = vadd.f32 %v6595, %v7031
      %v7446 = vadd.f32 %v6596, %v7036
      %v7447 = vadd.f32 %v6597, %v7041
      %v7448 = vadd.f32 %v6598, %v7046
      %v7449 = vadd.f32 %v6599, %v7051
      %v7450 = vadd.f32 %v6600, %v7056
      %v7451 = vadd.f32 %v6601, %v7061
      %v7452 = vadd.f32 %v6602, %v7066
      %v7453 = vadd.f32 %v6603, %v7071
      %v7454 = vadd.f32 %v6604, %v7076
      %v7455 = vadd.f32 %v6605, %v7081
      %v7456 = vadd.f32 %v6606, %v7086
      %v7457 = vadd.f32 %v6607, %v7091
      %v7458 = vadd.f32 %v6608, %v7096
      %v7459 = vadd.f32 %v6609, %v7101
      %v7460 = vadd.f32 %v6610, %v7106
      %v7461 = vadd.f32 %v6611, %v7111
      %v7462 = vadd.f32 %v6612, %v7116
      %v7463 = vadd.f32 %v6613, %v7121
      %v7464 = vadd.f32 %v6614, %v7126
      %v7465 = vadd.f32 %v6615, %v7131
      %v7466 = vadd.f32 %v6616, %v7136
      %v7467 = vadd.f32 %v6617, %v7141
      %v7468 = vadd.f32 %v6618, %v7146
      %v7469 = vadd.f32 %v6619, %v7151
      %v7470 = vadd.f32 %v6620, %v7156
      %v7471 = vadd.f32 %v6621, %v7161
      %v7472 = vadd.f32 %v6622, %v7166
      %v7473 = vadd.f32 %v6623, %v7171
      %v7474 = vadd.f32 %v6624, %v7176
      %v7475 = vadd.f32 %v6625, %v7181
      %v7476 = vadd.f32 %v6626, %v7186
      %v7477 = vadd.f32 %v6627, %v7191
      %v7478 = vadd.f32 %v6628, %v7196
      %v7479 = vadd.f32 %v6629, %v7201
      %v7480 = vadd.f32 %v6630, %v7206
      %v7481 = vadd.f32 %v6631, %v7211
      %v7482 = vadd.f32 %v6632, %v7216
      %v7483 = vadd.f32 %v6633, %v7221
      %v7484 = vadd.f32 %v6634, %v7226
      %v7485 = vadd.f32 %v6635, %v7231
      %v7486 = vadd.f32 %v6636, %v7236
      %v7487 = vadd.f32 %v6637, %v7241
      %v7488 = vadd.f32 %v6638, %v7246
      %v7489 = vadd.f32 %v6639, %v7251
      %v7490 = vadd.f32 %v6640, %v7256
      %v7491 = vadd.f32 %v6641, %v7261
      %v7492 = vadd.f32 %v6642, %v7266
      %v7493 = vadd.f32 %v6643, %v7271
      %v7494 = vadd.f32 %v6644, %v7276
      %v7495 = vadd.f32 %v6645, %v7281
      %v7496 = vadd.f32 %v6646, %v7286
      %v7497 = vadd.f32 %v6647, %v7291
      %v7498 = vadd.f32 %v6648, %v7296
      %v7499 = vadd.f32 %v6649, %v7301
      %v7500 = vadd.f32 %v6650, %v7306
      %v7501 = vadd.f32 %v6651, %v7311
      %v7502 = vadd.f32 %v6652, %v7316
      %v7503 = vadd.f32 %v6653, %v7321
      %v7504 = vadd.f32 %v6654, %v7326
      %v7505 = vadd.f32 %v6655, %v7331
      %v7506 = vadd.f32 %v6656, %v7336
      %v7507 = vadd.f32 %v6657, %v7341
      %v7508 = vadd.f32 %v6658, %v7346
      %v7509 = vadd.f32 %v6659, %v7351
      %v7510 = vadd.f32 %v6660, %v7356
      %v7511 = vadd.f32 %v6661, %v7361
      %v7512 = vadd.f32 %v6662, %v7366
      %v7513 = vadd.f32 %v6663, %v7371
      %v7514 = vadd.f32 %v6664, %v7376
      %v7515 = vadd.f32 %v6665, %v7381
      %v7516 = vadd.f32 %v6666, %v7386
      %v7518 = vrot.slane %v336, 1
      %v7519 = vrot.slane %v337, 1
      %v7520 = vsel %vm502, %v7518, %v7519
      %v7521 = vrot.slane %v338, 1
      %v7522 = vsel %vm502, %v7519, %v7521
      %v7523 = vrot.slane %v339, 1
      %v7524 = vsel %vm502, %v7521, %v7523
      %v7525 = vrot.slane %v340, 1
      %v7526 = vsel %vm502, %v7523, %v7525
      %s7527 = scalar_lea.vmem %s1, 28
      %v7528 = vld [vmem:[%s7527] sm:$0xf]
      %v7529 = vsel %vm793, %v7520, 0
      %v7531 = vsel %vm793, %v7522, 0
      %v7533 = vsel %vm793, %v7524, 0
      %v7535 = vsel %vm793, %v7526, 0
      %v7538 = vsel %vm1050, %v7528, 0
      %7540 = vmatprep.subr.mxu0 0.0
      %7541 = vmatpush1.msra.mxu0 %v7538
      %7542 = vmatprep.subr.mxu0 0.0
      %7543 = vmatpush1.msra.mxu0 0.0
      %7544 = vmatprep.subr.mxu0 0.0
      %7545 = vmatpush1.msra.mxu0 0.0
      %7546 = vmatprep.subr.mxu0 0.0
      %7547 = vmatpush1.msra.mxu0 0.0
      %7548 = vmatprep.subr.mxu0 0.0
      %7549 = vmatpush1.msra.mxu0 0.0
      %7550 = vmatprep.subr.mxu0 0.0
      %7551 = vmatpush1.msra.mxu0 0.0
      %7552 = vmatprep.subr.mxu0 0.0
      %7553 = vmatpush1.msra.mxu0 0.0
      %7554 = vmatprep.subr.mxu0 0.0
      %7555 = vmatpush1.msra.mxu0 0.0
      %7556 = vmatprep.subr.mxu0 0.0
      %7557 = vmatpush1.msra.mxu0 0.0
      %7558 = vmatprep.subr.mxu0 0.0
      %7559 = vmatpush1.msra.mxu0 0.0
      %7560 = vmatprep.subr.mxu0 0.0
      %7561 = vmatpush1.msra.mxu0 0.0
      %7562 = vmatprep.subr.mxu0 0.0
      %7563 = vmatpush1.msra.mxu0 0.0
      %7564 = vmatprep.subr.mxu0 0.0
      %7565 = vmatpush1.msra.mxu0 0.0
      %7566 = vmatprep.subr.mxu0 0.0
      %7567 = vmatpush1.msra.mxu0 0.0
      %7568 = vmatprep.subr.mxu0 0.0
      %7569 = vmatpush1.msra.mxu0 0.0
      %7570 = vmatprep.subr.mxu0 0.0
      %7571 = vmatpush1.msra.mxu0 0.0
      %7572 = vmatprep.subr.mxu0 0.0
      %7573 = vmatpush1.msra.mxu0 0.0
      %7574 = vmatprep.subr.mxu0 0.0
      %7575 = vmatpush1.msra.mxu0 0.0
      %7576 = vmatprep.subr.mxu0 0.0
      %7577 = vmatpush1.msra.mxu0 0.0
      %7578 = vmatprep.subr.mxu0 0.0
      %7579 = vmatpush1.msra.mxu0 0.0
      %7580 = vmatprep.subr.mxu0 0.0
      %7581 = vmatpush1.msra.mxu0 0.0
      %7582 = vmatprep.subr.mxu0 0.0
      %7583 = vmatpush1.msra.mxu0 0.0
      %7584 = vmatprep.subr.mxu0 0.0
      %7585 = vmatpush1.msra.mxu0 0.0
      %7586 = vmatprep.subr.mxu0 0.0
      %7587 = vmatpush1.msra.mxu0 0.0
      %7588 = vmatprep.subr.mxu0 0.0
      %7589 = vmatpush1.msra.mxu0 0.0
      %7590 = vmatprep.subr.mxu0 0.0
      %7591 = vmatpush1.msra.mxu0 0.0
      %7592 = vmatprep.subr.mxu0 0.0
      %7593 = vmatpush1.msra.mxu0 0.0
      %7594 = vmatprep.subr.mxu0 0.0
      %7595 = vmatpush1.msra.mxu0 0.0
      %7596 = vmatprep.subr.mxu0 0.0
      %7597 = vmatpush1.msra.mxu0 0.0
      %7598 = vmatprep.subr.mxu0 0.0
      %7599 = vmatpush1.msra.mxu0 0.0
      %7600 = vmatprep.subr.mxu0 0.0
      %7601 = vmatpush1.msra.mxu0 0.0
      %7602 = vmatprep.subr.mxu0 0.0
      %7603 = vmatpush1.msra.mxu0 0.0
      %7604 = vmatprep.mubr.f32.mxu0 0.0
      %7605 = vmatmul.mubr.f32.gmra.mrb[0].mxu0 %v810
      %v7606 = vpop.f32.mrb[0].mxu0
      %v7607 = vadd.f32 0.0, %v7606
      %v7608 = vpop.f32.mrb[0].mxu0
      %7609 = vmatprep.mubr.f32.mxu0 0.0
      %7610 = vmatmul.mubr.f32.gmra.mrb[0].mxu0 %v812
      %v7611 = vpop.f32.mrb[0].mxu0
      %v7612 = vadd.f32 0.0, %v7611
      %v7613 = vpop.f32.mrb[0].mxu0
      %7614 = vmatprep.mubr.f32.mxu0 0.0
      %7615 = vmatmul.mubr.f32.gmra.mrb[0].mxu0 %v814
      %v7616 = vpop.f32.mrb[0].mxu0
      %v7617 = vadd.f32 0.0, %v7616
      %v7618 = vpop.f32.mrb[0].mxu0
      %7619 = vmatprep.mubr.f32.mxu0 0.0
      %7620 = vmatmul.mubr.f32.gmra.mrb[0].mxu0 %v816
      %v7621 = vpop.f32.mrb[0].mxu0
      %v7622 = vadd.f32 0.0, %v7621
      %v7623 = vpop.f32.mrb[0].mxu0
      %7624 = vmatprep.mubr.f32.mxu0 0.0
      %7625 = vmatmul.mubr.f32.gmra.mrb[0].mxu0 %v818
      %v7626 = vpop.f32.mrb[0].mxu0
      %v7627 = vadd.f32 0.0, %v7626
      %v7628 = vpop.f32.mrb[0].mxu0
      %7629 = vmatprep.mubr.f32.mxu0 0.0
      %7630 = vmatmul.mubr.f32.gmra.mrb[0].mxu0 %v820
      %v7631 = vpop.f32.mrb[0].mxu0
      %v7632 = vadd.f32 0.0, %v7631
      %v7633 = vpop.f32.mrb[0].mxu0
      %7634 = vmatprep.mubr.f32.mxu0 0.0
      %7635 = vmatmul.mubr.f32.gmra.mrb[0].mxu0 %v822
      %v7636 = vpop.f32.mrb[0].mxu0
      %v7637 = vadd.f32 0.0, %v7636
      %v7638 = vpop.f32.mrb[0].mxu0
      %7639 = vmatprep.mubr.f32.mxu0 0.0
      %7640 = vmatmul.mubr.f32.gmra.mrb[0].mxu0 %v824
      %v7641 = vpop.f32.mrb[0].mxu0
      %v7642 = vadd.f32 0.0, %v7641
      %v7643 = vpop.f32.mrb[0].mxu0
      %7644 = vmatprep.mubr.f32.mxu0 0.0
      %7645 = vmatmul.mubr.f32.gmra.mrb[0].mxu0 %v826
      %v7646 = vpop.f32.mrb[0].mxu0
      %v7647 = vadd.f32 0.0, %v7646
      %v7648 = vpop.f32.mrb[0].mxu0
      %7649 = vmatprep.mubr.f32.mxu0 0.0
      %7650 = vmatmul.mubr.f32.gmra.mrb[0].mxu0 %v828
      %v7651 = vpop.f32.mrb[0].mxu0
      %v7652 = vadd.f32 0.0, %v7651
      %v7653 = vpop.f32.mrb[0].mxu0
      %7654 = vmatprep.mubr.f32.mxu0 0.0
      %7655 = vmatmul.mubr.f32.gmra.mrb[0].mxu0 %v830
      %v7656 = vpop.f32.mrb[0].mxu0
      %v7657 = vadd.f32 0.0, %v7656
      %v7658 = vpop.f32.mrb[0].mxu0
      %7659 = vmatprep.mubr.f32.mxu0 0.0
      %7660 = vmatmul.mubr.f32.gmra.mrb[0].mxu0 %v832
      %v7661 = vpop.f32.mrb[0].mxu0
      %v7662 = vadd.f32 0.0, %v7661
      %v7663 = vpop.f32.mrb[0].mxu0
      %7664 = vmatprep.mubr.f32.mxu0 0.0
      %7665 = vmatmul.mubr.f32.gmra.mrb[0].mxu0 %v834
      %v7666 = vpop.f32.mrb[0].mxu0
      %v7667 = vadd.f32 0.0, %v7666
      %v7668 = vpop.f32.mrb[0].mxu0
      %7669 = vmatprep.mubr.f32.mxu0 0.0
      %7670 = vmatmul.mubr.f32.gmra.mrb[0].mxu0 %v836
      %v7671 = vpop.f32.mrb[0].mxu0
      %v7672 = vadd.f32 0.0, %v7671
      %v7673 = vpop.f32.mrb[0].mxu0
      %7674 = vmatprep.mubr.f32.mxu0 0.0
      %7675 = vmatmul.mubr.f32.gmra.mrb[0].mxu0 %v838
      %v7676 = vpop.f32.mrb[0].mxu0
      %v7677 = vadd.f32 0.0, %v7676
      %v7678 = vpop.f32.mrb[0].mxu0
      %7679 = vmatprep.mubr.f32.mxu0 0.0
      %7680 = vmatmul.mubr.f32.gmra.mrb[0].mxu0 %v840
      %v7681 = vpop.f32.mrb[0].mxu0
      %v7682 = vadd.f32 0.0, %v7681
      %v7683 = vpop.f32.mrb[0].mxu0
      %7684 = vmatprep.mubr.f32.mxu0 0.0
      %7685 = vmatmul.mubr.f32.gmra.mrb[0].mxu0 %v842
      %v7686 = vpop.f32.mrb[0].mxu0
      %v7687 = vadd.f32 0.0, %v7686
      %v7688 = vpop.f32.mrb[0].mxu0
      %7689 = vmatprep.mubr.f32.mxu0 0.0
      %7690 = vmatmul.mubr.f32.gmra.mrb[0].mxu0 %v844
      %v7691 = vpop.f32.mrb[0].mxu0
      %v7692 = vadd.f32 0.0, %v7691
      %v7693 = vpop.f32.mrb[0].mxu0
      %7694 = vmatprep.mubr.f32.mxu0 0.0
      %7695 = vmatmul.mubr.f32.gmra.mrb[0].mxu0 %v846
      %v7696 = vpop.f32.mrb[0].mxu0
      %v7697 = vadd.f32 0.0, %v7696
      %v7698 = vpop.f32.mrb[0].mxu0
      %7699 = vmatprep.mubr.f32.mxu0 0.0
      %7700 = vmatmul.mubr.f32.gmra.mrb[0].mxu0 %v848
      %v7701 = vpop.f32.mrb[0].mxu0
      %v7702 = vadd.f32 0.0, %v7701
      %v7703 = vpop.f32.mrb[0].mxu0
      %7704 = vmatprep.mubr.f32.mxu0 0.0
      %7705 = vmatmul.mubr.f32.gmra.mrb[0].mxu0 %v850
      %v7706 = vpop.f32.mrb[0].mxu0
      %v7707 = vadd.f32 0.0, %v7706
      %v7708 = vpop.f32.mrb[0].mxu0
      %7709 = vmatprep.mubr.f32.mxu0 0.0
      %7710 = vmatmul.mubr.f32.gmra.mrb[0].mxu0 %v852
      %v7711 = vpop.f32.mrb[0].mxu0
      %v7712 = vadd.f32 0.0, %v7711
      %v7713 = vpop.f32.mrb[0].mxu0
      %7714 = vmatprep.mubr.f32.mxu0 0.0
      %7715 = vmatmul.mubr.f32.gmra.mrb[0].mxu0 %v854
      %v7716 = vpop.f32.mrb[0].mxu0
      %v7717 = vadd.f32 0.0, %v7716
      %v7718 = vpop.f32.mrb[0].mxu0
      %7719 = vmatprep.mubr.f32.mxu0 0.0
      %7720 = vmatmul.mubr.f32.gmra.mrb[0].mxu0 %v856
      %v7721 = vpop.f32.mrb[0].mxu0
      %v7722 = vadd.f32 0.0, %v7721
      %v7723 = vpop.f32.mrb[0].mxu0
      %7724 = vmatprep.mubr.f32.mxu0 0.0
      %7725 = vmatmul.mubr.f32.gmra.mrb[0].mxu0 %v858
      %v7726 = vpop.f32.mrb[0].mxu0
      %v7727 = vadd.f32 0.0, %v7726
      %v7728 = vpop.f32.mrb[0].mxu0
      %7729 = vmatprep.mubr.f32.mxu0 0.0
      %7730 = vmatmul.mubr.f32.gmra.mrb[0].mxu0 %v860
      %v7731 = vpop.f32.mrb[0].mxu0
      %v7732 = vadd.f32 0.0, %v7731
      %v7733 = vpop.f32.mrb[0].mxu0
      %7734 = vmatprep.mubr.f32.mxu0 0.0
      %7735 = vmatmul.mubr.f32.gmra.mrb[0].mxu0 %v862
      %v7736 = vpop.f32.mrb[0].mxu0
      %v7737 = vadd.f32 0.0, %v7736
      %v7738 = vpop.f32.mrb[0].mxu0
      %7739 = vmatprep.mubr.f32.mxu0 0.0
      %7740 = vmatmul.mubr.f32.gmra.mrb[0].mxu0 %v864
      %v7741 = vpop.f32.mrb[0].mxu0
      %v7742 = vadd.f32 0.0, %v7741
      %v7743 = vpop.f32.mrb[0].mxu0
      %7744 = vmatprep.mubr.f32.mxu0 0.0
      %7745 = vmatmul.mubr.f32.gmra.mrb[0].mxu0 %v866
      %v7746 = vpop.f32.mrb[0].mxu0
      %v7747 = vadd.f32 0.0, %v7746
      %v7748 = vpop.f32.mrb[0].mxu0
      %7749 = vmatprep.mubr.f32.mxu0 0.0
      %7750 = vmatmul.mubr.f32.gmra.mrb[0].mxu0 %v868
      %v7751 = vpop.f32.mrb[0].mxu0
      %v7752 = vadd.f32 0.0, %v7751
      %v7753 = vpop.f32.mrb[0].mxu0
      %7754 = vmatprep.mubr.f32.mxu0 0.0
      %7755 = vmatmul.mubr.f32.gmra.mrb[0].mxu0 %v870
      %v7756 = vpop.f32.mrb[0].mxu0
      %v7757 = vadd.f32 0.0, %v7756
      %v7758 = vpop.f32.mrb[0].mxu0
      %7759 = vmatprep.mubr.f32.mxu0 0.0
      %7760 = vmatmul.mubr.f32.gmra.mrb[0].mxu0 %v872
      %v7761 = vpop.f32.mrb[0].mxu0
      %v7762 = vadd.f32 0.0, %v7761
      %v7763 = vpop.f32.mrb[0].mxu0
      %7764 = vmatprep.mubr.f32.mxu0 0.0
      %7765 = vmatmul.mubr.f32.gmra.mrb[0].mxu0 %v874
      %v7766 = vpop.f32.mrb[0].mxu0
      %v7767 = vadd.f32 0.0, %v7766
      %v7768 = vpop.f32.mrb[0].mxu0
      %7769 = vmatprep.mubr.f32.mxu0 0.0
      %7770 = vmatmul.mubr.f32.gmra.mrb[0].mxu0 %v876
      %v7771 = vpop.f32.mrb[0].mxu0
      %v7772 = vadd.f32 0.0, %v7771
      %v7773 = vpop.f32.mrb[0].mxu0
      %7774 = vmatprep.mubr.f32.mxu0 0.0
      %7775 = vmatmul.mubr.f32.gmra.mrb[0].mxu0 %v878
      %v7776 = vpop.f32.mrb[0].mxu0
      %v7777 = vadd.f32 0.0, %v7776
      %v7778 = vpop.f32.mrb[0].mxu0
      %7779 = vmatprep.mubr.f32.mxu0 0.0
      %7780 = vmatmul.mubr.f32.gmra.mrb[0].mxu0 %v880
      %v7781 = vpop.f32.mrb[0].mxu0
      %v7782 = vadd.f32 0.0, %v7781
      %v7783 = vpop.f32.mrb[0].mxu0
      %7784 = vmatprep.mubr.f32.mxu0 0.0
      %7785 = vmatmul.mubr.f32.gmra.mrb[0].mxu0 %v882
      %v7786 = vpop.f32.mrb[0].mxu0
      %v7787 = vadd.f32 0.0, %v7786
      %v7788 = vpop.f32.mrb[0].mxu0
      %7789 = vmatprep.mubr.f32.mxu0 0.0
      %7790 = vmatmul.mubr.f32.gmra.mrb[0].mxu0 %v884
      %v7791 = vpop.f32.mrb[0].mxu0
      %v7792 = vadd.f32 0.0, %v7791
      %v7793 = vpop.f32.mrb[0].mxu0
      %7794 = vmatprep.mubr.f32.mxu0 0.0
      %7795 = vmatmul.mubr.f32.gmra.mrb[0].mxu0 %v886
      %v7796 = vpop.f32.mrb[0].mxu0
      %v7797 = vadd.f32 0.0, %v7796
      %v7798 = vpop.f32.mrb[0].mxu0
      %7799 = vmatprep.mubr.f32.mxu0 0.0
      %7800 = vmatmul.mubr.f32.gmra.mrb[0].mxu0 %v888
      %v7801 = vpop.f32.mrb[0].mxu0
      %v7802 = vadd.f32 0.0, %v7801
      %v7803 = vpop.f32.mrb[0].mxu0
      %7804 = vmatprep.mubr.f32.mxu0 0.0
      %7805 = vmatmul.mubr.f32.gmra.mrb[0].mxu0 %v890
      %v7806 = vpop.f32.mrb[0].mxu0
      %v7807 = vadd.f32 0.0, %v7806
      %v7808 = vpop.f32.mrb[0].mxu0
      %7809 = vmatprep.mubr.f32.mxu0 0.0
      %7810 = vmatmul.mubr.f32.gmra.mrb[0].mxu0 %v892
      %v7811 = vpop.f32.mrb[0].mxu0
      %v7812 = vadd.f32 0.0, %v7811
      %v7813 = vpop.f32.mrb[0].mxu0
      %7814 = vmatprep.mubr.f32.mxu0 0.0
      %7815 = vmatmul.mubr.f32.gmra.mrb[0].mxu0 %v894
      %v7816 = vpop.f32.mrb[0].mxu0
      %v7817 = vadd.f32 0.0, %v7816
      %v7818 = vpop.f32.mrb[0].mxu0
      %7819 = vmatprep.mubr.f32.mxu0 0.0
      %7820 = vmatmul.mubr.f32.gmra.mrb[0].mxu0 %v896
      %v7821 = vpop.f32.mrb[0].mxu0
      %v7822 = vadd.f32 0.0, %v7821
      %v7823 = vpop.f32.mrb[0].mxu0
      %7824 = vmatprep.mubr.f32.mxu0 0.0
      %7825 = vmatmul.mubr.f32.gmra.mrb[0].mxu0 %v898
      %v7826 = vpop.f32.mrb[0].mxu0
      %v7827 = vadd.f32 0.0, %v7826
      %v7828 = vpop.f32.mrb[0].mxu0
      %7829 = vmatprep.mubr.f32.mxu0 0.0
      %7830 = vmatmul.mubr.f32.gmra.mrb[0].mxu0 %v900
      %v7831 = vpop.f32.mrb[0].mxu0
      %v7832 = vadd.f32 0.0, %v7831
      %v7833 = vpop.f32.mrb[0].mxu0
      %7834 = vmatprep.mubr.f32.mxu0 0.0
      %7835 = vmatmul.mubr.f32.gmra.mrb[0].mxu0 %v902
      %v7836 = vpop.f32.mrb[0].mxu0
      %v7837 = vadd.f32 0.0, %v7836
      %v7838 = vpop.f32.mrb[0].mxu0
      %7839 = vmatprep.mubr.f32.mxu0 0.0
      %7840 = vmatmul.mubr.f32.gmra.mrb[0].mxu0 %v904
      %v7841 = vpop.f32.mrb[0].mxu0
      %v7842 = vadd.f32 0.0, %v7841
      %v7843 = vpop.f32.mrb[0].mxu0
      %7844 = vmatprep.mubr.f32.mxu0 0.0
      %7845 = vmatmul.mubr.f32.gmra.mrb[0].mxu0 %v906
      %v7846 = vpop.f32.mrb[0].mxu0
      %v7847 = vadd.f32 0.0, %v7846
      %v7848 = vpop.f32.mrb[0].mxu0
      %7849 = vmatprep.mubr.f32.mxu0 0.0
      %7850 = vmatmul.mubr.f32.gmra.mrb[0].mxu0 %v908
      %v7851 = vpop.f32.mrb[0].mxu0
      %v7852 = vadd.f32 0.0, %v7851
      %v7853 = vpop.f32.mrb[0].mxu0
      %7854 = vmatprep.mubr.f32.mxu0 0.0
      %7855 = vmatmul.mubr.f32.gmra.mrb[0].mxu0 %v910
      %v7856 = vpop.f32.mrb[0].mxu0
      %v7857 = vadd.f32 0.0, %v7856
      %v7858 = vpop.f32.mrb[0].mxu0
      %7859 = vmatprep.mubr.f32.mxu0 0.0
      %7860 = vmatmul.mubr.f32.gmra.mrb[0].mxu0 %v912
      %v7861 = vpop.f32.mrb[0].mxu0
      %v7862 = vadd.f32 0.0, %v7861
      %v7863 = vpop.f32.mrb[0].mxu0
      %7864 = vmatprep.mubr.f32.mxu0 0.0
      %7865 = vmatmul.mubr.f32.gmra.mrb[0].mxu0 %v914
      %v7866 = vpop.f32.mrb[0].mxu0
      %v7867 = vadd.f32 0.0, %v7866
      %v7868 = vpop.f32.mrb[0].mxu0
      %7869 = vmatprep.mubr.f32.mxu0 0.0
      %7870 = vmatmul.mubr.f32.gmra.mrb[0].mxu0 %v916
      %v7871 = vpop.f32.mrb[0].mxu0
      %v7872 = vadd.f32 0.0, %v7871
      %v7873 = vpop.f32.mrb[0].mxu0
      %7874 = vmatprep.mubr.f32.mxu0 0.0
      %7875 = vmatmul.mubr.f32.gmra.mrb[0].mxu0 %v918
      %v7876 = vpop.f32.mrb[0].mxu0
      %v7877 = vadd.f32 0.0, %v7876
      %v7878 = vpop.f32.mrb[0].mxu0
      %7879 = vmatprep.mubr.f32.mxu0 0.0
      %7880 = vmatmul.mubr.f32.gmra.mrb[0].mxu0 %v920
      %v7881 = vpop.f32.mrb[0].mxu0
      %v7882 = vadd.f32 0.0, %v7881
      %v7883 = vpop.f32.mrb[0].mxu0
      %7884 = vmatprep.mubr.f32.mxu0 0.0
      %7885 = vmatmul.mubr.f32.gmra.mrb[0].mxu0 %v922
      %v7886 = vpop.f32.mrb[0].mxu0
      %v7887 = vadd.f32 0.0, %v7886
      %v7888 = vpop.f32.mrb[0].mxu0
      %7889 = vmatprep.mubr.f32.mxu0 0.0
      %7890 = vmatmul.mubr.f32.gmra.mrb[0].mxu0 %v924
      %v7891 = vpop.f32.mrb[0].mxu0
      %v7892 = vadd.f32 0.0, %v7891
      %v7893 = vpop.f32.mrb[0].mxu0
      %7894 = vmatprep.mubr.f32.mxu0 0.0
      %7895 = vmatmul.mubr.f32.gmra.mrb[0].mxu0 %v926
      %v7896 = vpop.f32.mrb[0].mxu0
      %v7897 = vadd.f32 0.0, %v7896
      %v7898 = vpop.f32.mrb[0].mxu0
      %7899 = vmatprep.mubr.f32.mxu0 0.0
      %7900 = vmatmul.mubr.f32.gmra.mrb[0].mxu0 %v928
      %v7901 = vpop.f32.mrb[0].mxu0
      %v7902 = vadd.f32 0.0, %v7901
      %v7903 = vpop.f32.mrb[0].mxu0
      %7904 = vmatprep.mubr.f32.mxu0 0.0
      %7905 = vmatmul.mubr.f32.gmra.mrb[0].mxu0 %v930
      %v7906 = vpop.f32.mrb[0].mxu0
      %v7907 = vadd.f32 0.0, %v7906
      %v7908 = vpop.f32.mrb[0].mxu0
      %7909 = vmatprep.mubr.f32.mxu0 0.0
      %7910 = vmatmul.mubr.f32.gmra.mrb[0].mxu0 %v932
      %v7911 = vpop.f32.mrb[0].mxu0
      %v7912 = vadd.f32 0.0, %v7911
      %v7913 = vpop.f32.mrb[0].mxu0
      %7914 = vmatprep.mubr.f32.mxu0 0.0
      %7915 = vmatmul.mubr.f32.gmra.mrb[0].mxu0 %v934
      %v7916 = vpop.f32.mrb[0].mxu0
      %v7917 = vadd.f32 0.0, %v7916
      %v7918 = vpop.f32.mrb[0].mxu0
      %7919 = vmatprep.mubr.f32.mxu0 0.0
      %7920 = vmatmul.mubr.f32.gmra.mrb[0].mxu0 %v936
      %v7921 = vpop.f32.mrb[0].mxu0
      %v7922 = vadd.f32 0.0, %v7921
      %v7923 = vpop.f32.mrb[0].mxu0
      %7924 = vmatprep.mubr.f32.mxu0 0.0
      %7925 = vmatmul.mubr.f32.gmra.mrb[0].mxu0 %v938
      %v7926 = vpop.f32.mrb[0].mxu0
      %v7927 = vadd.f32 0.0, %v7926
      %v7928 = vpop.f32.mrb[0].mxu0
      %7929 = vmatprep.mubr.f32.mxu0 0.0
      %7930 = vmatmul.mubr.f32.gmra.mrb[0].mxu0 %v940
      %v7931 = vpop.f32.mrb[0].mxu0
      %v7932 = vadd.f32 0.0, %v7931
      %v7933 = vpop.f32.mrb[0].mxu0
      %7934 = vmatprep.mubr.f32.mxu0 0.0
      %7935 = vmatmul.mubr.f32.gmra.mrb[0].mxu0 %v942
      %v7936 = vpop.f32.mrb[0].mxu0
      %v7937 = vadd.f32 0.0, %v7936
      %v7938 = vpop.f32.mrb[0].mxu0
      %7939 = vmatprep.mubr.f32.mxu0 0.0
      %7940 = vmatmul.mubr.f32.gmra.mrb[0].mxu0 %v944
      %v7941 = vpop.f32.mrb[0].mxu0
      %v7942 = vadd.f32 0.0, %v7941
      %v7943 = vpop.f32.mrb[0].mxu0
      %7944 = vmatprep.mubr.f32.mxu0 0.0
      %7945 = vmatmul.mubr.f32.gmra.mrb[0].mxu0 %v946
      %v7946 = vpop.f32.mrb[0].mxu0
      %v7947 = vadd.f32 0.0, %v7946
      %v7948 = vpop.f32.mrb[0].mxu0
      %7949 = vmatprep.mubr.f32.mxu0 0.0
      %7950 = vmatmul.mubr.f32.gmra.mrb[0].mxu0 %v948
      %v7951 = vpop.f32.mrb[0].mxu0
      %v7952 = vadd.f32 0.0, %v7951
      %v7953 = vpop.f32.mrb[0].mxu0
      %7954 = vmatprep.mubr.f32.mxu0 0.0
      %7955 = vmatmul.mubr.f32.gmra.mrb[0].mxu0 %v950
      %v7956 = vpop.f32.mrb[0].mxu0
      %v7957 = vadd.f32 0.0, %v7956
      %v7958 = vpop.f32.mrb[0].mxu0
      %7959 = vmatprep.mubr.f32.mxu0 0.0
      %7960 = vmatmul.mubr.f32.gmra.mrb[0].mxu0 %v952
      %v7961 = vpop.f32.mrb[0].mxu0
      %v7962 = vadd.f32 0.0, %v7961
      %v7963 = vpop.f32.mrb[0].mxu0
      %7964 = vmatprep.mubr.f32.mxu0 0.0
      %7965 = vmatmul.mubr.f32.gmra.mrb[0].mxu0 %v954
      %v7966 = vpop.f32.mrb[0].mxu0
      %v7967 = vadd.f32 0.0, %v7966
      %v7968 = vpop.f32.mrb[0].mxu0
      %7969 = vmatprep.mubr.f32.mxu0 0.0
      %7970 = vmatmul.mubr.f32.gmra.mrb[0].mxu0 %v956
      %v7971 = vpop.f32.mrb[0].mxu0
      %v7972 = vadd.f32 0.0, %v7971
      %v7973 = vpop.f32.mrb[0].mxu0
      %7974 = vmatprep.mubr.f32.mxu0 0.0
      %7975 = vmatmul.mubr.f32.gmra.mrb[0].mxu0 %v958
      %v7976 = vpop.f32.mrb[0].mxu0
      %v7977 = vadd.f32 0.0, %v7976
      %v7978 = vpop.f32.mrb[0].mxu0
      %7979 = vmatprep.mubr.f32.mxu0 0.0
      %7980 = vmatmul.mubr.f32.gmra.mrb[0].mxu0 %v960
      %v7981 = vpop.f32.mrb[0].mxu0
      %v7982 = vadd.f32 0.0, %v7981
      %v7983 = vpop.f32.mrb[0].mxu0
      %7984 = vmatprep.mubr.f32.mxu0 0.0
      %7985 = vmatmul.mubr.f32.gmra.mrb[0].mxu0 %v962
      %v7986 = vpop.f32.mrb[0].mxu0
      %v7987 = vadd.f32 0.0, %v7986
      %v7988 = vpop.f32.mrb[0].mxu0
      %7989 = vmatprep.mubr.f32.mxu0 0.0
      %7990 = vmatmul.mubr.f32.gmra.mrb[0].mxu0 %v964
      %v7991 = vpop.f32.mrb[0].mxu0
      %v7992 = vadd.f32 0.0, %v7991
      %v7993 = vpop.f32.mrb[0].mxu0
      %7994 = vmatprep.mubr.f32.mxu0 0.0
      %7995 = vmatmul.mubr.f32.gmra.mrb[0].mxu0 %v966
      %v7996 = vpop.f32.mrb[0].mxu0
      %v7997 = vadd.f32 0.0, %v7996
      %v7998 = vpop.f32.mrb[0].mxu0
      %7999 = vmatprep.mubr.f32.mxu0 0.0
      %8000 = vmatmul.mubr.f32.gmra.mrb[0].mxu0 %v968
      %v8001 = vpop.f32.mrb[0].mxu0
      %v8002 = vadd.f32 0.0, %v8001
      %v8003 = vpop.f32.mrb[0].mxu0
      %8004 = vmatprep.mubr.f32.mxu0 0.0
      %8005 = vmatmul.mubr.f32.gmra.mrb[0].mxu0 %v970
      %v8006 = vpop.f32.mrb[0].mxu0
      %v8007 = vadd.f32 0.0, %v8006
      %v8008 = vpop.f32.mrb[0].mxu0
      %8009 = vmatprep.mubr.f32.mxu0 0.0
      %8010 = vmatmul.mubr.f32.gmra.mrb[0].mxu0 %v972
      %v8011 = vpop.f32.mrb[0].mxu0
      %v8012 = vadd.f32 0.0, %v8011
      %v8013 = vpop.f32.mrb[0].mxu0
      %8014 = vmatprep.mubr.f32.mxu0 0.0
      %8015 = vmatmul.mubr.f32.gmra.mrb[0].mxu0 %v974
      %v8016 = vpop.f32.mrb[0].mxu0
      %v8017 = vadd.f32 0.0, %v8016
      %v8018 = vpop.f32.mrb[0].mxu0
      %8019 = vmatprep.mubr.f32.mxu0 0.0
      %8020 = vmatmul.mubr.f32.gmra.mrb[0].mxu0 %v976
      %v8021 = vpop.f32.mrb[0].mxu0
      %v8022 = vadd.f32 0.0, %v8021
      %v8023 = vpop.f32.mrb[0].mxu0
      %8024 = vmatprep.mubr.f32.mxu0 0.0
      %8025 = vmatmul.mubr.f32.gmra.mrb[0].mxu0 %v978
      %v8026 = vpop.f32.mrb[0].mxu0
      %v8027 = vadd.f32 0.0, %v8026
      %v8028 = vpop.f32.mrb[0].mxu0
      %8029 = vmatprep.mubr.f32.mxu0 0.0
      %8030 = vmatmul.mubr.f32.gmra.mrb[0].mxu0 %v980
      %v8031 = vpop.f32.mrb[0].mxu0
      %v8032 = vadd.f32 0.0, %v8031
      %v8033 = vpop.f32.mrb[0].mxu0
      %8034 = vmatprep.mubr.f32.mxu0 0.0
      %8035 = vmatmul.mubr.f32.gmra.mrb[0].mxu0 %v982
      %v8036 = vpop.f32.mrb[0].mxu0
      %v8037 = vadd.f32 0.0, %v8036
      %v8038 = vpop.f32.mrb[0].mxu0
      %8039 = vmatprep.mubr.f32.mxu0 0.0
      %8040 = vmatmul.mubr.f32.gmra.mrb[0].mxu0 %v984
      %v8041 = vpop.f32.mrb[0].mxu0
      %v8042 = vadd.f32 0.0, %v8041
      %v8043 = vpop.f32.mrb[0].mxu0
      %8044 = vmatprep.mubr.f32.mxu0 0.0
      %8045 = vmatmul.mubr.f32.gmra.mrb[0].mxu0 %v986
      %v8046 = vpop.f32.mrb[0].mxu0
      %v8047 = vadd.f32 0.0, %v8046
      %v8048 = vpop.f32.mrb[0].mxu0
      %8049 = vmatprep.mubr.f32.mxu0 0.0
      %8050 = vmatmul.mubr.f32.gmra.mrb[0].mxu0 %v988
      %v8051 = vpop.f32.mrb[0].mxu0
      %v8052 = vadd.f32 0.0, %v8051
      %v8053 = vpop.f32.mrb[0].mxu0
      %8054 = vmatprep.mubr.f32.mxu0 0.0
      %8055 = vmatmul.mubr.f32.gmra.mrb[0].mxu0 %v990
      %v8056 = vpop.f32.mrb[0].mxu0
      %v8057 = vadd.f32 0.0, %v8056
      %v8058 = vpop.f32.mrb[0].mxu0
      %8059 = vmatprep.mubr.f32.mxu0 0.0
      %8060 = vmatmul.mubr.f32.gmra.mrb[0].mxu0 %v992
      %v8061 = vpop.f32.mrb[0].mxu0
      %v8062 = vadd.f32 0.0, %v8061
      %v8063 = vpop.f32.mrb[0].mxu0
      %8064 = vmatprep.mubr.f32.mxu0 0.0
      %8065 = vmatmul.mubr.f32.gmra.mrb[0].mxu0 %v994
      %v8066 = vpop.f32.mrb[0].mxu0
      %v8067 = vadd.f32 0.0, %v8066
      %v8068 = vpop.f32.mrb[0].mxu0
      %8069 = vmatprep.mubr.f32.mxu0 0.0
      %8070 = vmatmul.mubr.f32.gmra.mrb[0].mxu0 %v996
      %v8071 = vpop.f32.mrb[0].mxu0
      %v8072 = vadd.f32 0.0, %v8071
      %v8073 = vpop.f32.mrb[0].mxu0
      %8074 = vmatprep.mubr.f32.mxu0 0.0
      %8075 = vmatmul.mubr.f32.gmra.mrb[0].mxu0 %v998
      %v8076 = vpop.f32.mrb[0].mxu0
      %v8077 = vadd.f32 0.0, %v8076
      %v8078 = vpop.f32.mrb[0].mxu0
      %8079 = vmatprep.mubr.f32.mxu0 0.0
      %8080 = vmatmul.mubr.f32.gmra.mrb[0].mxu0 %v1000
      %v8081 = vpop.f32.mrb[0].mxu0
      %v8082 = vadd.f32 0.0, %v8081
      %v8083 = vpop.f32.mrb[0].mxu0
      %8084 = vmatprep.mubr.f32.mxu0 0.0
      %8085 = vmatmul.mubr.f32.gmra.mrb[0].mxu0 %v1002
      %v8086 = vpop.f32.mrb[0].mxu0
      %v8087 = vadd.f32 0.0, %v8086
      %v8088 = vpop.f32.mrb[0].mxu0
      %8089 = vmatprep.mubr.f32.mxu0 0.0
      %8090 = vmatmul.mubr.f32.gmra.mrb[0].mxu0 %v1004
      %v8091 = vpop.f32.mrb[0].mxu0
      %v8092 = vadd.f32 0.0, %v8091
      %v8093 = vpop.f32.mrb[0].mxu0
      %8094 = vmatprep.mubr.f32.mxu0 0.0
      %8095 = vmatmul.mubr.f32.gmra.mrb[0].mxu0 %v1006
      %v8096 = vpop.f32.mrb[0].mxu0
      %v8097 = vadd.f32 0.0, %v8096
      %v8098 = vpop.f32.mrb[0].mxu0
      %8099 = vmatprep.mubr.f32.mxu0 0.0
      %8100 = vmatmul.mubr.f32.gmra.mrb[0].mxu0 %v1008
      %v8101 = vpop.f32.mrb[0].mxu0
      %v8102 = vadd.f32 0.0, %v8101
      %v8103 = vpop.f32.mrb[0].mxu0
      %8104 = vmatprep.mubr.f32.mxu0 0.0
      %8105 = vmatmul.mubr.f32.gmra.mrb[0].mxu0 %v1010
      %v8106 = vpop.f32.mrb[0].mxu0
      %v8107 = vadd.f32 0.0, %v8106
      %v8108 = vpop.f32.mrb[0].mxu0
      %8109 = vmatprep.mubr.f32.mxu0 0.0
      %8110 = vmatmul.mubr.f32.gmra.mrb[0].mxu0 %v1012
      %v8111 = vpop.f32.mrb[0].mxu0
      %v8112 = vadd.f32 0.0, %v8111
      %v8113 = vpop.f32.mrb[0].mxu0
      %8114 = vmatprep.mubr.f32.mxu0 0.0
      %8115 = vmatmul.mubr.f32.gmra.mrb[0].mxu0 %v1014
      %v8116 = vpop.f32.mrb[0].mxu0
      %v8117 = vadd.f32 0.0, %v8116
      %v8118 = vpop.f32.mrb[0].mxu0
      %8119 = vmatprep.mubr.f32.mxu0 0.0
      %8120 = vmatmul.mubr.f32.gmra.mrb[0].mxu0 %v1016
      %v8121 = vpop.f32.mrb[0].mxu0
      %v8122 = vadd.f32 0.0, %v8121
      %v8123 = vpop.f32.mrb[0].mxu0
      %8124 = vmatprep.mubr.f32.mxu0 0.0
      %8125 = vmatmul.mubr.f32.gmra.mrb[0].mxu0 %v1018
      %v8126 = vpop.f32.mrb[0].mxu0
      %v8127 = vadd.f32 0.0, %v8126
      %v8128 = vpop.f32.mrb[0].mxu0
      %8129 = vmatprep.mubr.f32.mxu0 0.0
      %8130 = vmatmul.mubr.f32.gmra.mrb[0].mxu0 %v1020
      %v8131 = vpop.f32.mrb[0].mxu0
      %v8132 = vadd.f32 0.0, %v8131
      %v8133 = vpop.f32.mrb[0].mxu0
      %8134 = vmatprep.mubr.f32.mxu0 0.0
      %8135 = vmatmul.mubr.f32.gmra.mrb[0].mxu0 %v1022
      %v8136 = vpop.f32.mrb[0].mxu0
      %v8137 = vadd.f32 0.0, %v8136
      %v8138 = vpop.f32.mrb[0].mxu0
      %8139 = vmatprep.mubr.f32.mxu0 0.0
      %8140 = vmatmul.mubr.f32.gmra.mrb[0].mxu0 %v1024
      %v8141 = vpop.f32.mrb[0].mxu0
      %v8142 = vadd.f32 0.0, %v8141
      %v8143 = vpop.f32.mrb[0].mxu0
      %8144 = vmatprep.mubr.f32.mxu0 0.0
      %8145 = vmatmul.mubr.f32.gmra.mrb[0].mxu0 %v1026
      %v8146 = vpop.f32.mrb[0].mxu0
      %v8147 = vadd.f32 0.0, %v8146
      %v8148 = vpop.f32.mrb[0].mxu0
      %8149 = vmatprep.mubr.f32.mxu0 0.0
      %8150 = vmatmul.mubr.f32.gmra.mrb[0].mxu0 %v1028
      %v8151 = vpop.f32.mrb[0].mxu0
      %v8152 = vadd.f32 0.0, %v8151
      %v8153 = vpop.f32.mrb[0].mxu0
      %8154 = vmatprep.mubr.f32.mxu0 0.0
      %8155 = vmatmul.mubr.f32.gmra.mrb[0].mxu0 %v1030
      %v8156 = vpop.f32.mrb[0].mxu0
      %v8157 = vadd.f32 0.0, %v8156
      %v8158 = vpop.f32.mrb[0].mxu0
      %8159 = vmatprep.mubr.f32.mxu0 0.0
      %8160 = vmatmul.mubr.f32.gmra.mrb[0].mxu0 %v1032
      %v8161 = vpop.f32.mrb[0].mxu0
      %v8162 = vadd.f32 0.0, %v8161
      %v8163 = vpop.f32.mrb[0].mxu0
      %8164 = vmatprep.mubr.f32.mxu0 0.0
      %8165 = vmatmul.mubr.f32.gmra.mrb[0].mxu0 %v1034
      %v8166 = vpop.f32.mrb[0].mxu0
      %v8167 = vadd.f32 0.0, %v8166
      %v8168 = vpop.f32.mrb[0].mxu0
      %8169 = vmatprep.mubr.f32.mxu0 0.0
      %8170 = vmatmul.mubr.f32.gmra.mrb[0].mxu0 %v1036
      %v8171 = vpop.f32.mrb[0].mxu0
      %v8172 = vadd.f32 0.0, %v8171
      %v8173 = vpop.f32.mrb[0].mxu0
      %8174 = vmatprep.mubr.f32.mxu0 0.0
      %8175 = vmatmul.mubr.f32.gmra.mrb[0].mxu0 %v1038
      %v8176 = vpop.f32.mrb[0].mxu0
      %v8177 = vadd.f32 0.0, %v8176
      %v8178 = vpop.f32.mrb[0].mxu0
      %8179 = vmatprep.mubr.f32.mxu0 0.0
      %8180 = vmatmul.mubr.f32.gmra.mrb[0].mxu0 %v1040
      %v8181 = vpop.f32.mrb[0].mxu0
      %v8182 = vadd.f32 0.0, %v8181
      %v8183 = vpop.f32.mrb[0].mxu0
      %8184 = vmatprep.mubr.f32.mxu0 0.0
      %8185 = vmatmul.mubr.f32.gmra.mrb[0].mxu0 %v1042
      %v8186 = vpop.f32.mrb[0].mxu0
      %v8187 = vadd.f32 0.0, %v8186
      %v8188 = vpop.f32.mrb[0].mxu0
      %8189 = vmatprep.mubr.f32.mxu0 0.0
      %8190 = vmatmul.mubr.f32.gmra.mrb[0].mxu0 %v1044
      %v8191 = vpop.f32.mrb[0].mxu0
      %v8192 = vadd.f32 0.0, %v8191
      %v8193 = vpop.f32.mrb[0].mxu0
      %8194 = vmatprep.mubr.f32.mxu0 0.0
      %8195 = vmatmul.mubr.f32.gmra.mrb[0].mxu0 %v1046
      %v8196 = vpop.f32.mrb[0].mxu0
      %v8197 = vadd.f32 0.0, %v8196
      %v8198 = vpop.f32.mrb[0].mxu0
      %8199 = vmatprep.mubr.f32.mxu0 0.0
      %8200 = vmatmul.mubr.f32.gmra.mrb[0].mxu0 %v1048
      %v8201 = vpop.f32.mrb[0].mxu0
      %v8202 = vadd.f32 0.0, %v8201
      %v8203 = vpop.f32.mrb[0].mxu0
      %8204 = vmatprep.mubr.f32.mxu0 0.0
      %8205 = vmatmul.mubr.f32.gmra.mrb[0].mxu0 %v4968
      %v8206 = vpop.f32.mrb[0].mxu0
      %v8207 = vadd.f32 0.0, %v8206
      %v8208 = vpop.f32.mrb[0].mxu0
      %8209 = vmatprep.mubr.f32.mxu0 0.0
      %8210 = vmatmul.mubr.f32.gmra.mrb[0].mxu0 %v4970
      %v8211 = vpop.f32.mrb[0].mxu0
      %v8212 = vadd.f32 0.0, %v8211
      %v8213 = vpop.f32.mrb[0].mxu0
      %8214 = vmatprep.mubr.f32.mxu0 0.0
      %8215 = vmatmul.mubr.f32.gmra.mrb[0].mxu0 %v4972
      %v8216 = vpop.f32.mrb[0].mxu0
      %v8217 = vadd.f32 0.0, %v8216
      %v8218 = vpop.f32.mrb[0].mxu0
      %8219 = vmatprep.mubr.f32.mxu0 0.0
      %8220 = vmatmul.mubr.f32.gmra.mrb[0].mxu0 %v4974
      %v8221 = vpop.f32.mrb[0].mxu0
      %v8222 = vadd.f32 0.0, %v8221
      %v8223 = vpop.f32.mrb[0].mxu0
      %8224 = vmatprep.mubr.f32.mxu0 0.0
      %8225 = vmatmul.mubr.f32.gmra.mrb[0].mxu0 %v7529
      %v8226 = vpop.f32.mrb[0].mxu0
      %v8227 = vadd.f32 0.0, %v8226
      %v8228 = vpop.f32.mrb[0].mxu0
      %8229 = vmatprep.mubr.f32.mxu0 0.0
      %8230 = vmatmul.mubr.f32.gmra.mrb[0].mxu0 %v7531
      %v8231 = vpop.f32.mrb[0].mxu0
      %v8232 = vadd.f32 0.0, %v8231
      %v8233 = vpop.f32.mrb[0].mxu0
      %8234 = vmatprep.mubr.f32.mxu0 0.0
      %8235 = vmatmul.mubr.f32.gmra.mrb[0].mxu0 %v7533
      %v8236 = vpop.f32.mrb[0].mxu0
      %v8237 = vadd.f32 0.0, %v8236
      %v8238 = vpop.f32.mrb[0].mxu0
      %8239 = vmatprep.mubr.f32.mxu0 0.0
      %8240 = vmatmul.mubr.f32.gmra.mrb[0].mxu0 %v7535
      %v8241 = vpop.f32.mrb[0].mxu0
      %v8242 = vadd.f32 0.0, %v8241
      %v8243 = vpop.f32.mrb[0].mxu0
      %8244 = vdwg.mxu0
      %v8245 = vadd.f32 %v7389, %v7607
      %v8246 = vadd.f32 %v7390, %v7612
      %v8247 = vadd.f32 %v7391, %v7617
      %v8248 = vadd.f32 %v7392, %v7622
      %v8249 = vadd.f32 %v7393, %v7627
      %v8250 = vadd.f32 %v7394, %v7632
      %v8251 = vadd.f32 %v7395, %v7637
      %v8252 = vadd.f32 %v7396, %v7642
      %v8253 = vadd.f32 %v7397, %v7647
      %v8254 = vadd.f32 %v7398, %v7652
      %v8255 = vadd.f32 %v7399, %v7657
      %v8256 = vadd.f32 %v7400, %v7662
      %v8257 = vadd.f32 %v7401, %v7667
      %v8258 = vadd.f32 %v7402, %v7672
      %v8259 = vadd.f32 %v7403, %v7677
      %v8260 = vadd.f32 %v7404, %v7682
      %v8261 = vadd.f32 %v7405, %v7687
      %v8262 = vadd.f32 %v7406, %v7692
      %v8263 = vadd.f32 %v7407, %v7697
      %v8264 = vadd.f32 %v7408, %v7702
      %v8265 = vadd.f32 %v7409, %v7707
      %v8266 = vadd.f32 %v7410, %v7712
      %v8267 = vadd.f32 %v7411, %v7717
      %v8268 = vadd.f32 %v7412, %v7722
      %v8269 = vadd.f32 %v7413, %v7727
      %v8270 = vadd.f32 %v7414, %v7732
      %v8271 = vadd.f32 %v7415, %v7737
      %v8272 = vadd.f32 %v7416, %v7742
      %v8273 = vadd.f32 %v7417, %v7747
      %v8274 = vadd.f32 %v7418, %v7752
      %v8275 = vadd.f32 %v7419, %v7757
      %v8276 = vadd.f32 %v7420, %v7762
      %v8277 = vadd.f32 %v7421, %v7767
      %v8278 = vadd.f32 %v7422, %v7772
      %v8279 = vadd.f32 %v7423, %v7777
      %v8280 = vadd.f32 %v7424, %v7782
      %v8281 = vadd.f32 %v7425, %v7787
      %v8282 = vadd.f32 %v7426, %v7792
      %v8283 = vadd.f32 %v7427, %v7797
      %v8284 = vadd.f32 %v7428, %v7802
      %v8285 = vadd.f32 %v7429, %v7807
      %v8286 = vadd.f32 %v7430, %v7812
      %v8287 = vadd.f32 %v7431, %v7817
      %v8288 = vadd.f32 %v7432, %v7822
      %v8289 = vadd.f32 %v7433, %v7827
      %v8290 = vadd.f32 %v7434, %v7832
      %v8291 = vadd.f32 %v7435, %v7837
      %v8292 = vadd.f32 %v7436, %v7842
      %v8293 = vadd.f32 %v7437, %v7847
      %v8294 = vadd.f32 %v7438, %v7852
      %v8295 = vadd.f32 %v7439, %v7857
      %v8296 = vadd.f32 %v7440, %v7862
      %v8297 = vadd.f32 %v7441, %v7867
      %v8298 = vadd.f32 %v7442, %v7872
      %v8299 = vadd.f32 %v7443, %v7877
      %v8300 = vadd.f32 %v7444, %v7882
      %v8301 = vadd.f32 %v7445, %v7887
      %v8302 = vadd.f32 %v7446, %v7892
      %v8303 = vadd.f32 %v7447, %v7897
      %v8304 = vadd.f32 %v7448, %v7902
      %v8305 = vadd.f32 %v7449, %v7907
      %v8306 = vadd.f32 %v7450, %v7912
      %v8307 = vadd.f32 %v7451, %v7917
      %v8308 = vadd.f32 %v7452, %v7922
      %v8309 = vadd.f32 %v7453, %v7927
      %v8310 = vadd.f32 %v7454, %v7932
      %v8311 = vadd.f32 %v7455, %v7937
      %v8312 = vadd.f32 %v7456, %v7942
      %v8313 = vadd.f32 %v7457, %v7947
      %v8314 = vadd.f32 %v7458, %v7952
      %v8315 = vadd.f32 %v7459, %v7957
      %v8316 = vadd.f32 %v7460, %v7962
      %v8317 = vadd.f32 %v7461, %v7967
      %v8318 = vadd.f32 %v7462, %v7972
      %v8319 = vadd.f32 %v7463, %v7977
      %v8320 = vadd.f32 %v7464, %v7982
      %v8321 = vadd.f32 %v7465, %v7987
      %v8322 = vadd.f32 %v7466, %v7992
      %v8323 = vadd.f32 %v7467, %v7997
      %v8324 = vadd.f32 %v7468, %v8002
      %v8325 = vadd.f32 %v7469, %v8007
      %v8326 = vadd.f32 %v7470, %v8012
      %v8327 = vadd.f32 %v7471, %v8017
      %v8328 = vadd.f32 %v7472, %v8022
      %v8329 = vadd.f32 %v7473, %v8027
      %v8330 = vadd.f32 %v7474, %v8032
      %v8331 = vadd.f32 %v7475, %v8037
      %v8332 = vadd.f32 %v7476, %v8042
      %v8333 = vadd.f32 %v7477, %v8047
      %v8334 = vadd.f32 %v7478, %v8052
      %v8335 = vadd.f32 %v7479, %v8057
      %v8336 = vadd.f32 %v7480, %v8062
      %v8337 = vadd.f32 %v7481, %v8067
      %v8338 = vadd.f32 %v7482, %v8072
      %v8339 = vadd.f32 %v7483, %v8077
      %v8340 = vadd.f32 %v7484, %v8082
      %v8341 = vadd.f32 %v7485, %v8087
      %v8342 = vadd.f32 %v7486, %v8092
      %v8343 = vadd.f32 %v7487, %v8097
      %v8344 = vadd.f32 %v7488, %v8102
      %v8345 = vadd.f32 %v7489, %v8107
      %v8346 = vadd.f32 %v7490, %v8112
      %v8347 = vadd.f32 %v7491, %v8117
      %v8348 = vadd.f32 %v7492, %v8122
      %v8349 = vadd.f32 %v7493, %v8127
      %v8350 = vadd.f32 %v7494, %v8132
      %v8351 = vadd.f32 %v7495, %v8137
      %v8352 = vadd.f32 %v7496, %v8142
      %v8353 = vadd.f32 %v7497, %v8147
      %v8354 = vadd.f32 %v7498, %v8152
      %v8355 = vadd.f32 %v7499, %v8157
      %v8356 = vadd.f32 %v7500, %v8162
      %v8357 = vadd.f32 %v7501, %v8167
      %v8358 = vadd.f32 %v7502, %v8172
      %v8359 = vadd.f32 %v7503, %v8177
      %v8360 = vadd.f32 %v7504, %v8182
      %v8361 = vadd.f32 %v7505, %v8187
      %v8362 = vadd.f32 %v7506, %v8192
      %v8363 = vadd.f32 %v7507, %v8197
      %v8364 = vadd.f32 %v7508, %v8202
      %v8365 = vadd.f32 %v7509, %v8207
      %v8366 = vadd.f32 %v7510, %v8212
      %v8367 = vadd.f32 %v7511, %v8217
      %v8368 = vadd.f32 %v7512, %v8222
      %v8369 = vadd.f32 %v7513, %v8227
      %v8370 = vadd.f32 %v7514, %v8232
      %v8371 = vadd.f32 %v7515, %v8237
      %v8372 = vadd.f32 %v7516, %v8242
      %v8373 = vrot.slane %v336, 2
      %v8374 = vrot.slane %v337, 2
      %v8375 = vsel %vm2723, %v8373, %v8374
      %v8376 = vrot.slane %v338, 2
      %v8377 = vsel %vm2723, %v8374, %v8376
      %v8378 = vrot.slane %v339, 2
      %v8379 = vsel %vm2723, %v8376, %v8378
      %v8380 = vrot.slane %v340, 2
      %v8381 = vsel %vm2723, %v8378, %v8380
      %s8382 = scalar_lea.vmem %s1, 32
      %v8383 = vld [vmem:[%s8382] sm:$0xf]
      %v8384 = vsel %vm793, %v8375, 0
      %v8386 = vsel %vm793, %v8377, 0
      %v8388 = vsel %vm793, %v8379, 0
      %v8390 = vsel %vm793, %v8381, 0
      %v8393 = vsel %vm1050, %v8383, 0
      %8395 = vmatprep.subr.mxu0 0.0
      %8396 = vmatpush1.msra.mxu0 %v8393
      %8397 = vmatprep.subr.mxu0 0.0
      %8398 = vmatpush1.msra.mxu0 0.0
      %8399 = vmatprep.subr.mxu0 0.0
      %8400 = vmatpush1.msra.mxu0 0.0
      %8401 = vmatprep.subr.mxu0 0.0
      %8402 = vmatpush1.msra.mxu0 0.0
      %8403 = vmatprep.subr.mxu0 0.0
      %8404 = vmatpush1.msra.mxu0 0.0
      %8405 = vmatprep.subr.mxu0 0.0
      %8406 = vmatpush1.msra.mxu0 0.0
      %8407 = vmatprep.subr.mxu0 0.0
      %8408 = vmatpush1.msra.mxu0 0.0
      %8409 = vmatprep.subr.mxu0 0.0
      %8410 = vmatpush1.msra.mxu0 0.0
      %8411 = vmatprep.subr.mxu0 0.0
      %8412 = vmatpush1.msra.mxu0 0.0
      %8413 = vmatprep.subr.mxu0 0.0
      %8414 = vmatpush1.msra.mxu0 0.0
      %8415 = vmatprep.subr.mxu0 0.0
      %8416 = vmatpush1.msra.mxu0 0.0
      %8417 = vmatprep.subr.mxu0 0.0
      %8418 = vmatpush1.msra.mxu0 0.0
      %8419 = vmatprep.subr.mxu0 0.0
      %8420 = vmatpush1.msra.mxu0 0.0
      %8421 = vmatprep.subr.mxu0 0.0
      %8422 = vmatpush1.msra.mxu0 0.0
      %8423 = vmatprep.subr.mxu0 0.0
      %8424 = vmatpush1.msra.mxu0 0.0
      %8425 = vmatprep.subr.mxu0 0.0
      %8426 = vmatpush1.msra.mxu0 0.0
      %8427 = vmatprep.subr.mxu0 0.0
      %8428 = vmatpush1.msra.mxu0 0.0
      %8429 = vmatprep.subr.mxu0 0.0
      %8430 = vmatpush1.msra.mxu0 0.0
      %8431 = vmatprep.subr.mxu0 0.0
      %8432 = vmatpush1.msra.mxu0 0.0
      %8433 = vmatprep.subr.mxu0 0.0
      %8434 = vmatpush1.msra.mxu0 0.0
      %8435 = vmatprep.subr.mxu0 0.0
      %8436 = vmatpush1.msra.mxu0 0.0
      %8437 = vmatprep.subr.mxu0 0.0
      %8438 = vmatpush1.msra.mxu0 0.0
      %8439 = vmatprep.subr.mxu0 0.0
      %8440 = vmatpush1.msra.mxu0 0.0
      %8441 = vmatprep.subr.mxu0 0.0
      %8442 = vmatpush1.msra.mxu0 0.0
      %8443 = vmatprep.subr.mxu0 0.0
      %8444 = vmatpush1.msra.mxu0 0.0
      %8445 = vmatprep.subr.mxu0 0.0
      %8446 = vmatpush1.msra.mxu0 0.0
      %8447 = vmatprep.subr.mxu0 0.0
      %8448 = vmatpush1.msra.mxu0 0.0
      %8449 = vmatprep.subr.mxu0 0.0
      %8450 = vmatpush1.msra.mxu0 0.0
      %8451 = vmatprep.subr.mxu0 0.0
      %8452 = vmatpush1.msra.mxu0 0.0
      %8453 = vmatprep.subr.mxu0 0.0
      %8454 = vmatpush1.msra.mxu0 0.0
      %8455 = vmatprep.subr.mxu0 0.0
      %8456 = vmatpush1.msra.mxu0 0.0
      %8457 = vmatprep.subr.mxu0 0.0
      %8458 = vmatpush1.msra.mxu0 0.0
      %8459 = vmatprep.mubr.f32.mxu0 0.0
      %8460 = vmatmul.mubr.f32.gmra.mrb[0].mxu0 %v3030
      %v8461 = vpop.f32.mrb[0].mxu0
      %v8462 = vadd.f32 0.0, %v8461
      %v8463 = vpop.f32.mrb[0].mxu0
      %8464 = vmatprep.mubr.f32.mxu0 0.0
      %8465 = vmatmul.mubr.f32.gmra.mrb[0].mxu0 %v3032
      %v8466 = vpop.f32.mrb[0].mxu0
      %v8467 = vadd.f32 0.0, %v8466
      %v8468 = vpop.f32.mrb[0].mxu0
      %8469 = vmatprep.mubr.f32.mxu0 0.0
      %8470 = vmatmul.mubr.f32.gmra.mrb[0].mxu0 %v3034
      %v8471 = vpop.f32.mrb[0].mxu0
      %v8472 = vadd.f32 0.0, %v8471
      %v8473 = vpop.f32.mrb[0].mxu0
      %8474 = vmatprep.mubr.f32.mxu0 0.0
      %8475 = vmatmul.mubr.f32.gmra.mrb[0].mxu0 %v3036
      %v8476 = vpop.f32.mrb[0].mxu0
      %v8477 = vadd.f32 0.0, %v8476
      %v8478 = vpop.f32.mrb[0].mxu0
      %8479 = vmatprep.mubr.f32.mxu0 0.0
      %8480 = vmatmul.mubr.f32.gmra.mrb[0].mxu0 %v3038
      %v8481 = vpop.f32.mrb[0].mxu0
      %v8482 = vadd.f32 0.0, %v8481
      %v8483 = vpop.f32.mrb[0].mxu0
      %8484 = vmatprep.mubr.f32.mxu0 0.0
      %8485 = vmatmul.mubr.f32.gmra.mrb[0].mxu0 %v3040
      %v8486 = vpop.f32.mrb[0].mxu0
      %v8487 = vadd.f32 0.0, %v8486
      %v8488 = vpop.f32.mrb[0].mxu0
      %8489 = vmatprep.mubr.f32.mxu0 0.0
      %8490 = vmatmul.mubr.f32.gmra.mrb[0].mxu0 %v3042
      %v8491 = vpop.f32.mrb[0].mxu0
      %v8492 = vadd.f32 0.0, %v8491
      %v8493 = vpop.f32.mrb[0].mxu0
      %8494 = vmatprep.mubr.f32.mxu0 0.0
      %8495 = vmatmul.mubr.f32.gmra.mrb[0].mxu0 %v3044
      %v8496 = vpop.f32.mrb[0].mxu0
      %v8497 = vadd.f32 0.0, %v8496
      %v8498 = vpop.f32.mrb[0].mxu0
      %8499 = vmatprep.mubr.f32.mxu0 0.0
      %8500 = vmatmul.mubr.f32.gmra.mrb[0].mxu0 %v3046
      %v8501 = vpop.f32.mrb[0].mxu0
      %v8502 = vadd.f32 0.0, %v8501
      %v8503 = vpop.f32.mrb[0].mxu0
      %8504 = vmatprep.mubr.f32.mxu0 0.0
      %8505 = vmatmul.mubr.f32.gmra.mrb[0].mxu0 %v3048
      %v8506 = vpop.f32.mrb[0].mxu0
      %v8507 = vadd.f32 0.0, %v8506
      %v8508 = vpop.f32.mrb[0].mxu0
      %8509 = vmatprep.mubr.f32.mxu0 0.0
      %8510 = vmatmul.mubr.f32.gmra.mrb[0].mxu0 %v3050
      %v8511 = vpop.f32.mrb[0].mxu0
      %v8512 = vadd.f32 0.0, %v8511
      %v8513 = vpop.f32.mrb[0].mxu0
      %8514 = vmatprep.mubr.f32.mxu0 0.0
      %8515 = vmatmul.mubr.f32.gmra.mrb[0].mxu0 %v3052
      %v8516 = vpop.f32.mrb[0].mxu0
      %v8517 = vadd.f32 0.0, %v8516
      %v8518 = vpop.f32.mrb[0].mxu0
      %8519 = vmatprep.mubr.f32.mxu0 0.0
      %8520 = vmatmul.mubr.f32.gmra.mrb[0].mxu0 %v3054
      %v8521 = vpop.f32.mrb[0].mxu0
      %v8522 = vadd.f32 0.0, %v8521
      %v8523 = vpop.f32.mrb[0].mxu0
      %8524 = vmatprep.mubr.f32.mxu0 0.0
      %8525 = vmatmul.mubr.f32.gmra.mrb[0].mxu0 %v3056
      %v8526 = vpop.f32.mrb[0].mxu0
      %v8527 = vadd.f32 0.0, %v8526
      %v8528 = vpop.f32.mrb[0].mxu0
      %8529 = vmatprep.mubr.f32.mxu0 0.0
      %8530 = vmatmul.mubr.f32.gmra.mrb[0].mxu0 %v3058
      %v8531 = vpop.f32.mrb[0].mxu0
      %v8532 = vadd.f32 0.0, %v8531
      %v8533 = vpop.f32.mrb[0].mxu0
      %8534 = vmatprep.mubr.f32.mxu0 0.0
      %8535 = vmatmul.mubr.f32.gmra.mrb[0].mxu0 %v3060
      %v8536 = vpop.f32.mrb[0].mxu0
      %v8537 = vadd.f32 0.0, %v8536
      %v8538 = vpop.f32.mrb[0].mxu0
      %8539 = vmatprep.mubr.f32.mxu0 0.0
      %8540 = vmatmul.mubr.f32.gmra.mrb[0].mxu0 %v3062
      %v8541 = vpop.f32.mrb[0].mxu0
      %v8542 = vadd.f32 0.0, %v8541
      %v8543 = vpop.f32.mrb[0].mxu0
      %8544 = vmatprep.mubr.f32.mxu0 0.0
      %8545 = vmatmul.mubr.f32.gmra.mrb[0].mxu0 %v3064
      %v8546 = vpop.f32.mrb[0].mxu0
      %v8547 = vadd.f32 0.0, %v8546
      %v8548 = vpop.f32.mrb[0].mxu0
      %8549 = vmatprep.mubr.f32.mxu0 0.0
      %8550 = vmatmul.mubr.f32.gmra.mrb[0].mxu0 %v3066
      %v8551 = vpop.f32.mrb[0].mxu0
      %v8552 = vadd.f32 0.0, %v8551
      %v8553 = vpop.f32.mrb[0].mxu0
      %8554 = vmatprep.mubr.f32.mxu0 0.0
      %8555 = vmatmul.mubr.f32.gmra.mrb[0].mxu0 %v3068
      %v8556 = vpop.f32.mrb[0].mxu0
      %v8557 = vadd.f32 0.0, %v8556
      %v8558 = vpop.f32.mrb[0].mxu0
      %8559 = vmatprep.mubr.f32.mxu0 0.0
      %8560 = vmatmul.mubr.f32.gmra.mrb[0].mxu0 %v3070
      %v8561 = vpop.f32.mrb[0].mxu0
      %v8562 = vadd.f32 0.0, %v8561
      %v8563 = vpop.f32.mrb[0].mxu0
      %8564 = vmatprep.mubr.f32.mxu0 0.0
      %8565 = vmatmul.mubr.f32.gmra.mrb[0].mxu0 %v3072
      %v8566 = vpop.f32.mrb[0].mxu0
      %v8567 = vadd.f32 0.0, %v8566
      %v8568 = vpop.f32.mrb[0].mxu0
      %8569 = vmatprep.mubr.f32.mxu0 0.0
      %8570 = vmatmul.mubr.f32.gmra.mrb[0].mxu0 %v3074
      %v8571 = vpop.f32.mrb[0].mxu0
      %v8572 = vadd.f32 0.0, %v8571
      %v8573 = vpop.f32.mrb[0].mxu0
      %8574 = vmatprep.mubr.f32.mxu0 0.0
      %8575 = vmatmul.mubr.f32.gmra.mrb[0].mxu0 %v3076
      %v8576 = vpop.f32.mrb[0].mxu0
      %v8577 = vadd.f32 0.0, %v8576
      %v8578 = vpop.f32.mrb[0].mxu0
      %8579 = vmatprep.mubr.f32.mxu0 0.0
      %8580 = vmatmul.mubr.f32.gmra.mrb[0].mxu0 %v3078
      %v8581 = vpop.f32.mrb[0].mxu0
      %v8582 = vadd.f32 0.0, %v8581
      %v8583 = vpop.f32.mrb[0].mxu0
      %8584 = vmatprep.mubr.f32.mxu0 0.0
      %8585 = vmatmul.mubr.f32.gmra.mrb[0].mxu0 %v3080
      %v8586 = vpop.f32.mrb[0].mxu0
      %v8587 = vadd.f32 0.0, %v8586
      %v8588 = vpop.f32.mrb[0].mxu0
      %8589 = vmatprep.mubr.f32.mxu0 0.0
      %8590 = vmatmul.mubr.f32.gmra.mrb[0].mxu0 %v3082
      %v8591 = vpop.f32.mrb[0].mxu0
      %v8592 = vadd.f32 0.0, %v8591
      %v8593 = vpop.f32.mrb[0].mxu0
      %8594 = vmatprep.mubr.f32.mxu0 0.0
      %8595 = vmatmul.mubr.f32.gmra.mrb[0].mxu0 %v3084
      %v8596 = vpop.f32.mrb[0].mxu0
      %v8597 = vadd.f32 0.0, %v8596
      %v8598 = vpop.f32.mrb[0].mxu0
      %8599 = vmatprep.mubr.f32.mxu0 0.0
      %8600 = vmatmul.mubr.f32.gmra.mrb[0].mxu0 %v3086
      %v8601 = vpop.f32.mrb[0].mxu0
      %v8602 = vadd.f32 0.0, %v8601
      %v8603 = vpop.f32.mrb[0].mxu0
      %8604 = vmatprep.mubr.f32.mxu0 0.0
      %8605 = vmatmul.mubr.f32.gmra.mrb[0].mxu0 %v3088
      %v8606 = vpop.f32.mrb[0].mxu0
      %v8607 = vadd.f32 0.0, %v8606
      %v8608 = vpop.f32.mrb[0].mxu0
      %8609 = vmatprep.mubr.f32.mxu0 0.0
      %8610 = vmatmul.mubr.f32.gmra.mrb[0].mxu0 %v3090
      %v8611 = vpop.f32.mrb[0].mxu0
      %v8612 = vadd.f32 0.0, %v8611
      %v8613 = vpop.f32.mrb[0].mxu0
      %8614 = vmatprep.mubr.f32.mxu0 0.0
      %8615 = vmatmul.mubr.f32.gmra.mrb[0].mxu0 %v3092
      %v8616 = vpop.f32.mrb[0].mxu0
      %v8617 = vadd.f32 0.0, %v8616
      %v8618 = vpop.f32.mrb[0].mxu0
      %8619 = vmatprep.mubr.f32.mxu0 0.0
      %8620 = vmatmul.mubr.f32.gmra.mrb[0].mxu0 %v3094
      %v8621 = vpop.f32.mrb[0].mxu0
      %v8622 = vadd.f32 0.0, %v8621
      %v8623 = vpop.f32.mrb[0].mxu0
      %8624 = vmatprep.mubr.f32.mxu0 0.0
      %8625 = vmatmul.mubr.f32.gmra.mrb[0].mxu0 %v3096
      %v8626 = vpop.f32.mrb[0].mxu0
      %v8627 = vadd.f32 0.0, %v8626
      %v8628 = vpop.f32.mrb[0].mxu0
      %8629 = vmatprep.mubr.f32.mxu0 0.0
      %8630 = vmatmul.mubr.f32.gmra.mrb[0].mxu0 %v3098
      %v8631 = vpop.f32.mrb[0].mxu0
      %v8632 = vadd.f32 0.0, %v8631
      %v8633 = vpop.f32.mrb[0].mxu0
      %8634 = vmatprep.mubr.f32.mxu0 0.0
      %8635 = vmatmul.mubr.f32.gmra.mrb[0].mxu0 %v3100
      %v8636 = vpop.f32.mrb[0].mxu0
      %v8637 = vadd.f32 0.0, %v8636
      %v8638 = vpop.f32.mrb[0].mxu0
      %8639 = vmatprep.mubr.f32.mxu0 0.0
      %8640 = vmatmul.mubr.f32.gmra.mrb[0].mxu0 %v3102
      %v8641 = vpop.f32.mrb[0].mxu0
      %v8642 = vadd.f32 0.0, %v8641
      %v8643 = vpop.f32.mrb[0].mxu0
      %8644 = vmatprep.mubr.f32.mxu0 0.0
      %8645 = vmatmul.mubr.f32.gmra.mrb[0].mxu0 %v3104
      %v8646 = vpop.f32.mrb[0].mxu0
      %v8647 = vadd.f32 0.0, %v8646
      %v8648 = vpop.f32.mrb[0].mxu0
      %8649 = vmatprep.mubr.f32.mxu0 0.0
      %8650 = vmatmul.mubr.f32.gmra.mrb[0].mxu0 %v3106
      %v8651 = vpop.f32.mrb[0].mxu0
      %v8652 = vadd.f32 0.0, %v8651
      %v8653 = vpop.f32.mrb[0].mxu0
      %8654 = vmatprep.mubr.f32.mxu0 0.0
      %8655 = vmatmul.mubr.f32.gmra.mrb[0].mxu0 %v3108
      %v8656 = vpop.f32.mrb[0].mxu0
      %v8657 = vadd.f32 0.0, %v8656
      %v8658 = vpop.f32.mrb[0].mxu0
      %8659 = vmatprep.mubr.f32.mxu0 0.0
      %8660 = vmatmul.mubr.f32.gmra.mrb[0].mxu0 %v3110
      %v8661 = vpop.f32.mrb[0].mxu0
      %v8662 = vadd.f32 0.0, %v8661
      %v8663 = vpop.f32.mrb[0].mxu0
      %8664 = vmatprep.mubr.f32.mxu0 0.0
      %8665 = vmatmul.mubr.f32.gmra.mrb[0].mxu0 %v3112
      %v8666 = vpop.f32.mrb[0].mxu0
      %v8667 = vadd.f32 0.0, %v8666
      %v8668 = vpop.f32.mrb[0].mxu0
      %8669 = vmatprep.mubr.f32.mxu0 0.0
      %8670 = vmatmul.mubr.f32.gmra.mrb[0].mxu0 %v3114
      %v8671 = vpop.f32.mrb[0].mxu0
      %v8672 = vadd.f32 0.0, %v8671
      %v8673 = vpop.f32.mrb[0].mxu0
      %8674 = vmatprep.mubr.f32.mxu0 0.0
      %8675 = vmatmul.mubr.f32.gmra.mrb[0].mxu0 %v3116
      %v8676 = vpop.f32.mrb[0].mxu0
      %v8677 = vadd.f32 0.0, %v8676
      %v8678 = vpop.f32.mrb[0].mxu0
      %8679 = vmatprep.mubr.f32.mxu0 0.0
      %8680 = vmatmul.mubr.f32.gmra.mrb[0].mxu0 %v3118
      %v8681 = vpop.f32.mrb[0].mxu0
      %v8682 = vadd.f32 0.0, %v8681
      %v8683 = vpop.f32.mrb[0].mxu0
      %8684 = vmatprep.mubr.f32.mxu0 0.0
      %8685 = vmatmul.mubr.f32.gmra.mrb[0].mxu0 %v3120
      %v8686 = vpop.f32.mrb[0].mxu0
      %v8687 = vadd.f32 0.0, %v8686
      %v8688 = vpop.f32.mrb[0].mxu0
      %8689 = vmatprep.mubr.f32.mxu0 0.0
      %8690 = vmatmul.mubr.f32.gmra.mrb[0].mxu0 %v3122
      %v8691 = vpop.f32.mrb[0].mxu0
      %v8692 = vadd.f32 0.0, %v8691
      %v8693 = vpop.f32.mrb[0].mxu0
      %8694 = vmatprep.mubr.f32.mxu0 0.0
      %8695 = vmatmul.mubr.f32.gmra.mrb[0].mxu0 %v3124
      %v8696 = vpop.f32.mrb[0].mxu0
      %v8697 = vadd.f32 0.0, %v8696
      %v8698 = vpop.f32.mrb[0].mxu0
      %8699 = vmatprep.mubr.f32.mxu0 0.0
      %8700 = vmatmul.mubr.f32.gmra.mrb[0].mxu0 %v3126
      %v8701 = vpop.f32.mrb[0].mxu0
      %v8702 = vadd.f32 0.0, %v8701
      %v8703 = vpop.f32.mrb[0].mxu0
      %8704 = vmatprep.mubr.f32.mxu0 0.0
      %8705 = vmatmul.mubr.f32.gmra.mrb[0].mxu0 %v3128
      %v8706 = vpop.f32.mrb[0].mxu0
      %v8707 = vadd.f32 0.0, %v8706
      %v8708 = vpop.f32.mrb[0].mxu0
      %8709 = vmatprep.mubr.f32.mxu0 0.0
      %8710 = vmatmul.mubr.f32.gmra.mrb[0].mxu0 %v3130
      %v8711 = vpop.f32.mrb[0].mxu0
      %v8712 = vadd.f32 0.0, %v8711
      %v8713 = vpop.f32.mrb[0].mxu0
      %8714 = vmatprep.mubr.f32.mxu0 0.0
      %8715 = vmatmul.mubr.f32.gmra.mrb[0].mxu0 %v3132
      %v8716 = vpop.f32.mrb[0].mxu0
      %v8717 = vadd.f32 0.0, %v8716
      %v8718 = vpop.f32.mrb[0].mxu0
      %8719 = vmatprep.mubr.f32.mxu0 0.0
      %8720 = vmatmul.mubr.f32.gmra.mrb[0].mxu0 %v3134
      %v8721 = vpop.f32.mrb[0].mxu0
      %v8722 = vadd.f32 0.0, %v8721
      %v8723 = vpop.f32.mrb[0].mxu0
      %8724 = vmatprep.mubr.f32.mxu0 0.0
      %8725 = vmatmul.mubr.f32.gmra.mrb[0].mxu0 %v3136
      %v8726 = vpop.f32.mrb[0].mxu0
      %v8727 = vadd.f32 0.0, %v8726
      %v8728 = vpop.f32.mrb[0].mxu0
      %8729 = vmatprep.mubr.f32.mxu0 0.0
      %8730 = vmatmul.mubr.f32.gmra.mrb[0].mxu0 %v3138
      %v8731 = vpop.f32.mrb[0].mxu0
      %v8732 = vadd.f32 0.0, %v8731
      %v8733 = vpop.f32.mrb[0].mxu0
      %8734 = vmatprep.mubr.f32.mxu0 0.0
      %8735 = vmatmul.mubr.f32.gmra.mrb[0].mxu0 %v3140
      %v8736 = vpop.f32.mrb[0].mxu0
      %v8737 = vadd.f32 0.0, %v8736
      %v8738 = vpop.f32.mrb[0].mxu0
      %8739 = vmatprep.mubr.f32.mxu0 0.0
      %8740 = vmatmul.mubr.f32.gmra.mrb[0].mxu0 %v3142
      %v8741 = vpop.f32.mrb[0].mxu0
      %v8742 = vadd.f32 0.0, %v8741
      %v8743 = vpop.f32.mrb[0].mxu0
      %8744 = vmatprep.mubr.f32.mxu0 0.0
      %8745 = vmatmul.mubr.f32.gmra.mrb[0].mxu0 %v3144
      %v8746 = vpop.f32.mrb[0].mxu0
      %v8747 = vadd.f32 0.0, %v8746
      %v8748 = vpop.f32.mrb[0].mxu0
      %8749 = vmatprep.mubr.f32.mxu0 0.0
      %8750 = vmatmul.mubr.f32.gmra.mrb[0].mxu0 %v3146
      %v8751 = vpop.f32.mrb[0].mxu0
      %v8752 = vadd.f32 0.0, %v8751
      %v8753 = vpop.f32.mrb[0].mxu0
      %8754 = vmatprep.mubr.f32.mxu0 0.0
      %8755 = vmatmul.mubr.f32.gmra.mrb[0].mxu0 %v3148
      %v8756 = vpop.f32.mrb[0].mxu0
      %v8757 = vadd.f32 0.0, %v8756
      %v8758 = vpop.f32.mrb[0].mxu0
      %8759 = vmatprep.mubr.f32.mxu0 0.0
      %8760 = vmatmul.mubr.f32.gmra.mrb[0].mxu0 %v3150
      %v8761 = vpop.f32.mrb[0].mxu0
      %v8762 = vadd.f32 0.0, %v8761
      %v8763 = vpop.f32.mrb[0].mxu0
      %8764 = vmatprep.mubr.f32.mxu0 0.0
      %8765 = vmatmul.mubr.f32.gmra.mrb[0].mxu0 %v3152
      %v8766 = vpop.f32.mrb[0].mxu0
      %v8767 = vadd.f32 0.0, %v8766
      %v8768 = vpop.f32.mrb[0].mxu0
      %8769 = vmatprep.mubr.f32.mxu0 0.0
      %8770 = vmatmul.mubr.f32.gmra.mrb[0].mxu0 %v3154
      %v8771 = vpop.f32.mrb[0].mxu0
      %v8772 = vadd.f32 0.0, %v8771
      %v8773 = vpop.f32.mrb[0].mxu0
      %8774 = vmatprep.mubr.f32.mxu0 0.0
      %8775 = vmatmul.mubr.f32.gmra.mrb[0].mxu0 %v3156
      %v8776 = vpop.f32.mrb[0].mxu0
      %v8777 = vadd.f32 0.0, %v8776
      %v8778 = vpop.f32.mrb[0].mxu0
      %8779 = vmatprep.mubr.f32.mxu0 0.0
      %8780 = vmatmul.mubr.f32.gmra.mrb[0].mxu0 %v3158
      %v8781 = vpop.f32.mrb[0].mxu0
      %v8782 = vadd.f32 0.0, %v8781
      %v8783 = vpop.f32.mrb[0].mxu0
      %8784 = vmatprep.mubr.f32.mxu0 0.0
      %8785 = vmatmul.mubr.f32.gmra.mrb[0].mxu0 %v3160
      %v8786 = vpop.f32.mrb[0].mxu0
      %v8787 = vadd.f32 0.0, %v8786
      %v8788 = vpop.f32.mrb[0].mxu0
      %8789 = vmatprep.mubr.f32.mxu0 0.0
      %8790 = vmatmul.mubr.f32.gmra.mrb[0].mxu0 %v3162
      %v8791 = vpop.f32.mrb[0].mxu0
      %v8792 = vadd.f32 0.0, %v8791
      %v8793 = vpop.f32.mrb[0].mxu0
      %8794 = vmatprep.mubr.f32.mxu0 0.0
      %8795 = vmatmul.mubr.f32.gmra.mrb[0].mxu0 %v3164
      %v8796 = vpop.f32.mrb[0].mxu0
      %v8797 = vadd.f32 0.0, %v8796
      %v8798 = vpop.f32.mrb[0].mxu0
      %8799 = vmatprep.mubr.f32.mxu0 0.0
      %8800 = vmatmul.mubr.f32.gmra.mrb[0].mxu0 %v3166
      %v8801 = vpop.f32.mrb[0].mxu0
      %v8802 = vadd.f32 0.0, %v8801
      %v8803 = vpop.f32.mrb[0].mxu0
      %8804 = vmatprep.mubr.f32.mxu0 0.0
      %8805 = vmatmul.mubr.f32.gmra.mrb[0].mxu0 %v3168
      %v8806 = vpop.f32.mrb[0].mxu0
      %v8807 = vadd.f32 0.0, %v8806
      %v8808 = vpop.f32.mrb[0].mxu0
      %8809 = vmatprep.mubr.f32.mxu0 0.0
      %8810 = vmatmul.mubr.f32.gmra.mrb[0].mxu0 %v3170
      %v8811 = vpop.f32.mrb[0].mxu0
      %v8812 = vadd.f32 0.0, %v8811
      %v8813 = vpop.f32.mrb[0].mxu0
      %8814 = vmatprep.mubr.f32.mxu0 0.0
      %8815 = vmatmul.mubr.f32.gmra.mrb[0].mxu0 %v3172
      %v8816 = vpop.f32.mrb[0].mxu0
      %v8817 = vadd.f32 0.0, %v8816
      %v8818 = vpop.f32.mrb[0].mxu0
      %8819 = vmatprep.mubr.f32.mxu0 0.0
      %8820 = vmatmul.mubr.f32.gmra.mrb[0].mxu0 %v3174
      %v8821 = vpop.f32.mrb[0].mxu0
      %v8822 = vadd.f32 0.0, %v8821
      %v8823 = vpop.f32.mrb[0].mxu0
      %8824 = vmatprep.mubr.f32.mxu0 0.0
      %8825 = vmatmul.mubr.f32.gmra.mrb[0].mxu0 %v3176
      %v8826 = vpop.f32.mrb[0].mxu0
      %v8827 = vadd.f32 0.0, %v8826
      %v8828 = vpop.f32.mrb[0].mxu0
      %8829 = vmatprep.mubr.f32.mxu0 0.0
      %8830 = vmatmul.mubr.f32.gmra.mrb[0].mxu0 %v3178
      %v8831 = vpop.f32.mrb[0].mxu0
      %v8832 = vadd.f32 0.0, %v8831
      %v8833 = vpop.f32.mrb[0].mxu0
      %8834 = vmatprep.mubr.f32.mxu0 0.0
      %8835 = vmatmul.mubr.f32.gmra.mrb[0].mxu0 %v3180
      %v8836 = vpop.f32.mrb[0].mxu0
      %v8837 = vadd.f32 0.0, %v8836
      %v8838 = vpop.f32.mrb[0].mxu0
      %8839 = vmatprep.mubr.f32.mxu0 0.0
      %8840 = vmatmul.mubr.f32.gmra.mrb[0].mxu0 %v3182
      %v8841 = vpop.f32.mrb[0].mxu0
      %v8842 = vadd.f32 0.0, %v8841
      %v8843 = vpop.f32.mrb[0].mxu0
      %8844 = vmatprep.mubr.f32.mxu0 0.0
      %8845 = vmatmul.mubr.f32.gmra.mrb[0].mxu0 %v3184
      %v8846 = vpop.f32.mrb[0].mxu0
      %v8847 = vadd.f32 0.0, %v8846
      %v8848 = vpop.f32.mrb[0].mxu0
      %8849 = vmatprep.mubr.f32.mxu0 0.0
      %8850 = vmatmul.mubr.f32.gmra.mrb[0].mxu0 %v3186
      %v8851 = vpop.f32.mrb[0].mxu0
      %v8852 = vadd.f32 0.0, %v8851
      %v8853 = vpop.f32.mrb[0].mxu0
      %8854 = vmatprep.mubr.f32.mxu0 0.0
      %8855 = vmatmul.mubr.f32.gmra.mrb[0].mxu0 %v3188
      %v8856 = vpop.f32.mrb[0].mxu0
      %v8857 = vadd.f32 0.0, %v8856
      %v8858 = vpop.f32.mrb[0].mxu0
      %8859 = vmatprep.mubr.f32.mxu0 0.0
      %8860 = vmatmul.mubr.f32.gmra.mrb[0].mxu0 %v3190
      %v8861 = vpop.f32.mrb[0].mxu0
      %v8862 = vadd.f32 0.0, %v8861
      %v8863 = vpop.f32.mrb[0].mxu0
      %8864 = vmatprep.mubr.f32.mxu0 0.0
      %8865 = vmatmul.mubr.f32.gmra.mrb[0].mxu0 %v3192
      %v8866 = vpop.f32.mrb[0].mxu0
      %v8867 = vadd.f32 0.0, %v8866
      %v8868 = vpop.f32.mrb[0].mxu0
      %8869 = vmatprep.mubr.f32.mxu0 0.0
      %8870 = vmatmul.mubr.f32.gmra.mrb[0].mxu0 %v3194
      %v8871 = vpop.f32.mrb[0].mxu0
      %v8872 = vadd.f32 0.0, %v8871
      %v8873 = vpop.f32.mrb[0].mxu0
      %8874 = vmatprep.mubr.f32.mxu0 0.0
      %8875 = vmatmul.mubr.f32.gmra.mrb[0].mxu0 %v3196
      %v8876 = vpop.f32.mrb[0].mxu0
      %v8877 = vadd.f32 0.0, %v8876
      %v8878 = vpop.f32.mrb[0].mxu0
      %8879 = vmatprep.mubr.f32.mxu0 0.0
      %8880 = vmatmul.mubr.f32.gmra.mrb[0].mxu0 %v3198
      %v8881 = vpop.f32.mrb[0].mxu0
      %v8882 = vadd.f32 0.0, %v8881
      %v8883 = vpop.f32.mrb[0].mxu0
      %8884 = vmatprep.mubr.f32.mxu0 0.0
      %8885 = vmatmul.mubr.f32.gmra.mrb[0].mxu0 %v3200
      %v8886 = vpop.f32.mrb[0].mxu0
      %v8887 = vadd.f32 0.0, %v8886
      %v8888 = vpop.f32.mrb[0].mxu0
      %8889 = vmatprep.mubr.f32.mxu0 0.0
      %8890 = vmatmul.mubr.f32.gmra.mrb[0].mxu0 %v3202
      %v8891 = vpop.f32.mrb[0].mxu0
      %v8892 = vadd.f32 0.0, %v8891
      %v8893 = vpop.f32.mrb[0].mxu0
      %8894 = vmatprep.mubr.f32.mxu0 0.0
      %8895 = vmatmul.mubr.f32.gmra.mrb[0].mxu0 %v3204
      %v8896 = vpop.f32.mrb[0].mxu0
      %v8897 = vadd.f32 0.0, %v8896
      %v8898 = vpop.f32.mrb[0].mxu0
      %8899 = vmatprep.mubr.f32.mxu0 0.0
      %8900 = vmatmul.mubr.f32.gmra.mrb[0].mxu0 %v3206
      %v8901 = vpop.f32.mrb[0].mxu0
      %v8902 = vadd.f32 0.0, %v8901
      %v8903 = vpop.f32.mrb[0].mxu0
      %8904 = vmatprep.mubr.f32.mxu0 0.0
      %8905 = vmatmul.mubr.f32.gmra.mrb[0].mxu0 %v3208
      %v8906 = vpop.f32.mrb[0].mxu0
      %v8907 = vadd.f32 0.0, %v8906
      %v8908 = vpop.f32.mrb[0].mxu0
      %8909 = vmatprep.mubr.f32.mxu0 0.0
      %8910 = vmatmul.mubr.f32.gmra.mrb[0].mxu0 %v3210
      %v8911 = vpop.f32.mrb[0].mxu0
      %v8912 = vadd.f32 0.0, %v8911
      %v8913 = vpop.f32.mrb[0].mxu0
      %8914 = vmatprep.mubr.f32.mxu0 0.0
      %8915 = vmatmul.mubr.f32.gmra.mrb[0].mxu0 %v3212
      %v8916 = vpop.f32.mrb[0].mxu0
      %v8917 = vadd.f32 0.0, %v8916
      %v8918 = vpop.f32.mrb[0].mxu0
      %8919 = vmatprep.mubr.f32.mxu0 0.0
      %8920 = vmatmul.mubr.f32.gmra.mrb[0].mxu0 %v3214
      %v8921 = vpop.f32.mrb[0].mxu0
      %v8922 = vadd.f32 0.0, %v8921
      %v8923 = vpop.f32.mrb[0].mxu0
      %8924 = vmatprep.mubr.f32.mxu0 0.0
      %8925 = vmatmul.mubr.f32.gmra.mrb[0].mxu0 %v3216
      %v8926 = vpop.f32.mrb[0].mxu0
      %v8927 = vadd.f32 0.0, %v8926
      %v8928 = vpop.f32.mrb[0].mxu0
      %8929 = vmatprep.mubr.f32.mxu0 0.0
      %8930 = vmatmul.mubr.f32.gmra.mrb[0].mxu0 %v3218
      %v8931 = vpop.f32.mrb[0].mxu0
      %v8932 = vadd.f32 0.0, %v8931
      %v8933 = vpop.f32.mrb[0].mxu0
      %8934 = vmatprep.mubr.f32.mxu0 0.0
      %8935 = vmatmul.mubr.f32.gmra.mrb[0].mxu0 %v3220
      %v8936 = vpop.f32.mrb[0].mxu0
      %v8937 = vadd.f32 0.0, %v8936
      %v8938 = vpop.f32.mrb[0].mxu0
      %8939 = vmatprep.mubr.f32.mxu0 0.0
      %8940 = vmatmul.mubr.f32.gmra.mrb[0].mxu0 %v3222
      %v8941 = vpop.f32.mrb[0].mxu0
      %v8942 = vadd.f32 0.0, %v8941
      %v8943 = vpop.f32.mrb[0].mxu0
      %8944 = vmatprep.mubr.f32.mxu0 0.0
      %8945 = vmatmul.mubr.f32.gmra.mrb[0].mxu0 %v3224
      %v8946 = vpop.f32.mrb[0].mxu0
      %v8947 = vadd.f32 0.0, %v8946
      %v8948 = vpop.f32.mrb[0].mxu0
      %8949 = vmatprep.mubr.f32.mxu0 0.0
      %8950 = vmatmul.mubr.f32.gmra.mrb[0].mxu0 %v3226
      %v8951 = vpop.f32.mrb[0].mxu0
      %v8952 = vadd.f32 0.0, %v8951
      %v8953 = vpop.f32.mrb[0].mxu0
      %8954 = vmatprep.mubr.f32.mxu0 0.0
      %8955 = vmatmul.mubr.f32.gmra.mrb[0].mxu0 %v3228
      %v8956 = vpop.f32.mrb[0].mxu0
      %v8957 = vadd.f32 0.0, %v8956
      %v8958 = vpop.f32.mrb[0].mxu0
      %8959 = vmatprep.mubr.f32.mxu0 0.0
      %8960 = vmatmul.mubr.f32.gmra.mrb[0].mxu0 %v3230
      %v8961 = vpop.f32.mrb[0].mxu0
      %v8962 = vadd.f32 0.0, %v8961
      %v8963 = vpop.f32.mrb[0].mxu0
      %8964 = vmatprep.mubr.f32.mxu0 0.0
      %8965 = vmatmul.mubr.f32.gmra.mrb[0].mxu0 %v3232
      %v8966 = vpop.f32.mrb[0].mxu0
      %v8967 = vadd.f32 0.0, %v8966
      %v8968 = vpop.f32.mrb[0].mxu0
      %8969 = vmatprep.mubr.f32.mxu0 0.0
      %8970 = vmatmul.mubr.f32.gmra.mrb[0].mxu0 %v3234
      %v8971 = vpop.f32.mrb[0].mxu0
      %v8972 = vadd.f32 0.0, %v8971
      %v8973 = vpop.f32.mrb[0].mxu0
      %8974 = vmatprep.mubr.f32.mxu0 0.0
      %8975 = vmatmul.mubr.f32.gmra.mrb[0].mxu0 %v3236
      %v8976 = vpop.f32.mrb[0].mxu0
      %v8977 = vadd.f32 0.0, %v8976
      %v8978 = vpop.f32.mrb[0].mxu0
      %8979 = vmatprep.mubr.f32.mxu0 0.0
      %8980 = vmatmul.mubr.f32.gmra.mrb[0].mxu0 %v3238
      %v8981 = vpop.f32.mrb[0].mxu0
      %v8982 = vadd.f32 0.0, %v8981
      %v8983 = vpop.f32.mrb[0].mxu0
      %8984 = vmatprep.mubr.f32.mxu0 0.0
      %8985 = vmatmul.mubr.f32.gmra.mrb[0].mxu0 %v3240
      %v8986 = vpop.f32.mrb[0].mxu0
      %v8987 = vadd.f32 0.0, %v8986
      %v8988 = vpop.f32.mrb[0].mxu0
      %8989 = vmatprep.mubr.f32.mxu0 0.0
      %8990 = vmatmul.mubr.f32.gmra.mrb[0].mxu0 %v3242
      %v8991 = vpop.f32.mrb[0].mxu0
      %v8992 = vadd.f32 0.0, %v8991
      %v8993 = vpop.f32.mrb[0].mxu0
      %8994 = vmatprep.mubr.f32.mxu0 0.0
      %8995 = vmatmul.mubr.f32.gmra.mrb[0].mxu0 %v3244
      %v8996 = vpop.f32.mrb[0].mxu0
      %v8997 = vadd.f32 0.0, %v8996
      %v8998 = vpop.f32.mrb[0].mxu0
      %8999 = vmatprep.mubr.f32.mxu0 0.0
      %9000 = vmatmul.mubr.f32.gmra.mrb[0].mxu0 %v3246
      %v9001 = vpop.f32.mrb[0].mxu0
      %v9002 = vadd.f32 0.0, %v9001
      %v9003 = vpop.f32.mrb[0].mxu0
      %9004 = vmatprep.mubr.f32.mxu0 0.0
      %9005 = vmatmul.mubr.f32.gmra.mrb[0].mxu0 %v3248
      %v9006 = vpop.f32.mrb[0].mxu0
      %v9007 = vadd.f32 0.0, %v9006
      %v9008 = vpop.f32.mrb[0].mxu0
      %9009 = vmatprep.mubr.f32.mxu0 0.0
      %9010 = vmatmul.mubr.f32.gmra.mrb[0].mxu0 %v3250
      %v9011 = vpop.f32.mrb[0].mxu0
      %v9012 = vadd.f32 0.0, %v9011
      %v9013 = vpop.f32.mrb[0].mxu0
      %9014 = vmatprep.mubr.f32.mxu0 0.0
      %9015 = vmatmul.mubr.f32.gmra.mrb[0].mxu0 %v3252
      %v9016 = vpop.f32.mrb[0].mxu0
      %v9017 = vadd.f32 0.0, %v9016
      %v9018 = vpop.f32.mrb[0].mxu0
      %9019 = vmatprep.mubr.f32.mxu0 0.0
      %9020 = vmatmul.mubr.f32.gmra.mrb[0].mxu0 %v3254
      %v9021 = vpop.f32.mrb[0].mxu0
      %v9022 = vadd.f32 0.0, %v9021
      %v9023 = vpop.f32.mrb[0].mxu0
      %9024 = vmatprep.mubr.f32.mxu0 0.0
      %9025 = vmatmul.mubr.f32.gmra.mrb[0].mxu0 %v3256
      %v9026 = vpop.f32.mrb[0].mxu0
      %v9027 = vadd.f32 0.0, %v9026
      %v9028 = vpop.f32.mrb[0].mxu0
      %9029 = vmatprep.mubr.f32.mxu0 0.0
      %9030 = vmatmul.mubr.f32.gmra.mrb[0].mxu0 %v3258
      %v9031 = vpop.f32.mrb[0].mxu0
      %v9032 = vadd.f32 0.0, %v9031
      %v9033 = vpop.f32.mrb[0].mxu0
      %9034 = vmatprep.mubr.f32.mxu0 0.0
      %9035 = vmatmul.mubr.f32.gmra.mrb[0].mxu0 %v3260
      %v9036 = vpop.f32.mrb[0].mxu0
      %v9037 = vadd.f32 0.0, %v9036
      %v9038 = vpop.f32.mrb[0].mxu0
      %9039 = vmatprep.mubr.f32.mxu0 0.0
      %9040 = vmatmul.mubr.f32.gmra.mrb[0].mxu0 %v3262
      %v9041 = vpop.f32.mrb[0].mxu0
      %v9042 = vadd.f32 0.0, %v9041
      %v9043 = vpop.f32.mrb[0].mxu0
      %9044 = vmatprep.mubr.f32.mxu0 0.0
      %9045 = vmatmul.mubr.f32.gmra.mrb[0].mxu0 %v3264
      %v9046 = vpop.f32.mrb[0].mxu0
      %v9047 = vadd.f32 0.0, %v9046
      %v9048 = vpop.f32.mrb[0].mxu0
      %9049 = vmatprep.mubr.f32.mxu0 0.0
      %9050 = vmatmul.mubr.f32.gmra.mrb[0].mxu0 %v3266
      %v9051 = vpop.f32.mrb[0].mxu0
      %v9052 = vadd.f32 0.0, %v9051
      %v9053 = vpop.f32.mrb[0].mxu0
      %9054 = vmatprep.mubr.f32.mxu0 0.0
      %9055 = vmatmul.mubr.f32.gmra.mrb[0].mxu0 %v3268
      %v9056 = vpop.f32.mrb[0].mxu0
      %v9057 = vadd.f32 0.0, %v9056
      %v9058 = vpop.f32.mrb[0].mxu0
      %9059 = vmatprep.mubr.f32.mxu0 0.0
      %9060 = vmatmul.mubr.f32.gmra.mrb[0].mxu0 %v5823
      %v9061 = vpop.f32.mrb[0].mxu0
      %v9062 = vadd.f32 0.0, %v9061
      %v9063 = vpop.f32.mrb[0].mxu0
      %9064 = vmatprep.mubr.f32.mxu0 0.0
      %9065 = vmatmul.mubr.f32.gmra.mrb[0].mxu0 %v5825
      %v9066 = vpop.f32.mrb[0].mxu0
      %v9067 = vadd.f32 0.0, %v9066
      %v9068 = vpop.f32.mrb[0].mxu0
      %9069 = vmatprep.mubr.f32.mxu0 0.0
      %9070 = vmatmul.mubr.f32.gmra.mrb[0].mxu0 %v5827
      %v9071 = vpop.f32.mrb[0].mxu0
      %v9072 = vadd.f32 0.0, %v9071
      %v9073 = vpop.f32.mrb[0].mxu0
      %9074 = vmatprep.mubr.f32.mxu0 0.0
      %9075 = vmatmul.mubr.f32.gmra.mrb[0].mxu0 %v5829
      %v9076 = vpop.f32.mrb[0].mxu0
      %v9077 = vadd.f32 0.0, %v9076
      %v9078 = vpop.f32.mrb[0].mxu0
      %9079 = vmatprep.mubr.f32.mxu0 0.0
      %9080 = vmatmul.mubr.f32.gmra.mrb[0].mxu0 %v8384
      %v9081 = vpop.f32.mrb[0].mxu0
      %v9082 = vadd.f32 0.0, %v9081
      %v9083 = vpop.f32.mrb[0].mxu0
      %9084 = vmatprep.mubr.f32.mxu0 0.0
      %9085 = vmatmul.mubr.f32.gmra.mrb[0].mxu0 %v8386
      %v9086 = vpop.f32.mrb[0].mxu0
      %v9087 = vadd.f32 0.0, %v9086
      %v9088 = vpop.f32.mrb[0].mxu0
      %9089 = vmatprep.mubr.f32.mxu0 0.0
      %9090 = vmatmul.mubr.f32.gmra.mrb[0].mxu0 %v8388
      %v9091 = vpop.f32.mrb[0].mxu0
      %v9092 = vadd.f32 0.0, %v9091
      %v9093 = vpop.f32.mrb[0].mxu0
      %9094 = vmatprep.mubr.f32.mxu0 0.0
      %9095 = vmatmul.mubr.f32.gmra.mrb[0].mxu0 %v8390
      %v9096 = vpop.f32.mrb[0].mxu0
      %v9097 = vadd.f32 0.0, %v9096
      %v9098 = vpop.f32.mrb[0].mxu0
      %9099 = vdwg.mxu0
      %v9100 = vadd.f32 %v8245, %v8462
      %v9101 = vadd.f32 %v8246, %v8467
      %v9102 = vadd.f32 %v8247, %v8472
      %v9103 = vadd.f32 %v8248, %v8477
      %v9104 = vadd.f32 %v8249, %v8482
      %v9105 = vadd.f32 %v8250, %v8487
      %v9106 = vadd.f32 %v8251, %v8492
      %v9107 = vadd.f32 %v8252, %v8497
      %v9108 = vadd.f32 %v8253, %v8502
      %v9109 = vadd.f32 %v8254, %v8507
      %v9110 = vadd.f32 %v8255, %v8512
      %v9111 = vadd.f32 %v8256, %v8517
      %v9112 = vadd.f32 %v8257, %v8522
      %v9113 = vadd.f32 %v8258, %v8527
      %v9114 = vadd.f32 %v8259, %v8532
      %v9115 = vadd.f32 %v8260, %v8537
      %v9116 = vadd.f32 %v8261, %v8542
      %v9117 = vadd.f32 %v8262, %v8547
      %v9118 = vadd.f32 %v8263, %v8552
      %v9119 = vadd.f32 %v8264, %v8557
      %v9120 = vadd.f32 %v8265, %v8562
      %v9121 = vadd.f32 %v8266, %v8567
      %v9122 = vadd.f32 %v8267, %v8572
      %v9123 = vadd.f32 %v8268, %v8577
      %v9124 = vadd.f32 %v8269, %v8582
      %v9125 = vadd.f32 %v8270, %v8587
      %v9126 = vadd.f32 %v8271, %v8592
      %v9127 = vadd.f32 %v8272, %v8597
      %v9128 = vadd.f32 %v8273, %v8602
      %v9129 = vadd.f32 %v8274, %v8607
      %v9130 = vadd.f32 %v8275, %v8612
      %v9131 = vadd.f32 %v8276, %v8617
      %v9132 = vadd.f32 %v8277, %v8622
      %v9133 = vadd.f32 %v8278, %v8627
      %v9134 = vadd.f32 %v8279, %v8632
      %v9135 = vadd.f32 %v8280, %v8637
      %v9136 = vadd.f32 %v8281, %v8642
      %v9137 = vadd.f32 %v8282, %v8647
      %v9138 = vadd.f32 %v8283, %v8652
      %v9139 = vadd.f32 %v8284, %v8657
      %v9140 = vadd.f32 %v8285, %v8662
      %v9141 = vadd.f32 %v8286, %v8667
      %v9142 = vadd.f32 %v8287, %v8672
      %v9143 = vadd.f32 %v8288, %v8677
      %v9144 = vadd.f32 %v8289, %v8682
      %v9145 = vadd.f32 %v8290, %v8687
      %v9146 = vadd.f32 %v8291, %v8692
      %v9147 = vadd.f32 %v8292, %v8697
      %v9148 = vadd.f32 %v8293, %v8702
      %v9149 = vadd.f32 %v8294, %v8707
      %v9150 = vadd.f32 %v8295, %v8712
      %v9151 = vadd.f32 %v8296, %v8717
      %v9152 = vadd.f32 %v8297, %v8722
      %v9153 = vadd.f32 %v8298, %v8727
      %v9154 = vadd.f32 %v8299, %v8732
      %v9155 = vadd.f32 %v8300, %v8737
      %v9156 = vadd.f32 %v8301, %v8742
      %v9157 = vadd.f32 %v8302, %v8747
      %v9158 = vadd.f32 %v8303, %v8752
      %v9159 = vadd.f32 %v8304, %v8757
      %v9160 = vadd.f32 %v8305, %v8762
      %v9161 = vadd.f32 %v8306, %v8767
      %v9162 = vadd.f32 %v8307, %v8772
      %v9163 = vadd.f32 %v8308, %v8777
      %v9164 = vadd.f32 %v8309, %v8782
      %v9165 = vadd.f32 %v8310, %v8787
      %v9166 = vadd.f32 %v8311, %v8792
      %v9167 = vadd.f32 %v8312, %v8797
      %v9168 = vadd.f32 %v8313, %v8802
      %v9169 = vadd.f32 %v8314, %v8807
      %v9170 = vadd.f32 %v8315, %v8812
      %v9171 = vadd.f32 %v8316, %v8817
      %v9172 = vadd.f32 %v8317, %v8822
      %v9173 = vadd.f32 %v8318, %v8827
      %v9174 = vadd.f32 %v8319, %v8832
      %v9175 = vadd.f32 %v8320, %v8837
      %v9176 = vadd.f32 %v8321, %v8842
      %v9177 = vadd.f32 %v8322, %v8847
      %v9178 = vadd.f32 %v8323, %v8852
      %v9179 = vadd.f32 %v8324, %v8857
      %v9180 = vadd.f32 %v8325, %v8862
      %v9181 = vadd.f32 %v8326, %v8867
      %v9182 = vadd.f32 %v8327, %v8872
      %v9183 = vadd.f32 %v8328, %v8877
      %v9184 = vadd.f32 %v8329, %v8882
      %v9185 = vadd.f32 %v8330, %v8887
      %v9186 = vadd.f32 %v8331, %v8892
      %v9187 = vadd.f32 %v8332, %v8897
      %v9188 = vadd.f32 %v8333, %v8902
      %v9189 = vadd.f32 %v8334, %v8907
      %v9190 = vadd.f32 %v8335, %v8912
      %v9191 = vadd.f32 %v8336, %v8917
      %v9192 = vadd.f32 %v8337, %v8922
      %v9193 = vadd.f32 %v8338, %v8927
      %v9194 = vadd.f32 %v8339, %v8932
      %v9195 = vadd.f32 %v8340, %v8937
      %v9196 = vadd.f32 %v8341, %v8942
      %v9197 = vadd.f32 %v8342, %v8947
      %v9198 = vadd.f32 %v8343, %v8952
      %v9199 = vadd.f32 %v8344, %v8957
      %v9200 = vadd.f32 %v8345, %v8962
      %v9201 = vadd.f32 %v8346, %v8967
      %v9202 = vadd.f32 %v8347, %v8972
      %v9203 = vadd.f32 %v8348, %v8977
      %v9204 = vadd.f32 %v8349, %v8982
      %v9205 = vadd.f32 %v8350, %v8987
      %v9206 = vadd.f32 %v8351, %v8992
      %v9207 = vadd.f32 %v8352, %v8997
      %v9208 = vadd.f32 %v8353, %v9002
      %v9209 = vadd.f32 %v8354, %v9007
      %v9210 = vadd.f32 %v8355, %v9012
      %v9211 = vadd.f32 %v8356, %v9017
      %v9212 = vadd.f32 %v8357, %v9022
      %v9213 = vadd.f32 %v8358, %v9027
      %v9214 = vadd.f32 %v8359, %v9032
      %v9215 = vadd.f32 %v8360, %v9037
      %v9216 = vadd.f32 %v8361, %v9042
      %v9217 = vadd.f32 %v8362, %v9047
      %v9218 = vadd.f32 %v8363, %v9052
      %v9219 = vadd.f32 %v8364, %v9057
      %v9220 = vadd.f32 %v8365, %v9062
      %v9221 = vadd.f32 %v8366, %v9067
      %v9222 = vadd.f32 %v8367, %v9072
      %v9223 = vadd.f32 %v8368, %v9077
      %v9224 = vadd.f32 %v8369, %v9082
      %v9225 = vadd.f32 %v8370, %v9087
      %v9226 = vadd.f32 %v8371, %v9092
      %v9227 = vadd.f32 %v8372, %v9097
      %v9228 = vld [vmem:[%s2] sm:$0x1]
      %v9230 = vlaneseq
      %v9231 = vshrl.u32 %v9230, 7
      %v9232 = vsub.s32 0, %v9231
      %v9233 = vrot.slane %v9228, %v9232
      %v9235 = vadd.f32 %v9100, %v9233
      %v9236 = vadd.f32 %v9101, %v9233
      %v9237 = vadd.f32 %v9102, %v9233
      %v9238 = vadd.f32 %v9103, %v9233
      %v9239 = vadd.f32 %v9104, %v9233
      %v9240 = vadd.f32 %v9105, %v9233
      %v9241 = vadd.f32 %v9106, %v9233
      %v9242 = vadd.f32 %v9107, %v9233
      %v9243 = vadd.f32 %v9108, %v9233
      %v9244 = vadd.f32 %v9109, %v9233
      %v9245 = vadd.f32 %v9110, %v9233
      %v9246 = vadd.f32 %v9111, %v9233
      %v9247 = vadd.f32 %v9112, %v9233
      %v9248 = vadd.f32 %v9113, %v9233
      %v9249 = vadd.f32 %v9114, %v9233
      %v9250 = vadd.f32 %v9115, %v9233
      %v9251 = vadd.f32 %v9116, %v9233
      %v9252 = vadd.f32 %v9117, %v9233
      %v9253 = vadd.f32 %v9118, %v9233
      %v9254 = vadd.f32 %v9119, %v9233
      %v9255 = vadd.f32 %v9120, %v9233
      %v9256 = vadd.f32 %v9121, %v9233
      %v9257 = vadd.f32 %v9122, %v9233
      %v9258 = vadd.f32 %v9123, %v9233
      %v9259 = vadd.f32 %v9124, %v9233
      %v9260 = vadd.f32 %v9125, %v9233
      %v9261 = vadd.f32 %v9126, %v9233
      %v9262 = vadd.f32 %v9127, %v9233
      %v9263 = vadd.f32 %v9128, %v9233
      %v9264 = vadd.f32 %v9129, %v9233
      %v9265 = vadd.f32 %v9130, %v9233
      %v9266 = vadd.f32 %v9131, %v9233
      %v9267 = vadd.f32 %v9132, %v9233
      %v9268 = vadd.f32 %v9133, %v9233
      %v9269 = vadd.f32 %v9134, %v9233
      %v9270 = vadd.f32 %v9135, %v9233
      %v9271 = vadd.f32 %v9136, %v9233
      %v9272 = vadd.f32 %v9137, %v9233
      %v9273 = vadd.f32 %v9138, %v9233
      %v9274 = vadd.f32 %v9139, %v9233
      %v9275 = vadd.f32 %v9140, %v9233
      %v9276 = vadd.f32 %v9141, %v9233
      %v9277 = vadd.f32 %v9142, %v9233
      %v9278 = vadd.f32 %v9143, %v9233
      %v9279 = vadd.f32 %v9144, %v9233
      %v9280 = vadd.f32 %v9145, %v9233
      %v9281 = vadd.f32 %v9146, %v9233
      %v9282 = vadd.f32 %v9147, %v9233
      %v9283 = vadd.f32 %v9148, %v9233
      %v9284 = vadd.f32 %v9149, %v9233
      %v9285 = vadd.f32 %v9150, %v9233
      %v9286 = vadd.f32 %v9151, %v9233
      %v9287 = vadd.f32 %v9152, %v9233
      %v9288 = vadd.f32 %v9153, %v9233
      %v9289 = vadd.f32 %v9154, %v9233
      %v9290 = vadd.f32 %v9155, %v9233
      %v9291 = vadd.f32 %v9156, %v9233
      %v9292 = vadd.f32 %v9157, %v9233
      %v9293 = vadd.f32 %v9158, %v9233
      %v9294 = vadd.f32 %v9159, %v9233
      %v9295 = vadd.f32 %v9160, %v9233
      %v9296 = vadd.f32 %v9161, %v9233
      %v9297 = vadd.f32 %v9162, %v9233
      %v9298 = vadd.f32 %v9163, %v9233
      %v9299 = vadd.f32 %v9164, %v9233
      %v9300 = vadd.f32 %v9165, %v9233
      %v9301 = vadd.f32 %v9166, %v9233
      %v9302 = vadd.f32 %v9167, %v9233
      %v9303 = vadd.f32 %v9168, %v9233
      %v9304 = vadd.f32 %v9169, %v9233
      %v9305 = vadd.f32 %v9170, %v9233
      %v9306 = vadd.f32 %v9171, %v9233
      %v9307 = vadd.f32 %v9172, %v9233
      %v9308 = vadd.f32 %v9173, %v9233
      %v9309 = vadd.f32 %v9174, %v9233
      %v9310 = vadd.f32 %v9175, %v9233
      %v9311 = vadd.f32 %v9176, %v9233
      %v9312 = vadd.f32 %v9177, %v9233
      %v9313 = vadd.f32 %v9178, %v9233
      %v9314 = vadd.f32 %v9179, %v9233
      %v9315 = vadd.f32 %v9180, %v9233
      %v9316 = vadd.f32 %v9181, %v9233
      %v9317 = vadd.f32 %v9182, %v9233
      %v9318 = vadd.f32 %v9183, %v9233
      %v9319 = vadd.f32 %v9184, %v9233
      %v9320 = vadd.f32 %v9185, %v9233
      %v9321 = vadd.f32 %v9186, %v9233
      %v9322 = vadd.f32 %v9187, %v9233
      %v9323 = vadd.f32 %v9188, %v9233
      %v9324 = vadd.f32 %v9189, %v9233
      %v9325 = vadd.f32 %v9190, %v9233
      %v9326 = vadd.f32 %v9191, %v9233
      %v9327 = vadd.f32 %v9192, %v9233
      %v9328 = vadd.f32 %v9193, %v9233
      %v9329 = vadd.f32 %v9194, %v9233
      %v9330 = vadd.f32 %v9195, %v9233
      %v9331 = vadd.f32 %v9196, %v9233
      %v9332 = vadd.f32 %v9197, %v9233
      %v9333 = vadd.f32 %v9198, %v9233
      %v9334 = vadd.f32 %v9199, %v9233
      %v9335 = vadd.f32 %v9200, %v9233
      %v9336 = vadd.f32 %v9201, %v9233
      %v9337 = vadd.f32 %v9202, %v9233
      %v9338 = vadd.f32 %v9203, %v9233
      %v9339 = vadd.f32 %v9204, %v9233
      %v9340 = vadd.f32 %v9205, %v9233
      %v9341 = vadd.f32 %v9206, %v9233
      %v9342 = vadd.f32 %v9207, %v9233
      %v9343 = vadd.f32 %v9208, %v9233
      %v9344 = vadd.f32 %v9209, %v9233
      %v9345 = vadd.f32 %v9210, %v9233
      %v9346 = vadd.f32 %v9211, %v9233
      %v9347 = vadd.f32 %v9212, %v9233
      %v9348 = vadd.f32 %v9213, %v9233
      %v9349 = vadd.f32 %v9214, %v9233
      %v9350 = vadd.f32 %v9215, %v9233
      %v9351 = vadd.f32 %v9216, %v9233
      %v9352 = vadd.f32 %v9217, %v9233
      %v9353 = vadd.f32 %v9218, %v9233
      %v9354 = vadd.f32 %v9219, %v9233
      %v9355 = vadd.f32 %v9220, %v9233
      %v9356 = vadd.f32 %v9221, %v9233
      %v9357 = vadd.f32 %v9222, %v9233
      %v9358 = vadd.f32 %v9223, %v9233
      %v9359 = vadd.f32 %v9224, %v9233
      %v9360 = vadd.f32 %v9225, %v9233
      %v9361 = vadd.f32 %v9226, %v9233
      %v9362 = vadd.f32 %v9227, %v9233
      %9363 = vst [vmem:[%s170] sm:$0xff] %v9235
      %9364 = vst [vmem:[%s170 + $0x8] sm:$0xff] %v9236
      %9365 = vst [vmem:[%s170 + $0x10] sm:$0xff] %v9237
      %9366 = vst [vmem:[%s170 + $0x18] sm:$0xff] %v9238
      %9367 = vst [vmem:[%s170 + $0x20] sm:$0xff] %v9239
      %9368 = vst [vmem:[%s170 + $0x28] sm:$0xff] %v9240
      %9369 = vst [vmem:[%s170 + $0x30] sm:$0xff] %v9241
      %9370 = vst [vmem:[%s170 + $0x38] sm:$0xff] %v9242
      %9371 = vst [vmem:[%s170 + $0x40] sm:$0xff] %v9243
      %9372 = vst [vmem:[%s170 + $0x48] sm:$0xff] %v9244
      %9373 = vst [vmem:[%s170 + $0x50] sm:$0xff] %v9245
      %9374 = vst [vmem:[%s170 + $0x58] sm:$0xff] %v9246
      %9375 = vst [vmem:[%s170 + $0x60] sm:$0xff] %v9247
      %9376 = vst [vmem:[%s170 + $0x68] sm:$0xff] %v9248
      %9377 = vst [vmem:[%s170 + $0x70] sm:$0xff] %v9249
      %9378 = vst [vmem:[%s170 + $0x78] sm:$0xff] %v9250
      %9379 = vst [vmem:[%s170 + $0x80] sm:$0xff] %v9251
      %9380 = vst [vmem:[%s170 + $0x88] sm:$0xff] %v9252
      %9381 = vst [vmem:[%s170 + $0x90] sm:$0xff] %v9253
      %9382 = vst [vmem:[%s170 + $0x98] sm:$0xff] %v9254
      %9383 = vst [vmem:[%s170 + $0xa0] sm:$0xff] %v9255
      %9384 = vst [vmem:[%s170 + $0xa8] sm:$0xff] %v9256
      %9385 = vst [vmem:[%s170 + $0xb0] sm:$0xff] %v9257
      %9386 = vst [vmem:[%s170 + $0xb8] sm:$0xff] %v9258
      %9387 = vst [vmem:[%s170 + $0xc0] sm:$0xff] %v9259
      %9388 = vst [vmem:[%s170 + $0xc8] sm:$0xff] %v9260
      %9389 = vst [vmem:[%s170 + $0xd0] sm:$0xff] %v9261
      %9390 = vst [vmem:[%s170 + $0xd8] sm:$0xff] %v9262
      %9391 = vst [vmem:[%s170 + $0xe0] sm:$0xff] %v9263
      %9392 = vst [vmem:[%s170 + $0xe8] sm:$0xff] %v9264
      %9393 = vst [vmem:[%s170 + $0xf0] sm:$0xff] %v9265
      %9394 = vst [vmem:[%s170 + $0xf8] sm:$0xff] %v9266
      %9395 = vst [vmem:[%s170 + $0x100] sm:$0xff] %v9267
      %9396 = vst [vmem:[%s170 + $0x108] sm:$0xff] %v9268
      %9397 = vst [vmem:[%s170 + $0x110] sm:$0xff] %v9269
      %9398 = vst [vmem:[%s170 + $0x118] sm:$0xff] %v9270
      %9399 = vst [vmem:[%s170 + $0x120] sm:$0xff] %v9271
      %9400 = vst [vmem:[%s170 + $0x128] sm:$0xff] %v9272
      %9401 = vst [vmem:[%s170 + $0x130] sm:$0xff] %v9273
      %9402 = vst [vmem:[%s170 + $0x138] sm:$0xff] %v9274
      %9403 = vst [vmem:[%s170 + $0x140] sm:$0xff] %v9275
      %9404 = vst [vmem:[%s170 + $0x148] sm:$0xff] %v9276
      %9405 = vst [vmem:[%s170 + $0x150] sm:$0xff] %v9277
      %9406 = vst [vmem:[%s170 + $0x158] sm:$0xff] %v9278
      %9407 = vst [vmem:[%s170 + $0x160] sm:$0xff] %v9279
      %9408 = vst [vmem:[%s170 + $0x168] sm:$0xff] %v9280
      %9409 = vst [vmem:[%s170 + $0x170] sm:$0xff] %v9281
      %9410 = vst [vmem:[%s170 + $0x178] sm:$0xff] %v9282
      %9411 = vst [vmem:[%s170 + $0x180] sm:$0xff] %v9283
      %9412 = vst [vmem:[%s170 + $0x188] sm:$0xff] %v9284
      %9413 = vst [vmem:[%s170 + $0x190] sm:$0xff] %v9285
      %9414 = vst [vmem:[%s170 + $0x198] sm:$0xff] %v9286
      %9415 = vst [vmem:[%s170 + $0x1a0] sm:$0xff] %v9287
      %9416 = vst [vmem:[%s170 + $0x1a8] sm:$0xff] %v9288
      %9417 = vst [vmem:[%s170 + $0x1b0] sm:$0xff] %v9289
      %9418 = vst [vmem:[%s170 + $0x1b8] sm:$0xff] %v9290
      %9419 = vst [vmem:[%s170 + $0x1c0] sm:$0xff] %v9291
      %9420 = vst [vmem:[%s170 + $0x1c8] sm:$0xff] %v9292
      %9421 = vst [vmem:[%s170 + $0x1d0] sm:$0xff] %v9293
      %9422 = vst [vmem:[%s170 + $0x1d8] sm:$0xff] %v9294
      %9423 = vst [vmem:[%s170 + $0x1e0] sm:$0xff] %v9295
      %9424 = vst [vmem:[%s170 + $0x1e8] sm:$0xff] %v9296
      %9425 = vst [vmem:[%s170 + $0x1f0] sm:$0xff] %v9297
      %9426 = vst [vmem:[%s170 + $0x1f8] sm:$0xff] %v9298
      %9427 = vst [vmem:[%s170 + $0x200] sm:$0xff] %v9299
      %9428 = vst [vmem:[%s170 + $0x208] sm:$0xff] %v9300
      %9429 = vst [vmem:[%s170 + $0x210] sm:$0xff] %v9301
      %9430 = vst [vmem:[%s170 + $0x218] sm:$0xff] %v9302
      %9431 = vst [vmem:[%s170 + $0x220] sm:$0xff] %v9303
      %9432 = vst [vmem:[%s170 + $0x228] sm:$0xff] %v9304
      %9433 = vst [vmem:[%s170 + $0x230] sm:$0xff] %v9305
      %9434 = vst [vmem:[%s170 + $0x238] sm:$0xff] %v9306
      %9435 = vst [vmem:[%s170 + $0x240] sm:$0xff] %v9307
      %9436 = vst [vmem:[%s170 + $0x248] sm:$0xff] %v9308
      %9437 = vst [vmem:[%s170 + $0x250] sm:$0xff] %v9309
      %9438 = vst [vmem:[%s170 + $0x258] sm:$0xff] %v9310
      %9439 = vst [vmem:[%s170 + $0x260] sm:$0xff] %v9311
      %9440 = vst [vmem:[%s170 + $0x268] sm:$0xff] %v9312
      %9441 = vst [vmem:[%s170 + $0x270] sm:$0xff] %v9313
      %9442 = vst [vmem:[%s170 + $0x278] sm:$0xff] %v9314
      %9443 = vst [vmem:[%s170 + $0x280] sm:$0xff] %v9315
      %9444 = vst [vmem:[%s170 + $0x288] sm:$0xff] %v9316
      %9445 = vst [vmem:[%s170 + $0x290] sm:$0xff] %v9317
      %9446 = vst [vmem:[%s170 + $0x298] sm:$0xff] %v9318
      %9447 = vst [vmem:[%s170 + $0x2a0] sm:$0xff] %v9319
      %9448 = vst [vmem:[%s170 + $0x2a8] sm:$0xff] %v9320
      %9449 = vst [vmem:[%s170 + $0x2b0] sm:$0xff] %v9321
      %9450 = vst [vmem:[%s170 + $0x2b8] sm:$0xff] %v9322
      %9451 = vst [vmem:[%s170 + $0x2c0] sm:$0xff] %v9323
      %9452 = vst [vmem:[%s170 + $0x2c8] sm:$0xff] %v9324
      %9453 = vst [vmem:[%s170 + $0x2d0] sm:$0xff] %v9325
      %9454 = vst [vmem:[%s170 + $0x2d8] sm:$0xff] %v9326
      %9455 = vst [vmem:[%s170 + $0x2e0] sm:$0xff] %v9327
      %9456 = vst [vmem:[%s170 + $0x2e8] sm:$0xff] %v9328
      %9457 = vst [vmem:[%s170 + $0x2f0] sm:$0xff] %v9329
      %9458 = vst [vmem:[%s170 + $0x2f8] sm:$0xff] %v9330
      %9459 = vst [vmem:[%s170 + $0x300] sm:$0xff] %v9331
      %9460 = vst [vmem:[%s170 + $0x308] sm:$0xff] %v9332
      %9461 = vst [vmem:[%s170 + $0x310] sm:$0xff] %v9333
      %9462 = vst [vmem:[%s170 + $0x318] sm:$0xff] %v9334
      %9463 = vst [vmem:[%s170 + $0x320] sm:$0xff] %v9335
      %9464 = vst [vmem:[%s170 + $0x328] sm:$0xff] %v9336
      %9465 = vst [vmem:[%s170 + $0x330] sm:$0xff] %v9337
      %9466 = vst [vmem:[%s170 + $0x338] sm:$0xff] %v9338
      %9467 = vst [vmem:[%s170 + $0x340] sm:$0xff] %v9339
      %9468 = vst [vmem:[%s170 + $0x348] sm:$0xff] %v9340
      %9469 = vst [vmem:[%s170 + $0x350] sm:$0xff] %v9341
      %9470 = vst [vmem:[%s170 + $0x358] sm:$0xff] %v9342
      %9471 = vst [vmem:[%s170 + $0x360] sm:$0xff] %v9343
      %9472 = vst [vmem:[%s170 + $0x368] sm:$0xff] %v9344
      %9473 = vst [vmem:[%s170 + $0x370] sm:$0xff] %v9345
      %9474 = vst [vmem:[%s170 + $0x378] sm:$0xff] %v9346
      %9475 = vst [vmem:[%s170 + $0x380] sm:$0xff] %v9347
      %9476 = vst [vmem:[%s170 + $0x388] sm:$0xff] %v9348
      %9477 = vst [vmem:[%s170 + $0x390] sm:$0xff] %v9349
      %9478 = vst [vmem:[%s170 + $0x398] sm:$0xff] %v9350
      %9479 = vst [vmem:[%s170 + $0x3a0] sm:$0xff] %v9351
      %9480 = vst [vmem:[%s170 + $0x3a8] sm:$0xff] %v9352
      %9481 = vst [vmem:[%s170 + $0x3b0] sm:$0xff] %v9353
      %9482 = vst [vmem:[%s170 + $0x3b8] sm:$0xff] %v9354
      %9483 = vst [vmem:[%s170 + $0x3c0] sm:$0xff] %v9355
      %9484 = vst [vmem:[%s170 + $0x3c8] sm:$0xff] %v9356
      %9485 = vst [vmem:[%s170 + $0x3d0] sm:$0xff] %v9357
      %9486 = vst [vmem:[%s170 + $0x3d8] sm:$0xff] %v9358
      %9487 = vst [vmem:[%s170 + $0x3e0] sm:$0xff] %v9359
      %9488 = vst [vmem:[%s170 + $0x3e8] sm:$0xff] %v9360
      %9489 = vst [vmem:[%s170 + $0x3f0] sm:$0xff] %v9361
      %9490 = vst [vmem:[%s170 + $0x3f8] sm:$0xff] %v9362
      %p9491 = scmp.lt.s32.totalorder %s14, 1
      %s9492 = scalar_select %p9491, %s14, 1
      %s9493 = smul.addr %s9492, 128
      %s9494 = smul.addr %s9493, 8
      %s9495 = scalar_lea.vmem %s3, %s9494
      // Predicated region
      $region33: #{upsample_conv_layer.1} parent=31 // pred_check
        %p9496 = pneg %p100
      $region34: #{upsample_conv_layer.1} parent=31 // pred_check_branch
        %9498 = sbr.rel (%p9496) target = $region36
      $region35: #{upsample_conv_layer.1} parent=31 // pred_region
        _
      $region36: #{upsample_conv_layer.1} parent=31 // pred_fallthru
        _
    $region32: #{upsample_conv_layer.1} parent=5 // pred_fallthru
      _
    %p9499 = scmp.le.s32.totalorder 2, %s9
    // Predicated region
    $region37: #{upsample_conv_layer.1} parent=5 // pred_check
      %p9500 = pneg %p9499
    $region38: #{upsample_conv_layer.1} parent=5 // pred_check_branch
      %9502 = sbr.rel (%p9500) target = $region40
    $region39: #{upsample_conv_layer.1} parent=5 // pred_region
      %s9503 = ssub.s32 %s9, 2
      // Predicated region
      $region41: #{upsample_conv_layer.1} parent=39 // pred_check
        %p9504 = pneg %p106
      $region42: #{upsample_conv_layer.1} parent=39 // pred_check_branch
        %9506 = sbr.rel (%p9504) target = $region44
      $region43: #{upsample_conv_layer.1} parent=39 // pred_region
        %p9507 = scmp.lt.s32.totalorder %s15, 1
        %s9508 = scalar_select %p9507, %s15, 1
        %s9509 = smul.addr %s9508, 128
        %s9510 = smul.addr %s9509, 8
        %s9511 = scalar_lea.vmem %s3, %s9510
      $region44: #{upsample_conv_layer.1} parent=39 // pred_fallthru
        _
    $region40: #{upsample_conv_layer.1} parent=5 // pred_fallthru
      _
  $region6: #{upsample_conv_layer.1} parent=0 // loop_footer
    %s13 = sadd.s32 1, %s9
  $region7: #{upsample_conv_layer.1} parent=0 // loop_footer_branch
    %8 = sbr.rel target = $region3
  $region8: #{upsample_conv_layer.1} parent=0 // loop_exit
    _

</llo_original>
